<compile_context>
chip_gen: v7x
topology: tpu7x:2x2x1
jax: 0.10.0
libtpu: 0.0.40
codegen_flags: <defaults>
</compile_context>

<pallas_src>
import functools

import numpy as np
import jax
import jax.numpy as jnp
from jax.experimental import pallas as pl
from jax.experimental.pallas import tpu as pltpu

# _KT[phase][tap] = ConvTranspose2d(k=4, s=2, p=1) kernel index used by output phase
# `phase` for padded-input offset `tap`.
_KT = ((3, 1), (2, 0))


# --------------------------- host-side weight packing ---------------------------

def pack_band(w, n_r):
    """ConvTranspose2d weight (Cin, Cout, 4, 4) -> row-phase banded matrices.

    Returns (4, (n_r+1)*Cin, 2*n_r*Cout) f32, indexed by 2*ry + dy.
    band[2*ry+dy] maps an input slab row (original y = q+ry+dy-1, lanes = x*Cin+ci)
    to output row 2*q+ry with lanes = (2*r+rx)*Cout + co: the x-window gather and both
    column phases are folded into the band structure (left zero-pad rows are dropped,
    the right zero-pad column block multiplies zeros in the staged slab)."""
    w = np.asarray(w, np.float32)
    cin, cout = w.shape[0], w.shape[1]
    band = np.zeros((4, (n_r + 1) * cin, 2 * n_r * cout), np.float32)
    for ry in range(2):
        for dy in range(2):
            kh = _KT[ry][dy]
            for r in range(n_r):
                for rx in range(2):
                    for dx in range(2):
                        x = r + rx + dx - 1          # original input column of this tap
                        if x < 0:                    # multiplies the zero left-pad
                            continue
                        kw = _KT[rx][dx]
                        band[2 * ry + dy,
                             x * cin:(x + 1) * cin,
                             (2 * r + rx) * cout:(2 * r + rx + 1) * cout] = w[:, :, kh, kw]
    return band


def prepare_params(fc_w, fc_b, w1, b1, w2, b2):
    """One-time host-side repacking of PyTorch-layout parameters for the fused kernel."""
    fc_w = np.asarray(fc_w, np.float32)
    fc_b = np.asarray(fc_b, np.float32)
    w1 = np.asarray(w1, np.float32)
    b1 = np.asarray(b1, np.float32)
    w2 = np.asarray(w2, np.float32)
    b2 = np.asarray(b2, np.float32)
    c0, c1 = w1.shape[0], w1.shape[1]
    c2 = w2.shape[1]
    zdim = fc_w.shape[1]
    # fc output index is ch*49 + y*7 + x (matches x.view(B,-1,7,7)); re-pack columns to
    # (y, x, ch) with x padded 7->8 so every image row is one 512-lane aligned slab.
    wr = fc_w.reshape(c0, 7, 7, zdim).transpose(1, 2, 0, 3)          # (7,7,c0,zd)
    wp = np.zeros((7, 8, c0, zdim), np.float32)
    wp[:, :7] = wr
    fcw = np.ascontiguousarray(wp.reshape(7 * 8 * c0, zdim).T)       # (zd, 7*8*c0)
    br = fc_b.reshape(c0, 7, 7).transpose(1, 2, 0)
    bp = np.zeros((7, 8, c0), np.float32)
    bp[:, :7] = br
    fcb = bp.reshape(1, 7 * 8 * c0)
    w1b = pack_band(w1, 7)                                           # (4, 8*c0, 14*c1)
    w2b = pack_band(w2, 14)                                          # (4, 15*c1, 28*c2)
    b1b = np.tile(b1, 14)[None, :]                                   # (1, 14*c1)
    b2b = np.tile(b2, 28)[None, :]                                   # (1, 28*c2)
    return tuple(jnp.asarray(a) for a in (fcw, fcb, w1b, b1b, w2b, b2b))


# --------------------------------- Pallas kernel --------------------------------

def _decoder_kernel(z_ref, fcw_ref, fcb_ref, w1_ref, b1_ref, w2_ref, b2_ref,
                    o_ref, xs_ref, ys_ref, *, c0, c1, c2):
    f32 = jnp.float32
    b = pl.program_id(0)

    # ---------------- fc: (1, zdim) @ (zdim, 7*8*c0) ----------------
    zb = z_ref[pl.ds(b, 1), :]                                       # (1, zdim)
    h = jnp.dot(zb, fcw_ref[...], preferred_element_type=f32) + fcb_ref[...]

    # ---- stage padded layer-1 input: row = 1+y, lanes = x*c0 + ci (x=7 block is pad) ----
    xs_ref[...] = jnp.zeros_like(xs_ref)
    row_w = 8 * c0
    for y in range(7):                                               # 512-lane aligned copies
        xs_ref[1 + y:2 + y, :] = h[:, y * row_w:(y + 1) * row_w]

    # ---------------- deconv1: 7x7xc0 -> 14x14xc1, + ReLU ----------------
    rows1 = []
    for ry in range(2):                                              # output row phase
        acc = jnp.dot(xs_ref[ry:ry + 7, :], w1_ref[2 * ry + 0],
                      preferred_element_type=f32)
        acc = acc + jnp.dot(xs_ref[ry + 1:ry + 8, :], w1_ref[2 * ry + 1],
                            preferred_element_type=f32)
        acc = jnp.maximum(acc + b1_ref[...], 0.0)                    # (7, 14*c1)
        rows1.append(acc[:, None, :])
    y1 = jnp.concatenate(rows1, axis=1).reshape(14, 14 * c1)         # row-phase interleave

    # ---- stage padded layer-2 input: row = 1+y, lanes = x*c1 + c (x=14 block is pad) ----
    ys_ref[...] = jnp.zeros_like(ys_ref)
    ys_ref[1:15, 0:14 * c1] = y1

    # ---------------- deconv2: 14x14xc1 -> 28x28xc2 ----------------
    rows2 = []
    for ry in range(2):
        acc = jnp.dot(ys_ref[ry:ry + 14, :], w2_ref[2 * ry + 0],
                      preferred_element_type=f32)
        acc = acc + jnp.dot(ys_ref[ry + 1:ry + 15, :], w2_ref[2 * ry + 1],
                            preferred_element_type=f32)
        acc = acc + b2_ref[...]                                      # (14, 28*c2)
        rows2.append(acc[:, None, :])
    out = jnp.concatenate(rows2, axis=1).reshape(28, 28 * c2)

    o_ref[...] = out[None]                                           # (1, 28, 28*c2)


# ----------------------------------- wrapper -------------------------------------

@jax.jit
def decoder_apply(z, fcw, fcb, w1b, b1b, w2b, b2b):
    B, zdim = z.shape
    c0 = w1b.shape[1] // 8
    c1 = w1b.shape[2] // 14
    c2 = w2b.shape[2] // 28
    kern = functools.partial(_decoder_kernel, c0=c0, c1=c1, c2=c2)
    out_flat = pl.pallas_call(
        kern,
        out_shape=jax.ShapeDtypeStruct((B, 28, 28 * c2), jnp.float32),
        grid=(B,),
        in_specs=[
            pl.BlockSpec((B, zdim), lambda b: (0, 0)),
            pl.BlockSpec(fcw.shape, lambda b: (0, 0)),
            pl.BlockSpec(fcb.shape, lambda b: (0, 0)),
            pl.BlockSpec(w1b.shape, lambda b: (0, 0, 0)),
            pl.BlockSpec(b1b.shape, lambda b: (0, 0)),
            pl.BlockSpec(w2b.shape, lambda b: (0, 0, 0)),
            pl.BlockSpec(b2b.shape, lambda b: (0, 0)),
        ],
        out_specs=pl.BlockSpec((1, 28, 28 * c2), lambda b: (b, 0, 0)),
        scratch_shapes=[pltpu.VMEM((9, 8 * c0), jnp.float32),    # padded 7x7  slab
                        pltpu.VMEM((16, 15 * c1), jnp.float32)], # padded 14x14 slab
        compiler_params=pltpu.CompilerParams(
            dimension_semantics=("parallel",),
            vmem_limit_bytes=40 * 1024 * 1024),
    )(z, fcw, fcb, w1b, b1b, w2b, b2b)
    # lane-dense (B, 28, 28*c2) -> NCHW, as the PyTorch module returns.
    return jnp.transpose(out_flat.reshape(B, 28, 28, c2), (0, 3, 1, 2))


# ------------------------------- numpy reference ---------------------------------

def conv_transpose_ref(x, w, b, stride=2, pad=1):
    # x: (B, Cin, H, W), w: (Cin, Cout, K, K) -- PyTorch ConvTranspose2d semantics.
    B, Cin, H, W = x.shape
    _, Cout, K, _ = w.shape
    OH = (H - 1) * stride - 2 * pad + K
    OW = (W - 1) * stride - 2 * pad + K
    full = np.zeros((B, Cout, (H - 1) * stride + K, (W - 1) * stride + K), np.float64)
    for iy in range(H):
        for ix in range(W):
            contrib = np.einsum('bc,cokl->bokl', x[:, :, iy, ix], w)
            full[:, :, iy * stride:iy * stride + K,
                 ix * stride:ix * stride + K] += contrib
    return full[:, :, pad:pad + OH, pad:pad + OW] + b[None, :, None, None]


def reference_forward(z, fc_w, fc_b, w1, b1, w2, b2):
    h = z @ fc_w.T + fc_b
    x = h.reshape(z.shape[0], -1, 7, 7)
    x = np.maximum(conv_transpose_ref(x, w1, b1), 0.0)
    return conv_transpose_ref(x, w2, b2)


# ------------------------------------- main ---------------------------------------

if __name__ == "__main__":
    B, NUM_INPUT_CH, NF, ZD = 2, 16, 32, 20
    key = jax.random.PRNGKey(0)
    ks = jax.random.split(key, 7)

    z = jax.random.normal(ks[0], (B, ZD), jnp.float32)
    # nn.Linear(z_dim, num_filters * 98): weight (out, in), bias (out,)
    fc_w = jax.random.normal(ks[1], (NF * 98, ZD), jnp.float32) * 0.05
    fc_b = jax.random.normal(ks[2], (NF * 98,), jnp.float32) * 0.05
    # nn.ConvTranspose2d weight layout: (Cin, Cout, kH, kW)
    w1 = jax.random.normal(ks[3], (NF * 2, NF, 4, 4), jnp.float32) * 0.05
    b1 = jax.random.normal(ks[4], (NF,), jnp.float32) * 0.05
    w2 = jax.random.normal(ks[5], (NF, NUM_INPUT_CH, 4, 4), jnp.float32) * 0.05
    b2 = jax.random.normal(ks[6], (NUM_INPUT_CH,), jnp.float32) * 0.05

    packed = prepare_params(fc_w, fc_b, w1, b1, w2, b2)   # one-time weight prep
    out = decoder_apply(z, *packed)
    out = jax.block_until_ready(out)
    assert out.shape == (B, NUM_INPUT_CH, 28, 28), out.shape

    ref = reference_forward(np.asarray(z, np.float64), np.asarray(fc_w, np.float64),
                            np.asarray(fc_b, np.float64), np.asarray(w1, np.float64),
                            np.asarray(b1, np.float64), np.asarray(w2, np.float64),
                            np.asarray(b2, np.float64))
    err = float(np.max(np.abs(np.asarray(out) - ref)))
    assert np.allclose(np.asarray(out), ref, rtol=3e-3, atol=3e-3), err

    print("KERNEL_OK")
</pallas_src>

<mosaic_0001>
module attributes {stable_mosaic.version = 11 : i64} {
  func.func @_decoder_kernel(%arg0: i32, %arg1: memref<2x20xf32, #tpu.memory_space<vmem>>, %arg2: memref<20x3584xf32, #tpu.memory_space<vmem>>, %arg3: memref<1x3584xf32, #tpu.memory_space<vmem>>, %arg4: memref<4x512x448xf32, #tpu.memory_space<vmem>>, %arg5: memref<1x448xf32, #tpu.memory_space<vmem>>, %arg6: memref<4x480x448xf32, #tpu.memory_space<vmem>>, %arg7: memref<1x448xf32, #tpu.memory_space<vmem>>, %arg8: memref<1x28x448xf32, #tpu.memory_space<vmem>>, %arg9: memref<9x512xf32, #tpu.memory_space<vmem>>, %arg10: memref<16x480xf32, #tpu.memory_space<vmem>>) attributes {dimension_semantics = [#tpu.dimension_semantics<parallel>], iteration_bounds = array<i64: 2>, scalar_prefetch = 0 : i64, scratch_operands = 2 : i64, tpu.core_type = #tpu.core_type<tc>, window_params = [{pipeline_mode = #tpu.pipeline_mode<synchronous>, transform_indices = @transform_0, window_bounds = array<i64: 2, 20>}, {pipeline_mode = #tpu.pipeline_mode<synchronous>, transform_indices = @transform_1, window_bounds = array<i64: 20, 3584>}, {pipeline_mode = #tpu.pipeline_mode<synchronous>, transform_indices = @transform_2, window_bounds = array<i64: 1, 3584>}, {pipeline_mode = #tpu.pipeline_mode<synchronous>, transform_indices = @transform_3, window_bounds = array<i64: 4, 512, 448>}, {pipeline_mode = #tpu.pipeline_mode<synchronous>, transform_indices = @transform_4, window_bounds = array<i64: 1, 448>}, {pipeline_mode = #tpu.pipeline_mode<synchronous>, transform_indices = @transform_5, window_bounds = array<i64: 4, 480, 448>}, {pipeline_mode = #tpu.pipeline_mode<synchronous>, transform_indices = @transform_6, window_bounds = array<i64: 1, 448>}, {transform_indices = @transform_7, window_bounds = array<i64: 1, 28, 448>}]} {
    %0 = arith.index_cast %arg0 : i32 to index
    %c0 = arith.constant 0 : index
    %1 = vector.load %arg1[%0, %c0] : memref<2x20xf32, #tpu.memory_space<vmem>>, vector<1x20xf32>
    %c0_0 = arith.constant 0 : index
    %c0_1 = arith.constant 0 : index
    %2 = vector.load %arg2[%c0_0, %c0_1] : memref<20x3584xf32, #tpu.memory_space<vmem>>, vector<20x3584xf32>
    %cst = arith.constant dense<0.000000e+00> : vector<1x3584xf32>
    %3 = tpu.matmul %1, %2, %cst {dimension_numbers = #tpu.dot_dimension_numbers<[1], [0], [0], [1], [0, 0, 1, 1], [], []>} : vector<1x20xf32>, vector<20x3584xf32>, vector<1x3584xf32> -> vector<1x3584xf32>
    %c0_2 = arith.constant 0 : index
    %c0_3 = arith.constant 0 : index
    %4 = vector.load %arg3[%c0_2, %c0_3] : memref<1x3584xf32, #tpu.memory_space<vmem>>, vector<1x3584xf32>
    %5 = arith.addf %3, %4 : vector<1x3584xf32>
    %cst_4 = arith.constant 0.000000e+00 : f32
    %6 = vector.broadcast %cst_4 : f32 to vector<9x512xf32>
    %c0_5 = arith.constant 0 : index
    %c0_6 = arith.constant 0 : index
    %7 = vector.load %arg9[%c0_5, %c0_6] : memref<9x512xf32, #tpu.memory_space<vmem>>, vector<9x512xf32>
    tpu.vector_store %arg9[%c0_5, %c0_6], %6 {strides = array<i32>} : memref<9x512xf32, #tpu.memory_space<vmem>>, vector<9x512xf32>,
    %8 = vector.extract_strided_slice %5 {offsets = [0, 0], sizes = [1, 512], strides = [1, 1]} : vector<1x3584xf32> to vector<1x512xf32>
    %c1 = arith.constant 1 : index
    %c0_7 = arith.constant 0 : index
    %9 = vector.load %arg9[%c1, %c0_7] : memref<9x512xf32, #tpu.memory_space<vmem>>, vector<1x512xf32>
    tpu.vector_store %arg9[%c1, %c0_7], %8 {strides = array<i32>} : memref<9x512xf32, #tpu.memory_space<vmem>>, vector<1x512xf32>,
    %10 = vector.extract_strided_slice %5 {offsets = [0, 512], sizes = [1, 512], strides = [1, 1]} : vector<1x3584xf32> to vector<1x512xf32>
    %c2 = arith.constant 2 : index
    %c0_8 = arith.constant 0 : index
    %11 = vector.load %arg9[%c2, %c0_8] : memref<9x512xf32, #tpu.memory_space<vmem>>, vector<1x512xf32>
    tpu.vector_store %arg9[%c2, %c0_8], %10 {strides = array<i32>} : memref<9x512xf32, #tpu.memory_space<vmem>>, vector<1x512xf32>,
    %12 = vector.extract_strided_slice %5 {offsets = [0, 1024], sizes = [1, 512], strides = [1, 1]} : vector<1x3584xf32> to vector<1x512xf32>
    %c3 = arith.constant 3 : index
    %c0_9 = arith.constant 0 : index
    %13 = vector.load %arg9[%c3, %c0_9] : memref<9x512xf32, #tpu.memory_space<vmem>>, vector<1x512xf32>
    tpu.vector_store %arg9[%c3, %c0_9], %12 {strides = array<i32>} : memref<9x512xf32, #tpu.memory_space<vmem>>, vector<1x512xf32>,
    %14 = vector.extract_strided_slice %5 {offsets = [0, 1536], sizes = [1, 512], strides = [1, 1]} : vector<1x3584xf32> to vector<1x512xf32>
    %c4 = arith.constant 4 : index
    %c0_10 = arith.constant 0 : index
    %15 = vector.load %arg9[%c4, %c0_10] : memref<9x512xf32, #tpu.memory_space<vmem>>, vector<1x512xf32>
    tpu.vector_store %arg9[%c4, %c0_10], %14 {strides = array<i32>} : memref<9x512xf32, #tpu.memory_space<vmem>>, vector<1x512xf32>,
    %16 = vector.extract_strided_slice %5 {offsets = [0, 2048], sizes = [1, 512], strides = [1, 1]} : vector<1x3584xf32> to vector<1x512xf32>
    %c5 = arith.constant 5 : index
    %c0_11 = arith.constant 0 : index
    %17 = vector.load %arg9[%c5, %c0_11] : memref<9x512xf32, #tpu.memory_space<vmem>>, vector<1x512xf32>
    tpu.vector_store %arg9[%c5, %c0_11], %16 {strides = array<i32>} : memref<9x512xf32, #tpu.memory_space<vmem>>, vector<1x512xf32>,
    %18 = vector.extract_strided_slice %5 {offsets = [0, 2560], sizes = [1, 512], strides = [1, 1]} : vector<1x3584xf32> to vector<1x512xf32>
    %c6 = arith.constant 6 : index
    %c0_12 = arith.constant 0 : index
    %19 = vector.load %arg9[%c6, %c0_12] : memref<9x512xf32, #tpu.memory_space<vmem>>, vector<1x512xf32>
    tpu.vector_store %arg9[%c6, %c0_12], %18 {strides = array<i32>} : memref<9x512xf32, #tpu.memory_space<vmem>>, vector<1x512xf32>,
    %20 = vector.extract_strided_slice %5 {offsets = [0, 3072], sizes = [1, 512], strides = [1, 1]} : vector<1x3584xf32> to vector<1x512xf32>
    %c7 = arith.constant 7 : index
    %c0_13 = arith.constant 0 : index
    %21 = vector.load %arg9[%c7, %c0_13] : memref<9x512xf32, #tpu.memory_space<vmem>>, vector<1x512xf32>
    tpu.vector_store %arg9[%c7, %c0_13], %20 {strides = array<i32>} : memref<9x512xf32, #tpu.memory_space<vmem>>, vector<1x512xf32>,
    %c0_14 = arith.constant 0 : index
    %c0_15 = arith.constant 0 : index
    %22 = vector.load %arg9[%c0_14, %c0_15] : memref<9x512xf32, #tpu.memory_space<vmem>>, vector<7x512xf32>
    %c0_16 = arith.constant 0 : index
    %c0_17 = arith.constant 0 : index
    %c0_18 = arith.constant 0 : index
    %23 = vector.load %arg4[%c0_16, %c0_17, %c0_18] : memref<4x512x448xf32, #tpu.memory_space<vmem>>, vector<1x512x448xf32>
    %24 = vector.shape_cast %23 : vector<1x512x448xf32> to vector<512x448xf32>
    %cst_19 = arith.constant dense<0.000000e+00> : vector<7x448xf32>
    %25 = tpu.matmul %22, %24, %cst_19 {dimension_numbers = #tpu.dot_dimension_numbers<[1], [0], [0], [1], [0, 0, 1, 1], [], []>} : vector<7x512xf32>, vector<512x448xf32>, vector<7x448xf32> -> vector<7x448xf32>
    %c1_20 = arith.constant 1 : index
    %c0_21 = arith.constant 0 : index
    %26 = vector.load %arg9[%c1_20, %c0_21] : memref<9x512xf32, #tpu.memory_space<vmem>>, vector<7x512xf32>
    %c1_22 = arith.constant 1 : index
    %c0_23 = arith.constant 0 : index
    %c0_24 = arith.constant 0 : index
    %27 = vector.load %arg4[%c1_22, %c0_23, %c0_24] : memref<4x512x448xf32, #tpu.memory_space<vmem>>, vector<1x512x448xf32>
    %28 = vector.shape_cast %27 : vector<1x512x448xf32> to vector<512x448xf32>
    %cst_25 = arith.constant dense<0.000000e+00> : vector<7x448xf32>
    %29 = tpu.matmul %26, %28, %cst_25 {dimension_numbers = #tpu.dot_dimension_numbers<[1], [0], [0], [1], [0, 0, 1, 1], [], []>} : vector<7x512xf32>, vector<512x448xf32>, vector<7x448xf32> -> vector<7x448xf32>
    %30 = arith.addf %25, %29 : vector<7x448xf32>
    %c0_26 = arith.constant 0 : index
    %c0_27 = arith.constant 0 : index
    %31 = vector.load %arg5[%c0_26, %c0_27] : memref<1x448xf32, #tpu.memory_space<vmem>>, vector<1x448xf32>
    %32 = vector.broadcast %31 : vector<1x448xf32> to vector<7x448xf32>
    %33 = arith.addf %30, %32 : vector<7x448xf32>
    %cst_28 = arith.constant 0.000000e+00 : f32
    %34 = vector.broadcast %cst_28 : f32 to vector<7x448xf32>
    %35 = arith.maximumf %33, %34 : vector<7x448xf32>
    %36 = vector.shape_cast %35 : vector<7x448xf32> to vector<7x1x448xf32>
    %c1_29 = arith.constant 1 : index
    %c0_30 = arith.constant 0 : index
    %37 = vector.load %arg9[%c1_29, %c0_30] : memref<9x512xf32, #tpu.memory_space<vmem>>, vector<7x512xf32>
    %c2_31 = arith.constant 2 : index
    %c0_32 = arith.constant 0 : index
    %c0_33 = arith.constant 0 : index
    %38 = vector.load %arg4[%c2_31, %c0_32, %c0_33] : memref<4x512x448xf32, #tpu.memory_space<vmem>>, vector<1x512x448xf32>
    %39 = vector.shape_cast %38 : vector<1x512x448xf32> to vector<512x448xf32>
    %cst_34 = arith.constant dense<0.000000e+00> : vector<7x448xf32>
    %40 = tpu.matmul %37, %39, %cst_34 {dimension_numbers = #tpu.dot_dimension_numbers<[1], [0], [0], [1], [0, 0, 1, 1], [], []>} : vector<7x512xf32>, vector<512x448xf32>, vector<7x448xf32> -> vector<7x448xf32>
    %c2_35 = arith.constant 2 : index
    %c0_36 = arith.constant 0 : index
    %41 = vector.load %arg9[%c2_35, %c0_36] : memref<9x512xf32, #tpu.memory_space<vmem>>, vector<7x512xf32>
    %c3_37 = arith.constant 3 : index
    %c0_38 = arith.constant 0 : index
    %c0_39 = arith.constant 0 : index
    %42 = vector.load %arg4[%c3_37, %c0_38, %c0_39] : memref<4x512x448xf32, #tpu.memory_space<vmem>>, vector<1x512x448xf32>
    %43 = vector.shape_cast %42 : vector<1x512x448xf32> to vector<512x448xf32>
    %cst_40 = arith.constant dense<0.000000e+00> : vector<7x448xf32>
    %44 = tpu.matmul %41, %43, %cst_40 {dimension_numbers = #tpu.dot_dimension_numbers<[1], [0], [0], [1], [0, 0, 1, 1], [], []>} : vector<7x512xf32>, vector<512x448xf32>, vector<7x448xf32> -> vector<7x448xf32>
    %45 = arith.addf %40, %44 : vector<7x448xf32>
    %c0_41 = arith.constant 0 : index
    %c0_42 = arith.constant 0 : index
    %46 = vector.load %arg5[%c0_41, %c0_42] : memref<1x448xf32, #tpu.memory_space<vmem>>, vector<1x448xf32>
    %47 = vector.broadcast %46 : vector<1x448xf32> to vector<7x448xf32>
    %48 = arith.addf %45, %47 : vector<7x448xf32>
    %cst_43 = arith.constant 0.000000e+00 : f32
    %49 = vector.broadcast %cst_43 : f32 to vector<7x448xf32>
    %50 = arith.maximumf %48, %49 : vector<7x448xf32>
    %51 = vector.shape_cast %50 : vector<7x448xf32> to vector<7x1x448xf32>
    %52 = tpu.concatenate %36, %51 in 1 : vector<7x1x448xf32>, vector<7x1x448xf32> -> vector<7x2x448xf32>
    %53 = vector.shape_cast %52 : vector<7x2x448xf32> to vector<14x448xf32>
    %cst_44 = arith.constant 0.000000e+00 : f32
    %54 = vector.broadcast %cst_44 : f32 to vector<16x480xf32>
    %c0_45 = arith.constant 0 : index
    %c0_46 = arith.constant 0 : index
    %55 = vector.load %arg10[%c0_45, %c0_46] : memref<16x480xf32, #tpu.memory_space<vmem>>, vector<16x480xf32>
    tpu.vector_store %arg10[%c0_45, %c0_46], %54 {strides = array<i32>} : memref<16x480xf32, #tpu.memory_space<vmem>>, vector<16x480xf32>,
    %c1_47 = arith.constant 1 : index
    %c0_48 = arith.constant 0 : index
    %56 = vector.load %arg10[%c1_47, %c0_48] : memref<16x480xf32, #tpu.memory_space<vmem>>, vector<14x448xf32>
    tpu.vector_store %arg10[%c1_47, %c0_48], %53 {strides = array<i32>} : memref<16x480xf32, #tpu.memory_space<vmem>>, vector<14x448xf32>,
    %c0_49 = arith.constant 0 : index
    %c0_50 = arith.constant 0 : index
    %57 = vector.load %arg10[%c0_49, %c0_50] : memref<16x480xf32, #tpu.memory_space<vmem>>, vector<14x480xf32>
    %c0_51 = arith.constant 0 : index
    %c0_52 = arith.constant 0 : index
    %c0_53 = arith.constant 0 : index
    %58 = vector.load %arg6[%c0_51, %c0_52, %c0_53] : memref<4x480x448xf32, #tpu.memory_space<vmem>>, vector<1x480x448xf32>
    %59 = vector.shape_cast %58 : vector<1x480x448xf32> to vector<480x448xf32>
    %cst_54 = arith.constant dense<0.000000e+00> : vector<14x448xf32>
    %60 = tpu.matmul %57, %59, %cst_54 {dimension_numbers = #tpu.dot_dimension_numbers<[1], [0], [0], [1], [0, 0, 1, 1], [], []>} : vector<14x480xf32>, vector<480x448xf32>, vector<14x448xf32> -> vector<14x448xf32>
    %c1_55 = arith.constant 1 : index
    %c0_56 = arith.constant 0 : index
    %61 = vector.load %arg10[%c1_55, %c0_56] : memref<16x480xf32, #tpu.memory_space<vmem>>, vector<14x480xf32>
    %c1_57 = arith.constant 1 : index
    %c0_58 = arith.constant 0 : index
    %c0_59 = arith.constant 0 : index
    %62 = vector.load %arg6[%c1_57, %c0_58, %c0_59] : memref<4x480x448xf32, #tpu.memory_space<vmem>>, vector<1x480x448xf32>
    %63 = vector.shape_cast %62 : vector<1x480x448xf32> to vector<480x448xf32>
    %cst_60 = arith.constant dense<0.000000e+00> : vector<14x448xf32>
    %64 = tpu.matmul %61, %63, %cst_60 {dimension_numbers = #tpu.dot_dimension_numbers<[1], [0], [0], [1], [0, 0, 1, 1], [], []>} : vector<14x480xf32>, vector<480x448xf32>, vector<14x448xf32> -> vector<14x448xf32>
    %65 = arith.addf %60, %64 : vector<14x448xf32>
    %c0_61 = arith.constant 0 : index
    %c0_62 = arith.constant 0 : index
    %66 = vector.load %arg7[%c0_61, %c0_62] : memref<1x448xf32, #tpu.memory_space<vmem>>, vector<1x448xf32>
    %67 = vector.broadcast %66 : vector<1x448xf32> to vector<14x448xf32>
    %68 = arith.addf %65, %67 : vector<14x448xf32>
    %69 = vector.shape_cast %68 : vector<14x448xf32> to vector<14x1x448xf32>
    %c1_63 = arith.constant 1 : index
    %c0_64 = arith.constant 0 : index
    %70 = vector.load %arg10[%c1_63, %c0_64] : memref<16x480xf32, #tpu.memory_space<vmem>>, vector<14x480xf32>
    %c2_65 = arith.constant 2 : index
    %c0_66 = arith.constant 0 : index
    %c0_67 = arith.constant 0 : index
    %71 = vector.load %arg6[%c2_65, %c0_66, %c0_67] : memref<4x480x448xf32, #tpu.memory_space<vmem>>, vector<1x480x448xf32>
    %72 = vector.shape_cast %71 : vector<1x480x448xf32> to vector<480x448xf32>
    %cst_68 = arith.constant dense<0.000000e+00> : vector<14x448xf32>
    %73 = tpu.matmul %70, %72, %cst_68 {dimension_numbers = #tpu.dot_dimension_numbers<[1], [0], [0], [1], [0, 0, 1, 1], [], []>} : vector<14x480xf32>, vector<480x448xf32>, vector<14x448xf32> -> vector<14x448xf32>
    %c2_69 = arith.constant 2 : index
    %c0_70 = arith.constant 0 : index
    %74 = vector.load %arg10[%c2_69, %c0_70] : memref<16x480xf32, #tpu.memory_space<vmem>>, vector<14x480xf32>
    %c3_71 = arith.constant 3 : index
    %c0_72 = arith.constant 0 : index
    %c0_73 = arith.constant 0 : index
    %75 = vector.load %arg6[%c3_71, %c0_72, %c0_73] : memref<4x480x448xf32, #tpu.memory_space<vmem>>, vector<1x480x448xf32>
    %76 = vector.shape_cast %75 : vector<1x480x448xf32> to vector<480x448xf32>
    %cst_74 = arith.constant dense<0.000000e+00> : vector<14x448xf32>
    %77 = tpu.matmul %74, %76, %cst_74 {dimension_numbers = #tpu.dot_dimension_numbers<[1], [0], [0], [1], [0, 0, 1, 1], [], []>} : vector<14x480xf32>, vector<480x448xf32>, vector<14x448xf32> -> vector<14x448xf32>
    %78 = arith.addf %73, %77 : vector<14x448xf32>
    %c0_75 = arith.constant 0 : index
    %c0_76 = arith.constant 0 : index
    %79 = vector.load %arg7[%c0_75, %c0_76] : memref<1x448xf32, #tpu.memory_space<vmem>>, vector<1x448xf32>
    %80 = vector.broadcast %79 : vector<1x448xf32> to vector<14x448xf32>
    %81 = arith.addf %78, %80 : vector<14x448xf32>
    %82 = vector.shape_cast %81 : vector<14x448xf32> to vector<14x1x448xf32>
    %83 = tpu.concatenate %69, %82 in 1 : vector<14x1x448xf32>, vector<14x1x448xf32> -> vector<14x2x448xf32>
    %84 = vector.shape_cast %83 : vector<14x2x448xf32> to vector<28x448xf32>
    %85 = vector.shape_cast %84 : vector<28x448xf32> to vector<1x28x448xf32>
    %c0_77 = arith.constant 0 : index
    %c0_78 = arith.constant 0 : index
    %c0_79 = arith.constant 0 : index
    %86 = vector.load %arg8[%c0_77, %c0_78, %c0_79] : memref<1x28x448xf32, #tpu.memory_space<vmem>>, vector<1x28x448xf32>
    tpu.vector_store %arg8[%c0_77, %c0_78, %c0_79], %85 {strides = array<i32>} : memref<1x28x448xf32, #tpu.memory_space<vmem>>, vector<1x28x448xf32>,
    return
  }
  func.func @transform_0(%arg0: i32) -> (i32, i32) {
    %c0_i32 = arith.constant 0 : i32
    %c0_i32_0 = arith.constant 0 : i32
    %c0_i32_1 = arith.constant 0 : i32
    return %c0_i32, %c0_i32_0 : i32, i32
  }
  func.func @transform_1(%arg0: i32) -> (i32, i32) {
    %c0_i32 = arith.constant 0 : i32
    %c0_i32_0 = arith.constant 0 : i32
    %c0_i32_1 = arith.constant 0 : i32
    return %c0_i32, %c0_i32_0 : i32, i32
  }
  func.func @transform_2(%arg0: i32) -> (i32, i32) {
    %c0_i32 = arith.constant 0 : i32
    %c0_i32_0 = arith.constant 0 : i32
    %c0_i32_1 = arith.constant 0 : i32
    return %c0_i32, %c0_i32_0 : i32, i32
  }
  func.func @transform_3(%arg0: i32) -> (i32, i32, i32) {
    %c0_i32 = arith.constant 0 : i32
    %c0_i32_0 = arith.constant 0 : i32
    %c0_i32_1 = arith.constant 0 : i32
    %c0_i32_2 = arith.constant 0 : i32
    return %c0_i32, %c0_i32_0, %c0_i32_1 : i32, i32, i32
  }
  func.func @transform_4(%arg0: i32) -> (i32, i32) {
    %c0_i32 = arith.constant 0 : i32
    %c0_i32_0 = arith.constant 0 : i32
    %c0_i32_1 = arith.constant 0 : i32
    return %c0_i32, %c0_i32_0 : i32, i32
  }
  func.func @transform_5(%arg0: i32) -> (i32, i32, i32) {
    %c0_i32 = arith.constant 0 : i32
    %c0_i32_0 = arith.constant 0 : i32
    %c0_i32_1 = arith.constant 0 : i32
    %c0_i32_2 = arith.constant 0 : i32
    return %c0_i32, %c0_i32_0, %c0_i32_1 : i32, i32, i32
  }
  func.func @transform_6(%arg0: i32) -> (i32, i32) {
    %c0_i32 = arith.constant 0 : i32
    %c0_i32_0 = arith.constant 0 : i32
    %c0_i32_1 = arith.constant 0 : i32
    return %c0_i32, %c0_i32_0 : i32, i32
  }
  func.func @transform_7(%arg0: i32) -> (i32, i32, i32) {
    %c0_i32 = arith.constant 0 : i32
    %c0_i32_0 = arith.constant 0 : i32
    %c0_i32_1 = arith.constant 0 : i32
    return %arg0, %c0_i32, %c0_i32_0 : i32, i32, i32
  }
}

</mosaic_0001>

<llo_original>
// kernel: decoder_apply.1
$region0: #{decoder_apply.1}
  #allocation0 [shape = 'u32[]', space=smem, size = 0x4, offset = 0x4, fixed_abs, tag = 'smem constant byte address 0x4 - core index']
  #allocation1 [shape = 'u32[144,128]{1,0:T(1,128)}', space=vmem, size = 0x12000, scoped, tag = 'internal scratch']
  #allocation2 [shape = 'f32[9,512]{1,0:T(8,128)}', space=vmem, size = 0x8000, scoped, tag = 'scratch operand']
  #allocation3 [shape = 'f32[16,480]{1,0:T(8,128)}', space=vmem, size = 0x8000, scoped, tag = 'scratch operand']
  %s0 = inlined_call_operand.vmem [shape: f32[2,20], index: 0, kind: input, shape index: {}]
  %s1 = inlined_call_operand.vmem [shape: f32[20,3584], index: 1, kind: input, shape index: {}]
  %s2 = inlined_call_operand.vmem [shape: f32[1,3584], index: 2, kind: input, shape index: {}]
  %s3 = inlined_call_operand.vmem [shape: f32[4,512,448], index: 3, kind: input, shape index: {}]
  %s4 = inlined_call_operand.vmem [shape: f32[1,448], index: 4, kind: input, shape index: {}]
  %s5 = inlined_call_operand.vmem [shape: f32[4,480,448], index: 5, kind: input, shape index: {}]
  %s6 = inlined_call_operand.vmem [shape: f32[1,448], index: 6, kind: input, shape index: {}]
  %s7 = inlined_call_operand.vmem [shape: f32[2,28,448], index: 7, kind: output, shape index: {}]
  %s8 = sld [smem:[#allocation0]]
  $region61: #{decoder_apply.1} parent=0
    _
  %s10 = ssub.s32 1, %s8
  %s11 = scalar_select 0, %s10, %s8
  loop: start=0, step=1, limit=4
  $region2: #{decoder_apply.1} parent=0 // loop_pre_header
    _
  $region3: #{decoder_apply.1} parent=0 // loop_header
    %s13 = sphi 0, %s17
    %p14 = scmp.ge.s32.totalorder %s13, 4
    %s21 = sphi 0, %s21
    %s23 = sphi 0, %s21
    %s24 = sphi 0, %s23
    %s38 = sphi 0, %s24
    %s42 = sphi 0, %s42
    %s44 = sphi 0, %s42
    %s45 = sphi 0, %s44
    %s59 = sphi 0, %s45
    %s63 = sphi 0, %s63
    %s65 = sphi 0, %s63
    %s66 = sphi 0, %s65
    %s80 = sphi 0, %s66
    %s84 = sphi 0, %s84
    %s86 = sphi 0, %s84
    %s87 = sphi 0, %s86
    %s101 = sphi 0, %s87
    %s105 = sphi 0, %s105
    %s107 = sphi 0, %s105
    %s108 = sphi 0, %s107
    %s122 = sphi 0, %s108
    %s126 = sphi 0, %s126
    %s128 = sphi 0, %s126
    %s129 = sphi 0, %s128
    %s143 = sphi 0, %s129
    %s147 = sphi 0, %s147
    %s149 = sphi 0, %s147
    %s150 = sphi 0, %s149
    %s164 = sphi 0, %s150
    %s170 = sphi 0, %s172
    %s173 = sphi 0, %s170
    %s174 = sphi 0, %s173
    %s190 = sphi 0, %s174
  $region4: #{decoder_apply.1} parent=0 // loop_header_branch
    %16 = sbr.rel (%p14) target = $region8
  $region5: #{decoder_apply.1} parent=0 // loop_body
    %s18 = ssub.s32 %s13, 1
    %s19 = ssub.s32 %s13, 2
    %s20 = sadd.s32 %s13, 1
    %s22 = sadd.s32 %s21, 1
    %p25 = scmp.eq.s32.totalorder %s13, 1
    %p26 = scmp.ne.s32.totalorder %s21, %s23
    %p27 = scmp.eq.s32.totalorder %s13, 0
    %p28 = por %p26, %p27
    %p29 = scmp.ne.s32.totalorder %s21, %s23
    %p30 = scmp.eq.s32.totalorder %s18, 1
    %p31 = por %p29, %p30
    %p32 = scmp.ne.s32.totalorder %s23, %s24
    %p33 = scmp.eq.s32.totalorder %s18, 0
    %p34 = por %p32, %p33
    %p35 = scmp.ne.s32.totalorder %s23, %s24
    %p36 = scmp.eq.s32.totalorder %s19, 1
    %p37 = por %p35, %p36
    %p39 = scmp.ne.s32.totalorder %s24, %s38
    %p40 = scmp.eq.s32.totalorder %s19, 0
    %p41 = por %p39, %p40
    %s43 = sadd.s32 %s42, 1
    %p46 = scmp.eq.s32.totalorder %s13, 1
    %p47 = scmp.ne.s32.totalorder %s42, %s44
    %p48 = scmp.eq.s32.totalorder %s13, 0
    %p49 = por %p47, %p48
    %p50 = scmp.ne.s32.totalorder %s42, %s44
    %p51 = scmp.eq.s32.totalorder %s18, 1
    %p52 = por %p50, %p51
    %p53 = scmp.ne.s32.totalorder %s44, %s45
    %p54 = scmp.eq.s32.totalorder %s18, 0
    %p55 = por %p53, %p54
    %p56 = scmp.ne.s32.totalorder %s44, %s45
    %p57 = scmp.eq.s32.totalorder %s19, 1
    %p58 = por %p56, %p57
    %p60 = scmp.ne.s32.totalorder %s45, %s59
    %p61 = scmp.eq.s32.totalorder %s19, 0
    %p62 = por %p60, %p61
    %s64 = sadd.s32 %s63, 1
    %p67 = scmp.eq.s32.totalorder %s13, 1
    %p68 = scmp.ne.s32.totalorder %s63, %s65
    %p69 = scmp.eq.s32.totalorder %s13, 0
    %p70 = por %p68, %p69
    %p71 = scmp.ne.s32.totalorder %s63, %s65
    %p72 = scmp.eq.s32.totalorder %s18, 1
    %p73 = por %p71, %p72
    %p74 = scmp.ne.s32.totalorder %s65, %s66
    %p75 = scmp.eq.s32.totalorder %s18, 0
    %p76 = por %p74, %p75
    %p77 = scmp.ne.s32.totalorder %s65, %s66
    %p78 = scmp.eq.s32.totalorder %s19, 1
    %p79 = por %p77, %p78
    %p81 = scmp.ne.s32.totalorder %s66, %s80
    %p82 = scmp.eq.s32.totalorder %s19, 0
    %p83 = por %p81, %p82
    %s85 = sadd.s32 %s84, 1
    %p88 = scmp.eq.s32.totalorder %s13, 1
    %p89 = scmp.ne.s32.totalorder %s84, %s86
    %p90 = scmp.eq.s32.totalorder %s13, 0
    %p91 = por %p89, %p90
    %p92 = scmp.ne.s32.totalorder %s84, %s86
    %p93 = scmp.eq.s32.totalorder %s18, 1
    %p94 = por %p92, %p93
    %p95 = scmp.ne.s32.totalorder %s86, %s87
    %p96 = scmp.eq.s32.totalorder %s18, 0
    %p97 = por %p95, %p96
    %p98 = scmp.ne.s32.totalorder %s86, %s87
    %p99 = scmp.eq.s32.totalorder %s19, 1
    %p100 = por %p98, %p99
    %p102 = scmp.ne.s32.totalorder %s87, %s101
    %p103 = scmp.eq.s32.totalorder %s19, 0
    %p104 = por %p102, %p103
    %s106 = sadd.s32 %s105, 1
    %p109 = scmp.eq.s32.totalorder %s13, 1
    %p110 = scmp.ne.s32.totalorder %s105, %s107
    %p111 = scmp.eq.s32.totalorder %s13, 0
    %p112 = por %p110, %p111
    %p113 = scmp.ne.s32.totalorder %s105, %s107
    %p114 = scmp.eq.s32.totalorder %s18, 1
    %p115 = por %p113, %p114
    %p116 = scmp.ne.s32.totalorder %s107, %s108
    %p117 = scmp.eq.s32.totalorder %s18, 0
    %p118 = por %p116, %p117
    %p119 = scmp.ne.s32.totalorder %s107, %s108
    %p120 = scmp.eq.s32.totalorder %s19, 1
    %p121 = por %p119, %p120
    %p123 = scmp.ne.s32.totalorder %s108, %s122
    %p124 = scmp.eq.s32.totalorder %s19, 0
    %p125 = por %p123, %p124
    %s127 = sadd.s32 %s126, 1
    %p130 = scmp.eq.s32.totalorder %s13, 1
    %p131 = scmp.ne.s32.totalorder %s126, %s128
    %p132 = scmp.eq.s32.totalorder %s13, 0
    %p133 = por %p131, %p132
    %p134 = scmp.ne.s32.totalorder %s126, %s128
    %p135 = scmp.eq.s32.totalorder %s18, 1
    %p136 = por %p134, %p135
    %p137 = scmp.ne.s32.totalorder %s128, %s129
    %p138 = scmp.eq.s32.totalorder %s18, 0
    %p139 = por %p137, %p138
    %p140 = scmp.ne.s32.totalorder %s128, %s129
    %p141 = scmp.eq.s32.totalorder %s19, 1
    %p142 = por %p140, %p141
    %p144 = scmp.ne.s32.totalorder %s129, %s143
    %p145 = scmp.eq.s32.totalorder %s19, 0
    %p146 = por %p144, %p145
    %s148 = sadd.s32 %s147, 1
    %p151 = scmp.eq.s32.totalorder %s13, 1
    %p152 = scmp.ne.s32.totalorder %s147, %s149
    %p153 = scmp.eq.s32.totalorder %s13, 0
    %p154 = por %p152, %p153
    %p155 = scmp.ne.s32.totalorder %s147, %s149
    %p156 = scmp.eq.s32.totalorder %s18, 1
    %p157 = por %p155, %p156
    %p158 = scmp.ne.s32.totalorder %s149, %s150
    %p159 = scmp.eq.s32.totalorder %s18, 0
    %p160 = por %p158, %p159
    %p161 = scmp.ne.s32.totalorder %s149, %s150
    %p162 = scmp.eq.s32.totalorder %s19, 1
    %p163 = por %p161, %p162
    %p165 = scmp.ne.s32.totalorder %s150, %s164
    %p166 = scmp.eq.s32.totalorder %s19, 0
    %p167 = por %p165, %p166
    %s168 = ssub.s32 %s13, %s20
    %p169 = scmp.eq.s32.totalorder %s168, 0
    %s171 = sadd.s32 %s170, 1
    %s172 = scalar_select %p169, %s170, %s171
    %p175 = pneg %p169
    %p176 = scmp.eq.s32.totalorder %s13, 1
    %p177 = por %p175, %p176
    %p178 = scmp.ne.s32.totalorder %s170, %s173
    %p179 = scmp.eq.s32.totalorder %s13, 0
    %p180 = por %p178, %p179
    %p181 = scmp.ne.s32.totalorder %s170, %s173
    %p182 = scmp.eq.s32.totalorder %s18, 1
    %p183 = por %p181, %p182
    %p184 = scmp.ne.s32.totalorder %s173, %s174
    %p185 = scmp.eq.s32.totalorder %s18, 0
    %p186 = por %p184, %p185
    %p187 = scmp.ne.s32.totalorder %s173, %s174
    %p188 = scmp.eq.s32.totalorder %s19, 1
    %p189 = por %p187, %p188
    %p191 = scmp.ne.s32.totalorder %s174, %s190
    %p192 = scmp.eq.s32.totalorder %s19, 0
    %p193 = por %p191, %p192
    %p194 = scmp.le.s32.totalorder 1, %s13
    %p195 = scmp.lt.s32.totalorder %s13, 3
    %p196 = pnand %p194, %p195
    %p197 = pneg %p196
    // Predicated region
    $region9: #{decoder_apply.1} parent=5 // pred_check
      _
    $region10: #{decoder_apply.1} parent=5 // pred_check_branch
      %199 = sbr.rel (%p196) target = $region12
    $region11: #{decoder_apply.1} parent=5 // pred_region
      %s200 = ssub.s32 %s13, 1
      // Predicated region
      $region13: #{decoder_apply.1} parent=11 // pred_check
        %p201 = pneg %p34
      $region14: #{decoder_apply.1} parent=11 // pred_check_branch
        %203 = sbr.rel (%p201) target = $region16
      $region15: #{decoder_apply.1} parent=11 // pred_region
        _
      $region16: #{decoder_apply.1} parent=11 // pred_fallthru
        _
      // Predicated region
      $region17: #{decoder_apply.1} parent=11 // pred_check
        %p204 = pneg %p55
      $region18: #{decoder_apply.1} parent=11 // pred_check_branch
        %206 = sbr.rel (%p204) target = $region20
      $region19: #{decoder_apply.1} parent=11 // pred_region
        _
      $region20: #{decoder_apply.1} parent=11 // pred_fallthru
        _
      // Predicated region
      $region21: #{decoder_apply.1} parent=11 // pred_check
        %p207 = pneg %p76
      $region22: #{decoder_apply.1} parent=11 // pred_check_branch
        %209 = sbr.rel (%p207) target = $region24
      $region23: #{decoder_apply.1} parent=11 // pred_region
        _
      $region24: #{decoder_apply.1} parent=11 // pred_fallthru
        _
      // Predicated region
      $region25: #{decoder_apply.1} parent=11 // pred_check
        %p210 = pneg %p97
      $region26: #{decoder_apply.1} parent=11 // pred_check_branch
        %212 = sbr.rel (%p210) target = $region28
      $region27: #{decoder_apply.1} parent=11 // pred_region
        _
      $region28: #{decoder_apply.1} parent=11 // pred_fallthru
        _
      // Predicated region
      $region29: #{decoder_apply.1} parent=11 // pred_check
        %p213 = pneg %p118
      $region30: #{decoder_apply.1} parent=11 // pred_check_branch
        %215 = sbr.rel (%p213) target = $region32
      $region31: #{decoder_apply.1} parent=11 // pred_region
        _
      $region32: #{decoder_apply.1} parent=11 // pred_fallthru
        _
      // Predicated region
      $region33: #{decoder_apply.1} parent=11 // pred_check
        %p216 = pneg %p139
      $region34: #{decoder_apply.1} parent=11 // pred_check_branch
        %218 = sbr.rel (%p216) target = $region36
      $region35: #{decoder_apply.1} parent=11 // pred_region
        _
      $region36: #{decoder_apply.1} parent=11 // pred_fallthru
        _
      // Predicated region
      $region37: #{decoder_apply.1} parent=11 // pred_check
        %p219 = pneg %p160
      $region38: #{decoder_apply.1} parent=11 // pred_check_branch
        %221 = sbr.rel (%p219) target = $region40
      $region39: #{decoder_apply.1} parent=11 // pred_region
        _
      $region40: #{decoder_apply.1} parent=11 // pred_fallthru
        _
    $region12: #{decoder_apply.1} parent=5 // pred_fallthru
      _
    %p222 = scmp.lt.s32.totalorder %s13, 2
    // Predicated region
    $region41: #{decoder_apply.1} parent=5 // pred_check
      %p223 = pneg %p222
    $region42: #{decoder_apply.1} parent=5 // pred_check_branch
      %225 = sbr.rel (%p223) target = $region44
    $region43: #{decoder_apply.1} parent=5 // pred_region
      _
    $region44: #{decoder_apply.1} parent=5 // pred_fallthru
      _
    %p226 = scmp.le.s32.totalorder 1, %s13
    %p227 = scmp.lt.s32.totalorder %s13, 3
    %p228 = pnand %p226, %p227
    %p229 = pneg %p228
    // Predicated region
    $region45: #{decoder_apply.1} parent=5 // pred_check
      _
    $region46: #{decoder_apply.1} parent=5 // pred_check_branch
      %231 = sbr.rel (%p228) target = $region48
    $region47: #{decoder_apply.1} parent=5 // pred_region
      %s232 = ssub.s32 %s13, 1
      %p233 = pneg %p34
      %p234 = pneg %p31
      %p235 = pneg %p55
      %p236 = pneg %p52
      %p237 = pneg %p76
      %p238 = pneg %p73
      %p239 = pneg %p97
      %p240 = pneg %p94
      %p241 = pneg %p118
      %p242 = pneg %p115
      %p243 = pneg %p139
      %p244 = pneg %p136
      %p245 = pneg %p160
      %p246 = pneg %p157
      %p247 = pneg %p186
      %p248 = pneg %p183
      %p249 = scmp.lt.s32.totalorder %s18, 1
      %s250 = scalar_select %p249, %s18, 1
      %s251 = smul.addr %s250, 16
      %s252 = smul.addr %s251, 8
      %s253 = scalar_lea.vmem %s7, %s252
      %p254 = scmp.lt.s32.totalorder %s18, 1
      %s255 = scalar_select %p254, %s18, 1
      %s256 = smul.addr %s255, 16
      %s257 = smul.addr %s256, 8
      %s258 = scalar_lea.vmem %s7, %s257
      %s259 = scalar_lea.vmem %s0, %s18
      %v260 = vld [vmem:[%s259] sm:$0x1]
      %v261 = vld [vmem:[%s1] sm:$0xff]
      %v262 = vld [vmem:[%s1 + $0x8] sm:$0xff]
      %v263 = vld [vmem:[%s1 + $0x10] sm:$0xff]
      %v264 = vld [vmem:[%s1 + $0x18] sm:$0xff]
      %v265 = vld [vmem:[%s1 + $0x20] sm:$0xff]
      %v266 = vld [vmem:[%s1 + $0x28] sm:$0xff]
      %v267 = vld [vmem:[%s1 + $0x30] sm:$0xff]
      %v268 = vld [vmem:[%s1 + $0x38] sm:$0xff]
      %v269 = vld [vmem:[%s1 + $0x40] sm:$0xff]
      %v270 = vld [vmem:[%s1 + $0x48] sm:$0xff]
      %v271 = vld [vmem:[%s1 + $0x50] sm:$0xff]
      %v272 = vld [vmem:[%s1 + $0x58] sm:$0xff]
      %v273 = vld [vmem:[%s1 + $0x60] sm:$0xff]
      %v274 = vld [vmem:[%s1 + $0x68] sm:$0xff]
      %v275 = vld [vmem:[%s1 + $0x70] sm:$0xff]
      %v276 = vld [vmem:[%s1 + $0x78] sm:$0xff]
      %v277 = vld [vmem:[%s1 + $0x80] sm:$0xff]
      %v278 = vld [vmem:[%s1 + $0x88] sm:$0xff]
      %v279 = vld [vmem:[%s1 + $0x90] sm:$0xff]
      %v280 = vld [vmem:[%s1 + $0x98] sm:$0xff]
      %v281 = vld [vmem:[%s1 + $0xa0] sm:$0xff]
      %v282 = vld [vmem:[%s1 + $0xa8] sm:$0xff]
      %v283 = vld [vmem:[%s1 + $0xb0] sm:$0xff]
      %v284 = vld [vmem:[%s1 + $0xb8] sm:$0xff]
      %v285 = vld [vmem:[%s1 + $0xc0] sm:$0xff]
      %v286 = vld [vmem:[%s1 + $0xc8] sm:$0xff]
      %v287 = vld [vmem:[%s1 + $0xd0] sm:$0xff]
      %v288 = vld [vmem:[%s1 + $0xd8] sm:$0xff]
      %v289 = vld [vmem:[%s1 + $0xe0] sm:$0xff]
      %v290 = vld [vmem:[%s1 + $0xe8] sm:$0xff]
      %v291 = vld [vmem:[%s1 + $0xf0] sm:$0xff]
      %v292 = vld [vmem:[%s1 + $0xf8] sm:$0xff]
      %v293 = vld [vmem:[%s1 + $0x100] sm:$0xff]
      %v294 = vld [vmem:[%s1 + $0x108] sm:$0xff]
      %v295 = vld [vmem:[%s1 + $0x110] sm:$0xff]
      %v296 = vld [vmem:[%s1 + $0x118] sm:$0xff]
      %v297 = vld [vmem:[%s1 + $0x120] sm:$0xff]
      %v298 = vld [vmem:[%s1 + $0x128] sm:$0xff]
      %v299 = vld [vmem:[%s1 + $0x130] sm:$0xff]
      %v300 = vld [vmem:[%s1 + $0x138] sm:$0xff]
      %v301 = vld [vmem:[%s1 + $0x140] sm:$0xff]
      %v302 = vld [vmem:[%s1 + $0x148] sm:$0xff]
      %v303 = vld [vmem:[%s1 + $0x150] sm:$0xff]
      %v304 = vld [vmem:[%s1 + $0x158] sm:$0xff]
      %v305 = vld [vmem:[%s1 + $0x160] sm:$0xff]
      %v306 = vld [vmem:[%s1 + $0x168] sm:$0xff]
      %v307 = vld [vmem:[%s1 + $0x170] sm:$0xff]
      %v308 = vld [vmem:[%s1 + $0x178] sm:$0xff]
      %v309 = vld [vmem:[%s1 + $0x180] sm:$0xff]
      %v310 = vld [vmem:[%s1 + $0x188] sm:$0xff]
      %v311 = vld [vmem:[%s1 + $0x190] sm:$0xff]
      %v312 = vld [vmem:[%s1 + $0x198] sm:$0xff]
      %v313 = vld [vmem:[%s1 + $0x1a0] sm:$0xff]
      %v314 = vld [vmem:[%s1 + $0x1a8] sm:$0xff]
      %v315 = vld [vmem:[%s1 + $0x1b0] sm:$0xff]
      %v316 = vld [vmem:[%s1 + $0x1b8] sm:$0xff]
      %v317 = vld [vmem:[%s1 + $0x1c0] sm:$0xf]
      %v318 = vld [vmem:[%s1 + $0x1c8] sm:$0xf]
      %v319 = vld [vmem:[%s1 + $0x1d0] sm:$0xf]
      %v320 = vld [vmem:[%s1 + $0x1d8] sm:$0xf]
      %v321 = vld [vmem:[%s1 + $0x1e0] sm:$0xf]
      %v322 = vld [vmem:[%s1 + $0x1e8] sm:$0xf]
      %v323 = vld [vmem:[%s1 + $0x1f0] sm:$0xf]
      %v324 = vld [vmem:[%s1 + $0x1f8] sm:$0xf]
      %v325 = vld [vmem:[%s1 + $0x200] sm:$0xf]
      %v326 = vld [vmem:[%s1 + $0x208] sm:$0xf]
      %v327 = vld [vmem:[%s1 + $0x210] sm:$0xf]
      %v328 = vld [vmem:[%s1 + $0x218] sm:$0xf]
      %v329 = vld [vmem:[%s1 + $0x220] sm:$0xf]
      %v330 = vld [vmem:[%s1 + $0x228] sm:$0xf]
      %v331 = vld [vmem:[%s1 + $0x230] sm:$0xf]
      %v332 = vld [vmem:[%s1 + $0x238] sm:$0xf]
      %v333 = vld [vmem:[%s1 + $0x240] sm:$0xf]
      %v334 = vld [vmem:[%s1 + $0x248] sm:$0xf]
      %v335 = vld [vmem:[%s1 + $0x250] sm:$0xf]
      %v336 = vld [vmem:[%s1 + $0x258] sm:$0xf]
      %v337 = vld [vmem:[%s1 + $0x260] sm:$0xf]
      %v338 = vld [vmem:[%s1 + $0x268] sm:$0xf]
      %v339 = vld [vmem:[%s1 + $0x270] sm:$0xf]
      %v340 = vld [vmem:[%s1 + $0x278] sm:$0xf]
      %v341 = vld [vmem:[%s1 + $0x280] sm:$0xf]
      %v342 = vld [vmem:[%s1 + $0x288] sm:$0xf]
      %v343 = vld [vmem:[%s1 + $0x290] sm:$0xf]
      %v344 = vld [vmem:[%s1 + $0x298] sm:$0xf]
      %v345 = vld [vmem:[%s2] sm:$0xff]
      %v346 = vld [vmem:[%s2 + $0x8] sm:$0xff]
      %v347 = vld [vmem:[%s2 + $0x10] sm:$0xff]
      %v348 = vld [vmem:[%s2 + $0x18] sm:$0xf]
      %v353 = vlaneseq
      %v354 = vshrl.u32 %v353, 7
      %v355 = vsub.s32 0, %v354
      %v356 = vrot.slane %v345, %v355
      %v357 = vlaneseq
      %v358 = vshrl.u32 %v357, 7
      %v359 = vsub.s32 1, %v358
      %v360 = vrot.slane %v345, %v359
      %v361 = vlaneseq
      %v362 = vshrl.u32 %v361, 7
      %v363 = vsub.s32 2, %v362
      %v364 = vrot.slane %v345, %v363
      %v365 = vlaneseq
      %v366 = vshrl.u32 %v365, 7
      %v367 = vsub.s32 3, %v366
      %v368 = vrot.slane %v345, %v367
      %v369 = vlaneseq
      %v370 = vshrl.u32 %v369, 7
      %v371 = vsub.s32 4, %v370
      %v372 = vrot.slane %v345, %v371
      %v373 = vlaneseq
      %v374 = vshrl.u32 %v373, 7
      %v375 = vsub.s32 5, %v374
      %v376 = vrot.slane %v345, %v375
      %v377 = vlaneseq
      %v378 = vshrl.u32 %v377, 7
      %v379 = vsub.s32 6, %v378
      %v380 = vrot.slane %v345, %v379
      %v381 = vlaneseq
      %v382 = vshrl.u32 %v381, 7
      %v383 = vsub.s32 7, %v382
      %v384 = vrot.slane %v345, %v383
      %v385 = vlaneseq
      %v386 = vshrl.u32 %v385, 7
      %v387 = vsub.s32 0, %v386
      %v388 = vrot.slane %v346, %v387
      %v389 = vlaneseq
      %v390 = vshrl.u32 %v389, 7
      %v391 = vsub.s32 1, %v390
      %v392 = vrot.slane %v346, %v391
      %v393 = vlaneseq
      %v394 = vshrl.u32 %v393, 7
      %v395 = vsub.s32 2, %v394
      %v396 = vrot.slane %v346, %v395
      %v397 = vlaneseq
      %v398 = vshrl.u32 %v397, 7
      %v399 = vsub.s32 3, %v398
      %v400 = vrot.slane %v346, %v399
      %v401 = vlaneseq
      %v402 = vshrl.u32 %v401, 7
      %v403 = vsub.s32 4, %v402
      %v404 = vrot.slane %v346, %v403
      %v405 = vlaneseq
      %v406 = vshrl.u32 %v405, 7
      %v407 = vsub.s32 5, %v406
      %v408 = vrot.slane %v346, %v407
      %v409 = vlaneseq
      %v410 = vshrl.u32 %v409, 7
      %v411 = vsub.s32 6, %v410
      %v412 = vrot.slane %v346, %v411
      %v413 = vlaneseq
      %v414 = vshrl.u32 %v413, 7
      %v415 = vsub.s32 7, %v414
      %v416 = vrot.slane %v346, %v415
      %v417 = vlaneseq
      %v418 = vshrl.u32 %v417, 7
      %v419 = vsub.s32 0, %v418
      %v420 = vrot.slane %v347, %v419
      %v421 = vlaneseq
      %v422 = vshrl.u32 %v421, 7
      %v423 = vsub.s32 1, %v422
      %v424 = vrot.slane %v347, %v423
      %v425 = vlaneseq
      %v426 = vshrl.u32 %v425, 7
      %v427 = vsub.s32 2, %v426
      %v428 = vrot.slane %v347, %v427
      %v429 = vlaneseq
      %v430 = vshrl.u32 %v429, 7
      %v431 = vsub.s32 3, %v430
      %v432 = vrot.slane %v347, %v431
      %v433 = vlaneseq
      %v434 = vshrl.u32 %v433, 7
      %v435 = vsub.s32 4, %v434
      %v436 = vrot.slane %v347, %v435
      %v437 = vlaneseq
      %v438 = vshrl.u32 %v437, 7
      %v439 = vsub.s32 5, %v438
      %v440 = vrot.slane %v347, %v439
      %v441 = vlaneseq
      %v442 = vshrl.u32 %v441, 7
      %v443 = vsub.s32 6, %v442
      %v444 = vrot.slane %v347, %v443
      %v445 = vlaneseq
      %v446 = vshrl.u32 %v445, 7
      %v447 = vsub.s32 7, %v446
      %v448 = vrot.slane %v347, %v447
      %v449 = vlaneseq
      %v450 = vshrl.u32 %v449, 7
      %v451 = vsub.s32 0, %v450
      %v452 = vrot.slane %v348, %v451
      %v453 = vlaneseq
      %v454 = vshrl.u32 %v453, 7
      %v455 = vsub.s32 1, %v454
      %v456 = vrot.slane %v348, %v455
      %v457 = vlaneseq
      %v458 = vshrl.u32 %v457, 7
      %v459 = vsub.s32 2, %v458
      %v460 = vrot.slane %v348, %v459
      %v461 = vlaneseq
      %v462 = vshrl.u32 %v461, 7
      %v463 = vsub.s32 3, %v462
      %v464 = vrot.slane %v348, %v463
      %vm493 = vcmask 162816
      %v495 = vsel %vm493, %v260, 0
      %vm497 = vcmask 1043456
      %v499 = vsel %vm497, %v317, 0
      %v502 = vsel %vm497, %v318, 0
      %v505 = vsel %vm497, %v319, 0
      %v508 = vsel %vm497, %v320, 0
      %v511 = vsel %vm497, %v321, 0
      %v514 = vsel %vm497, %v322, 0
      %v517 = vsel %vm497, %v323, 0
      %v520 = vsel %vm497, %v324, 0
      %v523 = vsel %vm497, %v325, 0
      %v526 = vsel %vm497, %v326, 0
      %v529 = vsel %vm497, %v327, 0
      %v532 = vsel %vm497, %v328, 0
      %v535 = vsel %vm497, %v329, 0
      %v538 = vsel %vm497, %v330, 0
      %v541 = vsel %vm497, %v331, 0
      %v544 = vsel %vm497, %v332, 0
      %v547 = vsel %vm497, %v333, 0
      %v550 = vsel %vm497, %v334, 0
      %v553 = vsel %vm497, %v335, 0
      %v556 = vsel %vm497, %v336, 0
      %v559 = vsel %vm497, %v337, 0
      %v562 = vsel %vm497, %v338, 0
      %v565 = vsel %vm497, %v339, 0
      %v568 = vsel %vm497, %v340, 0
      %v571 = vsel %vm497, %v341, 0
      %v574 = vsel %vm497, %v342, 0
      %v577 = vsel %vm497, %v343, 0
      %v580 = vsel %vm497, %v344, 0
      %582 = vmatprep.subr.mxu0 %v262
      %583 = vmatpush1.msra.mxu0 %v261
      %584 = vmatprep.subr.mxu0 %v290
      %585 = vmatpush1.msra.mxu0 %v289
      %586 = vmatprep.subr.mxu0 %v502
      %587 = vmatpush1.msra.mxu0 %v499
      %588 = vmatprep.subr.mxu0 0.0
      %589 = vmatpush1.msra.mxu0 0.0
      %590 = vmatprep.subr.mxu0 0.0
      %591 = vmatpush1.msra.mxu0 0.0
      %592 = vmatprep.subr.mxu0 0.0
      %593 = vmatpush1.msra.mxu0 0.0
      %594 = vmatprep.subr.mxu0 0.0
      %595 = vmatpush1.msra.mxu0 0.0
      %596 = vmatprep.subr.mxu0 0.0
      %597 = vmatpush1.msra.mxu0 0.0
      %598 = vmatprep.subr.mxu0 0.0
      %599 = vmatpush1.msra.mxu0 0.0
      %600 = vmatprep.subr.mxu0 0.0
      %601 = vmatpush1.msra.mxu0 0.0
      %602 = vmatprep.subr.mxu0 0.0
      %603 = vmatpush1.msra.mxu0 0.0
      %604 = vmatprep.subr.mxu0 0.0
      %605 = vmatpush1.msra.mxu0 0.0
      %606 = vmatprep.subr.mxu0 0.0
      %607 = vmatpush1.msra.mxu0 0.0
      %608 = vmatprep.subr.mxu0 0.0
      %609 = vmatpush1.msra.mxu0 0.0
      %610 = vmatprep.subr.mxu0 0.0
      %611 = vmatpush1.msra.mxu0 0.0
      %612 = vmatprep.subr.mxu0 0.0
      %613 = vmatpush1.msra.mxu0 0.0
      %614 = vmatprep.subr.mxu0 0.0
      %615 = vmatpush1.msra.mxu0 0.0
      %616 = vmatprep.subr.mxu0 0.0
      %617 = vmatpush1.msra.mxu0 0.0
      %618 = vmatprep.subr.mxu0 0.0
      %619 = vmatpush1.msra.mxu0 0.0
      %620 = vmatprep.subr.mxu0 0.0
      %621 = vmatpush1.msra.mxu0 0.0
      %622 = vmatprep.subr.mxu0 0.0
      %623 = vmatpush1.msra.mxu0 0.0
      %624 = vmatprep.subr.mxu0 0.0
      %625 = vmatpush1.msra.mxu0 0.0
      %626 = vmatprep.subr.mxu0 0.0
      %627 = vmatpush1.msra.mxu0 0.0
      %628 = vmatprep.subr.mxu0 0.0
      %629 = vmatpush1.msra.mxu0 0.0
      %630 = vmatprep.subr.mxu0 0.0
      %631 = vmatpush1.msra.mxu0 0.0
      %632 = vmatprep.subr.mxu0 0.0
      %633 = vmatpush1.msra.mxu0 0.0
      %634 = vmatprep.subr.mxu0 0.0
      %635 = vmatpush1.msra.mxu0 0.0
      %636 = vmatprep.subr.mxu0 0.0
      %637 = vmatpush1.msra.mxu0 0.0
      %638 = vmatprep.subr.mxu0 0.0
      %639 = vmatpush1.msra.mxu0 0.0
      %640 = vmatprep.subr.mxu0 0.0
      %641 = vmatpush1.msra.mxu0 0.0
      %642 = vmatprep.subr.mxu0 0.0
      %643 = vmatpush1.msra.mxu0 0.0
      %644 = vmatprep.subr.mxu0 0.0
      %645 = vmatpush1.msra.mxu0 0.0
      %646 = vmatprep.mubr.f32.mxu0 0.0
      %647 = vmatmul.mubr.f32.gmra.mrb[0].mxu0 %v495
      %v648 = vpop.f32.mrb[0].mxu0
      %v649 = vadd.f32 %v356, %v648
      %v650 = vpop.f32.mrb[0].mxu0
      %v651 = vadd.f32 %v360, %v650
      %652 = vdwg.mxu0
      %653 = vmatprep.subr.mxu0 %v264
      %654 = vmatpush1.msra.mxu0 %v263
      %655 = vmatprep.subr.mxu0 %v292
      %656 = vmatpush1.msra.mxu0 %v291
      %657 = vmatprep.subr.mxu0 %v508
      %658 = vmatpush1.msra.mxu0 %v505
      %659 = vmatprep.subr.mxu0 0.0
      %660 = vmatpush1.msra.mxu0 0.0
      %661 = vmatprep.subr.mxu0 0.0
      %662 = vmatpush1.msra.mxu0 0.0
      %663 = vmatprep.subr.mxu0 0.0
      %664 = vmatpush1.msra.mxu0 0.0
      %665 = vmatprep.subr.mxu0 0.0
      %666 = vmatpush1.msra.mxu0 0.0
      %667 = vmatprep.subr.mxu0 0.0
      %668 = vmatpush1.msra.mxu0 0.0
      %669 = vmatprep.subr.mxu0 0.0
      %670 = vmatpush1.msra.mxu0 0.0
      %671 = vmatprep.subr.mxu0 0.0
      %672 = vmatpush1.msra.mxu0 0.0
      %673 = vmatprep.subr.mxu0 0.0
      %674 = vmatpush1.msra.mxu0 0.0
      %675 = vmatprep.subr.mxu0 0.0
      %676 = vmatpush1.msra.mxu0 0.0
      %677 = vmatprep.subr.mxu0 0.0
      %678 = vmatpush1.msra.mxu0 0.0
      %679 = vmatprep.subr.mxu0 0.0
      %680 = vmatpush1.msra.mxu0 0.0
      %681 = vmatprep.subr.mxu0 0.0
      %682 = vmatpush1.msra.mxu0 0.0
      %683 = vmatprep.subr.mxu0 0.0
      %684 = vmatpush1.msra.mxu0 0.0
      %685 = vmatprep.subr.mxu0 0.0
      %686 = vmatpush1.msra.mxu0 0.0
      %687 = vmatprep.subr.mxu0 0.0
      %688 = vmatpush1.msra.mxu0 0.0
      %689 = vmatprep.subr.mxu0 0.0
      %690 = vmatpush1.msra.mxu0 0.0
      %691 = vmatprep.subr.mxu0 0.0
      %692 = vmatpush1.msra.mxu0 0.0
      %693 = vmatprep.subr.mxu0 0.0
      %694 = vmatpush1.msra.mxu0 0.0
      %695 = vmatprep.subr.mxu0 0.0
      %696 = vmatpush1.msra.mxu0 0.0
      %697 = vmatprep.subr.mxu0 0.0
      %698 = vmatpush1.msra.mxu0 0.0
      %699 = vmatprep.subr.mxu0 0.0
      %700 = vmatpush1.msra.mxu0 0.0
      %701 = vmatprep.subr.mxu0 0.0
      %702 = vmatpush1.msra.mxu0 0.0
      %703 = vmatprep.subr.mxu0 0.0
      %704 = vmatpush1.msra.mxu0 0.0
      %705 = vmatprep.subr.mxu0 0.0
      %706 = vmatpush1.msra.mxu0 0.0
      %707 = vmatprep.subr.mxu0 0.0
      %708 = vmatpush1.msra.mxu0 0.0
      %709 = vmatprep.subr.mxu0 0.0
      %710 = vmatpush1.msra.mxu0 0.0
      %711 = vmatprep.subr.mxu0 0.0
      %712 = vmatpush1.msra.mxu0 0.0
      %713 = vmatprep.subr.mxu0 0.0
      %714 = vmatpush1.msra.mxu0 0.0
      %715 = vmatprep.subr.mxu0 0.0
      %716 = vmatpush1.msra.mxu0 0.0
      %717 = vmatprep.mubr.f32.mxu0 0.0
      %718 = vmatmul.mubr.f32.gmra.mrb[0].mxu0 %v495
      %v719 = vpop.f32.mrb[0].mxu0
      %v720 = vadd.f32 %v364, %v719
      %v721 = vpop.f32.mrb[0].mxu0
      %v722 = vadd.f32 %v368, %v721
      %723 = vdwg.mxu0
      %724 = vmatprep.subr.mxu0 %v266
      %725 = vmatpush1.msra.mxu0 %v265
      %726 = vmatprep.subr.mxu0 %v294
      %727 = vmatpush1.msra.mxu0 %v293
      %728 = vmatprep.subr.mxu0 %v514
      %729 = vmatpush1.msra.mxu0 %v511
      %730 = vmatprep.subr.mxu0 0.0
      %731 = vmatpush1.msra.mxu0 0.0
      %732 = vmatprep.subr.mxu0 0.0
      %733 = vmatpush1.msra.mxu0 0.0
      %734 = vmatprep.subr.mxu0 0.0
      %735 = vmatpush1.msra.mxu0 0.0
      %736 = vmatprep.subr.mxu0 0.0
      %737 = vmatpush1.msra.mxu0 0.0
      %738 = vmatprep.subr.mxu0 0.0
      %739 = vmatpush1.msra.mxu0 0.0
      %740 = vmatprep.subr.mxu0 0.0
      %741 = vmatpush1.msra.mxu0 0.0
      %742 = vmatprep.subr.mxu0 0.0
      %743 = vmatpush1.msra.mxu0 0.0
      %744 = vmatprep.subr.mxu0 0.0
      %745 = vmatpush1.msra.mxu0 0.0
      %746 = vmatprep.subr.mxu0 0.0
      %747 = vmatpush1.msra.mxu0 0.0
      %748 = vmatprep.subr.mxu0 0.0
      %749 = vmatpush1.msra.mxu0 0.0
      %750 = vmatprep.subr.mxu0 0.0
      %751 = vmatpush1.msra.mxu0 0.0
      %752 = vmatprep.subr.mxu0 0.0
      %753 = vmatpush1.msra.mxu0 0.0
      %754 = vmatprep.subr.mxu0 0.0
      %755 = vmatpush1.msra.mxu0 0.0
      %756 = vmatprep.subr.mxu0 0.0
      %757 = vmatpush1.msra.mxu0 0.0
      %758 = vmatprep.subr.mxu0 0.0
      %759 = vmatpush1.msra.mxu0 0.0
      %760 = vmatprep.subr.mxu0 0.0
      %761 = vmatpush1.msra.mxu0 0.0
      %762 = vmatprep.subr.mxu0 0.0
      %763 = vmatpush1.msra.mxu0 0.0
      %764 = vmatprep.subr.mxu0 0.0
      %765 = vmatpush1.msra.mxu0 0.0
      %766 = vmatprep.subr.mxu0 0.0
      %767 = vmatpush1.msra.mxu0 0.0
      %768 = vmatprep.subr.mxu0 0.0
      %769 = vmatpush1.msra.mxu0 0.0
      %770 = vmatprep.subr.mxu0 0.0
      %771 = vmatpush1.msra.mxu0 0.0
      %772 = vmatprep.subr.mxu0 0.0
      %773 = vmatpush1.msra.mxu0 0.0
      %774 = vmatprep.subr.mxu0 0.0
      %775 = vmatpush1.msra.mxu0 0.0
      %776 = vmatprep.subr.mxu0 0.0
      %777 = vmatpush1.msra.mxu0 0.0
      %778 = vmatprep.subr.mxu0 0.0
      %779 = vmatpush1.msra.mxu0 0.0
      %780 = vmatprep.subr.mxu0 0.0
      %781 = vmatpush1.msra.mxu0 0.0
      %782 = vmatprep.subr.mxu0 0.0
      %783 = vmatpush1.msra.mxu0 0.0
      %784 = vmatprep.subr.mxu0 0.0
      %785 = vmatpush1.msra.mxu0 0.0
      %786 = vmatprep.subr.mxu0 0.0
      %787 = vmatpush1.msra.mxu0 0.0
      %788 = vmatprep.mubr.f32.mxu0 0.0
      %789 = vmatmul.mubr.f32.gmra.mrb[0].mxu0 %v495
      %v790 = vpop.f32.mrb[0].mxu0
      %v791 = vadd.f32 %v372, %v790
      %v792 = vpop.f32.mrb[0].mxu0
      %v793 = vadd.f32 %v376, %v792
      %794 = vdwg.mxu0
      %795 = vmatprep.subr.mxu0 %v268
      %796 = vmatpush1.msra.mxu0 %v267
      %797 = vmatprep.subr.mxu0 %v296
      %798 = vmatpush1.msra.mxu0 %v295
      %799 = vmatprep.subr.mxu0 %v520
      %800 = vmatpush1.msra.mxu0 %v517
      %801 = vmatprep.subr.mxu0 0.0
      %802 = vmatpush1.msra.mxu0 0.0
      %803 = vmatprep.subr.mxu0 0.0
      %804 = vmatpush1.msra.mxu0 0.0
      %805 = vmatprep.subr.mxu0 0.0
      %806 = vmatpush1.msra.mxu0 0.0
      %807 = vmatprep.subr.mxu0 0.0
      %808 = vmatpush1.msra.mxu0 0.0
      %809 = vmatprep.subr.mxu0 0.0
      %810 = vmatpush1.msra.mxu0 0.0
      %811 = vmatprep.subr.mxu0 0.0
      %812 = vmatpush1.msra.mxu0 0.0
      %813 = vmatprep.subr.mxu0 0.0
      %814 = vmatpush1.msra.mxu0 0.0
      %815 = vmatprep.subr.mxu0 0.0
      %816 = vmatpush1.msra.mxu0 0.0
      %817 = vmatprep.subr.mxu0 0.0
      %818 = vmatpush1.msra.mxu0 0.0
      %819 = vmatprep.subr.mxu0 0.0
      %820 = vmatpush1.msra.mxu0 0.0
      %821 = vmatprep.subr.mxu0 0.0
      %822 = vmatpush1.msra.mxu0 0.0
      %823 = vmatprep.subr.mxu0 0.0
      %824 = vmatpush1.msra.mxu0 0.0
      %825 = vmatprep.subr.mxu0 0.0
      %826 = vmatpush1.msra.mxu0 0.0
      %827 = vmatprep.subr.mxu0 0.0
      %828 = vmatpush1.msra.mxu0 0.0
      %829 = vmatprep.subr.mxu0 0.0
      %830 = vmatpush1.msra.mxu0 0.0
      %831 = vmatprep.subr.mxu0 0.0
      %832 = vmatpush1.msra.mxu0 0.0
      %833 = vmatprep.subr.mxu0 0.0
      %834 = vmatpush1.msra.mxu0 0.0
      %835 = vmatprep.subr.mxu0 0.0
      %836 = vmatpush1.msra.mxu0 0.0
      %837 = vmatprep.subr.mxu0 0.0
      %838 = vmatpush1.msra.mxu0 0.0
      %839 = vmatprep.subr.mxu0 0.0
      %840 = vmatpush1.msra.mxu0 0.0
      %841 = vmatprep.subr.mxu0 0.0
      %842 = vmatpush1.msra.mxu0 0.0
      %843 = vmatprep.subr.mxu0 0.0
      %844 = vmatpush1.msra.mxu0 0.0
      %845 = vmatprep.subr.mxu0 0.0
      %846 = vmatpush1.msra.mxu0 0.0
      %847 = vmatprep.subr.mxu0 0.0
      %848 = vmatpush1.msra.mxu0 0.0
      %849 = vmatprep.subr.mxu0 0.0
      %850 = vmatpush1.msra.mxu0 0.0
      %851 = vmatprep.subr.mxu0 0.0
      %852 = vmatpush1.msra.mxu0 0.0
      %853 = vmatprep.subr.mxu0 0.0
      %854 = vmatpush1.msra.mxu0 0.0
      %855 = vmatprep.subr.mxu0 0.0
      %856 = vmatpush1.msra.mxu0 0.0
      %857 = vmatprep.subr.mxu0 0.0
      %858 = vmatpush1.msra.mxu0 0.0
      %859 = vmatprep.mubr.f32.mxu0 0.0
      %860 = vmatmul.mubr.f32.gmra.mrb[0].mxu0 %v495
      %v861 = vpop.f32.mrb[0].mxu0
      %v862 = vadd.f32 %v380, %v861
      %v863 = vpop.f32.mrb[0].mxu0
      %v864 = vadd.f32 %v384, %v863
      %865 = vdwg.mxu0
      %866 = vmatprep.subr.mxu0 %v270
      %867 = vmatpush1.msra.mxu0 %v269
      %868 = vmatprep.subr.mxu0 %v298
      %869 = vmatpush1.msra.mxu0 %v297
      %870 = vmatprep.subr.mxu0 %v526
      %871 = vmatpush1.msra.mxu0 %v523
      %872 = vmatprep.subr.mxu0 0.0
      %873 = vmatpush1.msra.mxu0 0.0
      %874 = vmatprep.subr.mxu0 0.0
      %875 = vmatpush1.msra.mxu0 0.0
      %876 = vmatprep.subr.mxu0 0.0
      %877 = vmatpush1.msra.mxu0 0.0
      %878 = vmatprep.subr.mxu0 0.0
      %879 = vmatpush1.msra.mxu0 0.0
      %880 = vmatprep.subr.mxu0 0.0
      %881 = vmatpush1.msra.mxu0 0.0
      %882 = vmatprep.subr.mxu0 0.0
      %883 = vmatpush1.msra.mxu0 0.0
      %884 = vmatprep.subr.mxu0 0.0
      %885 = vmatpush1.msra.mxu0 0.0
      %886 = vmatprep.subr.mxu0 0.0
      %887 = vmatpush1.msra.mxu0 0.0
      %888 = vmatprep.subr.mxu0 0.0
      %889 = vmatpush1.msra.mxu0 0.0
      %890 = vmatprep.subr.mxu0 0.0
      %891 = vmatpush1.msra.mxu0 0.0
      %892 = vmatprep.subr.mxu0 0.0
      %893 = vmatpush1.msra.mxu0 0.0
      %894 = vmatprep.subr.mxu0 0.0
      %895 = vmatpush1.msra.mxu0 0.0
      %896 = vmatprep.subr.mxu0 0.0
      %897 = vmatpush1.msra.mxu0 0.0
      %898 = vmatprep.subr.mxu0 0.0
      %899 = vmatpush1.msra.mxu0 0.0
      %900 = vmatprep.subr.mxu0 0.0
      %901 = vmatpush1.msra.mxu0 0.0
      %902 = vmatprep.subr.mxu0 0.0
      %903 = vmatpush1.msra.mxu0 0.0
      %904 = vmatprep.subr.mxu0 0.0
      %905 = vmatpush1.msra.mxu0 0.0
      %906 = vmatprep.subr.mxu0 0.0
      %907 = vmatpush1.msra.mxu0 0.0
      %908 = vmatprep.subr.mxu0 0.0
      %909 = vmatpush1.msra.mxu0 0.0
      %910 = vmatprep.subr.mxu0 0.0
      %911 = vmatpush1.msra.mxu0 0.0
      %912 = vmatprep.subr.mxu0 0.0
      %913 = vmatpush1.msra.mxu0 0.0
      %914 = vmatprep.subr.mxu0 0.0
      %915 = vmatpush1.msra.mxu0 0.0
      %916 = vmatprep.subr.mxu0 0.0
      %917 = vmatpush1.msra.mxu0 0.0
      %918 = vmatprep.subr.mxu0 0.0
      %919 = vmatpush1.msra.mxu0 0.0
      %920 = vmatprep.subr.mxu0 0.0
      %921 = vmatpush1.msra.mxu0 0.0
      %922 = vmatprep.subr.mxu0 0.0
      %923 = vmatpush1.msra.mxu0 0.0
      %924 = vmatprep.subr.mxu0 0.0
      %925 = vmatpush1.msra.mxu0 0.0
      %926 = vmatprep.subr.mxu0 0.0
      %927 = vmatpush1.msra.mxu0 0.0
      %928 = vmatprep.subr.mxu0 0.0
      %929 = vmatpush1.msra.mxu0 0.0
      %930 = vmatprep.mubr.f32.mxu0 0.0
      %931 = vmatmul.mubr.f32.gmra.mrb[0].mxu0 %v495
      %v932 = vpop.f32.mrb[0].mxu0
      %v933 = vadd.f32 %v388, %v932
      %v934 = vpop.f32.mrb[0].mxu0
      %v935 = vadd.f32 %v392, %v934
      %936 = vdwg.mxu0
      %937 = vmatprep.subr.mxu0 %v272
      %938 = vmatpush1.msra.mxu0 %v271
      %939 = vmatprep.subr.mxu0 %v300
      %940 = vmatpush1.msra.mxu0 %v299
      %941 = vmatprep.subr.mxu0 %v532
      %942 = vmatpush1.msra.mxu0 %v529
      %943 = vmatprep.subr.mxu0 0.0
      %944 = vmatpush1.msra.mxu0 0.0
      %945 = vmatprep.subr.mxu0 0.0
      %946 = vmatpush1.msra.mxu0 0.0
      %947 = vmatprep.subr.mxu0 0.0
      %948 = vmatpush1.msra.mxu0 0.0
      %949 = vmatprep.subr.mxu0 0.0
      %950 = vmatpush1.msra.mxu0 0.0
      %951 = vmatprep.subr.mxu0 0.0
      %952 = vmatpush1.msra.mxu0 0.0
      %953 = vmatprep.subr.mxu0 0.0
      %954 = vmatpush1.msra.mxu0 0.0
      %955 = vmatprep.subr.mxu0 0.0
      %956 = vmatpush1.msra.mxu0 0.0
      %957 = vmatprep.subr.mxu0 0.0
      %958 = vmatpush1.msra.mxu0 0.0
      %959 = vmatprep.subr.mxu0 0.0
      %960 = vmatpush1.msra.mxu0 0.0
      %961 = vmatprep.subr.mxu0 0.0
      %962 = vmatpush1.msra.mxu0 0.0
      %963 = vmatprep.subr.mxu0 0.0
      %964 = vmatpush1.msra.mxu0 0.0
      %965 = vmatprep.subr.mxu0 0.0
      %966 = vmatpush1.msra.mxu0 0.0
      %967 = vmatprep.subr.mxu0 0.0
      %968 = vmatpush1.msra.mxu0 0.0
      %969 = vmatprep.subr.mxu0 0.0
      %970 = vmatpush1.msra.mxu0 0.0
      %971 = vmatprep.subr.mxu0 0.0
      %972 = vmatpush1.msra.mxu0 0.0
      %973 = vmatprep.subr.mxu0 0.0
      %974 = vmatpush1.msra.mxu0 0.0
      %975 = vmatprep.subr.mxu0 0.0
      %976 = vmatpush1.msra.mxu0 0.0
      %977 = vmatprep.subr.mxu0 0.0
      %978 = vmatpush1.msra.mxu0 0.0
      %979 = vmatprep.subr.mxu0 0.0
      %980 = vmatpush1.msra.mxu0 0.0
      %981 = vmatprep.subr.mxu0 0.0
      %982 = vmatpush1.msra.mxu0 0.0
      %983 = vmatprep.subr.mxu0 0.0
      %984 = vmatpush1.msra.mxu0 0.0
      %985 = vmatprep.subr.mxu0 0.0
      %986 = vmatpush1.msra.mxu0 0.0
      %987 = vmatprep.subr.mxu0 0.0
      %988 = vmatpush1.msra.mxu0 0.0
      %989 = vmatprep.subr.mxu0 0.0
      %990 = vmatpush1.msra.mxu0 0.0
      %991 = vmatprep.subr.mxu0 0.0
      %992 = vmatpush1.msra.mxu0 0.0
      %993 = vmatprep.subr.mxu0 0.0
      %994 = vmatpush1.msra.mxu0 0.0
      %995 = vmatprep.subr.mxu0 0.0
      %996 = vmatpush1.msra.mxu0 0.0
      %997 = vmatprep.subr.mxu0 0.0
      %998 = vmatpush1.msra.mxu0 0.0
      %999 = vmatprep.subr.mxu0 0.0
      %1000 = vmatpush1.msra.mxu0 0.0
      %1001 = vmatprep.mubr.f32.mxu0 0.0
      %1002 = vmatmul.mubr.f32.gmra.mrb[0].mxu0 %v495
      %v1003 = vpop.f32.mrb[0].mxu0
      %v1004 = vadd.f32 %v396, %v1003
      %v1005 = vpop.f32.mrb[0].mxu0
      %v1006 = vadd.f32 %v400, %v1005
      %1007 = vdwg.mxu0
      %1008 = vmatprep.subr.mxu0 %v274
      %1009 = vmatpush1.msra.mxu0 %v273
      %1010 = vmatprep.subr.mxu0 %v302
      %1011 = vmatpush1.msra.mxu0 %v301
      %1012 = vmatprep.subr.mxu0 %v538
      %1013 = vmatpush1.msra.mxu0 %v535
      %1014 = vmatprep.subr.mxu0 0.0
      %1015 = vmatpush1.msra.mxu0 0.0
      %1016 = vmatprep.subr.mxu0 0.0
      %1017 = vmatpush1.msra.mxu0 0.0
      %1018 = vmatprep.subr.mxu0 0.0
      %1019 = vmatpush1.msra.mxu0 0.0
      %1020 = vmatprep.subr.mxu0 0.0
      %1021 = vmatpush1.msra.mxu0 0.0
      %1022 = vmatprep.subr.mxu0 0.0
      %1023 = vmatpush1.msra.mxu0 0.0
      %1024 = vmatprep.subr.mxu0 0.0
      %1025 = vmatpush1.msra.mxu0 0.0
      %1026 = vmatprep.subr.mxu0 0.0
      %1027 = vmatpush1.msra.mxu0 0.0
      %1028 = vmatprep.subr.mxu0 0.0
      %1029 = vmatpush1.msra.mxu0 0.0
      %1030 = vmatprep.subr.mxu0 0.0
      %1031 = vmatpush1.msra.mxu0 0.0
      %1032 = vmatprep.subr.mxu0 0.0
      %1033 = vmatpush1.msra.mxu0 0.0
      %1034 = vmatprep.subr.mxu0 0.0
      %1035 = vmatpush1.msra.mxu0 0.0
      %1036 = vmatprep.subr.mxu0 0.0
      %1037 = vmatpush1.msra.mxu0 0.0
      %1038 = vmatprep.subr.mxu0 0.0
      %1039 = vmatpush1.msra.mxu0 0.0
      %1040 = vmatprep.subr.mxu0 0.0
      %1041 = vmatpush1.msra.mxu0 0.0
      %1042 = vmatprep.subr.mxu0 0.0
      %1043 = vmatpush1.msra.mxu0 0.0
      %1044 = vmatprep.subr.mxu0 0.0
      %1045 = vmatpush1.msra.mxu0 0.0
      %1046 = vmatprep.subr.mxu0 0.0
      %1047 = vmatpush1.msra.mxu0 0.0
      %1048 = vmatprep.subr.mxu0 0.0
      %1049 = vmatpush1.msra.mxu0 0.0
      %1050 = vmatprep.subr.mxu0 0.0
      %1051 = vmatpush1.msra.mxu0 0.0
      %1052 = vmatprep.subr.mxu0 0.0
      %1053 = vmatpush1.msra.mxu0 0.0
      %1054 = vmatprep.subr.mxu0 0.0
      %1055 = vmatpush1.msra.mxu0 0.0
      %1056 = vmatprep.subr.mxu0 0.0
      %1057 = vmatpush1.msra.mxu0 0.0
      %1058 = vmatprep.subr.mxu0 0.0
      %1059 = vmatpush1.msra.mxu0 0.0
      %1060 = vmatprep.subr.mxu0 0.0
      %1061 = vmatpush1.msra.mxu0 0.0
      %1062 = vmatprep.subr.mxu0 0.0
      %1063 = vmatpush1.msra.mxu0 0.0
      %1064 = vmatprep.subr.mxu0 0.0
      %1065 = vmatpush1.msra.mxu0 0.0
      %1066 = vmatprep.subr.mxu0 0.0
      %1067 = vmatpush1.msra.mxu0 0.0
      %1068 = vmatprep.subr.mxu0 0.0
      %1069 = vmatpush1.msra.mxu0 0.0
      %1070 = vmatprep.subr.mxu0 0.0
      %1071 = vmatpush1.msra.mxu0 0.0
      %1072 = vmatprep.mubr.f32.mxu0 0.0
      %1073 = vmatmul.mubr.f32.gmra.mrb[0].mxu0 %v495
      %v1074 = vpop.f32.mrb[0].mxu0
      %v1075 = vadd.f32 %v404, %v1074
      %v1076 = vpop.f32.mrb[0].mxu0
      %v1077 = vadd.f32 %v408, %v1076
      %1078 = vdwg.mxu0
      %1079 = vmatprep.subr.mxu0 %v276
      %1080 = vmatpush1.msra.mxu0 %v275
      %1081 = vmatprep.subr.mxu0 %v304
      %1082 = vmatpush1.msra.mxu0 %v303
      %1083 = vmatprep.subr.mxu0 %v544
      %1084 = vmatpush1.msra.mxu0 %v541
      %1085 = vmatprep.subr.mxu0 0.0
      %1086 = vmatpush1.msra.mxu0 0.0
      %1087 = vmatprep.subr.mxu0 0.0
      %1088 = vmatpush1.msra.mxu0 0.0
      %1089 = vmatprep.subr.mxu0 0.0
      %1090 = vmatpush1.msra.mxu0 0.0
      %1091 = vmatprep.subr.mxu0 0.0
      %1092 = vmatpush1.msra.mxu0 0.0
      %1093 = vmatprep.subr.mxu0 0.0
      %1094 = vmatpush1.msra.mxu0 0.0
      %1095 = vmatprep.subr.mxu0 0.0
      %1096 = vmatpush1.msra.mxu0 0.0
      %1097 = vmatprep.subr.mxu0 0.0
      %1098 = vmatpush1.msra.mxu0 0.0
      %1099 = vmatprep.subr.mxu0 0.0
      %1100 = vmatpush1.msra.mxu0 0.0
      %1101 = vmatprep.subr.mxu0 0.0
      %1102 = vmatpush1.msra.mxu0 0.0
      %1103 = vmatprep.subr.mxu0 0.0
      %1104 = vmatpush1.msra.mxu0 0.0
      %1105 = vmatprep.subr.mxu0 0.0
      %1106 = vmatpush1.msra.mxu0 0.0
      %1107 = vmatprep.subr.mxu0 0.0
      %1108 = vmatpush1.msra.mxu0 0.0
      %1109 = vmatprep.subr.mxu0 0.0
      %1110 = vmatpush1.msra.mxu0 0.0
      %1111 = vmatprep.subr.mxu0 0.0
      %1112 = vmatpush1.msra.mxu0 0.0
      %1113 = vmatprep.subr.mxu0 0.0
      %1114 = vmatpush1.msra.mxu0 0.0
      %1115 = vmatprep.subr.mxu0 0.0
      %1116 = vmatpush1.msra.mxu0 0.0
      %1117 = vmatprep.subr.mxu0 0.0
      %1118 = vmatpush1.msra.mxu0 0.0
      %1119 = vmatprep.subr.mxu0 0.0
      %1120 = vmatpush1.msra.mxu0 0.0
      %1121 = vmatprep.subr.mxu0 0.0
      %1122 = vmatpush1.msra.mxu0 0.0
      %1123 = vmatprep.subr.mxu0 0.0
      %1124 = vmatpush1.msra.mxu0 0.0
      %1125 = vmatprep.subr.mxu0 0.0
      %1126 = vmatpush1.msra.mxu0 0.0
      %1127 = vmatprep.subr.mxu0 0.0
      %1128 = vmatpush1.msra.mxu0 0.0
      %1129 = vmatprep.subr.mxu0 0.0
      %1130 = vmatpush1.msra.mxu0 0.0
      %1131 = vmatprep.subr.mxu0 0.0
      %1132 = vmatpush1.msra.mxu0 0.0
      %1133 = vmatprep.subr.mxu0 0.0
      %1134 = vmatpush1.msra.mxu0 0.0
      %1135 = vmatprep.subr.mxu0 0.0
      %1136 = vmatpush1.msra.mxu0 0.0
      %1137 = vmatprep.subr.mxu0 0.0
      %1138 = vmatpush1.msra.mxu0 0.0
      %1139 = vmatprep.subr.mxu0 0.0
      %1140 = vmatpush1.msra.mxu0 0.0
      %1141 = vmatprep.subr.mxu0 0.0
      %1142 = vmatpush1.msra.mxu0 0.0
      %1143 = vmatprep.mubr.f32.mxu0 0.0
      %1144 = vmatmul.mubr.f32.gmra.mrb[0].mxu0 %v495
      %v1145 = vpop.f32.mrb[0].mxu0
      %v1146 = vadd.f32 %v412, %v1145
      %v1147 = vpop.f32.mrb[0].mxu0
      %v1148 = vadd.f32 %v416, %v1147
      %1149 = vdwg.mxu0
      %1150 = vmatprep.subr.mxu0 %v278
      %1151 = vmatpush1.msra.mxu0 %v277
      %1152 = vmatprep.subr.mxu0 %v306
      %1153 = vmatpush1.msra.mxu0 %v305
      %1154 = vmatprep.subr.mxu0 %v550
      %1155 = vmatpush1.msra.mxu0 %v547
      %1156 = vmatprep.subr.mxu0 0.0
      %1157 = vmatpush1.msra.mxu0 0.0
      %1158 = vmatprep.subr.mxu0 0.0
      %1159 = vmatpush1.msra.mxu0 0.0
      %1160 = vmatprep.subr.mxu0 0.0
      %1161 = vmatpush1.msra.mxu0 0.0
      %1162 = vmatprep.subr.mxu0 0.0
      %1163 = vmatpush1.msra.mxu0 0.0
      %1164 = vmatprep.subr.mxu0 0.0
      %1165 = vmatpush1.msra.mxu0 0.0
      %1166 = vmatprep.subr.mxu0 0.0
      %1167 = vmatpush1.msra.mxu0 0.0
      %1168 = vmatprep.subr.mxu0 0.0
      %1169 = vmatpush1.msra.mxu0 0.0
      %1170 = vmatprep.subr.mxu0 0.0
      %1171 = vmatpush1.msra.mxu0 0.0
      %1172 = vmatprep.subr.mxu0 0.0
      %1173 = vmatpush1.msra.mxu0 0.0
      %1174 = vmatprep.subr.mxu0 0.0
      %1175 = vmatpush1.msra.mxu0 0.0
      %1176 = vmatprep.subr.mxu0 0.0
      %1177 = vmatpush1.msra.mxu0 0.0
      %1178 = vmatprep.subr.mxu0 0.0
      %1179 = vmatpush1.msra.mxu0 0.0
      %1180 = vmatprep.subr.mxu0 0.0
      %1181 = vmatpush1.msra.mxu0 0.0
      %1182 = vmatprep.subr.mxu0 0.0
      %1183 = vmatpush1.msra.mxu0 0.0
      %1184 = vmatprep.subr.mxu0 0.0
      %1185 = vmatpush1.msra.mxu0 0.0
      %1186 = vmatprep.subr.mxu0 0.0
      %1187 = vmatpush1.msra.mxu0 0.0
      %1188 = vmatprep.subr.mxu0 0.0
      %1189 = vmatpush1.msra.mxu0 0.0
      %1190 = vmatprep.subr.mxu0 0.0
      %1191 = vmatpush1.msra.mxu0 0.0
      %1192 = vmatprep.subr.mxu0 0.0
      %1193 = vmatpush1.msra.mxu0 0.0
      %1194 = vmatprep.subr.mxu0 0.0
      %1195 = vmatpush1.msra.mxu0 0.0
      %1196 = vmatprep.subr.mxu0 0.0
      %1197 = vmatpush1.msra.mxu0 0.0
      %1198 = vmatprep.subr.mxu0 0.0
      %1199 = vmatpush1.msra.mxu0 0.0
      %1200 = vmatprep.subr.mxu0 0.0
      %1201 = vmatpush1.msra.mxu0 0.0
      %1202 = vmatprep.subr.mxu0 0.0
      %1203 = vmatpush1.msra.mxu0 0.0
      %1204 = vmatprep.subr.mxu0 0.0
      %1205 = vmatpush1.msra.mxu0 0.0
      %1206 = vmatprep.subr.mxu0 0.0
      %1207 = vmatpush1.msra.mxu0 0.0
      %1208 = vmatprep.subr.mxu0 0.0
      %1209 = vmatpush1.msra.mxu0 0.0
      %1210 = vmatprep.subr.mxu0 0.0
      %1211 = vmatpush1.msra.mxu0 0.0
      %1212 = vmatprep.subr.mxu0 0.0
      %1213 = vmatpush1.msra.mxu0 0.0
      %1214 = vmatprep.mubr.f32.mxu0 0.0
      %1215 = vmatmul.mubr.f32.gmra.mrb[0].mxu0 %v495
      %v1216 = vpop.f32.mrb[0].mxu0
      %v1217 = vadd.f32 %v420, %v1216
      %v1218 = vpop.f32.mrb[0].mxu0
      %v1219 = vadd.f32 %v424, %v1218
      %1220 = vdwg.mxu0
      %1221 = vmatprep.subr.mxu0 %v280
      %1222 = vmatpush1.msra.mxu0 %v279
      %1223 = vmatprep.subr.mxu0 %v308
      %1224 = vmatpush1.msra.mxu0 %v307
      %1225 = vmatprep.subr.mxu0 %v556
      %1226 = vmatpush1.msra.mxu0 %v553
      %1227 = vmatprep.subr.mxu0 0.0
      %1228 = vmatpush1.msra.mxu0 0.0
      %1229 = vmatprep.subr.mxu0 0.0
      %1230 = vmatpush1.msra.mxu0 0.0
      %1231 = vmatprep.subr.mxu0 0.0
      %1232 = vmatpush1.msra.mxu0 0.0
      %1233 = vmatprep.subr.mxu0 0.0
      %1234 = vmatpush1.msra.mxu0 0.0
      %1235 = vmatprep.subr.mxu0 0.0
      %1236 = vmatpush1.msra.mxu0 0.0
      %1237 = vmatprep.subr.mxu0 0.0
      %1238 = vmatpush1.msra.mxu0 0.0
      %1239 = vmatprep.subr.mxu0 0.0
      %1240 = vmatpush1.msra.mxu0 0.0
      %1241 = vmatprep.subr.mxu0 0.0
      %1242 = vmatpush1.msra.mxu0 0.0
      %1243 = vmatprep.subr.mxu0 0.0
      %1244 = vmatpush1.msra.mxu0 0.0
      %1245 = vmatprep.subr.mxu0 0.0
      %1246 = vmatpush1.msra.mxu0 0.0
      %1247 = vmatprep.subr.mxu0 0.0
      %1248 = vmatpush1.msra.mxu0 0.0
      %1249 = vmatprep.subr.mxu0 0.0
      %1250 = vmatpush1.msra.mxu0 0.0
      %1251 = vmatprep.subr.mxu0 0.0
      %1252 = vmatpush1.msra.mxu0 0.0
      %1253 = vmatprep.subr.mxu0 0.0
      %1254 = vmatpush1.msra.mxu0 0.0
      %1255 = vmatprep.subr.mxu0 0.0
      %1256 = vmatpush1.msra.mxu0 0.0
      %1257 = vmatprep.subr.mxu0 0.0
      %1258 = vmatpush1.msra.mxu0 0.0
      %1259 = vmatprep.subr.mxu0 0.0
      %1260 = vmatpush1.msra.mxu0 0.0
      %1261 = vmatprep.subr.mxu0 0.0
      %1262 = vmatpush1.msra.mxu0 0.0
      %1263 = vmatprep.subr.mxu0 0.0
      %1264 = vmatpush1.msra.mxu0 0.0
      %1265 = vmatprep.subr.mxu0 0.0
      %1266 = vmatpush1.msra.mxu0 0.0
      %1267 = vmatprep.subr.mxu0 0.0
      %1268 = vmatpush1.msra.mxu0 0.0
      %1269 = vmatprep.subr.mxu0 0.0
      %1270 = vmatpush1.msra.mxu0 0.0
      %1271 = vmatprep.subr.mxu0 0.0
      %1272 = vmatpush1.msra.mxu0 0.0
      %1273 = vmatprep.subr.mxu0 0.0
      %1274 = vmatpush1.msra.mxu0 0.0
      %1275 = vmatprep.subr.mxu0 0.0
      %1276 = vmatpush1.msra.mxu0 0.0
      %1277 = vmatprep.subr.mxu0 0.0
      %1278 = vmatpush1.msra.mxu0 0.0
      %1279 = vmatprep.subr.mxu0 0.0
      %1280 = vmatpush1.msra.mxu0 0.0
      %1281 = vmatprep.subr.mxu0 0.0
      %1282 = vmatpush1.msra.mxu0 0.0
      %1283 = vmatprep.subr.mxu0 0.0
      %1284 = vmatpush1.msra.mxu0 0.0
      %1285 = vmatprep.mubr.f32.mxu0 0.0
      %1286 = vmatmul.mubr.f32.gmra.mrb[0].mxu0 %v495
      %v1287 = vpop.f32.mrb[0].mxu0
      %v1288 = vadd.f32 %v428, %v1287
      %v1289 = vpop.f32.mrb[0].mxu0
      %v1290 = vadd.f32 %v432, %v1289
      %1291 = vdwg.mxu0
      %1292 = vmatprep.subr.mxu0 %v282
      %1293 = vmatpush1.msra.mxu0 %v281
      %1294 = vmatprep.subr.mxu0 %v310
      %1295 = vmatpush1.msra.mxu0 %v309
      %1296 = vmatprep.subr.mxu0 %v562
      %1297 = vmatpush1.msra.mxu0 %v559
      %1298 = vmatprep.subr.mxu0 0.0
      %1299 = vmatpush1.msra.mxu0 0.0
      %1300 = vmatprep.subr.mxu0 0.0
      %1301 = vmatpush1.msra.mxu0 0.0
      %1302 = vmatprep.subr.mxu0 0.0
      %1303 = vmatpush1.msra.mxu0 0.0
      %1304 = vmatprep.subr.mxu0 0.0
      %1305 = vmatpush1.msra.mxu0 0.0
      %1306 = vmatprep.subr.mxu0 0.0
      %1307 = vmatpush1.msra.mxu0 0.0
      %1308 = vmatprep.subr.mxu0 0.0
      %1309 = vmatpush1.msra.mxu0 0.0
      %1310 = vmatprep.subr.mxu0 0.0
      %1311 = vmatpush1.msra.mxu0 0.0
      %1312 = vmatprep.subr.mxu0 0.0
      %1313 = vmatpush1.msra.mxu0 0.0
      %1314 = vmatprep.subr.mxu0 0.0
      %1315 = vmatpush1.msra.mxu0 0.0
      %1316 = vmatprep.subr.mxu0 0.0
      %1317 = vmatpush1.msra.mxu0 0.0
      %1318 = vmatprep.subr.mxu0 0.0
      %1319 = vmatpush1.msra.mxu0 0.0
      %1320 = vmatprep.subr.mxu0 0.0
      %1321 = vmatpush1.msra.mxu0 0.0
      %1322 = vmatprep.subr.mxu0 0.0
      %1323 = vmatpush1.msra.mxu0 0.0
      %1324 = vmatprep.subr.mxu0 0.0
      %1325 = vmatpush1.msra.mxu0 0.0
      %1326 = vmatprep.subr.mxu0 0.0
      %1327 = vmatpush1.msra.mxu0 0.0
      %1328 = vmatprep.subr.mxu0 0.0
      %1329 = vmatpush1.msra.mxu0 0.0
      %1330 = vmatprep.subr.mxu0 0.0
      %1331 = vmatpush1.msra.mxu0 0.0
      %1332 = vmatprep.subr.mxu0 0.0
      %1333 = vmatpush1.msra.mxu0 0.0
      %1334 = vmatprep.subr.mxu0 0.0
      %1335 = vmatpush1.msra.mxu0 0.0
      %1336 = vmatprep.subr.mxu0 0.0
      %1337 = vmatpush1.msra.mxu0 0.0
      %1338 = vmatprep.subr.mxu0 0.0
      %1339 = vmatpush1.msra.mxu0 0.0
      %1340 = vmatprep.subr.mxu0 0.0
      %1341 = vmatpush1.msra.mxu0 0.0
      %1342 = vmatprep.subr.mxu0 0.0
      %1343 = vmatpush1.msra.mxu0 0.0
      %1344 = vmatprep.subr.mxu0 0.0
      %1345 = vmatpush1.msra.mxu0 0.0
      %1346 = vmatprep.subr.mxu0 0.0
      %1347 = vmatpush1.msra.mxu0 0.0
      %1348 = vmatprep.subr.mxu0 0.0
      %1349 = vmatpush1.msra.mxu0 0.0
      %1350 = vmatprep.subr.mxu0 0.0
      %1351 = vmatpush1.msra.mxu0 0.0
      %1352 = vmatprep.subr.mxu0 0.0
      %1353 = vmatpush1.msra.mxu0 0.0
      %1354 = vmatprep.subr.mxu0 0.0
      %1355 = vmatpush1.msra.mxu0 0.0
      %1356 = vmatprep.mubr.f32.mxu0 0.0
      %1357 = vmatmul.mubr.f32.gmra.mrb[0].mxu0 %v495
      %v1358 = vpop.f32.mrb[0].mxu0
      %v1359 = vadd.f32 %v436, %v1358
      %v1360 = vpop.f32.mrb[0].mxu0
      %v1361 = vadd.f32 %v440, %v1360
      %1362 = vdwg.mxu0
      %1363 = vmatprep.subr.mxu0 %v284
      %1364 = vmatpush1.msra.mxu0 %v283
      %1365 = vmatprep.subr.mxu0 %v312
      %1366 = vmatpush1.msra.mxu0 %v311
      %1367 = vmatprep.subr.mxu0 %v568
      %1368 = vmatpush1.msra.mxu0 %v565
      %1369 = vmatprep.subr.mxu0 0.0
      %1370 = vmatpush1.msra.mxu0 0.0
      %1371 = vmatprep.subr.mxu0 0.0
      %1372 = vmatpush1.msra.mxu0 0.0
      %1373 = vmatprep.subr.mxu0 0.0
      %1374 = vmatpush1.msra.mxu0 0.0
      %1375 = vmatprep.subr.mxu0 0.0
      %1376 = vmatpush1.msra.mxu0 0.0
      %1377 = vmatprep.subr.mxu0 0.0
      %1378 = vmatpush1.msra.mxu0 0.0
      %1379 = vmatprep.subr.mxu0 0.0
      %1380 = vmatpush1.msra.mxu0 0.0
      %1381 = vmatprep.subr.mxu0 0.0
      %1382 = vmatpush1.msra.mxu0 0.0
      %1383 = vmatprep.subr.mxu0 0.0
      %1384 = vmatpush1.msra.mxu0 0.0
      %1385 = vmatprep.subr.mxu0 0.0
      %1386 = vmatpush1.msra.mxu0 0.0
      %1387 = vmatprep.subr.mxu0 0.0
      %1388 = vmatpush1.msra.mxu0 0.0
      %1389 = vmatprep.subr.mxu0 0.0
      %1390 = vmatpush1.msra.mxu0 0.0
      %1391 = vmatprep.subr.mxu0 0.0
      %1392 = vmatpush1.msra.mxu0 0.0
      %1393 = vmatprep.subr.mxu0 0.0
      %1394 = vmatpush1.msra.mxu0 0.0
      %1395 = vmatprep.subr.mxu0 0.0
      %1396 = vmatpush1.msra.mxu0 0.0
      %1397 = vmatprep.subr.mxu0 0.0
      %1398 = vmatpush1.msra.mxu0 0.0
      %1399 = vmatprep.subr.mxu0 0.0
      %1400 = vmatpush1.msra.mxu0 0.0
      %1401 = vmatprep.subr.mxu0 0.0
      %1402 = vmatpush1.msra.mxu0 0.0
      %1403 = vmatprep.subr.mxu0 0.0
      %1404 = vmatpush1.msra.mxu0 0.0
      %1405 = vmatprep.subr.mxu0 0.0
      %1406 = vmatpush1.msra.mxu0 0.0
      %1407 = vmatprep.subr.mxu0 0.0
      %1408 = vmatpush1.msra.mxu0 0.0
      %1409 = vmatprep.subr.mxu0 0.0
      %1410 = vmatpush1.msra.mxu0 0.0
      %1411 = vmatprep.subr.mxu0 0.0
      %1412 = vmatpush1.msra.mxu0 0.0
      %1413 = vmatprep.subr.mxu0 0.0
      %1414 = vmatpush1.msra.mxu0 0.0
      %1415 = vmatprep.subr.mxu0 0.0
      %1416 = vmatpush1.msra.mxu0 0.0
      %1417 = vmatprep.subr.mxu0 0.0
      %1418 = vmatpush1.msra.mxu0 0.0
      %1419 = vmatprep.subr.mxu0 0.0
      %1420 = vmatpush1.msra.mxu0 0.0
      %1421 = vmatprep.subr.mxu0 0.0
      %1422 = vmatpush1.msra.mxu0 0.0
      %1423 = vmatprep.subr.mxu0 0.0
      %1424 = vmatpush1.msra.mxu0 0.0
      %1425 = vmatprep.subr.mxu0 0.0
      %1426 = vmatpush1.msra.mxu0 0.0
      %1427 = vmatprep.mubr.f32.mxu0 0.0
      %1428 = vmatmul.mubr.f32.gmra.mrb[0].mxu0 %v495
      %v1429 = vpop.f32.mrb[0].mxu0
      %v1430 = vadd.f32 %v444, %v1429
      %v1431 = vpop.f32.mrb[0].mxu0
      %v1432 = vadd.f32 %v448, %v1431
      %1433 = vdwg.mxu0
      %1434 = vmatprep.subr.mxu0 %v286
      %1435 = vmatpush1.msra.mxu0 %v285
      %1436 = vmatprep.subr.mxu0 %v314
      %1437 = vmatpush1.msra.mxu0 %v313
      %1438 = vmatprep.subr.mxu0 %v574
      %1439 = vmatpush1.msra.mxu0 %v571
      %1440 = vmatprep.subr.mxu0 0.0
      %1441 = vmatpush1.msra.mxu0 0.0
      %1442 = vmatprep.subr.mxu0 0.0
      %1443 = vmatpush1.msra.mxu0 0.0
      %1444 = vmatprep.subr.mxu0 0.0
      %1445 = vmatpush1.msra.mxu0 0.0
      %1446 = vmatprep.subr.mxu0 0.0
      %1447 = vmatpush1.msra.mxu0 0.0
      %1448 = vmatprep.subr.mxu0 0.0
      %1449 = vmatpush1.msra.mxu0 0.0
      %1450 = vmatprep.subr.mxu0 0.0
      %1451 = vmatpush1.msra.mxu0 0.0
      %1452 = vmatprep.subr.mxu0 0.0
      %1453 = vmatpush1.msra.mxu0 0.0
      %1454 = vmatprep.subr.mxu0 0.0
      %1455 = vmatpush1.msra.mxu0 0.0
      %1456 = vmatprep.subr.mxu0 0.0
      %1457 = vmatpush1.msra.mxu0 0.0
      %1458 = vmatprep.subr.mxu0 0.0
      %1459 = vmatpush1.msra.mxu0 0.0
      %1460 = vmatprep.subr.mxu0 0.0
      %1461 = vmatpush1.msra.mxu0 0.0
      %1462 = vmatprep.subr.mxu0 0.0
      %1463 = vmatpush1.msra.mxu0 0.0
      %1464 = vmatprep.subr.mxu0 0.0
      %1465 = vmatpush1.msra.mxu0 0.0
      %1466 = vmatprep.subr.mxu0 0.0
      %1467 = vmatpush1.msra.mxu0 0.0
      %1468 = vmatprep.subr.mxu0 0.0
      %1469 = vmatpush1.msra.mxu0 0.0
      %1470 = vmatprep.subr.mxu0 0.0
      %1471 = vmatpush1.msra.mxu0 0.0
      %1472 = vmatprep.subr.mxu0 0.0
      %1473 = vmatpush1.msra.mxu0 0.0
      %1474 = vmatprep.subr.mxu0 0.0
      %1475 = vmatpush1.msra.mxu0 0.0
      %1476 = vmatprep.subr.mxu0 0.0
      %1477 = vmatpush1.msra.mxu0 0.0
      %1478 = vmatprep.subr.mxu0 0.0
      %1479 = vmatpush1.msra.mxu0 0.0
      %1480 = vmatprep.subr.mxu0 0.0
      %1481 = vmatpush1.msra.mxu0 0.0
      %1482 = vmatprep.subr.mxu0 0.0
      %1483 = vmatpush1.msra.mxu0 0.0
      %1484 = vmatprep.subr.mxu0 0.0
      %1485 = vmatpush1.msra.mxu0 0.0
      %1486 = vmatprep.subr.mxu0 0.0
      %1487 = vmatpush1.msra.mxu0 0.0
      %1488 = vmatprep.subr.mxu0 0.0
      %1489 = vmatpush1.msra.mxu0 0.0
      %1490 = vmatprep.subr.mxu0 0.0
      %1491 = vmatpush1.msra.mxu0 0.0
      %1492 = vmatprep.subr.mxu0 0.0
      %1493 = vmatpush1.msra.mxu0 0.0
      %1494 = vmatprep.subr.mxu0 0.0
      %1495 = vmatpush1.msra.mxu0 0.0
      %1496 = vmatprep.subr.mxu0 0.0
      %1497 = vmatpush1.msra.mxu0 0.0
      %1498 = vmatprep.mubr.f32.mxu0 0.0
      %1499 = vmatmul.mubr.f32.gmra.mrb[0].mxu0 %v495
      %v1500 = vpop.f32.mrb[0].mxu0
      %v1501 = vadd.f32 %v452, %v1500
      %v1502 = vpop.f32.mrb[0].mxu0
      %v1503 = vadd.f32 %v456, %v1502
      %1504 = vdwg.mxu0
      %1505 = vmatprep.subr.mxu0 %v288
      %1506 = vmatpush1.msra.mxu0 %v287
      %1507 = vmatprep.subr.mxu0 %v316
      %1508 = vmatpush1.msra.mxu0 %v315
      %1509 = vmatprep.subr.mxu0 %v580
      %1510 = vmatpush1.msra.mxu0 %v577
      %1511 = vmatprep.subr.mxu0 0.0
      %1512 = vmatpush1.msra.mxu0 0.0
      %1513 = vmatprep.subr.mxu0 0.0
      %1514 = vmatpush1.msra.mxu0 0.0
      %1515 = vmatprep.subr.mxu0 0.0
      %1516 = vmatpush1.msra.mxu0 0.0
      %1517 = vmatprep.subr.mxu0 0.0
      %1518 = vmatpush1.msra.mxu0 0.0
      %1519 = vmatprep.subr.mxu0 0.0
      %1520 = vmatpush1.msra.mxu0 0.0
      %1521 = vmatprep.subr.mxu0 0.0
      %1522 = vmatpush1.msra.mxu0 0.0
      %1523 = vmatprep.subr.mxu0 0.0
      %1524 = vmatpush1.msra.mxu0 0.0
      %1525 = vmatprep.subr.mxu0 0.0
      %1526 = vmatpush1.msra.mxu0 0.0
      %1527 = vmatprep.subr.mxu0 0.0
      %1528 = vmatpush1.msra.mxu0 0.0
      %1529 = vmatprep.subr.mxu0 0.0
      %1530 = vmatpush1.msra.mxu0 0.0
      %1531 = vmatprep.subr.mxu0 0.0
      %1532 = vmatpush1.msra.mxu0 0.0
      %1533 = vmatprep.subr.mxu0 0.0
      %1534 = vmatpush1.msra.mxu0 0.0
      %1535 = vmatprep.subr.mxu0 0.0
      %1536 = vmatpush1.msra.mxu0 0.0
      %1537 = vmatprep.subr.mxu0 0.0
      %1538 = vmatpush1.msra.mxu0 0.0
      %1539 = vmatprep.subr.mxu0 0.0
      %1540 = vmatpush1.msra.mxu0 0.0
      %1541 = vmatprep.subr.mxu0 0.0
      %1542 = vmatpush1.msra.mxu0 0.0
      %1543 = vmatprep.subr.mxu0 0.0
      %1544 = vmatpush1.msra.mxu0 0.0
      %1545 = vmatprep.subr.mxu0 0.0
      %1546 = vmatpush1.msra.mxu0 0.0
      %1547 = vmatprep.subr.mxu0 0.0
      %1548 = vmatpush1.msra.mxu0 0.0
      %1549 = vmatprep.subr.mxu0 0.0
      %1550 = vmatpush1.msra.mxu0 0.0
      %1551 = vmatprep.subr.mxu0 0.0
      %1552 = vmatpush1.msra.mxu0 0.0
      %1553 = vmatprep.subr.mxu0 0.0
      %1554 = vmatpush1.msra.mxu0 0.0
      %1555 = vmatprep.subr.mxu0 0.0
      %1556 = vmatpush1.msra.mxu0 0.0
      %1557 = vmatprep.subr.mxu0 0.0
      %1558 = vmatpush1.msra.mxu0 0.0
      %1559 = vmatprep.subr.mxu0 0.0
      %1560 = vmatpush1.msra.mxu0 0.0
      %1561 = vmatprep.subr.mxu0 0.0
      %1562 = vmatpush1.msra.mxu0 0.0
      %1563 = vmatprep.subr.mxu0 0.0
      %1564 = vmatpush1.msra.mxu0 0.0
      %1565 = vmatprep.subr.mxu0 0.0
      %1566 = vmatpush1.msra.mxu0 0.0
      %1567 = vmatprep.subr.mxu0 0.0
      %1568 = vmatpush1.msra.mxu0 0.0
      %1569 = vmatprep.mubr.f32.mxu0 0.0
      %1570 = vmatmul.mubr.f32.gmra.mrb[0].mxu0 %v495
      %v1571 = vpop.f32.mrb[0].mxu0
      %v1572 = vadd.f32 %v460, %v1571
      %v1573 = vpop.f32.mrb[0].mxu0
      %v1574 = vadd.f32 %v464, %v1573
      %1575 = vdwg.mxu0
      %1576 = vst [vmem:[#allocation2] sm:$0xff] 0.0
      %1577 = vst [vmem:[#allocation2 + $0x8] sm:$0xff] 0.0
      %1578 = vst [vmem:[#allocation2 + $0x10] sm:$0xff] 0.0
      %1579 = vst [vmem:[#allocation2 + $0x18] sm:$0xff] 0.0
      %1580 = vst [vmem:[#allocation2 + $0x20] sm:$0x1] 0.0
      %1581 = vst [vmem:[#allocation2 + $0x28] sm:$0x1] 0.0
      %1582 = vst [vmem:[#allocation2 + $0x30] sm:$0x1] 0.0
      %1583 = vst [vmem:[#allocation2 + $0x38] sm:$0x1] 0.0
      %v1588 = vcombine.low %v649, %v651
      %v1589 = vcombine.low %v720, %v722
      %v1591 = vunpack.c.l.s4 1966171168
      %v1592 = vunpack.c.0.s8 %v1591
      %v1593 = vlaneseq
      %v1594 = vshrl.u32 %v1593, 7
      %v1595 = vsub.s32 %v1592, %v1594
      %v1596 = vrot.slane %v1588, %v1595
      %v1598 = vunpack.c.l.s4 1966171168
      %v1599 = vunpack.c.0.s8 %v1598
      %v1600 = vlaneseq
      %v1601 = vshrl.u32 %v1600, 7
      %v1602 = vsub.s32 %v1599, %v1601
      %v1603 = vrot.slane %v1589, %v1602
      %v1604 = vcombine.low %v1596, %v1603
      %v1606 = vunpack.c.l.s4 1966171168
      %v1607 = vunpack.c.0.s8 %v1606
      %v1608 = vlaneseq
      %v1609 = vshrl.u32 %v1608, 7
      %v1610 = vsub.s32 %v1607, %v1609
      %v1611 = vrot.slane %v1604, %v1610
      %v1613 = vlaneseq
      %vm1614 = vcmp.ge.s32.totalorder %v1613, 0
      %vm1615 = vcmp.lt.s32.totalorder %v1613, 512
      %vm1616 = vmand %vm1614, %vm1615
      %s1617 = scalar_lea.vmem [#allocation2], 1
      %1618 = vst.msk [vmem:[%s1617] ss:$8 sm:$0xf] %vm1616, %v1611
      %1619 = vst.msk [vmem:[%s1617] ss:$8 sm:$0x0] %vm1616, %v1611
      %v1624 = vcombine.low %v791, %v793
      %v1625 = vcombine.low %v862, %v864
      %v1627 = vunpack.c.l.s4 1966171168
      %v1628 = vunpack.c.0.s8 %v1627
      %v1629 = vlaneseq
      %v1630 = vshrl.u32 %v1629, 7
      %v1631 = vsub.s32 %v1628, %v1630
      %v1632 = vrot.slane %v1624, %v1631
      %v1634 = vunpack.c.l.s4 1966171168
      %v1635 = vunpack.c.0.s8 %v1634
      %v1636 = vlaneseq
      %v1637 = vshrl.u32 %v1636, 7
      %v1638 = vsub.s32 %v1635, %v1637
      %v1639 = vrot.slane %v1625, %v1638
      %v1640 = vcombine.low %v1632, %v1639
      %v1642 = vunpack.c.l.s4 1966171168
      %v1643 = vunpack.c.0.s8 %v1642
      %v1644 = vlaneseq
      %v1645 = vshrl.u32 %v1644, 7
      %v1646 = vsub.s32 %v1643, %v1645
      %v1647 = vrot.slane %v1640, %v1646
      %s1649 = scalar_lea.vmem [#allocation2], 2
      %1650 = vst.msk [vmem:[%s1649] ss:$8 sm:$0xf] %vm1616, %v1647
      %1651 = vst.msk [vmem:[%s1649] ss:$8 sm:$0x0] %vm1616, %v1647
      %v1656 = vcombine.low %v933, %v935
      %v1657 = vcombine.low %v1004, %v1006
      %v1659 = vunpack.c.l.s4 1966171168
      %v1660 = vunpack.c.0.s8 %v1659
      %v1661 = vlaneseq
      %v1662 = vshrl.u32 %v1661, 7
      %v1663 = vsub.s32 %v1660, %v1662
      %v1664 = vrot.slane %v1656, %v1663
      %v1666 = vunpack.c.l.s4 1966171168
      %v1667 = vunpack.c.0.s8 %v1666
      %v1668 = vlaneseq
      %v1669 = vshrl.u32 %v1668, 7
      %v1670 = vsub.s32 %v1667, %v1669
      %v1671 = vrot.slane %v1657, %v1670
      %v1672 = vcombine.low %v1664, %v1671
      %v1674 = vunpack.c.l.s4 1966171168
      %v1675 = vunpack.c.0.s8 %v1674
      %v1676 = vlaneseq
      %v1677 = vshrl.u32 %v1676, 7
      %v1678 = vsub.s32 %v1675, %v1677
      %v1679 = vrot.slane %v1672, %v1678
      %s1681 = scalar_lea.vmem [#allocation2], 3
      %1682 = vst.msk [vmem:[%s1681] ss:$8 sm:$0xf] %vm1616, %v1679
      %1683 = vst.msk [vmem:[%s1681] ss:$8 sm:$0x0] %vm1616, %v1679
      %v1688 = vcombine.low %v1075, %v1077
      %v1689 = vcombine.low %v1146, %v1148
      %v1691 = vunpack.c.l.s4 1966171168
      %v1692 = vunpack.c.0.s8 %v1691
      %v1693 = vlaneseq
      %v1694 = vshrl.u32 %v1693, 7
      %v1695 = vsub.s32 %v1692, %v1694
      %v1696 = vrot.slane %v1688, %v1695
      %v1698 = vunpack.c.l.s4 1966171168
      %v1699 = vunpack.c.0.s8 %v1698
      %v1700 = vlaneseq
      %v1701 = vshrl.u32 %v1700, 7
      %v1702 = vsub.s32 %v1699, %v1701
      %v1703 = vrot.slane %v1689, %v1702
      %v1704 = vcombine.low %v1696, %v1703
      %v1706 = vunpack.c.l.s4 1966171168
      %v1707 = vunpack.c.0.s8 %v1706
      %v1708 = vlaneseq
      %v1709 = vshrl.u32 %v1708, 7
      %v1710 = vsub.s32 %v1707, %v1709
      %v1711 = vrot.slane %v1704, %v1710
      %s1713 = scalar_lea.vmem [#allocation2], 4
      %1714 = vst.msk [vmem:[%s1713] ss:$8 sm:$0xf] %vm1616, %v1711
      %1715 = vst.msk [vmem:[%s1713] ss:$8 sm:$0x0] %vm1616, %v1711
      %v1720 = vcombine.low %v1217, %v1219
      %v1721 = vcombine.low %v1288, %v1290
      %v1723 = vunpack.c.l.s4 1966171168
      %v1724 = vunpack.c.0.s8 %v1723
      %v1725 = vlaneseq
      %v1726 = vshrl.u32 %v1725, 7
      %v1727 = vsub.s32 %v1724, %v1726
      %v1728 = vrot.slane %v1720, %v1727
      %v1730 = vunpack.c.l.s4 1966171168
      %v1731 = vunpack.c.0.s8 %v1730
      %v1732 = vlaneseq
      %v1733 = vshrl.u32 %v1732, 7
      %v1734 = vsub.s32 %v1731, %v1733
      %v1735 = vrot.slane %v1721, %v1734
      %v1736 = vcombine.low %v1728, %v1735
      %v1738 = vunpack.c.l.s4 1966171168
      %v1739 = vunpack.c.0.s8 %v1738
      %v1740 = vlaneseq
      %v1741 = vshrl.u32 %v1740, 7
      %v1742 = vsub.s32 %v1739, %v1741
      %v1743 = vrot.slane %v1736, %v1742
      %s1745 = scalar_lea.vmem [#allocation2], 5
      %1746 = vst.msk [vmem:[%s1745] ss:$8 sm:$0xf] %vm1616, %v1743
      %1747 = vst.msk [vmem:[%s1745] ss:$8 sm:$0x0] %vm1616, %v1743
      %v1752 = vcombine.low %v1359, %v1361
      %v1753 = vcombine.low %v1430, %v1432
      %v1755 = vunpack.c.l.s4 1966171168
      %v1756 = vunpack.c.0.s8 %v1755
      %v1757 = vlaneseq
      %v1758 = vshrl.u32 %v1757, 7
      %v1759 = vsub.s32 %v1756, %v1758
      %v1760 = vrot.slane %v1752, %v1759
      %v1762 = vunpack.c.l.s4 1966171168
      %v1763 = vunpack.c.0.s8 %v1762
      %v1764 = vlaneseq
      %v1765 = vshrl.u32 %v1764, 7
      %v1766 = vsub.s32 %v1763, %v1765
      %v1767 = vrot.slane %v1753, %v1766
      %v1768 = vcombine.low %v1760, %v1767
      %v1770 = vunpack.c.l.s4 1966171168
      %v1771 = vunpack.c.0.s8 %v1770
      %v1772 = vlaneseq
      %v1773 = vshrl.u32 %v1772, 7
      %v1774 = vsub.s32 %v1771, %v1773
      %v1775 = vrot.slane %v1768, %v1774
      %s1777 = scalar_lea.vmem [#allocation2], 6
      %1778 = vst.msk [vmem:[%s1777] ss:$8 sm:$0xf] %vm1616, %v1775
      %1779 = vst.msk [vmem:[%s1777] ss:$8 sm:$0x0] %vm1616, %v1775
      %v1784 = vcombine.low %v1501, %v1503
      %v1785 = vcombine.low %v1572, %v1574
      %v1787 = vunpack.c.l.s4 1966171168
      %v1788 = vunpack.c.0.s8 %v1787
      %v1789 = vlaneseq
      %v1790 = vshrl.u32 %v1789, 7
      %v1791 = vsub.s32 %v1788, %v1790
      %v1792 = vrot.slane %v1784, %v1791
      %v1794 = vunpack.c.l.s4 1966171168
      %v1795 = vunpack.c.0.s8 %v1794
      %v1796 = vlaneseq
      %v1797 = vshrl.u32 %v1796, 7
      %v1798 = vsub.s32 %v1795, %v1797
      %v1799 = vrot.slane %v1785, %v1798
      %v1800 = vcombine.low %v1792, %v1799
      %v1802 = vunpack.c.l.s4 1966171168
      %v1803 = vunpack.c.0.s8 %v1802
      %v1804 = vlaneseq
      %v1805 = vshrl.u32 %v1804, 7
      %v1806 = vsub.s32 %v1803, %v1805
      %v1807 = vrot.slane %v1800, %v1806
      %s1809 = scalar_lea.vmem [#allocation2], 7
      %1810 = vst.msk [vmem:[%s1809] ss:$8 sm:$0xf] %vm1616, %v1807
      %1811 = vst.msk [vmem:[%s1809] ss:$8 sm:$0x0] %vm1616, %v1807
      %v1812 = vld [vmem:[#allocation2] sm:$0x7f]
      %v1813 = vld [vmem:[#allocation2 + $0x8] sm:$0x7f]
      %v1814 = vld [vmem:[#allocation2 + $0x10] sm:$0x7f]
      %v1815 = vld [vmem:[#allocation2 + $0x18] sm:$0x7f]
      %v1816 = vld [vmem:[%s3] sm:$0xff]
      %v1817 = vld [vmem:[%s3 + $0x8] sm:$0xff]
      %v1818 = vld [vmem:[%s3 + $0x10] sm:$0xff]
      %v1819 = vld [vmem:[%s3 + $0x18] sm:$0xff]
      %v1820 = vld [vmem:[%s3 + $0x20] sm:$0xff]
      %v1821 = vld [vmem:[%s3 + $0x28] sm:$0xff]
      %v1822 = vld [vmem:[%s3 + $0x30] sm:$0xff]
      %v1823 = vld [vmem:[%s3 + $0x38] sm:$0xff]
      %v1824 = vld [vmem:[%s3 + $0x40] sm:$0xff]
      %v1825 = vld [vmem:[%s3 + $0x48] sm:$0xff]
      %v1826 = vld [vmem:[%s3 + $0x50] sm:$0xff]
      %v1827 = vld [vmem:[%s3 + $0x58] sm:$0xff]
      %v1828 = vld [vmem:[%s3 + $0x60] sm:$0xff]
      %v1829 = vld [vmem:[%s3 + $0x68] sm:$0xff]
      %v1830 = vld [vmem:[%s3 + $0x70] sm:$0xff]
      %v1831 = vld [vmem:[%s3 + $0x78] sm:$0xff]
      %v1832 = vld [vmem:[%s3 + $0x80] sm:$0xff]
      %v1833 = vld [vmem:[%s3 + $0x88] sm:$0xff]
      %v1834 = vld [vmem:[%s3 + $0x90] sm:$0xff]
      %v1835 = vld [vmem:[%s3 + $0x98] sm:$0xff]
      %v1836 = vld [vmem:[%s3 + $0xa0] sm:$0xff]
      %v1837 = vld [vmem:[%s3 + $0xa8] sm:$0xff]
      %v1838 = vld [vmem:[%s3 + $0xb0] sm:$0xff]
      %v1839 = vld [vmem:[%s3 + $0xb8] sm:$0xff]
      %v1840 = vld [vmem:[%s3 + $0xc0] sm:$0xff]
      %v1841 = vld [vmem:[%s3 + $0xc8] sm:$0xff]
      %v1842 = vld [vmem:[%s3 + $0xd0] sm:$0xff]
      %v1843 = vld [vmem:[%s3 + $0xd8] sm:$0xff]
      %v1844 = vld [vmem:[%s3 + $0xe0] sm:$0xff]
      %v1845 = vld [vmem:[%s3 + $0xe8] sm:$0xff]
      %v1846 = vld [vmem:[%s3 + $0xf0] sm:$0xff]
      %v1847 = vld [vmem:[%s3 + $0xf8] sm:$0xff]
      %v1848 = vld [vmem:[%s3 + $0x100] sm:$0xff]
      %v1849 = vld [vmem:[%s3 + $0x108] sm:$0xff]
      %v1850 = vld [vmem:[%s3 + $0x110] sm:$0xff]
      %v1851 = vld [vmem:[%s3 + $0x118] sm:$0xff]
      %v1852 = vld [vmem:[%s3 + $0x120] sm:$0xff]
      %v1853 = vld [vmem:[%s3 + $0x128] sm:$0xff]
      %v1854 = vld [vmem:[%s3 + $0x130] sm:$0xff]
      %v1855 = vld [vmem:[%s3 + $0x138] sm:$0xff]
      %v1856 = vld [vmem:[%s3 + $0x140] sm:$0xff]
      %v1857 = vld [vmem:[%s3 + $0x148] sm:$0xff]
      %v1858 = vld [vmem:[%s3 + $0x150] sm:$0xff]
      %v1859 = vld [vmem:[%s3 + $0x158] sm:$0xff]
      %v1860 = vld [vmem:[%s3 + $0x160] sm:$0xff]
      %v1861 = vld [vmem:[%s3 + $0x168] sm:$0xff]
      %v1862 = vld [vmem:[%s3 + $0x170] sm:$0xff]
      %v1863 = vld [vmem:[%s3 + $0x178] sm:$0xff]
      %v1864 = vld [vmem:[%s3 + $0x180] sm:$0xff]
      %v1865 = vld [vmem:[%s3 + $0x188] sm:$0xff]
      %v1866 = vld [vmem:[%s3 + $0x190] sm:$0xff]
      %v1867 = vld [vmem:[%s3 + $0x198] sm:$0xff]
      %v1868 = vld [vmem:[%s3 + $0x1a0] sm:$0xff]
      %v1869 = vld [vmem:[%s3 + $0x1a8] sm:$0xff]
      %v1870 = vld [vmem:[%s3 + $0x1b0] sm:$0xff]
      %v1871 = vld [vmem:[%s3 + $0x1b8] sm:$0xff]
      %v1872 = vld [vmem:[%s3 + $0x1c0] sm:$0xff]
      %v1873 = vld [vmem:[%s3 + $0x1c8] sm:$0xff]
      %v1874 = vld [vmem:[%s3 + $0x1d0] sm:$0xff]
      %v1875 = vld [vmem:[%s3 + $0x1d8] sm:$0xff]
      %v1876 = vld [vmem:[%s3 + $0x1e0] sm:$0xff]
      %v1877 = vld [vmem:[%s3 + $0x1e8] sm:$0xff]
      %v1878 = vld [vmem:[%s3 + $0x1f0] sm:$0xff]
      %v1879 = vld [vmem:[%s3 + $0x1f8] sm:$0xff]
      %v1880 = vld [vmem:[%s3 + $0x200] sm:$0xff]
      %v1881 = vld [vmem:[%s3 + $0x208] sm:$0xff]
      %v1882 = vld [vmem:[%s3 + $0x210] sm:$0xff]
      %v1883 = vld [vmem:[%s3 + $0x218] sm:$0xff]
      %v1884 = vld [vmem:[%s3 + $0x220] sm:$0xff]
      %v1885 = vld [vmem:[%s3 + $0x228] sm:$0xff]
      %v1886 = vld [vmem:[%s3 + $0x230] sm:$0xff]
      %v1887 = vld [vmem:[%s3 + $0x238] sm:$0xff]
      %v1888 = vld [vmem:[%s3 + $0x240] sm:$0xff]
      %v1889 = vld [vmem:[%s3 + $0x248] sm:$0xff]
      %v1890 = vld [vmem:[%s3 + $0x250] sm:$0xff]
      %v1891 = vld [vmem:[%s3 + $0x258] sm:$0xff]
      %v1892 = vld [vmem:[%s3 + $0x260] sm:$0xff]
      %v1893 = vld [vmem:[%s3 + $0x268] sm:$0xff]
      %v1894 = vld [vmem:[%s3 + $0x270] sm:$0xff]
      %v1895 = vld [vmem:[%s3 + $0x278] sm:$0xff]
      %v1896 = vld [vmem:[%s3 + $0x280] sm:$0xff]
      %v1897 = vld [vmem:[%s3 + $0x288] sm:$0xff]
      %v1898 = vld [vmem:[%s3 + $0x290] sm:$0xff]
      %v1899 = vld [vmem:[%s3 + $0x298] sm:$0xff]
      %v1900 = vld [vmem:[%s3 + $0x2a0] sm:$0xff]
      %v1901 = vld [vmem:[%s3 + $0x2a8] sm:$0xff]
      %v1902 = vld [vmem:[%s3 + $0x2b0] sm:$0xff]
      %v1903 = vld [vmem:[%s3 + $0x2b8] sm:$0xff]
      %v1904 = vld [vmem:[%s3 + $0x2c0] sm:$0xff]
      %v1905 = vld [vmem:[%s3 + $0x2c8] sm:$0xff]
      %v1906 = vld [vmem:[%s3 + $0x2d0] sm:$0xff]
      %v1907 = vld [vmem:[%s3 + $0x2d8] sm:$0xff]
      %v1908 = vld [vmem:[%s3 + $0x2e0] sm:$0xff]
      %v1909 = vld [vmem:[%s3 + $0x2e8] sm:$0xff]
      %v1910 = vld [vmem:[%s3 + $0x2f0] sm:$0xff]
      %v1911 = vld [vmem:[%s3 + $0x2f8] sm:$0xff]
      %v1912 = vld [vmem:[%s3 + $0x300] sm:$0xff]
      %v1913 = vld [vmem:[%s3 + $0x308] sm:$0xff]
      %v1914 = vld [vmem:[%s3 + $0x310] sm:$0xff]
      %v1915 = vld [vmem:[%s3 + $0x318] sm:$0xff]
      %v1916 = vld [vmem:[%s3 + $0x320] sm:$0xff]
      %v1917 = vld [vmem:[%s3 + $0x328] sm:$0xff]
      %v1918 = vld [vmem:[%s3 + $0x330] sm:$0xff]
      %v1919 = vld [vmem:[%s3 + $0x338] sm:$0xff]
      %v1920 = vld [vmem:[%s3 + $0x340] sm:$0xff]
      %v1921 = vld [vmem:[%s3 + $0x348] sm:$0xff]
      %v1922 = vld [vmem:[%s3 + $0x350] sm:$0xff]
      %v1923 = vld [vmem:[%s3 + $0x358] sm:$0xff]
      %v1924 = vld [vmem:[%s3 + $0x360] sm:$0xff]
      %v1925 = vld [vmem:[%s3 + $0x368] sm:$0xff]
      %v1926 = vld [vmem:[%s3 + $0x370] sm:$0xff]
      %v1927 = vld [vmem:[%s3 + $0x378] sm:$0xff]
      %v1928 = vld [vmem:[%s3 + $0x380] sm:$0xff]
      %v1929 = vld [vmem:[%s3 + $0x388] sm:$0xff]
      %v1930 = vld [vmem:[%s3 + $0x390] sm:$0xff]
      %v1931 = vld [vmem:[%s3 + $0x398] sm:$0xff]
      %v1932 = vld [vmem:[%s3 + $0x3a0] sm:$0xff]
      %v1933 = vld [vmem:[%s3 + $0x3a8] sm:$0xff]
      %v1934 = vld [vmem:[%s3 + $0x3b0] sm:$0xff]
      %v1935 = vld [vmem:[%s3 + $0x3b8] sm:$0xff]
      %v1936 = vld [vmem:[%s3 + $0x3c0] sm:$0xff]
      %v1937 = vld [vmem:[%s3 + $0x3c8] sm:$0xff]
      %v1938 = vld [vmem:[%s3 + $0x3d0] sm:$0xff]
      %v1939 = vld [vmem:[%s3 + $0x3d8] sm:$0xff]
      %v1940 = vld [vmem:[%s3 + $0x3e0] sm:$0xff]
      %v1941 = vld [vmem:[%s3 + $0x3e8] sm:$0xff]
      %v1942 = vld [vmem:[%s3 + $0x3f0] sm:$0xff]
      %v1943 = vld [vmem:[%s3 + $0x3f8] sm:$0xff]
      %v1944 = vld [vmem:[%s3 + $0x400] sm:$0xff]
      %v1945 = vld [vmem:[%s3 + $0x408] sm:$0xff]
      %v1946 = vld [vmem:[%s3 + $0x410] sm:$0xff]
      %v1947 = vld [vmem:[%s3 + $0x418] sm:$0xff]
      %v1948 = vld [vmem:[%s3 + $0x420] sm:$0xff]
      %v1949 = vld [vmem:[%s3 + $0x428] sm:$0xff]
      %v1950 = vld [vmem:[%s3 + $0x430] sm:$0xff]
      %v1951 = vld [vmem:[%s3 + $0x438] sm:$0xff]
      %v1952 = vld [vmem:[%s3 + $0x440] sm:$0xff]
      %v1953 = vld [vmem:[%s3 + $0x448] sm:$0xff]
      %v1954 = vld [vmem:[%s3 + $0x450] sm:$0xff]
      %v1955 = vld [vmem:[%s3 + $0x458] sm:$0xff]
      %v1956 = vld [vmem:[%s3 + $0x460] sm:$0xff]
      %v1957 = vld [vmem:[%s3 + $0x468] sm:$0xff]
      %v1958 = vld [vmem:[%s3 + $0x470] sm:$0xff]
      %v1959 = vld [vmem:[%s3 + $0x478] sm:$0xff]
      %v1960 = vld [vmem:[%s3 + $0x480] sm:$0xff]
      %v1961 = vld [vmem:[%s3 + $0x488] sm:$0xff]
      %v1962 = vld [vmem:[%s3 + $0x490] sm:$0xff]
      %v1963 = vld [vmem:[%s3 + $0x498] sm:$0xff]
      %v1964 = vld [vmem:[%s3 + $0x4a0] sm:$0xff]
      %v1965 = vld [vmem:[%s3 + $0x4a8] sm:$0xff]
      %v1966 = vld [vmem:[%s3 + $0x4b0] sm:$0xff]
      %v1967 = vld [vmem:[%s3 + $0x4b8] sm:$0xff]
      %v1968 = vld [vmem:[%s3 + $0x4c0] sm:$0xff]
      %v1969 = vld [vmem:[%s3 + $0x4c8] sm:$0xff]
      %v1970 = vld [vmem:[%s3 + $0x4d0] sm:$0xff]
      %v1971 = vld [vmem:[%s3 + $0x4d8] sm:$0xff]
      %v1972 = vld [vmem:[%s3 + $0x4e0] sm:$0xff]
      %v1973 = vld [vmem:[%s3 + $0x4e8] sm:$0xff]
      %v1974 = vld [vmem:[%s3 + $0x4f0] sm:$0xff]
      %v1975 = vld [vmem:[%s3 + $0x4f8] sm:$0xff]
      %v1976 = vld [vmem:[%s3 + $0x500] sm:$0xff]
      %v1977 = vld [vmem:[%s3 + $0x508] sm:$0xff]
      %v1978 = vld [vmem:[%s3 + $0x510] sm:$0xff]
      %v1979 = vld [vmem:[%s3 + $0x518] sm:$0xff]
      %v1980 = vld [vmem:[%s3 + $0x520] sm:$0xff]
      %v1981 = vld [vmem:[%s3 + $0x528] sm:$0xff]
      %v1982 = vld [vmem:[%s3 + $0x530] sm:$0xff]
      %v1983 = vld [vmem:[%s3 + $0x538] sm:$0xff]
      %v1984 = vld [vmem:[%s3 + $0x540] sm:$0xff]
      %v1985 = vld [vmem:[%s3 + $0x548] sm:$0xff]
      %v1986 = vld [vmem:[%s3 + $0x550] sm:$0xff]
      %v1987 = vld [vmem:[%s3 + $0x558] sm:$0xff]
      %v1988 = vld [vmem:[%s3 + $0x560] sm:$0xff]
      %v1989 = vld [vmem:[%s3 + $0x568] sm:$0xff]
      %v1990 = vld [vmem:[%s3 + $0x570] sm:$0xff]
      %v1991 = vld [vmem:[%s3 + $0x578] sm:$0xff]
      %v1992 = vld [vmem:[%s3 + $0x580] sm:$0xff]
      %v1993 = vld [vmem:[%s3 + $0x588] sm:$0xff]
      %v1994 = vld [vmem:[%s3 + $0x590] sm:$0xff]
      %v1995 = vld [vmem:[%s3 + $0x598] sm:$0xff]
      %v1996 = vld [vmem:[%s3 + $0x5a0] sm:$0xff]
      %v1997 = vld [vmem:[%s3 + $0x5a8] sm:$0xff]
      %v1998 = vld [vmem:[%s3 + $0x5b0] sm:$0xff]
      %v1999 = vld [vmem:[%s3 + $0x5b8] sm:$0xff]
      %v2000 = vld [vmem:[%s3 + $0x5c0] sm:$0xff]
      %v2001 = vld [vmem:[%s3 + $0x5c8] sm:$0xff]
      %v2002 = vld [vmem:[%s3 + $0x5d0] sm:$0xff]
      %v2003 = vld [vmem:[%s3 + $0x5d8] sm:$0xff]
      %v2004 = vld [vmem:[%s3 + $0x5e0] sm:$0xff]
      %v2005 = vld [vmem:[%s3 + $0x5e8] sm:$0xff]
      %v2006 = vld [vmem:[%s3 + $0x5f0] sm:$0xff]
      %v2007 = vld [vmem:[%s3 + $0x5f8] sm:$0xff]
      %v2008 = vld [vmem:[%s3 + $0x600] sm:$0xff]
      %v2009 = vld [vmem:[%s3 + $0x608] sm:$0xff]
      %v2010 = vld [vmem:[%s3 + $0x610] sm:$0xff]
      %v2011 = vld [vmem:[%s3 + $0x618] sm:$0xff]
      %v2012 = vld [vmem:[%s3 + $0x620] sm:$0xff]
      %v2013 = vld [vmem:[%s3 + $0x628] sm:$0xff]
      %v2014 = vld [vmem:[%s3 + $0x630] sm:$0xff]
      %v2015 = vld [vmem:[%s3 + $0x638] sm:$0xff]
      %v2016 = vld [vmem:[%s3 + $0x640] sm:$0xff]
      %v2017 = vld [vmem:[%s3 + $0x648] sm:$0xff]
      %v2018 = vld [vmem:[%s3 + $0x650] sm:$0xff]
      %v2019 = vld [vmem:[%s3 + $0x658] sm:$0xff]
      %v2020 = vld [vmem:[%s3 + $0x660] sm:$0xff]
      %v2021 = vld [vmem:[%s3 + $0x668] sm:$0xff]
      %v2022 = vld [vmem:[%s3 + $0x670] sm:$0xff]
      %v2023 = vld [vmem:[%s3 + $0x678] sm:$0xff]
      %v2024 = vld [vmem:[%s3 + $0x680] sm:$0xff]
      %v2025 = vld [vmem:[%s3 + $0x688] sm:$0xff]
      %v2026 = vld [vmem:[%s3 + $0x690] sm:$0xff]
      %v2027 = vld [vmem:[%s3 + $0x698] sm:$0xff]
      %v2028 = vld [vmem:[%s3 + $0x6a0] sm:$0xff]
      %v2029 = vld [vmem:[%s3 + $0x6a8] sm:$0xff]
      %v2030 = vld [vmem:[%s3 + $0x6b0] sm:$0xff]
      %v2031 = vld [vmem:[%s3 + $0x6b8] sm:$0xff]
      %v2032 = vld [vmem:[%s3 + $0x6c0] sm:$0xff]
      %v2033 = vld [vmem:[%s3 + $0x6c8] sm:$0xff]
      %v2034 = vld [vmem:[%s3 + $0x6d0] sm:$0xff]
      %v2035 = vld [vmem:[%s3 + $0x6d8] sm:$0xff]
      %v2036 = vld [vmem:[%s3 + $0x6e0] sm:$0xff]
      %v2037 = vld [vmem:[%s3 + $0x6e8] sm:$0xff]
      %v2038 = vld [vmem:[%s3 + $0x6f0] sm:$0xff]
      %v2039 = vld [vmem:[%s3 + $0x6f8] sm:$0xff]
      %v2040 = vld [vmem:[%s3 + $0x700] sm:$0xff]
      %v2041 = vld [vmem:[%s3 + $0x708] sm:$0xff]
      %v2042 = vld [vmem:[%s3 + $0x710] sm:$0xff]
      %v2043 = vld [vmem:[%s3 + $0x718] sm:$0xff]
      %v2044 = vld [vmem:[%s3 + $0x720] sm:$0xff]
      %v2045 = vld [vmem:[%s3 + $0x728] sm:$0xff]
      %v2046 = vld [vmem:[%s3 + $0x730] sm:$0xff]
      %v2047 = vld [vmem:[%s3 + $0x738] sm:$0xff]
      %v2048 = vld [vmem:[%s3 + $0x740] sm:$0xff]
      %v2049 = vld [vmem:[%s3 + $0x748] sm:$0xff]
      %v2050 = vld [vmem:[%s3 + $0x750] sm:$0xff]
      %v2051 = vld [vmem:[%s3 + $0x758] sm:$0xff]
      %v2052 = vld [vmem:[%s3 + $0x760] sm:$0xff]
      %v2053 = vld [vmem:[%s3 + $0x768] sm:$0xff]
      %v2054 = vld [vmem:[%s3 + $0x770] sm:$0xff]
      %v2055 = vld [vmem:[%s3 + $0x778] sm:$0xff]
      %v2056 = vld [vmem:[%s3 + $0x780] sm:$0xff]
      %v2057 = vld [vmem:[%s3 + $0x788] sm:$0xff]
      %v2058 = vld [vmem:[%s3 + $0x790] sm:$0xff]
      %v2059 = vld [vmem:[%s3 + $0x798] sm:$0xff]
      %v2060 = vld [vmem:[%s3 + $0x7a0] sm:$0xff]
      %v2061 = vld [vmem:[%s3 + $0x7a8] sm:$0xff]
      %v2062 = vld [vmem:[%s3 + $0x7b0] sm:$0xff]
      %v2063 = vld [vmem:[%s3 + $0x7b8] sm:$0xff]
      %v2064 = vld [vmem:[%s3 + $0x7c0] sm:$0xff]
      %v2065 = vld [vmem:[%s3 + $0x7c8] sm:$0xff]
      %v2066 = vld [vmem:[%s3 + $0x7d0] sm:$0xff]
      %v2067 = vld [vmem:[%s3 + $0x7d8] sm:$0xff]
      %v2068 = vld [vmem:[%s3 + $0x7e0] sm:$0xff]
      %v2069 = vld [vmem:[%s3 + $0x7e8] sm:$0xff]
      %v2070 = vld [vmem:[%s3 + $0x7f0] sm:$0xff]
      %v2071 = vld [vmem:[%s3 + $0x7f8] sm:$0xff]
      %v2072 = vld [vmem:[#allocation2] sm:$0xfe]
      %v2073 = vld [vmem:[#allocation2 + $0x8] sm:$0xfe]
      %v2074 = vld [vmem:[#allocation2 + $0x10] sm:$0xfe]
      %v2075 = vld [vmem:[#allocation2 + $0x18] sm:$0xfe]
      %s2076 = scalar_lea.vmem %s3, 2048
      %v2077 = vld [vmem:[%s2076] sm:$0xff]
      %v2078 = vld [vmem:[%s2076 + $0x8] sm:$0xff]
      %v2079 = vld [vmem:[%s2076 + $0x10] sm:$0xff]
      %v2080 = vld [vmem:[%s2076 + $0x18] sm:$0xff]
      %v2081 = vld [vmem:[%s2076 + $0x20] sm:$0xff]
      %v2082 = vld [vmem:[%s2076 + $0x28] sm:$0xff]
      %v2083 = vld [vmem:[%s2076 + $0x30] sm:$0xff]
      %v2084 = vld [vmem:[%s2076 + $0x38] sm:$0xff]
      %v2085 = vld [vmem:[%s2076 + $0x40] sm:$0xff]
      %v2086 = vld [vmem:[%s2076 + $0x48] sm:$0xff]
      %v2087 = vld [vmem:[%s2076 + $0x50] sm:$0xff]
      %v2088 = vld [vmem:[%s2076 + $0x58] sm:$0xff]
      %v2089 = vld [vmem:[%s2076 + $0x60] sm:$0xff]
      %v2090 = vld [vmem:[%s2076 + $0x68] sm:$0xff]
      %v2091 = vld [vmem:[%s2076 + $0x70] sm:$0xff]
      %v2092 = vld [vmem:[%s2076 + $0x78] sm:$0xff]
      %v2093 = vld [vmem:[%s2076 + $0x80] sm:$0xff]
      %v2094 = vld [vmem:[%s2076 + $0x88] sm:$0xff]
      %v2095 = vld [vmem:[%s2076 + $0x90] sm:$0xff]
      %v2096 = vld [vmem:[%s2076 + $0x98] sm:$0xff]
      %v2097 = vld [vmem:[%s2076 + $0xa0] sm:$0xff]
      %v2098 = vld [vmem:[%s2076 + $0xa8] sm:$0xff]
      %v2099 = vld [vmem:[%s2076 + $0xb0] sm:$0xff]
      %v2100 = vld [vmem:[%s2076 + $0xb8] sm:$0xff]
      %v2101 = vld [vmem:[%s2076 + $0xc0] sm:$0xff]
      %v2102 = vld [vmem:[%s2076 + $0xc8] sm:$0xff]
      %v2103 = vld [vmem:[%s2076 + $0xd0] sm:$0xff]
      %v2104 = vld [vmem:[%s2076 + $0xd8] sm:$0xff]
      %v2105 = vld [vmem:[%s2076 + $0xe0] sm:$0xff]
      %v2106 = vld [vmem:[%s2076 + $0xe8] sm:$0xff]
      %v2107 = vld [vmem:[%s2076 + $0xf0] sm:$0xff]
      %v2108 = vld [vmem:[%s2076 + $0xf8] sm:$0xff]
      %v2109 = vld [vmem:[%s2076 + $0x100] sm:$0xff]
      %v2110 = vld [vmem:[%s2076 + $0x108] sm:$0xff]
      %v2111 = vld [vmem:[%s2076 + $0x110] sm:$0xff]
      %v2112 = vld [vmem:[%s2076 + $0x118] sm:$0xff]
      %v2113 = vld [vmem:[%s2076 + $0x120] sm:$0xff]
      %v2114 = vld [vmem:[%s2076 + $0x128] sm:$0xff]
      %v2115 = vld [vmem:[%s2076 + $0x130] sm:$0xff]
      %v2116 = vld [vmem:[%s2076 + $0x138] sm:$0xff]
      %v2117 = vld [vmem:[%s2076 + $0x140] sm:$0xff]
      %v2118 = vld [vmem:[%s2076 + $0x148] sm:$0xff]
      %v2119 = vld [vmem:[%s2076 + $0x150] sm:$0xff]
      %v2120 = vld [vmem:[%s2076 + $0x158] sm:$0xff]
      %v2121 = vld [vmem:[%s2076 + $0x160] sm:$0xff]
      %v2122 = vld [vmem:[%s2076 + $0x168] sm:$0xff]
      %v2123 = vld [vmem:[%s2076 + $0x170] sm:$0xff]
      %v2124 = vld [vmem:[%s2076 + $0x178] sm:$0xff]
      %v2125 = vld [vmem:[%s2076 + $0x180] sm:$0xff]
      %v2126 = vld [vmem:[%s2076 + $0x188] sm:$0xff]
      %v2127 = vld [vmem:[%s2076 + $0x190] sm:$0xff]
      %v2128 = vld [vmem:[%s2076 + $0x198] sm:$0xff]
      %v2129 = vld [vmem:[%s2076 + $0x1a0] sm:$0xff]
      %v2130 = vld [vmem:[%s2076 + $0x1a8] sm:$0xff]
      %v2131 = vld [vmem:[%s2076 + $0x1b0] sm:$0xff]
      %v2132 = vld [vmem:[%s2076 + $0x1b8] sm:$0xff]
      %v2133 = vld [vmem:[%s2076 + $0x1c0] sm:$0xff]
      %v2134 = vld [vmem:[%s2076 + $0x1c8] sm:$0xff]
      %v2135 = vld [vmem:[%s2076 + $0x1d0] sm:$0xff]
      %v2136 = vld [vmem:[%s2076 + $0x1d8] sm:$0xff]
      %v2137 = vld [vmem:[%s2076 + $0x1e0] sm:$0xff]
      %v2138 = vld [vmem:[%s2076 + $0x1e8] sm:$0xff]
      %v2139 = vld [vmem:[%s2076 + $0x1f0] sm:$0xff]
      %v2140 = vld [vmem:[%s2076 + $0x1f8] sm:$0xff]
      %v2141 = vld [vmem:[%s2076 + $0x200] sm:$0xff]
      %v2142 = vld [vmem:[%s2076 + $0x208] sm:$0xff]
      %v2143 = vld [vmem:[%s2076 + $0x210] sm:$0xff]
      %v2144 = vld [vmem:[%s2076 + $0x218] sm:$0xff]
      %v2145 = vld [vmem:[%s2076 + $0x220] sm:$0xff]
      %v2146 = vld [vmem:[%s2076 + $0x228] sm:$0xff]
      %v2147 = vld [vmem:[%s2076 + $0x230] sm:$0xff]
      %v2148 = vld [vmem:[%s2076 + $0x238] sm:$0xff]
      %v2149 = vld [vmem:[%s2076 + $0x240] sm:$0xff]
      %v2150 = vld [vmem:[%s2076 + $0x248] sm:$0xff]
      %v2151 = vld [vmem:[%s2076 + $0x250] sm:$0xff]
      %v2152 = vld [vmem:[%s2076 + $0x258] sm:$0xff]
      %v2153 = vld [vmem:[%s2076 + $0x260] sm:$0xff]
      %v2154 = vld [vmem:[%s2076 + $0x268] sm:$0xff]
      %v2155 = vld [vmem:[%s2076 + $0x270] sm:$0xff]
      %v2156 = vld [vmem:[%s2076 + $0x278] sm:$0xff]
      %v2157 = vld [vmem:[%s2076 + $0x280] sm:$0xff]
      %v2158 = vld [vmem:[%s2076 + $0x288] sm:$0xff]
      %v2159 = vld [vmem:[%s2076 + $0x290] sm:$0xff]
      %v2160 = vld [vmem:[%s2076 + $0x298] sm:$0xff]
      %v2161 = vld [vmem:[%s2076 + $0x2a0] sm:$0xff]
      %v2162 = vld [vmem:[%s2076 + $0x2a8] sm:$0xff]
      %v2163 = vld [vmem:[%s2076 + $0x2b0] sm:$0xff]
      %v2164 = vld [vmem:[%s2076 + $0x2b8] sm:$0xff]
      %v2165 = vld [vmem:[%s2076 + $0x2c0] sm:$0xff]
      %v2166 = vld [vmem:[%s2076 + $0x2c8] sm:$0xff]
      %v2167 = vld [vmem:[%s2076 + $0x2d0] sm:$0xff]
      %v2168 = vld [vmem:[%s2076 + $0x2d8] sm:$0xff]
      %v2169 = vld [vmem:[%s2076 + $0x2e0] sm:$0xff]
      %v2170 = vld [vmem:[%s2076 + $0x2e8] sm:$0xff]
      %v2171 = vld [vmem:[%s2076 + $0x2f0] sm:$0xff]
      %v2172 = vld [vmem:[%s2076 + $0x2f8] sm:$0xff]
      %v2173 = vld [vmem:[%s2076 + $0x300] sm:$0xff]
      %v2174 = vld [vmem:[%s2076 + $0x308] sm:$0xff]
      %v2175 = vld [vmem:[%s2076 + $0x310] sm:$0xff]
      %v2176 = vld [vmem:[%s2076 + $0x318] sm:$0xff]
      %v2177 = vld [vmem:[%s2076 + $0x320] sm:$0xff]
      %v2178 = vld [vmem:[%s2076 + $0x328] sm:$0xff]
      %v2179 = vld [vmem:[%s2076 + $0x330] sm:$0xff]
      %v2180 = vld [vmem:[%s2076 + $0x338] sm:$0xff]
      %v2181 = vld [vmem:[%s2076 + $0x340] sm:$0xff]
      %v2182 = vld [vmem:[%s2076 + $0x348] sm:$0xff]
      %v2183 = vld [vmem:[%s2076 + $0x350] sm:$0xff]
      %v2184 = vld [vmem:[%s2076 + $0x358] sm:$0xff]
      %v2185 = vld [vmem:[%s2076 + $0x360] sm:$0xff]
      %v2186 = vld [vmem:[%s2076 + $0x368] sm:$0xff]
      %v2187 = vld [vmem:[%s2076 + $0x370] sm:$0xff]
      %v2188 = vld [vmem:[%s2076 + $0x378] sm:$0xff]
      %v2189 = vld [vmem:[%s2076 + $0x380] sm:$0xff]
      %v2190 = vld [vmem:[%s2076 + $0x388] sm:$0xff]
      %v2191 = vld [vmem:[%s2076 + $0x390] sm:$0xff]
      %v2192 = vld [vmem:[%s2076 + $0x398] sm:$0xff]
      %v2193 = vld [vmem:[%s2076 + $0x3a0] sm:$0xff]
      %v2194 = vld [vmem:[%s2076 + $0x3a8] sm:$0xff]
      %v2195 = vld [vmem:[%s2076 + $0x3b0] sm:$0xff]
      %v2196 = vld [vmem:[%s2076 + $0x3b8] sm:$0xff]
      %v2197 = vld [vmem:[%s2076 + $0x3c0] sm:$0xff]
      %v2198 = vld [vmem:[%s2076 + $0x3c8] sm:$0xff]
      %v2199 = vld [vmem:[%s2076 + $0x3d0] sm:$0xff]
      %v2200 = vld [vmem:[%s2076 + $0x3d8] sm:$0xff]
      %v2201 = vld [vmem:[%s2076 + $0x3e0] sm:$0xff]
      %v2202 = vld [vmem:[%s2076 + $0x3e8] sm:$0xff]
      %v2203 = vld [vmem:[%s2076 + $0x3f0] sm:$0xff]
      %v2204 = vld [vmem:[%s2076 + $0x3f8] sm:$0xff]
      %v2205 = vld [vmem:[%s2076 + $0x400] sm:$0xff]
      %v2206 = vld [vmem:[%s2076 + $0x408] sm:$0xff]
      %v2207 = vld [vmem:[%s2076 + $0x410] sm:$0xff]
      %v2208 = vld [vmem:[%s2076 + $0x418] sm:$0xff]
      %v2209 = vld [vmem:[%s2076 + $0x420] sm:$0xff]
      %v2210 = vld [vmem:[%s2076 + $0x428] sm:$0xff]
      %v2211 = vld [vmem:[%s2076 + $0x430] sm:$0xff]
      %v2212 = vld [vmem:[%s2076 + $0x438] sm:$0xff]
      %v2213 = vld [vmem:[%s2076 + $0x440] sm:$0xff]
      %v2214 = vld [vmem:[%s2076 + $0x448] sm:$0xff]
      %v2215 = vld [vmem:[%s2076 + $0x450] sm:$0xff]
      %v2216 = vld [vmem:[%s2076 + $0x458] sm:$0xff]
      %v2217 = vld [vmem:[%s2076 + $0x460] sm:$0xff]
      %v2218 = vld [vmem:[%s2076 + $0x468] sm:$0xff]
      %v2219 = vld [vmem:[%s2076 + $0x470] sm:$0xff]
      %v2220 = vld [vmem:[%s2076 + $0x478] sm:$0xff]
      %v2221 = vld [vmem:[%s2076 + $0x480] sm:$0xff]
      %v2222 = vld [vmem:[%s2076 + $0x488] sm:$0xff]
      %v2223 = vld [vmem:[%s2076 + $0x490] sm:$0xff]
      %v2224 = vld [vmem:[%s2076 + $0x498] sm:$0xff]
      %v2225 = vld [vmem:[%s2076 + $0x4a0] sm:$0xff]
      %v2226 = vld [vmem:[%s2076 + $0x4a8] sm:$0xff]
      %v2227 = vld [vmem:[%s2076 + $0x4b0] sm:$0xff]
      %v2228 = vld [vmem:[%s2076 + $0x4b8] sm:$0xff]
      %v2229 = vld [vmem:[%s2076 + $0x4c0] sm:$0xff]
      %v2230 = vld [vmem:[%s2076 + $0x4c8] sm:$0xff]
      %v2231 = vld [vmem:[%s2076 + $0x4d0] sm:$0xff]
      %v2232 = vld [vmem:[%s2076 + $0x4d8] sm:$0xff]
      %v2233 = vld [vmem:[%s2076 + $0x4e0] sm:$0xff]
      %v2234 = vld [vmem:[%s2076 + $0x4e8] sm:$0xff]
      %v2235 = vld [vmem:[%s2076 + $0x4f0] sm:$0xff]
      %v2236 = vld [vmem:[%s2076 + $0x4f8] sm:$0xff]
      %v2237 = vld [vmem:[%s2076 + $0x500] sm:$0xff]
      %v2238 = vld [vmem:[%s2076 + $0x508] sm:$0xff]
      %v2239 = vld [vmem:[%s2076 + $0x510] sm:$0xff]
      %v2240 = vld [vmem:[%s2076 + $0x518] sm:$0xff]
      %v2241 = vld [vmem:[%s2076 + $0x520] sm:$0xff]
      %v2242 = vld [vmem:[%s2076 + $0x528] sm:$0xff]
      %v2243 = vld [vmem:[%s2076 + $0x530] sm:$0xff]
      %v2244 = vld [vmem:[%s2076 + $0x538] sm:$0xff]
      %v2245 = vld [vmem:[%s2076 + $0x540] sm:$0xff]
      %v2246 = vld [vmem:[%s2076 + $0x548] sm:$0xff]
      %v2247 = vld [vmem:[%s2076 + $0x550] sm:$0xff]
      %v2248 = vld [vmem:[%s2076 + $0x558] sm:$0xff]
      %v2249 = vld [vmem:[%s2076 + $0x560] sm:$0xff]
      %v2250 = vld [vmem:[%s2076 + $0x568] sm:$0xff]
      %v2251 = vld [vmem:[%s2076 + $0x570] sm:$0xff]
      %v2252 = vld [vmem:[%s2076 + $0x578] sm:$0xff]
      %v2253 = vld [vmem:[%s2076 + $0x580] sm:$0xff]
      %v2254 = vld [vmem:[%s2076 + $0x588] sm:$0xff]
      %v2255 = vld [vmem:[%s2076 + $0x590] sm:$0xff]
      %v2256 = vld [vmem:[%s2076 + $0x598] sm:$0xff]
      %v2257 = vld [vmem:[%s2076 + $0x5a0] sm:$0xff]
      %v2258 = vld [vmem:[%s2076 + $0x5a8] sm:$0xff]
      %v2259 = vld [vmem:[%s2076 + $0x5b0] sm:$0xff]
      %v2260 = vld [vmem:[%s2076 + $0x5b8] sm:$0xff]
      %v2261 = vld [vmem:[%s2076 + $0x5c0] sm:$0xff]
      %v2262 = vld [vmem:[%s2076 + $0x5c8] sm:$0xff]
      %v2263 = vld [vmem:[%s2076 + $0x5d0] sm:$0xff]
      %v2264 = vld [vmem:[%s2076 + $0x5d8] sm:$0xff]
      %v2265 = vld [vmem:[%s2076 + $0x5e0] sm:$0xff]
      %v2266 = vld [vmem:[%s2076 + $0x5e8] sm:$0xff]
      %v2267 = vld [vmem:[%s2076 + $0x5f0] sm:$0xff]
      %v2268 = vld [vmem:[%s2076 + $0x5f8] sm:$0xff]
      %v2269 = vld [vmem:[%s2076 + $0x600] sm:$0xff]
      %v2270 = vld [vmem:[%s2076 + $0x608] sm:$0xff]
      %v2271 = vld [vmem:[%s2076 + $0x610] sm:$0xff]
      %v2272 = vld [vmem:[%s2076 + $0x618] sm:$0xff]
      %v2273 = vld [vmem:[%s2076 + $0x620] sm:$0xff]
      %v2274 = vld [vmem:[%s2076 + $0x628] sm:$0xff]
      %v2275 = vld [vmem:[%s2076 + $0x630] sm:$0xff]
      %v2276 = vld [vmem:[%s2076 + $0x638] sm:$0xff]
      %v2277 = vld [vmem:[%s2076 + $0x640] sm:$0xff]
      %v2278 = vld [vmem:[%s2076 + $0x648] sm:$0xff]
      %v2279 = vld [vmem:[%s2076 + $0x650] sm:$0xff]
      %v2280 = vld [vmem:[%s2076 + $0x658] sm:$0xff]
      %v2281 = vld [vmem:[%s2076 + $0x660] sm:$0xff]
      %v2282 = vld [vmem:[%s2076 + $0x668] sm:$0xff]
      %v2283 = vld [vmem:[%s2076 + $0x670] sm:$0xff]
      %v2284 = vld [vmem:[%s2076 + $0x678] sm:$0xff]
      %v2285 = vld [vmem:[%s2076 + $0x680] sm:$0xff]
      %v2286 = vld [vmem:[%s2076 + $0x688] sm:$0xff]
      %v2287 = vld [vmem:[%s2076 + $0x690] sm:$0xff]
      %v2288 = vld [vmem:[%s2076 + $0x698] sm:$0xff]
      %v2289 = vld [vmem:[%s2076 + $0x6a0] sm:$0xff]
      %v2290 = vld [vmem:[%s2076 + $0x6a8] sm:$0xff]
      %v2291 = vld [vmem:[%s2076 + $0x6b0] sm:$0xff]
      %v2292 = vld [vmem:[%s2076 + $0x6b8] sm:$0xff]
      %v2293 = vld [vmem:[%s2076 + $0x6c0] sm:$0xff]
      %v2294 = vld [vmem:[%s2076 + $0x6c8] sm:$0xff]
      %v2295 = vld [vmem:[%s2076 + $0x6d0] sm:$0xff]
      %v2296 = vld [vmem:[%s2076 + $0x6d8] sm:$0xff]
      %v2297 = vld [vmem:[%s2076 + $0x6e0] sm:$0xff]
      %v2298 = vld [vmem:[%s2076 + $0x6e8] sm:$0xff]
      %v2299 = vld [vmem:[%s2076 + $0x6f0] sm:$0xff]
      %v2300 = vld [vmem:[%s2076 + $0x6f8] sm:$0xff]
      %v2301 = vld [vmem:[%s2076 + $0x700] sm:$0xff]
      %v2302 = vld [vmem:[%s2076 + $0x708] sm:$0xff]
      %v2303 = vld [vmem:[%s2076 + $0x710] sm:$0xff]
      %v2304 = vld [vmem:[%s2076 + $0x718] sm:$0xff]
      %v2305 = vld [vmem:[%s2076 + $0x720] sm:$0xff]
      %v2306 = vld [vmem:[%s2076 + $0x728] sm:$0xff]
      %v2307 = vld [vmem:[%s2076 + $0x730] sm:$0xff]
      %v2308 = vld [vmem:[%s2076 + $0x738] sm:$0xff]
      %v2309 = vld [vmem:[%s2076 + $0x740] sm:$0xff]
      %v2310 = vld [vmem:[%s2076 + $0x748] sm:$0xff]
      %v2311 = vld [vmem:[%s2076 + $0x750] sm:$0xff]
      %v2312 = vld [vmem:[%s2076 + $0x758] sm:$0xff]
      %v2313 = vld [vmem:[%s2076 + $0x760] sm:$0xff]
      %v2314 = vld [vmem:[%s2076 + $0x768] sm:$0xff]
      %v2315 = vld [vmem:[%s2076 + $0x770] sm:$0xff]
      %v2316 = vld [vmem:[%s2076 + $0x778] sm:$0xff]
      %v2317 = vld [vmem:[%s2076 + $0x780] sm:$0xff]
      %v2318 = vld [vmem:[%s2076 + $0x788] sm:$0xff]
      %v2319 = vld [vmem:[%s2076 + $0x790] sm:$0xff]
      %v2320 = vld [vmem:[%s2076 + $0x798] sm:$0xff]
      %v2321 = vld [vmem:[%s2076 + $0x7a0] sm:$0xff]
      %v2322 = vld [vmem:[%s2076 + $0x7a8] sm:$0xff]
      %v2323 = vld [vmem:[%s2076 + $0x7b0] sm:$0xff]
      %v2324 = vld [vmem:[%s2076 + $0x7b8] sm:$0xff]
      %v2325 = vld [vmem:[%s2076 + $0x7c0] sm:$0xff]
      %v2326 = vld [vmem:[%s2076 + $0x7c8] sm:$0xff]
      %v2327 = vld [vmem:[%s2076 + $0x7d0] sm:$0xff]
      %v2328 = vld [vmem:[%s2076 + $0x7d8] sm:$0xff]
      %v2329 = vld [vmem:[%s2076 + $0x7e0] sm:$0xff]
      %v2330 = vld [vmem:[%s2076 + $0x7e8] sm:$0xff]
      %v2331 = vld [vmem:[%s2076 + $0x7f0] sm:$0xff]
      %v2332 = vld [vmem:[%s2076 + $0x7f8] sm:$0xff]
      %v2337 = vrot.slane %v2072, 1
      %v2338 = vrot.slane %v2073, 1
      %v2339 = vrot.slane %v2074, 1
      %v2340 = vrot.slane %v2075, 1
      %2345 = vmatprep.subr.mxu0 %v2078
      %2346 = vmatpush1.msra.mxu0 %v2077
      %2347 = vmatprep.subr.mxu0 %v2082
      %2348 = vmatpush1.msra.mxu0 %v2081
      %2349 = vmatprep.subr.mxu0 %v2086
      %2350 = vmatpush1.msra.mxu0 %v2085
      %2351 = vmatprep.subr.mxu0 %v2090
      %2352 = vmatpush1.msra.mxu0 %v2089
      %2353 = vmatprep.subr.mxu0 %v2094
      %2354 = vmatpush1.msra.mxu0 %v2093
      %2355 = vmatprep.subr.mxu0 %v2098
      %2356 = vmatpush1.msra.mxu0 %v2097
      %2357 = vmatprep.subr.mxu0 %v2102
      %2358 = vmatpush1.msra.mxu0 %v2101
      %2359 = vmatprep.subr.mxu0 %v2106
      %2360 = vmatpush1.msra.mxu0 %v2105
      %2361 = vmatprep.subr.mxu0 %v2110
      %2362 = vmatpush1.msra.mxu0 %v2109
      %2363 = vmatprep.subr.mxu0 %v2114
      %2364 = vmatpush1.msra.mxu0 %v2113
      %2365 = vmatprep.subr.mxu0 %v2118
      %2366 = vmatpush1.msra.mxu0 %v2117
      %2367 = vmatprep.subr.mxu0 %v2122
      %2368 = vmatpush1.msra.mxu0 %v2121
      %2369 = vmatprep.subr.mxu0 %v2126
      %2370 = vmatpush1.msra.mxu0 %v2125
      %2371 = vmatprep.subr.mxu0 %v2130
      %2372 = vmatpush1.msra.mxu0 %v2129
      %2373 = vmatprep.subr.mxu0 %v2134
      %2374 = vmatpush1.msra.mxu0 %v2133
      %2375 = vmatprep.subr.mxu0 %v2138
      %2376 = vmatpush1.msra.mxu0 %v2137
      %2377 = vmatprep.subr.mxu0 %v2142
      %2378 = vmatpush1.msra.mxu0 %v2141
      %2379 = vmatprep.subr.mxu0 %v2146
      %2380 = vmatpush1.msra.mxu0 %v2145
      %2381 = vmatprep.subr.mxu0 %v2150
      %2382 = vmatpush1.msra.mxu0 %v2149
      %2383 = vmatprep.subr.mxu0 %v2154
      %2384 = vmatpush1.msra.mxu0 %v2153
      %2385 = vmatprep.subr.mxu0 %v2158
      %2386 = vmatpush1.msra.mxu0 %v2157
      %2387 = vmatprep.subr.mxu0 %v2162
      %2388 = vmatpush1.msra.mxu0 %v2161
      %2389 = vmatprep.subr.mxu0 %v2166
      %2390 = vmatpush1.msra.mxu0 %v2165
      %2391 = vmatprep.subr.mxu0 %v2170
      %2392 = vmatpush1.msra.mxu0 %v2169
      %2393 = vmatprep.subr.mxu0 %v2174
      %2394 = vmatpush1.msra.mxu0 %v2173
      %2395 = vmatprep.subr.mxu0 %v2178
      %2396 = vmatpush1.msra.mxu0 %v2177
      %2397 = vmatprep.subr.mxu0 %v2182
      %2398 = vmatpush1.msra.mxu0 %v2181
      %2399 = vmatprep.subr.mxu0 %v2186
      %2400 = vmatpush1.msra.mxu0 %v2185
      %2401 = vmatprep.subr.mxu0 %v2190
      %2402 = vmatpush1.msra.mxu0 %v2189
      %2403 = vmatprep.subr.mxu0 %v2194
      %2404 = vmatpush1.msra.mxu0 %v2193
      %2405 = vmatprep.subr.mxu0 %v2198
      %2406 = vmatpush1.msra.mxu0 %v2197
      %2407 = vmatprep.subr.mxu0 %v2202
      %2408 = vmatpush1.msra.mxu0 %v2201
      %2409 = vmatprep.mubr.f32.mxu0 %v2338
      %2410 = vmatmul.mubr.f32.gmra.mrb[0].mxu0 %v2337
      %v2411 = vpop.f32.mrb[0].mxu0
      %v2412 = vadd.f32 0.0, %v2411
      %v2413 = vpop.f32.mrb[0].mxu0
      %v2414 = vadd.f32 0.0, %v2413
      %2415 = vdwg.mxu0
      %2416 = vmatprep.subr.mxu0 %v2206
      %2417 = vmatpush1.msra.mxu0 %v2205
      %2418 = vmatprep.subr.mxu0 %v2210
      %2419 = vmatpush1.msra.mxu0 %v2209
      %2420 = vmatprep.subr.mxu0 %v2214
      %2421 = vmatpush1.msra.mxu0 %v2213
      %2422 = vmatprep.subr.mxu0 %v2218
      %2423 = vmatpush1.msra.mxu0 %v2217
      %2424 = vmatprep.subr.mxu0 %v2222
      %2425 = vmatpush1.msra.mxu0 %v2221
      %2426 = vmatprep.subr.mxu0 %v2226
      %2427 = vmatpush1.msra.mxu0 %v2225
      %2428 = vmatprep.subr.mxu0 %v2230
      %2429 = vmatpush1.msra.mxu0 %v2229
      %2430 = vmatprep.subr.mxu0 %v2234
      %2431 = vmatpush1.msra.mxu0 %v2233
      %2432 = vmatprep.subr.mxu0 %v2238
      %2433 = vmatpush1.msra.mxu0 %v2237
      %2434 = vmatprep.subr.mxu0 %v2242
      %2435 = vmatpush1.msra.mxu0 %v2241
      %2436 = vmatprep.subr.mxu0 %v2246
      %2437 = vmatpush1.msra.mxu0 %v2245
      %2438 = vmatprep.subr.mxu0 %v2250
      %2439 = vmatpush1.msra.mxu0 %v2249
      %2440 = vmatprep.subr.mxu0 %v2254
      %2441 = vmatpush1.msra.mxu0 %v2253
      %2442 = vmatprep.subr.mxu0 %v2258
      %2443 = vmatpush1.msra.mxu0 %v2257
      %2444 = vmatprep.subr.mxu0 %v2262
      %2445 = vmatpush1.msra.mxu0 %v2261
      %2446 = vmatprep.subr.mxu0 %v2266
      %2447 = vmatpush1.msra.mxu0 %v2265
      %2448 = vmatprep.subr.mxu0 %v2270
      %2449 = vmatpush1.msra.mxu0 %v2269
      %2450 = vmatprep.subr.mxu0 %v2274
      %2451 = vmatpush1.msra.mxu0 %v2273
      %2452 = vmatprep.subr.mxu0 %v2278
      %2453 = vmatpush1.msra.mxu0 %v2277
      %2454 = vmatprep.subr.mxu0 %v2282
      %2455 = vmatpush1.msra.mxu0 %v2281
      %2456 = vmatprep.subr.mxu0 %v2286
      %2457 = vmatpush1.msra.mxu0 %v2285
      %2458 = vmatprep.subr.mxu0 %v2290
      %2459 = vmatpush1.msra.mxu0 %v2289
      %2460 = vmatprep.subr.mxu0 %v2294
      %2461 = vmatpush1.msra.mxu0 %v2293
      %2462 = vmatprep.subr.mxu0 %v2298
      %2463 = vmatpush1.msra.mxu0 %v2297
      %2464 = vmatprep.subr.mxu0 %v2302
      %2465 = vmatpush1.msra.mxu0 %v2301
      %2466 = vmatprep.subr.mxu0 %v2306
      %2467 = vmatpush1.msra.mxu0 %v2305
      %2468 = vmatprep.subr.mxu0 %v2310
      %2469 = vmatpush1.msra.mxu0 %v2309
      %2470 = vmatprep.subr.mxu0 %v2314
      %2471 = vmatpush1.msra.mxu0 %v2313
      %2472 = vmatprep.subr.mxu0 %v2318
      %2473 = vmatpush1.msra.mxu0 %v2317
      %2474 = vmatprep.subr.mxu0 %v2322
      %2475 = vmatpush1.msra.mxu0 %v2321
      %2476 = vmatprep.subr.mxu0 %v2326
      %2477 = vmatpush1.msra.mxu0 %v2325
      %2478 = vmatprep.subr.mxu0 %v2330
      %2479 = vmatpush1.msra.mxu0 %v2329
      %2480 = vmatprep.mubr.f32.mxu0 %v2340
      %2481 = vmatmul.mubr.f32.gmra.mrb[0].mxu0 %v2339
      %v2482 = vpop.f32.mrb[0].mxu0
      %v2483 = vadd.f32 %v2412, %v2482
      %v2484 = vpop.f32.mrb[0].mxu0
      %v2485 = vadd.f32 %v2414, %v2484
      %2486 = vdwg.mxu0
      %2487 = vmatprep.subr.mxu0 %v2080
      %2488 = vmatpush1.msra.mxu0 %v2079
      %2489 = vmatprep.subr.mxu0 %v2084
      %2490 = vmatpush1.msra.mxu0 %v2083
      %2491 = vmatprep.subr.mxu0 %v2088
      %2492 = vmatpush1.msra.mxu0 %v2087
      %2493 = vmatprep.subr.mxu0 %v2092
      %2494 = vmatpush1.msra.mxu0 %v2091
      %2495 = vmatprep.subr.mxu0 %v2096
      %2496 = vmatpush1.msra.mxu0 %v2095
      %2497 = vmatprep.subr.mxu0 %v2100
      %2498 = vmatpush1.msra.mxu0 %v2099
      %2499 = vmatprep.subr.mxu0 %v2104
      %2500 = vmatpush1.msra.mxu0 %v2103
      %2501 = vmatprep.subr.mxu0 %v2108
      %2502 = vmatpush1.msra.mxu0 %v2107
      %2503 = vmatprep.subr.mxu0 %v2112
      %2504 = vmatpush1.msra.mxu0 %v2111
      %2505 = vmatprep.subr.mxu0 %v2116
      %2506 = vmatpush1.msra.mxu0 %v2115
      %2507 = vmatprep.subr.mxu0 %v2120
      %2508 = vmatpush1.msra.mxu0 %v2119
      %2509 = vmatprep.subr.mxu0 %v2124
      %2510 = vmatpush1.msra.mxu0 %v2123
      %2511 = vmatprep.subr.mxu0 %v2128
      %2512 = vmatpush1.msra.mxu0 %v2127
      %2513 = vmatprep.subr.mxu0 %v2132
      %2514 = vmatpush1.msra.mxu0 %v2131
      %2515 = vmatprep.subr.mxu0 %v2136
      %2516 = vmatpush1.msra.mxu0 %v2135
      %2517 = vmatprep.subr.mxu0 %v2140
      %2518 = vmatpush1.msra.mxu0 %v2139
      %2519 = vmatprep.subr.mxu0 %v2144
      %2520 = vmatpush1.msra.mxu0 %v2143
      %2521 = vmatprep.subr.mxu0 %v2148
      %2522 = vmatpush1.msra.mxu0 %v2147
      %2523 = vmatprep.subr.mxu0 %v2152
      %2524 = vmatpush1.msra.mxu0 %v2151
      %2525 = vmatprep.subr.mxu0 %v2156
      %2526 = vmatpush1.msra.mxu0 %v2155
      %2527 = vmatprep.subr.mxu0 %v2160
      %2528 = vmatpush1.msra.mxu0 %v2159
      %2529 = vmatprep.subr.mxu0 %v2164
      %2530 = vmatpush1.msra.mxu0 %v2163
      %2531 = vmatprep.subr.mxu0 %v2168
      %2532 = vmatpush1.msra.mxu0 %v2167
      %2533 = vmatprep.subr.mxu0 %v2172
      %2534 = vmatpush1.msra.mxu0 %v2171
      %2535 = vmatprep.subr.mxu0 %v2176
      %2536 = vmatpush1.msra.mxu0 %v2175
      %2537 = vmatprep.subr.mxu0 %v2180
      %2538 = vmatpush1.msra.mxu0 %v2179
      %2539 = vmatprep.subr.mxu0 %v2184
      %2540 = vmatpush1.msra.mxu0 %v2183
      %2541 = vmatprep.subr.mxu0 %v2188
      %2542 = vmatpush1.msra.mxu0 %v2187
      %2543 = vmatprep.subr.mxu0 %v2192
      %2544 = vmatpush1.msra.mxu0 %v2191
      %2545 = vmatprep.subr.mxu0 %v2196
      %2546 = vmatpush1.msra.mxu0 %v2195
      %2547 = vmatprep.subr.mxu0 %v2200
      %2548 = vmatpush1.msra.mxu0 %v2199
      %2549 = vmatprep.subr.mxu0 %v2204
      %2550 = vmatpush1.msra.mxu0 %v2203
      %2551 = vmatprep.mubr.f32.mxu0 %v2338
      %2552 = vmatmul.mubr.f32.gmra.mrb[0].mxu0 %v2337
      %v2553 = vpop.f32.mrb[0].mxu0
      %v2554 = vadd.f32 0.0, %v2553
      %v2555 = vpop.f32.mrb[0].mxu0
      %v2556 = vadd.f32 0.0, %v2555
      %2557 = vdwg.mxu0
      %2558 = vmatprep.subr.mxu0 %v2208
      %2559 = vmatpush1.msra.mxu0 %v2207
      %2560 = vmatprep.subr.mxu0 %v2212
      %2561 = vmatpush1.msra.mxu0 %v2211
      %2562 = vmatprep.subr.mxu0 %v2216
      %2563 = vmatpush1.msra.mxu0 %v2215
      %2564 = vmatprep.subr.mxu0 %v2220
      %2565 = vmatpush1.msra.mxu0 %v2219
      %2566 = vmatprep.subr.mxu0 %v2224
      %2567 = vmatpush1.msra.mxu0 %v2223
      %2568 = vmatprep.subr.mxu0 %v2228
      %2569 = vmatpush1.msra.mxu0 %v2227
      %2570 = vmatprep.subr.mxu0 %v2232
      %2571 = vmatpush1.msra.mxu0 %v2231
      %2572 = vmatprep.subr.mxu0 %v2236
      %2573 = vmatpush1.msra.mxu0 %v2235
      %2574 = vmatprep.subr.mxu0 %v2240
      %2575 = vmatpush1.msra.mxu0 %v2239
      %2576 = vmatprep.subr.mxu0 %v2244
      %2577 = vmatpush1.msra.mxu0 %v2243
      %2578 = vmatprep.subr.mxu0 %v2248
      %2579 = vmatpush1.msra.mxu0 %v2247
      %2580 = vmatprep.subr.mxu0 %v2252
      %2581 = vmatpush1.msra.mxu0 %v2251
      %2582 = vmatprep.subr.mxu0 %v2256
      %2583 = vmatpush1.msra.mxu0 %v2255
      %2584 = vmatprep.subr.mxu0 %v2260
      %2585 = vmatpush1.msra.mxu0 %v2259
      %2586 = vmatprep.subr.mxu0 %v2264
      %2587 = vmatpush1.msra.mxu0 %v2263
      %2588 = vmatprep.subr.mxu0 %v2268
      %2589 = vmatpush1.msra.mxu0 %v2267
      %2590 = vmatprep.subr.mxu0 %v2272
      %2591 = vmatpush1.msra.mxu0 %v2271
      %2592 = vmatprep.subr.mxu0 %v2276
      %2593 = vmatpush1.msra.mxu0 %v2275
      %2594 = vmatprep.subr.mxu0 %v2280
      %2595 = vmatpush1.msra.mxu0 %v2279
      %2596 = vmatprep.subr.mxu0 %v2284
      %2597 = vmatpush1.msra.mxu0 %v2283
      %2598 = vmatprep.subr.mxu0 %v2288
      %2599 = vmatpush1.msra.mxu0 %v2287
      %2600 = vmatprep.subr.mxu0 %v2292
      %2601 = vmatpush1.msra.mxu0 %v2291
      %2602 = vmatprep.subr.mxu0 %v2296
      %2603 = vmatpush1.msra.mxu0 %v2295
      %2604 = vmatprep.subr.mxu0 %v2300
      %2605 = vmatpush1.msra.mxu0 %v2299
      %2606 = vmatprep.subr.mxu0 %v2304
      %2607 = vmatpush1.msra.mxu0 %v2303
      %2608 = vmatprep.subr.mxu0 %v2308
      %2609 = vmatpush1.msra.mxu0 %v2307
      %2610 = vmatprep.subr.mxu0 %v2312
      %2611 = vmatpush1.msra.mxu0 %v2311
      %2612 = vmatprep.subr.mxu0 %v2316
      %2613 = vmatpush1.msra.mxu0 %v2315
      %2614 = vmatprep.subr.mxu0 %v2320
      %2615 = vmatpush1.msra.mxu0 %v2319
      %2616 = vmatprep.subr.mxu0 %v2324
      %2617 = vmatpush1.msra.mxu0 %v2323
      %2618 = vmatprep.subr.mxu0 %v2328
      %2619 = vmatpush1.msra.mxu0 %v2327
      %2620 = vmatprep.subr.mxu0 %v2332
      %2621 = vmatpush1.msra.mxu0 %v2331
      %2622 = vmatprep.mubr.f32.mxu0 %v2340
      %2623 = vmatmul.mubr.f32.gmra.mrb[0].mxu0 %v2339
      %v2624 = vpop.f32.mrb[0].mxu0
      %v2625 = vadd.f32 %v2554, %v2624
      %v2626 = vpop.f32.mrb[0].mxu0
      %v2627 = vadd.f32 %v2556, %v2626
      %2628 = vdwg.mxu0
      %2629 = vmatprep.subr.mxu0 %v1817
      %2630 = vmatpush1.msra.mxu0 %v1816
      %2631 = vmatprep.subr.mxu0 %v1821
      %2632 = vmatpush1.msra.mxu0 %v1820
      %2633 = vmatprep.subr.mxu0 %v1825
      %2634 = vmatpush1.msra.mxu0 %v1824
      %2635 = vmatprep.subr.mxu0 %v1829
      %2636 = vmatpush1.msra.mxu0 %v1828
      %2637 = vmatprep.subr.mxu0 %v1833
      %2638 = vmatpush1.msra.mxu0 %v1832
      %2639 = vmatprep.subr.mxu0 %v1837
      %2640 = vmatpush1.msra.mxu0 %v1836
      %2641 = vmatprep.subr.mxu0 %v1841
      %2642 = vmatpush1.msra.mxu0 %v1840
      %2643 = vmatprep.subr.mxu0 %v1845
      %2644 = vmatpush1.msra.mxu0 %v1844
      %2645 = vmatprep.subr.mxu0 %v1849
      %2646 = vmatpush1.msra.mxu0 %v1848
      %2647 = vmatprep.subr.mxu0 %v1853
      %2648 = vmatpush1.msra.mxu0 %v1852
      %2649 = vmatprep.subr.mxu0 %v1857
      %2650 = vmatpush1.msra.mxu0 %v1856
      %2651 = vmatprep.subr.mxu0 %v1861
      %2652 = vmatpush1.msra.mxu0 %v1860
      %2653 = vmatprep.subr.mxu0 %v1865
      %2654 = vmatpush1.msra.mxu0 %v1864
      %2655 = vmatprep.subr.mxu0 %v1869
      %2656 = vmatpush1.msra.mxu0 %v1868
      %2657 = vmatprep.subr.mxu0 %v1873
      %2658 = vmatpush1.msra.mxu0 %v1872
      %2659 = vmatprep.subr.mxu0 %v1877
      %2660 = vmatpush1.msra.mxu0 %v1876
      %2661 = vmatprep.subr.mxu0 %v1881
      %2662 = vmatpush1.msra.mxu0 %v1880
      %2663 = vmatprep.subr.mxu0 %v1885
      %2664 = vmatpush1.msra.mxu0 %v1884
      %2665 = vmatprep.subr.mxu0 %v1889
      %2666 = vmatpush1.msra.mxu0 %v1888
      %2667 = vmatprep.subr.mxu0 %v1893
      %2668 = vmatpush1.msra.mxu0 %v1892
      %2669 = vmatprep.subr.mxu0 %v1897
      %2670 = vmatpush1.msra.mxu0 %v1896
      %2671 = vmatprep.subr.mxu0 %v1901
      %2672 = vmatpush1.msra.mxu0 %v1900
      %2673 = vmatprep.subr.mxu0 %v1905
      %2674 = vmatpush1.msra.mxu0 %v1904
      %2675 = vmatprep.subr.mxu0 %v1909
      %2676 = vmatpush1.msra.mxu0 %v1908
      %2677 = vmatprep.subr.mxu0 %v1913
      %2678 = vmatpush1.msra.mxu0 %v1912
      %2679 = vmatprep.subr.mxu0 %v1917
      %2680 = vmatpush1.msra.mxu0 %v1916
      %2681 = vmatprep.subr.mxu0 %v1921
      %2682 = vmatpush1.msra.mxu0 %v1920
      %2683 = vmatprep.subr.mxu0 %v1925
      %2684 = vmatpush1.msra.mxu0 %v1924
      %2685 = vmatprep.subr.mxu0 %v1929
      %2686 = vmatpush1.msra.mxu0 %v1928
      %2687 = vmatprep.subr.mxu0 %v1933
      %2688 = vmatpush1.msra.mxu0 %v1932
      %2689 = vmatprep.subr.mxu0 %v1937
      %2690 = vmatpush1.msra.mxu0 %v1936
      %2691 = vmatprep.subr.mxu0 %v1941
      %2692 = vmatpush1.msra.mxu0 %v1940
      %2693 = vmatprep.mubr.f32.mxu0 %v1813
      %2694 = vmatmul.mubr.f32.gmra.mrb[0].mxu0 %v1812
      %v2695 = vpop.f32.mrb[0].mxu0
      %v2696 = vadd.f32 %v2483, %v2695
      %v2697 = vpop.f32.mrb[0].mxu0
      %v2698 = vadd.f32 %v2485, %v2697
      %2699 = vdwg.mxu0
      %2700 = vmatprep.subr.mxu0 %v1945
      %2701 = vmatpush1.msra.mxu0 %v1944
      %2702 = vmatprep.subr.mxu0 %v1949
      %2703 = vmatpush1.msra.mxu0 %v1948
      %2704 = vmatprep.subr.mxu0 %v1953
      %2705 = vmatpush1.msra.mxu0 %v1952
      %2706 = vmatprep.subr.mxu0 %v1957
      %2707 = vmatpush1.msra.mxu0 %v1956
      %2708 = vmatprep.subr.mxu0 %v1961
      %2709 = vmatpush1.msra.mxu0 %v1960
      %2710 = vmatprep.subr.mxu0 %v1965
      %2711 = vmatpush1.msra.mxu0 %v1964
      %2712 = vmatprep.subr.mxu0 %v1969
      %2713 = vmatpush1.msra.mxu0 %v1968
      %2714 = vmatprep.subr.mxu0 %v1973
      %2715 = vmatpush1.msra.mxu0 %v1972
      %2716 = vmatprep.subr.mxu0 %v1977
      %2717 = vmatpush1.msra.mxu0 %v1976
      %2718 = vmatprep.subr.mxu0 %v1981
      %2719 = vmatpush1.msra.mxu0 %v1980
      %2720 = vmatprep.subr.mxu0 %v1985
      %2721 = vmatpush1.msra.mxu0 %v1984
      %2722 = vmatprep.subr.mxu0 %v1989
      %2723 = vmatpush1.msra.mxu0 %v1988
      %2724 = vmatprep.subr.mxu0 %v1993
      %2725 = vmatpush1.msra.mxu0 %v1992
      %2726 = vmatprep.subr.mxu0 %v1997
      %2727 = vmatpush1.msra.mxu0 %v1996
      %2728 = vmatprep.subr.mxu0 %v2001
      %2729 = vmatpush1.msra.mxu0 %v2000
      %2730 = vmatprep.subr.mxu0 %v2005
      %2731 = vmatpush1.msra.mxu0 %v2004
      %2732 = vmatprep.subr.mxu0 %v2009
      %2733 = vmatpush1.msra.mxu0 %v2008
      %2734 = vmatprep.subr.mxu0 %v2013
      %2735 = vmatpush1.msra.mxu0 %v2012
      %2736 = vmatprep.subr.mxu0 %v2017
      %2737 = vmatpush1.msra.mxu0 %v2016
      %2738 = vmatprep.subr.mxu0 %v2021
      %2739 = vmatpush1.msra.mxu0 %v2020
      %2740 = vmatprep.subr.mxu0 %v2025
      %2741 = vmatpush1.msra.mxu0 %v2024
      %2742 = vmatprep.subr.mxu0 %v2029
      %2743 = vmatpush1.msra.mxu0 %v2028
      %2744 = vmatprep.subr.mxu0 %v2033
      %2745 = vmatpush1.msra.mxu0 %v2032
      %2746 = vmatprep.subr.mxu0 %v2037
      %2747 = vmatpush1.msra.mxu0 %v2036
      %2748 = vmatprep.subr.mxu0 %v2041
      %2749 = vmatpush1.msra.mxu0 %v2040
      %2750 = vmatprep.subr.mxu0 %v2045
      %2751 = vmatpush1.msra.mxu0 %v2044
      %2752 = vmatprep.subr.mxu0 %v2049
      %2753 = vmatpush1.msra.mxu0 %v2048
      %2754 = vmatprep.subr.mxu0 %v2053
      %2755 = vmatpush1.msra.mxu0 %v2052
      %2756 = vmatprep.subr.mxu0 %v2057
      %2757 = vmatpush1.msra.mxu0 %v2056
      %2758 = vmatprep.subr.mxu0 %v2061
      %2759 = vmatpush1.msra.mxu0 %v2060
      %2760 = vmatprep.subr.mxu0 %v2065
      %2761 = vmatpush1.msra.mxu0 %v2064
      %2762 = vmatprep.subr.mxu0 %v2069
      %2763 = vmatpush1.msra.mxu0 %v2068
      %2764 = vmatprep.mubr.f32.mxu0 %v1815
      %2765 = vmatmul.mubr.f32.gmra.mrb[0].mxu0 %v1814
      %v2766 = vpop.f32.mrb[0].mxu0
      %v2767 = vadd.f32 %v2696, %v2766
      %v2768 = vpop.f32.mrb[0].mxu0
      %v2769 = vadd.f32 %v2698, %v2768
      %2770 = vdwg.mxu0
      %2771 = vmatprep.subr.mxu0 %v1819
      %2772 = vmatpush1.msra.mxu0 %v1818
      %2773 = vmatprep.subr.mxu0 %v1823
      %2774 = vmatpush1.msra.mxu0 %v1822
      %2775 = vmatprep.subr.mxu0 %v1827
      %2776 = vmatpush1.msra.mxu0 %v1826
      %2777 = vmatprep.subr.mxu0 %v1831
      %2778 = vmatpush1.msra.mxu0 %v1830
      %2779 = vmatprep.subr.mxu0 %v1835
      %2780 = vmatpush1.msra.mxu0 %v1834
      %2781 = vmatprep.subr.mxu0 %v1839
      %2782 = vmatpush1.msra.mxu0 %v1838
      %2783 = vmatprep.subr.mxu0 %v1843
      %2784 = vmatpush1.msra.mxu0 %v1842
      %2785 = vmatprep.subr.mxu0 %v1847
      %2786 = vmatpush1.msra.mxu0 %v1846
      %2787 = vmatprep.subr.mxu0 %v1851
      %2788 = vmatpush1.msra.mxu0 %v1850
      %2789 = vmatprep.subr.mxu0 %v1855
      %2790 = vmatpush1.msra.mxu0 %v1854
      %2791 = vmatprep.subr.mxu0 %v1859
      %2792 = vmatpush1.msra.mxu0 %v1858
      %2793 = vmatprep.subr.mxu0 %v1863
      %2794 = vmatpush1.msra.mxu0 %v1862
      %2795 = vmatprep.subr.mxu0 %v1867
      %2796 = vmatpush1.msra.mxu0 %v1866
      %2797 = vmatprep.subr.mxu0 %v1871
      %2798 = vmatpush1.msra.mxu0 %v1870
      %2799 = vmatprep.subr.mxu0 %v1875
      %2800 = vmatpush1.msra.mxu0 %v1874
      %2801 = vmatprep.subr.mxu0 %v1879
      %2802 = vmatpush1.msra.mxu0 %v1878
      %2803 = vmatprep.subr.mxu0 %v1883
      %2804 = vmatpush1.msra.mxu0 %v1882
      %2805 = vmatprep.subr.mxu0 %v1887
      %2806 = vmatpush1.msra.mxu0 %v1886
      %2807 = vmatprep.subr.mxu0 %v1891
      %2808 = vmatpush1.msra.mxu0 %v1890
      %2809 = vmatprep.subr.mxu0 %v1895
      %2810 = vmatpush1.msra.mxu0 %v1894
      %2811 = vmatprep.subr.mxu0 %v1899
      %2812 = vmatpush1.msra.mxu0 %v1898
      %2813 = vmatprep.subr.mxu0 %v1903
      %2814 = vmatpush1.msra.mxu0 %v1902
      %2815 = vmatprep.subr.mxu0 %v1907
      %2816 = vmatpush1.msra.mxu0 %v1906
      %2817 = vmatprep.subr.mxu0 %v1911
      %2818 = vmatpush1.msra.mxu0 %v1910
      %2819 = vmatprep.subr.mxu0 %v1915
      %2820 = vmatpush1.msra.mxu0 %v1914
      %2821 = vmatprep.subr.mxu0 %v1919
      %2822 = vmatpush1.msra.mxu0 %v1918
      %2823 = vmatprep.subr.mxu0 %v1923
      %2824 = vmatpush1.msra.mxu0 %v1922
      %2825 = vmatprep.subr.mxu0 %v1927
      %2826 = vmatpush1.msra.mxu0 %v1926
      %2827 = vmatprep.subr.mxu0 %v1931
      %2828 = vmatpush1.msra.mxu0 %v1930
      %2829 = vmatprep.subr.mxu0 %v1935
      %2830 = vmatpush1.msra.mxu0 %v1934
      %2831 = vmatprep.subr.mxu0 %v1939
      %2832 = vmatpush1.msra.mxu0 %v1938
      %2833 = vmatprep.subr.mxu0 %v1943
      %2834 = vmatpush1.msra.mxu0 %v1942
      %2835 = vmatprep.mubr.f32.mxu0 %v1813
      %2836 = vmatmul.mubr.f32.gmra.mrb[0].mxu0 %v1812
      %v2837 = vpop.f32.mrb[0].mxu0
      %v2838 = vadd.f32 %v2625, %v2837
      %v2839 = vpop.f32.mrb[0].mxu0
      %v2840 = vadd.f32 %v2627, %v2839
      %2841 = vdwg.mxu0
      %2842 = vmatprep.subr.mxu0 %v1947
      %2843 = vmatpush1.msra.mxu0 %v1946
      %2844 = vmatprep.subr.mxu0 %v1951
      %2845 = vmatpush1.msra.mxu0 %v1950
      %2846 = vmatprep.subr.mxu0 %v1955
      %2847 = vmatpush1.msra.mxu0 %v1954
      %2848 = vmatprep.subr.mxu0 %v1959
      %2849 = vmatpush1.msra.mxu0 %v1958
      %2850 = vmatprep.subr.mxu0 %v1963
      %2851 = vmatpush1.msra.mxu0 %v1962
      %2852 = vmatprep.subr.mxu0 %v1967
      %2853 = vmatpush1.msra.mxu0 %v1966
      %2854 = vmatprep.subr.mxu0 %v1971
      %2855 = vmatpush1.msra.mxu0 %v1970
      %2856 = vmatprep.subr.mxu0 %v1975
      %2857 = vmatpush1.msra.mxu0 %v1974
      %2858 = vmatprep.subr.mxu0 %v1979
      %2859 = vmatpush1.msra.mxu0 %v1978
      %2860 = vmatprep.subr.mxu0 %v1983
      %2861 = vmatpush1.msra.mxu0 %v1982
      %2862 = vmatprep.subr.mxu0 %v1987
      %2863 = vmatpush1.msra.mxu0 %v1986
      %2864 = vmatprep.subr.mxu0 %v1991
      %2865 = vmatpush1.msra.mxu0 %v1990
      %2866 = vmatprep.subr.mxu0 %v1995
      %2867 = vmatpush1.msra.mxu0 %v1994
      %2868 = vmatprep.subr.mxu0 %v1999
      %2869 = vmatpush1.msra.mxu0 %v1998
      %2870 = vmatprep.subr.mxu0 %v2003
      %2871 = vmatpush1.msra.mxu0 %v2002
      %2872 = vmatprep.subr.mxu0 %v2007
      %2873 = vmatpush1.msra.mxu0 %v2006
      %2874 = vmatprep.subr.mxu0 %v2011
      %2875 = vmatpush1.msra.mxu0 %v2010
      %2876 = vmatprep.subr.mxu0 %v2015
      %2877 = vmatpush1.msra.mxu0 %v2014
      %2878 = vmatprep.subr.mxu0 %v2019
      %2879 = vmatpush1.msra.mxu0 %v2018
      %2880 = vmatprep.subr.mxu0 %v2023
      %2881 = vmatpush1.msra.mxu0 %v2022
      %2882 = vmatprep.subr.mxu0 %v2027
      %2883 = vmatpush1.msra.mxu0 %v2026
      %2884 = vmatprep.subr.mxu0 %v2031
      %2885 = vmatpush1.msra.mxu0 %v2030
      %2886 = vmatprep.subr.mxu0 %v2035
      %2887 = vmatpush1.msra.mxu0 %v2034
      %2888 = vmatprep.subr.mxu0 %v2039
      %2889 = vmatpush1.msra.mxu0 %v2038
      %2890 = vmatprep.subr.mxu0 %v2043
      %2891 = vmatpush1.msra.mxu0 %v2042
      %2892 = vmatprep.subr.mxu0 %v2047
      %2893 = vmatpush1.msra.mxu0 %v2046
      %2894 = vmatprep.subr.mxu0 %v2051
      %2895 = vmatpush1.msra.mxu0 %v2050
      %2896 = vmatprep.subr.mxu0 %v2055
      %2897 = vmatpush1.msra.mxu0 %v2054
      %2898 = vmatprep.subr.mxu0 %v2059
      %2899 = vmatpush1.msra.mxu0 %v2058
      %2900 = vmatprep.subr.mxu0 %v2063
      %2901 = vmatpush1.msra.mxu0 %v2062
      %2902 = vmatprep.subr.mxu0 %v2067
      %2903 = vmatpush1.msra.mxu0 %v2066
      %2904 = vmatprep.subr.mxu0 %v2071
      %2905 = vmatpush1.msra.mxu0 %v2070
      %2906 = vmatprep.mubr.f32.mxu0 %v1815
      %2907 = vmatmul.mubr.f32.gmra.mrb[0].mxu0 %v1814
      %v2908 = vpop.f32.mrb[0].mxu0
      %v2909 = vadd.f32 %v2838, %v2908
      %v2910 = vpop.f32.mrb[0].mxu0
      %v2911 = vadd.f32 %v2840, %v2910
      %2912 = vdwg.mxu0
      %v2913 = vld [vmem:[%s4] sm:$0xf]
      %v2915 = vlaneseq
      %v2916 = vshrl.u32 %v2915, 7
      %v2917 = vsub.s32 0, %v2916
      %v2918 = vrot.slane %v2913, %v2917
      %v2919 = vlaneseq
      %v2920 = vshrl.u32 %v2919, 7
      %v2921 = vsub.s32 1, %v2920
      %v2922 = vrot.slane %v2913, %v2921
      %v2923 = vlaneseq
      %v2924 = vshrl.u32 %v2923, 7
      %v2925 = vsub.s32 2, %v2924
      %v2926 = vrot.slane %v2913, %v2925
      %v2927 = vlaneseq
      %v2928 = vshrl.u32 %v2927, 7
      %v2929 = vsub.s32 3, %v2928
      %v2930 = vrot.slane %v2913, %v2929
      %v2935 = vadd.f32 %v2767, %v2918
      %v2936 = vadd.f32 %v2769, %v2922
      %v2937 = vadd.f32 %v2909, %v2926
      %v2938 = vadd.f32 %v2911, %v2930
      %v2939 = vmax.f32 %v2935, 0.0
      %v2940 = vmax.f32 %v2936, 0.0
      %v2941 = vmax.f32 %v2937, 0.0
      %v2942 = vmax.f32 %v2938, 0.0
      %v2947 = vcombine.low %v2939, %v2940
      %v2948 = vcombine.high %v2939, %v2940
      %v2949 = vcombine.low %v2941, %v2942
      %v2950 = vcombine.high %v2941, %v2942
      %v2952 = vunpack.c.l.s4 1966171168
      %v2953 = vunpack.c.0.s8 %v2952
      %v2954 = vlaneseq
      %v2955 = vshrl.u32 %v2954, 7
      %v2956 = vsub.s32 %v2953, %v2955
      %v2957 = vrot.slane %v2947, %v2956
      %v2959 = vunpack.c.l.s4 1966171168
      %v2960 = vunpack.c.0.s8 %v2959
      %v2961 = vlaneseq
      %v2962 = vshrl.u32 %v2961, 7
      %v2963 = vsub.s32 %v2960, %v2962
      %v2964 = vrot.slane %v2948, %v2963
      %v2966 = vunpack.c.l.s4 1966171168
      %v2967 = vunpack.c.0.s8 %v2966
      %v2968 = vlaneseq
      %v2969 = vshrl.u32 %v2968, 7
      %v2970 = vsub.s32 %v2967, %v2969
      %v2971 = vrot.slane %v2949, %v2970
      %v2973 = vunpack.c.l.s4 1966171168
      %v2974 = vunpack.c.0.s8 %v2973
      %v2975 = vlaneseq
      %v2976 = vshrl.u32 %v2975, 7
      %v2977 = vsub.s32 %v2974, %v2976
      %v2978 = vrot.slane %v2950, %v2977
      %v2979 = vcombine.low %v2957, %v2971
      %v2980 = vcombine.high %v2957, %v2971
      %v2981 = vcombine.low %v2964, %v2978
      %v2982 = vcombine.high %v2964, %v2978
      %v2984 = vunpack.c.l.s4 1966171168
      %v2985 = vunpack.c.0.s8 %v2984
      %v2986 = vlaneseq
      %v2987 = vshrl.u32 %v2986, 7
      %v2988 = vsub.s32 %v2985, %v2987
      %v2989 = vrot.slane %v2979, %v2988
      %v2991 = vunpack.c.l.s4 1966171168
      %v2992 = vunpack.c.0.s8 %v2991
      %v2993 = vlaneseq
      %v2994 = vshrl.u32 %v2993, 7
      %v2995 = vsub.s32 %v2992, %v2994
      %v2996 = vrot.slane %v2981, %v2995
      %v2998 = vunpack.c.l.s4 1966171168
      %v2999 = vunpack.c.0.s8 %v2998
      %v3000 = vlaneseq
      %v3001 = vshrl.u32 %v3000, 7
      %v3002 = vsub.s32 %v2999, %v3001
      %v3003 = vrot.slane %v2980, %v3002
      %v3005 = vunpack.c.l.s4 1966171168
      %v3006 = vunpack.c.0.s8 %v3005
      %v3007 = vlaneseq
      %v3008 = vshrl.u32 %v3007, 7
      %v3009 = vsub.s32 %v3006, %v3008
      %v3010 = vrot.slane %v2982, %v3009
      %v3011 = vcombine.high %v2989, %v2989
      %v3012 = vcombine.high %v2996, %v2996
      %v3013 = vcombine.high %v3003, %v3003
      %s3014 = scalar_lea.vmem %s3, 4096
      %v3015 = vld [vmem:[%s3014] sm:$0xff]
      %v3016 = vld [vmem:[%s3014 + $0x8] sm:$0xff]
      %v3017 = vld [vmem:[%s3014 + $0x10] sm:$0xff]
      %v3018 = vld [vmem:[%s3014 + $0x18] sm:$0xff]
      %v3019 = vld [vmem:[%s3014 + $0x20] sm:$0xff]
      %v3020 = vld [vmem:[%s3014 + $0x28] sm:$0xff]
      %v3021 = vld [vmem:[%s3014 + $0x30] sm:$0xff]
      %v3022 = vld [vmem:[%s3014 + $0x38] sm:$0xff]
      %v3023 = vld [vmem:[%s3014 + $0x40] sm:$0xff]
      %v3024 = vld [vmem:[%s3014 + $0x48] sm:$0xff]
      %v3025 = vld [vmem:[%s3014 + $0x50] sm:$0xff]
      %v3026 = vld [vmem:[%s3014 + $0x58] sm:$0xff]
      %v3027 = vld [vmem:[%s3014 + $0x60] sm:$0xff]
      %v3028 = vld [vmem:[%s3014 + $0x68] sm:$0xff]
      %v3029 = vld [vmem:[%s3014 + $0x70] sm:$0xff]
      %v3030 = vld [vmem:[%s3014 + $0x78] sm:$0xff]
      %v3031 = vld [vmem:[%s3014 + $0x80] sm:$0xff]
      %v3032 = vld [vmem:[%s3014 + $0x88] sm:$0xff]
      %v3033 = vld [vmem:[%s3014 + $0x90] sm:$0xff]
      %v3034 = vld [vmem:[%s3014 + $0x98] sm:$0xff]
      %v3035 = vld [vmem:[%s3014 + $0xa0] sm:$0xff]
      %v3036 = vld [vmem:[%s3014 + $0xa8] sm:$0xff]
      %v3037 = vld [vmem:[%s3014 + $0xb0] sm:$0xff]
      %v3038 = vld [vmem:[%s3014 + $0xb8] sm:$0xff]
      %v3039 = vld [vmem:[%s3014 + $0xc0] sm:$0xff]
      %v3040 = vld [vmem:[%s3014 + $0xc8] sm:$0xff]
      %v3041 = vld [vmem:[%s3014 + $0xd0] sm:$0xff]
      %v3042 = vld [vmem:[%s3014 + $0xd8] sm:$0xff]
      %v3043 = vld [vmem:[%s3014 + $0xe0] sm:$0xff]
      %v3044 = vld [vmem:[%s3014 + $0xe8] sm:$0xff]
      %v3045 = vld [vmem:[%s3014 + $0xf0] sm:$0xff]
      %v3046 = vld [vmem:[%s3014 + $0xf8] sm:$0xff]
      %v3047 = vld [vmem:[%s3014 + $0x100] sm:$0xff]
      %v3048 = vld [vmem:[%s3014 + $0x108] sm:$0xff]
      %v3049 = vld [vmem:[%s3014 + $0x110] sm:$0xff]
      %v3050 = vld [vmem:[%s3014 + $0x118] sm:$0xff]
      %v3051 = vld [vmem:[%s3014 + $0x120] sm:$0xff]
      %v3052 = vld [vmem:[%s3014 + $0x128] sm:$0xff]
      %v3053 = vld [vmem:[%s3014 + $0x130] sm:$0xff]
      %v3054 = vld [vmem:[%s3014 + $0x138] sm:$0xff]
      %v3055 = vld [vmem:[%s3014 + $0x140] sm:$0xff]
      %v3056 = vld [vmem:[%s3014 + $0x148] sm:$0xff]
      %v3057 = vld [vmem:[%s3014 + $0x150] sm:$0xff]
      %v3058 = vld [vmem:[%s3014 + $0x158] sm:$0xff]
      %v3059 = vld [vmem:[%s3014 + $0x160] sm:$0xff]
      %v3060 = vld [vmem:[%s3014 + $0x168] sm:$0xff]
      %v3061 = vld [vmem:[%s3014 + $0x170] sm:$0xff]
      %v3062 = vld [vmem:[%s3014 + $0x178] sm:$0xff]
      %v3063 = vld [vmem:[%s3014 + $0x180] sm:$0xff]
      %v3064 = vld [vmem:[%s3014 + $0x188] sm:$0xff]
      %v3065 = vld [vmem:[%s3014 + $0x190] sm:$0xff]
      %v3066 = vld [vmem:[%s3014 + $0x198] sm:$0xff]
      %v3067 = vld [vmem:[%s3014 + $0x1a0] sm:$0xff]
      %v3068 = vld [vmem:[%s3014 + $0x1a8] sm:$0xff]
      %v3069 = vld [vmem:[%s3014 + $0x1b0] sm:$0xff]
      %v3070 = vld [vmem:[%s3014 + $0x1b8] sm:$0xff]
      %v3071 = vld [vmem:[%s3014 + $0x1c0] sm:$0xff]
      %v3072 = vld [vmem:[%s3014 + $0x1c8] sm:$0xff]
      %v3073 = vld [vmem:[%s3014 + $0x1d0] sm:$0xff]
      %v3074 = vld [vmem:[%s3014 + $0x1d8] sm:$0xff]
      %v3075 = vld [vmem:[%s3014 + $0x1e0] sm:$0xff]
      %v3076 = vld [vmem:[%s3014 + $0x1e8] sm:$0xff]
      %v3077 = vld [vmem:[%s3014 + $0x1f0] sm:$0xff]
      %v3078 = vld [vmem:[%s3014 + $0x1f8] sm:$0xff]
      %v3079 = vld [vmem:[%s3014 + $0x200] sm:$0xff]
      %v3080 = vld [vmem:[%s3014 + $0x208] sm:$0xff]
      %v3081 = vld [vmem:[%s3014 + $0x210] sm:$0xff]
      %v3082 = vld [vmem:[%s3014 + $0x218] sm:$0xff]
      %v3083 = vld [vmem:[%s3014 + $0x220] sm:$0xff]
      %v3084 = vld [vmem:[%s3014 + $0x228] sm:$0xff]
      %v3085 = vld [vmem:[%s3014 + $0x230] sm:$0xff]
      %v3086 = vld [vmem:[%s3014 + $0x238] sm:$0xff]
      %v3087 = vld [vmem:[%s3014 + $0x240] sm:$0xff]
      %v3088 = vld [vmem:[%s3014 + $0x248] sm:$0xff]
      %v3089 = vld [vmem:[%s3014 + $0x250] sm:$0xff]
      %v3090 = vld [vmem:[%s3014 + $0x258] sm:$0xff]
      %v3091 = vld [vmem:[%s3014 + $0x260] sm:$0xff]
      %v3092 = vld [vmem:[%s3014 + $0x268] sm:$0xff]
      %v3093 = vld [vmem:[%s3014 + $0x270] sm:$0xff]
      %v3094 = vld [vmem:[%s3014 + $0x278] sm:$0xff]
      %v3095 = vld [vmem:[%s3014 + $0x280] sm:$0xff]
      %v3096 = vld [vmem:[%s3014 + $0x288] sm:$0xff]
      %v3097 = vld [vmem:[%s3014 + $0x290] sm:$0xff]
      %v3098 = vld [vmem:[%s3014 + $0x298] sm:$0xff]
      %v3099 = vld [vmem:[%s3014 + $0x2a0] sm:$0xff]
      %v3100 = vld [vmem:[%s3014 + $0x2a8] sm:$0xff]
      %v3101 = vld [vmem:[%s3014 + $0x2b0] sm:$0xff]
      %v3102 = vld [vmem:[%s3014 + $0x2b8] sm:$0xff]
      %v3103 = vld [vmem:[%s3014 + $0x2c0] sm:$0xff]
      %v3104 = vld [vmem:[%s3014 + $0x2c8] sm:$0xff]
      %v3105 = vld [vmem:[%s3014 + $0x2d0] sm:$0xff]
      %v3106 = vld [vmem:[%s3014 + $0x2d8] sm:$0xff]
      %v3107 = vld [vmem:[%s3014 + $0x2e0] sm:$0xff]
      %v3108 = vld [vmem:[%s3014 + $0x2e8] sm:$0xff]
      %v3109 = vld [vmem:[%s3014 + $0x2f0] sm:$0xff]
      %v3110 = vld [vmem:[%s3014 + $0x2f8] sm:$0xff]
      %v3111 = vld [vmem:[%s3014 + $0x300] sm:$0xff]
      %v3112 = vld [vmem:[%s3014 + $0x308] sm:$0xff]
      %v3113 = vld [vmem:[%s3014 + $0x310] sm:$0xff]
      %v3114 = vld [vmem:[%s3014 + $0x318] sm:$0xff]
      %v3115 = vld [vmem:[%s3014 + $0x320] sm:$0xff]
      %v3116 = vld [vmem:[%s3014 + $0x328] sm:$0xff]
      %v3117 = vld [vmem:[%s3014 + $0x330] sm:$0xff]
      %v3118 = vld [vmem:[%s3014 + $0x338] sm:$0xff]
      %v3119 = vld [vmem:[%s3014 + $0x340] sm:$0xff]
      %v3120 = vld [vmem:[%s3014 + $0x348] sm:$0xff]
      %v3121 = vld [vmem:[%s3014 + $0x350] sm:$0xff]
      %v3122 = vld [vmem:[%s3014 + $0x358] sm:$0xff]
      %v3123 = vld [vmem:[%s3014 + $0x360] sm:$0xff]
      %v3124 = vld [vmem:[%s3014 + $0x368] sm:$0xff]
      %v3125 = vld [vmem:[%s3014 + $0x370] sm:$0xff]
      %v3126 = vld [vmem:[%s3014 + $0x378] sm:$0xff]
      %v3127 = vld [vmem:[%s3014 + $0x380] sm:$0xff]
      %v3128 = vld [vmem:[%s3014 + $0x388] sm:$0xff]
      %v3129 = vld [vmem:[%s3014 + $0x390] sm:$0xff]
      %v3130 = vld [vmem:[%s3014 + $0x398] sm:$0xff]
      %v3131 = vld [vmem:[%s3014 + $0x3a0] sm:$0xff]
      %v3132 = vld [vmem:[%s3014 + $0x3a8] sm:$0xff]
      %v3133 = vld [vmem:[%s3014 + $0x3b0] sm:$0xff]
      %v3134 = vld [vmem:[%s3014 + $0x3b8] sm:$0xff]
      %v3135 = vld [vmem:[%s3014 + $0x3c0] sm:$0xff]
      %v3136 = vld [vmem:[%s3014 + $0x3c8] sm:$0xff]
      %v3137 = vld [vmem:[%s3014 + $0x3d0] sm:$0xff]
      %v3138 = vld [vmem:[%s3014 + $0x3d8] sm:$0xff]
      %v3139 = vld [vmem:[%s3014 + $0x3e0] sm:$0xff]
      %v3140 = vld [vmem:[%s3014 + $0x3e8] sm:$0xff]
      %v3141 = vld [vmem:[%s3014 + $0x3f0] sm:$0xff]
      %v3142 = vld [vmem:[%s3014 + $0x3f8] sm:$0xff]
      %v3143 = vld [vmem:[%s3014 + $0x400] sm:$0xff]
      %v3144 = vld [vmem:[%s3014 + $0x408] sm:$0xff]
      %v3145 = vld [vmem:[%s3014 + $0x410] sm:$0xff]
      %v3146 = vld [vmem:[%s3014 + $0x418] sm:$0xff]
      %v3147 = vld [vmem:[%s3014 + $0x420] sm:$0xff]
      %v3148 = vld [vmem:[%s3014 + $0x428] sm:$0xff]
      %v3149 = vld [vmem:[%s3014 + $0x430] sm:$0xff]
      %v3150 = vld [vmem:[%s3014 + $0x438] sm:$0xff]
      %v3151 = vld [vmem:[%s3014 + $0x440] sm:$0xff]
      %v3152 = vld [vmem:[%s3014 + $0x448] sm:$0xff]
      %v3153 = vld [vmem:[%s3014 + $0x450] sm:$0xff]
      %v3154 = vld [vmem:[%s3014 + $0x458] sm:$0xff]
      %v3155 = vld [vmem:[%s3014 + $0x460] sm:$0xff]
      %v3156 = vld [vmem:[%s3014 + $0x468] sm:$0xff]
      %v3157 = vld [vmem:[%s3014 + $0x470] sm:$0xff]
      %v3158 = vld [vmem:[%s3014 + $0x478] sm:$0xff]
      %v3159 = vld [vmem:[%s3014 + $0x480] sm:$0xff]
      %v3160 = vld [vmem:[%s3014 + $0x488] sm:$0xff]
      %v3161 = vld [vmem:[%s3014 + $0x490] sm:$0xff]
      %v3162 = vld [vmem:[%s3014 + $0x498] sm:$0xff]
      %v3163 = vld [vmem:[%s3014 + $0x4a0] sm:$0xff]
      %v3164 = vld [vmem:[%s3014 + $0x4a8] sm:$0xff]
      %v3165 = vld [vmem:[%s3014 + $0x4b0] sm:$0xff]
      %v3166 = vld [vmem:[%s3014 + $0x4b8] sm:$0xff]
      %v3167 = vld [vmem:[%s3014 + $0x4c0] sm:$0xff]
      %v3168 = vld [vmem:[%s3014 + $0x4c8] sm:$0xff]
      %v3169 = vld [vmem:[%s3014 + $0x4d0] sm:$0xff]
      %v3170 = vld [vmem:[%s3014 + $0x4d8] sm:$0xff]
      %v3171 = vld [vmem:[%s3014 + $0x4e0] sm:$0xff]
      %v3172 = vld [vmem:[%s3014 + $0x4e8] sm:$0xff]
      %v3173 = vld [vmem:[%s3014 + $0x4f0] sm:$0xff]
      %v3174 = vld [vmem:[%s3014 + $0x4f8] sm:$0xff]
      %v3175 = vld [vmem:[%s3014 + $0x500] sm:$0xff]
      %v3176 = vld [vmem:[%s3014 + $0x508] sm:$0xff]
      %v3177 = vld [vmem:[%s3014 + $0x510] sm:$0xff]
      %v3178 = vld [vmem:[%s3014 + $0x518] sm:$0xff]
      %v3179 = vld [vmem:[%s3014 + $0x520] sm:$0xff]
      %v3180 = vld [vmem:[%s3014 + $0x528] sm:$0xff]
      %v3181 = vld [vmem:[%s3014 + $0x530] sm:$0xff]
      %v3182 = vld [vmem:[%s3014 + $0x538] sm:$0xff]
      %v3183 = vld [vmem:[%s3014 + $0x540] sm:$0xff]
      %v3184 = vld [vmem:[%s3014 + $0x548] sm:$0xff]
      %v3185 = vld [vmem:[%s3014 + $0x550] sm:$0xff]
      %v3186 = vld [vmem:[%s3014 + $0x558] sm:$0xff]
      %v3187 = vld [vmem:[%s3014 + $0x560] sm:$0xff]
      %v3188 = vld [vmem:[%s3014 + $0x568] sm:$0xff]
      %v3189 = vld [vmem:[%s3014 + $0x570] sm:$0xff]
      %v3190 = vld [vmem:[%s3014 + $0x578] sm:$0xff]
      %v3191 = vld [vmem:[%s3014 + $0x580] sm:$0xff]
      %v3192 = vld [vmem:[%s3014 + $0x588] sm:$0xff]
      %v3193 = vld [vmem:[%s3014 + $0x590] sm:$0xff]
      %v3194 = vld [vmem:[%s3014 + $0x598] sm:$0xff]
      %v3195 = vld [vmem:[%s3014 + $0x5a0] sm:$0xff]
      %v3196 = vld [vmem:[%s3014 + $0x5a8] sm:$0xff]
      %v3197 = vld [vmem:[%s3014 + $0x5b0] sm:$0xff]
      %v3198 = vld [vmem:[%s3014 + $0x5b8] sm:$0xff]
      %v3199 = vld [vmem:[%s3014 + $0x5c0] sm:$0xff]
      %v3200 = vld [vmem:[%s3014 + $0x5c8] sm:$0xff]
      %v3201 = vld [vmem:[%s3014 + $0x5d0] sm:$0xff]
      %v3202 = vld [vmem:[%s3014 + $0x5d8] sm:$0xff]
      %v3203 = vld [vmem:[%s3014 + $0x5e0] sm:$0xff]
      %v3204 = vld [vmem:[%s3014 + $0x5e8] sm:$0xff]
      %v3205 = vld [vmem:[%s3014 + $0x5f0] sm:$0xff]
      %v3206 = vld [vmem:[%s3014 + $0x5f8] sm:$0xff]
      %v3207 = vld [vmem:[%s3014 + $0x600] sm:$0xff]
      %v3208 = vld [vmem:[%s3014 + $0x608] sm:$0xff]
      %v3209 = vld [vmem:[%s3014 + $0x610] sm:$0xff]
      %v3210 = vld [vmem:[%s3014 + $0x618] sm:$0xff]
      %v3211 = vld [vmem:[%s3014 + $0x620] sm:$0xff]
      %v3212 = vld [vmem:[%s3014 + $0x628] sm:$0xff]
      %v3213 = vld [vmem:[%s3014 + $0x630] sm:$0xff]
      %v3214 = vld [vmem:[%s3014 + $0x638] sm:$0xff]
      %v3215 = vld [vmem:[%s3014 + $0x640] sm:$0xff]
      %v3216 = vld [vmem:[%s3014 + $0x648] sm:$0xff]
      %v3217 = vld [vmem:[%s3014 + $0x650] sm:$0xff]
      %v3218 = vld [vmem:[%s3014 + $0x658] sm:$0xff]
      %v3219 = vld [vmem:[%s3014 + $0x660] sm:$0xff]
      %v3220 = vld [vmem:[%s3014 + $0x668] sm:$0xff]
      %v3221 = vld [vmem:[%s3014 + $0x670] sm:$0xff]
      %v3222 = vld [vmem:[%s3014 + $0x678] sm:$0xff]
      %v3223 = vld [vmem:[%s3014 + $0x680] sm:$0xff]
      %v3224 = vld [vmem:[%s3014 + $0x688] sm:$0xff]
      %v3225 = vld [vmem:[%s3014 + $0x690] sm:$0xff]
      %v3226 = vld [vmem:[%s3014 + $0x698] sm:$0xff]
      %v3227 = vld [vmem:[%s3014 + $0x6a0] sm:$0xff]
      %v3228 = vld [vmem:[%s3014 + $0x6a8] sm:$0xff]
      %v3229 = vld [vmem:[%s3014 + $0x6b0] sm:$0xff]
      %v3230 = vld [vmem:[%s3014 + $0x6b8] sm:$0xff]
      %v3231 = vld [vmem:[%s3014 + $0x6c0] sm:$0xff]
      %v3232 = vld [vmem:[%s3014 + $0x6c8] sm:$0xff]
      %v3233 = vld [vmem:[%s3014 + $0x6d0] sm:$0xff]
      %v3234 = vld [vmem:[%s3014 + $0x6d8] sm:$0xff]
      %v3235 = vld [vmem:[%s3014 + $0x6e0] sm:$0xff]
      %v3236 = vld [vmem:[%s3014 + $0x6e8] sm:$0xff]
      %v3237 = vld [vmem:[%s3014 + $0x6f0] sm:$0xff]
      %v3238 = vld [vmem:[%s3014 + $0x6f8] sm:$0xff]
      %v3239 = vld [vmem:[%s3014 + $0x700] sm:$0xff]
      %v3240 = vld [vmem:[%s3014 + $0x708] sm:$0xff]
      %v3241 = vld [vmem:[%s3014 + $0x710] sm:$0xff]
      %v3242 = vld [vmem:[%s3014 + $0x718] sm:$0xff]
      %v3243 = vld [vmem:[%s3014 + $0x720] sm:$0xff]
      %v3244 = vld [vmem:[%s3014 + $0x728] sm:$0xff]
      %v3245 = vld [vmem:[%s3014 + $0x730] sm:$0xff]
      %v3246 = vld [vmem:[%s3014 + $0x738] sm:$0xff]
      %v3247 = vld [vmem:[%s3014 + $0x740] sm:$0xff]
      %v3248 = vld [vmem:[%s3014 + $0x748] sm:$0xff]
      %v3249 = vld [vmem:[%s3014 + $0x750] sm:$0xff]
      %v3250 = vld [vmem:[%s3014 + $0x758] sm:$0xff]
      %v3251 = vld [vmem:[%s3014 + $0x760] sm:$0xff]
      %v3252 = vld [vmem:[%s3014 + $0x768] sm:$0xff]
      %v3253 = vld [vmem:[%s3014 + $0x770] sm:$0xff]
      %v3254 = vld [vmem:[%s3014 + $0x778] sm:$0xff]
      %v3255 = vld [vmem:[%s3014 + $0x780] sm:$0xff]
      %v3256 = vld [vmem:[%s3014 + $0x788] sm:$0xff]
      %v3257 = vld [vmem:[%s3014 + $0x790] sm:$0xff]
      %v3258 = vld [vmem:[%s3014 + $0x798] sm:$0xff]
      %v3259 = vld [vmem:[%s3014 + $0x7a0] sm:$0xff]
      %v3260 = vld [vmem:[%s3014 + $0x7a8] sm:$0xff]
      %v3261 = vld [vmem:[%s3014 + $0x7b0] sm:$0xff]
      %v3262 = vld [vmem:[%s3014 + $0x7b8] sm:$0xff]
      %v3263 = vld [vmem:[%s3014 + $0x7c0] sm:$0xff]
      %v3264 = vld [vmem:[%s3014 + $0x7c8] sm:$0xff]
      %v3265 = vld [vmem:[%s3014 + $0x7d0] sm:$0xff]
      %v3266 = vld [vmem:[%s3014 + $0x7d8] sm:$0xff]
      %v3267 = vld [vmem:[%s3014 + $0x7e0] sm:$0xff]
      %v3268 = vld [vmem:[%s3014 + $0x7e8] sm:$0xff]
      %v3269 = vld [vmem:[%s3014 + $0x7f0] sm:$0xff]
      %v3270 = vld [vmem:[%s3014 + $0x7f8] sm:$0xff]
      %v3271 = vld [vmem:[#allocation2] sm:$0xfc]
      %v3272 = vld [vmem:[#allocation2 + $0x8] sm:$0xfc]
      %v3273 = vld [vmem:[#allocation2 + $0x10] sm:$0xfc]
      %v3274 = vld [vmem:[#allocation2 + $0x18] sm:$0xfc]
      %v3275 = vld [vmem:[#allocation2 + $0x20] sm:$0x1]
      %v3276 = vld [vmem:[#allocation2 + $0x28] sm:$0x1]
      %v3277 = vld [vmem:[#allocation2 + $0x30] sm:$0x1]
      %v3278 = vld [vmem:[#allocation2 + $0x38] sm:$0x1]
      %s3279 = scalar_lea.vmem %s3, 6144
      %v3280 = vld [vmem:[%s3279] sm:$0xff]
      %v3281 = vld [vmem:[%s3279 + $0x8] sm:$0xff]
      %v3282 = vld [vmem:[%s3279 + $0x10] sm:$0xff]
      %v3283 = vld [vmem:[%s3279 + $0x18] sm:$0xff]
      %v3284 = vld [vmem:[%s3279 + $0x20] sm:$0xff]
      %v3285 = vld [vmem:[%s3279 + $0x28] sm:$0xff]
      %v3286 = vld [vmem:[%s3279 + $0x30] sm:$0xff]
      %v3287 = vld [vmem:[%s3279 + $0x38] sm:$0xff]
      %v3288 = vld [vmem:[%s3279 + $0x40] sm:$0xff]
      %v3289 = vld [vmem:[%s3279 + $0x48] sm:$0xff]
      %v3290 = vld [vmem:[%s3279 + $0x50] sm:$0xff]
      %v3291 = vld [vmem:[%s3279 + $0x58] sm:$0xff]
      %v3292 = vld [vmem:[%s3279 + $0x60] sm:$0xff]
      %v3293 = vld [vmem:[%s3279 + $0x68] sm:$0xff]
      %v3294 = vld [vmem:[%s3279 + $0x70] sm:$0xff]
      %v3295 = vld [vmem:[%s3279 + $0x78] sm:$0xff]
      %v3296 = vld [vmem:[%s3279 + $0x80] sm:$0xff]
      %v3297 = vld [vmem:[%s3279 + $0x88] sm:$0xff]
      %v3298 = vld [vmem:[%s3279 + $0x90] sm:$0xff]
      %v3299 = vld [vmem:[%s3279 + $0x98] sm:$0xff]
      %v3300 = vld [vmem:[%s3279 + $0xa0] sm:$0xff]
      %v3301 = vld [vmem:[%s3279 + $0xa8] sm:$0xff]
      %v3302 = vld [vmem:[%s3279 + $0xb0] sm:$0xff]
      %v3303 = vld [vmem:[%s3279 + $0xb8] sm:$0xff]
      %v3304 = vld [vmem:[%s3279 + $0xc0] sm:$0xff]
      %v3305 = vld [vmem:[%s3279 + $0xc8] sm:$0xff]
      %v3306 = vld [vmem:[%s3279 + $0xd0] sm:$0xff]
      %v3307 = vld [vmem:[%s3279 + $0xd8] sm:$0xff]
      %v3308 = vld [vmem:[%s3279 + $0xe0] sm:$0xff]
      %v3309 = vld [vmem:[%s3279 + $0xe8] sm:$0xff]
      %v3310 = vld [vmem:[%s3279 + $0xf0] sm:$0xff]
      %v3311 = vld [vmem:[%s3279 + $0xf8] sm:$0xff]
      %v3312 = vld [vmem:[%s3279 + $0x100] sm:$0xff]
      %v3313 = vld [vmem:[%s3279 + $0x108] sm:$0xff]
      %v3314 = vld [vmem:[%s3279 + $0x110] sm:$0xff]
      %v3315 = vld [vmem:[%s3279 + $0x118] sm:$0xff]
      %v3316 = vld [vmem:[%s3279 + $0x120] sm:$0xff]
      %v3317 = vld [vmem:[%s3279 + $0x128] sm:$0xff]
      %v3318 = vld [vmem:[%s3279 + $0x130] sm:$0xff]
      %v3319 = vld [vmem:[%s3279 + $0x138] sm:$0xff]
      %v3320 = vld [vmem:[%s3279 + $0x140] sm:$0xff]
      %v3321 = vld [vmem:[%s3279 + $0x148] sm:$0xff]
      %v3322 = vld [vmem:[%s3279 + $0x150] sm:$0xff]
      %v3323 = vld [vmem:[%s3279 + $0x158] sm:$0xff]
      %v3324 = vld [vmem:[%s3279 + $0x160] sm:$0xff]
      %v3325 = vld [vmem:[%s3279 + $0x168] sm:$0xff]
      %v3326 = vld [vmem:[%s3279 + $0x170] sm:$0xff]
      %v3327 = vld [vmem:[%s3279 + $0x178] sm:$0xff]
      %v3328 = vld [vmem:[%s3279 + $0x180] sm:$0xff]
      %v3329 = vld [vmem:[%s3279 + $0x188] sm:$0xff]
      %v3330 = vld [vmem:[%s3279 + $0x190] sm:$0xff]
      %v3331 = vld [vmem:[%s3279 + $0x198] sm:$0xff]
      %v3332 = vld [vmem:[%s3279 + $0x1a0] sm:$0xff]
      %v3333 = vld [vmem:[%s3279 + $0x1a8] sm:$0xff]
      %v3334 = vld [vmem:[%s3279 + $0x1b0] sm:$0xff]
      %v3335 = vld [vmem:[%s3279 + $0x1b8] sm:$0xff]
      %v3336 = vld [vmem:[%s3279 + $0x1c0] sm:$0xff]
      %v3337 = vld [vmem:[%s3279 + $0x1c8] sm:$0xff]
      %v3338 = vld [vmem:[%s3279 + $0x1d0] sm:$0xff]
      %v3339 = vld [vmem:[%s3279 + $0x1d8] sm:$0xff]
      %v3340 = vld [vmem:[%s3279 + $0x1e0] sm:$0xff]
      %v3341 = vld [vmem:[%s3279 + $0x1e8] sm:$0xff]
      %v3342 = vld [vmem:[%s3279 + $0x1f0] sm:$0xff]
      %v3343 = vld [vmem:[%s3279 + $0x1f8] sm:$0xff]
      %v3344 = vld [vmem:[%s3279 + $0x200] sm:$0xff]
      %v3345 = vld [vmem:[%s3279 + $0x208] sm:$0xff]
      %v3346 = vld [vmem:[%s3279 + $0x210] sm:$0xff]
      %v3347 = vld [vmem:[%s3279 + $0x218] sm:$0xff]
      %v3348 = vld [vmem:[%s3279 + $0x220] sm:$0xff]
      %v3349 = vld [vmem:[%s3279 + $0x228] sm:$0xff]
      %v3350 = vld [vmem:[%s3279 + $0x230] sm:$0xff]
      %v3351 = vld [vmem:[%s3279 + $0x238] sm:$0xff]
      %v3352 = vld [vmem:[%s3279 + $0x240] sm:$0xff]
      %v3353 = vld [vmem:[%s3279 + $0x248] sm:$0xff]
      %v3354 = vld [vmem:[%s3279 + $0x250] sm:$0xff]
      %v3355 = vld [vmem:[%s3279 + $0x258] sm:$0xff]
      %v3356 = vld [vmem:[%s3279 + $0x260] sm:$0xff]
      %v3357 = vld [vmem:[%s3279 + $0x268] sm:$0xff]
      %v3358 = vld [vmem:[%s3279 + $0x270] sm:$0xff]
      %v3359 = vld [vmem:[%s3279 + $0x278] sm:$0xff]
      %v3360 = vld [vmem:[%s3279 + $0x280] sm:$0xff]
      %v3361 = vld [vmem:[%s3279 + $0x288] sm:$0xff]
      %v3362 = vld [vmem:[%s3279 + $0x290] sm:$0xff]
      %v3363 = vld [vmem:[%s3279 + $0x298] sm:$0xff]
      %v3364 = vld [vmem:[%s3279 + $0x2a0] sm:$0xff]
      %v3365 = vld [vmem:[%s3279 + $0x2a8] sm:$0xff]
      %v3366 = vld [vmem:[%s3279 + $0x2b0] sm:$0xff]
      %v3367 = vld [vmem:[%s3279 + $0x2b8] sm:$0xff]
      %v3368 = vld [vmem:[%s3279 + $0x2c0] sm:$0xff]
      %v3369 = vld [vmem:[%s3279 + $0x2c8] sm:$0xff]
      %v3370 = vld [vmem:[%s3279 + $0x2d0] sm:$0xff]
      %v3371 = vld [vmem:[%s3279 + $0x2d8] sm:$0xff]
      %v3372 = vld [vmem:[%s3279 + $0x2e0] sm:$0xff]
      %v3373 = vld [vmem:[%s3279 + $0x2e8] sm:$0xff]
      %v3374 = vld [vmem:[%s3279 + $0x2f0] sm:$0xff]
      %v3375 = vld [vmem:[%s3279 + $0x2f8] sm:$0xff]
      %v3376 = vld [vmem:[%s3279 + $0x300] sm:$0xff]
      %v3377 = vld [vmem:[%s3279 + $0x308] sm:$0xff]
      %v3378 = vld [vmem:[%s3279 + $0x310] sm:$0xff]
      %v3379 = vld [vmem:[%s3279 + $0x318] sm:$0xff]
      %v3380 = vld [vmem:[%s3279 + $0x320] sm:$0xff]
      %v3381 = vld [vmem:[%s3279 + $0x328] sm:$0xff]
      %v3382 = vld [vmem:[%s3279 + $0x330] sm:$0xff]
      %v3383 = vld [vmem:[%s3279 + $0x338] sm:$0xff]
      %v3384 = vld [vmem:[%s3279 + $0x340] sm:$0xff]
      %v3385 = vld [vmem:[%s3279 + $0x348] sm:$0xff]
      %v3386 = vld [vmem:[%s3279 + $0x350] sm:$0xff]
      %v3387 = vld [vmem:[%s3279 + $0x358] sm:$0xff]
      %v3388 = vld [vmem:[%s3279 + $0x360] sm:$0xff]
      %v3389 = vld [vmem:[%s3279 + $0x368] sm:$0xff]
      %v3390 = vld [vmem:[%s3279 + $0x370] sm:$0xff]
      %v3391 = vld [vmem:[%s3279 + $0x378] sm:$0xff]
      %v3392 = vld [vmem:[%s3279 + $0x380] sm:$0xff]
      %v3393 = vld [vmem:[%s3279 + $0x388] sm:$0xff]
      %v3394 = vld [vmem:[%s3279 + $0x390] sm:$0xff]
      %v3395 = vld [vmem:[%s3279 + $0x398] sm:$0xff]
      %v3396 = vld [vmem:[%s3279 + $0x3a0] sm:$0xff]
      %v3397 = vld [vmem:[%s3279 + $0x3a8] sm:$0xff]
      %v3398 = vld [vmem:[%s3279 + $0x3b0] sm:$0xff]
      %v3399 = vld [vmem:[%s3279 + $0x3b8] sm:$0xff]
      %v3400 = vld [vmem:[%s3279 + $0x3c0] sm:$0xff]
      %v3401 = vld [vmem:[%s3279 + $0x3c8] sm:$0xff]
      %v3402 = vld [vmem:[%s3279 + $0x3d0] sm:$0xff]
      %v3403 = vld [vmem:[%s3279 + $0x3d8] sm:$0xff]
      %v3404 = vld [vmem:[%s3279 + $0x3e0] sm:$0xff]
      %v3405 = vld [vmem:[%s3279 + $0x3e8] sm:$0xff]
      %v3406 = vld [vmem:[%s3279 + $0x3f0] sm:$0xff]
      %v3407 = vld [vmem:[%s3279 + $0x3f8] sm:$0xff]
      %v3408 = vld [vmem:[%s3279 + $0x400] sm:$0xff]
      %v3409 = vld [vmem:[%s3279 + $0x408] sm:$0xff]
      %v3410 = vld [vmem:[%s3279 + $0x410] sm:$0xff]
      %v3411 = vld [vmem:[%s3279 + $0x418] sm:$0xff]
      %v3412 = vld [vmem:[%s3279 + $0x420] sm:$0xff]
      %v3413 = vld [vmem:[%s3279 + $0x428] sm:$0xff]
      %v3414 = vld [vmem:[%s3279 + $0x430] sm:$0xff]
      %v3415 = vld [vmem:[%s3279 + $0x438] sm:$0xff]
      %v3416 = vld [vmem:[%s3279 + $0x440] sm:$0xff]
      %v3417 = vld [vmem:[%s3279 + $0x448] sm:$0xff]
      %v3418 = vld [vmem:[%s3279 + $0x450] sm:$0xff]
      %v3419 = vld [vmem:[%s3279 + $0x458] sm:$0xff]
      %v3420 = vld [vmem:[%s3279 + $0x460] sm:$0xff]
      %v3421 = vld [vmem:[%s3279 + $0x468] sm:$0xff]
      %v3422 = vld [vmem:[%s3279 + $0x470] sm:$0xff]
      %v3423 = vld [vmem:[%s3279 + $0x478] sm:$0xff]
      %v3424 = vld [vmem:[%s3279 + $0x480] sm:$0xff]
      %v3425 = vld [vmem:[%s3279 + $0x488] sm:$0xff]
      %v3426 = vld [vmem:[%s3279 + $0x490] sm:$0xff]
      %v3427 = vld [vmem:[%s3279 + $0x498] sm:$0xff]
      %v3428 = vld [vmem:[%s3279 + $0x4a0] sm:$0xff]
      %v3429 = vld [vmem:[%s3279 + $0x4a8] sm:$0xff]
      %v3430 = vld [vmem:[%s3279 + $0x4b0] sm:$0xff]
      %v3431 = vld [vmem:[%s3279 + $0x4b8] sm:$0xff]
      %v3432 = vld [vmem:[%s3279 + $0x4c0] sm:$0xff]
      %v3433 = vld [vmem:[%s3279 + $0x4c8] sm:$0xff]
      %v3434 = vld [vmem:[%s3279 + $0x4d0] sm:$0xff]
      %v3435 = vld [vmem:[%s3279 + $0x4d8] sm:$0xff]
      %v3436 = vld [vmem:[%s3279 + $0x4e0] sm:$0xff]
      %v3437 = vld [vmem:[%s3279 + $0x4e8] sm:$0xff]
      %v3438 = vld [vmem:[%s3279 + $0x4f0] sm:$0xff]
      %v3439 = vld [vmem:[%s3279 + $0x4f8] sm:$0xff]
      %v3440 = vld [vmem:[%s3279 + $0x500] sm:$0xff]
      %v3441 = vld [vmem:[%s3279 + $0x508] sm:$0xff]
      %v3442 = vld [vmem:[%s3279 + $0x510] sm:$0xff]
      %v3443 = vld [vmem:[%s3279 + $0x518] sm:$0xff]
      %v3444 = vld [vmem:[%s3279 + $0x520] sm:$0xff]
      %v3445 = vld [vmem:[%s3279 + $0x528] sm:$0xff]
      %v3446 = vld [vmem:[%s3279 + $0x530] sm:$0xff]
      %v3447 = vld [vmem:[%s3279 + $0x538] sm:$0xff]
      %v3448 = vld [vmem:[%s3279 + $0x540] sm:$0xff]
      %v3449 = vld [vmem:[%s3279 + $0x548] sm:$0xff]
      %v3450 = vld [vmem:[%s3279 + $0x550] sm:$0xff]
      %v3451 = vld [vmem:[%s3279 + $0x558] sm:$0xff]
      %v3452 = vld [vmem:[%s3279 + $0x560] sm:$0xff]
      %v3453 = vld [vmem:[%s3279 + $0x568] sm:$0xff]
      %v3454 = vld [vmem:[%s3279 + $0x570] sm:$0xff]
      %v3455 = vld [vmem:[%s3279 + $0x578] sm:$0xff]
      %v3456 = vld [vmem:[%s3279 + $0x580] sm:$0xff]
      %v3457 = vld [vmem:[%s3279 + $0x588] sm:$0xff]
      %v3458 = vld [vmem:[%s3279 + $0x590] sm:$0xff]
      %v3459 = vld [vmem:[%s3279 + $0x598] sm:$0xff]
      %v3460 = vld [vmem:[%s3279 + $0x5a0] sm:$0xff]
      %v3461 = vld [vmem:[%s3279 + $0x5a8] sm:$0xff]
      %v3462 = vld [vmem:[%s3279 + $0x5b0] sm:$0xff]
      %v3463 = vld [vmem:[%s3279 + $0x5b8] sm:$0xff]
      %v3464 = vld [vmem:[%s3279 + $0x5c0] sm:$0xff]
      %v3465 = vld [vmem:[%s3279 + $0x5c8] sm:$0xff]
      %v3466 = vld [vmem:[%s3279 + $0x5d0] sm:$0xff]
      %v3467 = vld [vmem:[%s3279 + $0x5d8] sm:$0xff]
      %v3468 = vld [vmem:[%s3279 + $0x5e0] sm:$0xff]
      %v3469 = vld [vmem:[%s3279 + $0x5e8] sm:$0xff]
      %v3470 = vld [vmem:[%s3279 + $0x5f0] sm:$0xff]
      %v3471 = vld [vmem:[%s3279 + $0x5f8] sm:$0xff]
      %v3472 = vld [vmem:[%s3279 + $0x600] sm:$0xff]
      %v3473 = vld [vmem:[%s3279 + $0x608] sm:$0xff]
      %v3474 = vld [vmem:[%s3279 + $0x610] sm:$0xff]
      %v3475 = vld [vmem:[%s3279 + $0x618] sm:$0xff]
      %v3476 = vld [vmem:[%s3279 + $0x620] sm:$0xff]
      %v3477 = vld [vmem:[%s3279 + $0x628] sm:$0xff]
      %v3478 = vld [vmem:[%s3279 + $0x630] sm:$0xff]
      %v3479 = vld [vmem:[%s3279 + $0x638] sm:$0xff]
      %v3480 = vld [vmem:[%s3279 + $0x640] sm:$0xff]
      %v3481 = vld [vmem:[%s3279 + $0x648] sm:$0xff]
      %v3482 = vld [vmem:[%s3279 + $0x650] sm:$0xff]
      %v3483 = vld [vmem:[%s3279 + $0x658] sm:$0xff]
      %v3484 = vld [vmem:[%s3279 + $0x660] sm:$0xff]
      %v3485 = vld [vmem:[%s3279 + $0x668] sm:$0xff]
      %v3486 = vld [vmem:[%s3279 + $0x670] sm:$0xff]
      %v3487 = vld [vmem:[%s3279 + $0x678] sm:$0xff]
      %v3488 = vld [vmem:[%s3279 + $0x680] sm:$0xff]
      %v3489 = vld [vmem:[%s3279 + $0x688] sm:$0xff]
      %v3490 = vld [vmem:[%s3279 + $0x690] sm:$0xff]
      %v3491 = vld [vmem:[%s3279 + $0x698] sm:$0xff]
      %v3492 = vld [vmem:[%s3279 + $0x6a0] sm:$0xff]
      %v3493 = vld [vmem:[%s3279 + $0x6a8] sm:$0xff]
      %v3494 = vld [vmem:[%s3279 + $0x6b0] sm:$0xff]
      %v3495 = vld [vmem:[%s3279 + $0x6b8] sm:$0xff]
      %v3496 = vld [vmem:[%s3279 + $0x6c0] sm:$0xff]
      %v3497 = vld [vmem:[%s3279 + $0x6c8] sm:$0xff]
      %v3498 = vld [vmem:[%s3279 + $0x6d0] sm:$0xff]
      %v3499 = vld [vmem:[%s3279 + $0x6d8] sm:$0xff]
      %v3500 = vld [vmem:[%s3279 + $0x6e0] sm:$0xff]
      %v3501 = vld [vmem:[%s3279 + $0x6e8] sm:$0xff]
      %v3502 = vld [vmem:[%s3279 + $0x6f0] sm:$0xff]
      %v3503 = vld [vmem:[%s3279 + $0x6f8] sm:$0xff]
      %v3504 = vld [vmem:[%s3279 + $0x700] sm:$0xff]
      %v3505 = vld [vmem:[%s3279 + $0x708] sm:$0xff]
      %v3506 = vld [vmem:[%s3279 + $0x710] sm:$0xff]
      %v3507 = vld [vmem:[%s3279 + $0x718] sm:$0xff]
      %v3508 = vld [vmem:[%s3279 + $0x720] sm:$0xff]
      %v3509 = vld [vmem:[%s3279 + $0x728] sm:$0xff]
      %v3510 = vld [vmem:[%s3279 + $0x730] sm:$0xff]
      %v3511 = vld [vmem:[%s3279 + $0x738] sm:$0xff]
      %v3512 = vld [vmem:[%s3279 + $0x740] sm:$0xff]
      %v3513 = vld [vmem:[%s3279 + $0x748] sm:$0xff]
      %v3514 = vld [vmem:[%s3279 + $0x750] sm:$0xff]
      %v3515 = vld [vmem:[%s3279 + $0x758] sm:$0xff]
      %v3516 = vld [vmem:[%s3279 + $0x760] sm:$0xff]
      %v3517 = vld [vmem:[%s3279 + $0x768] sm:$0xff]
      %v3518 = vld [vmem:[%s3279 + $0x770] sm:$0xff]
      %v3519 = vld [vmem:[%s3279 + $0x778] sm:$0xff]
      %v3520 = vld [vmem:[%s3279 + $0x780] sm:$0xff]
      %v3521 = vld [vmem:[%s3279 + $0x788] sm:$0xff]
      %v3522 = vld [vmem:[%s3279 + $0x790] sm:$0xff]
      %v3523 = vld [vmem:[%s3279 + $0x798] sm:$0xff]
      %v3524 = vld [vmem:[%s3279 + $0x7a0] sm:$0xff]
      %v3525 = vld [vmem:[%s3279 + $0x7a8] sm:$0xff]
      %v3526 = vld [vmem:[%s3279 + $0x7b0] sm:$0xff]
      %v3527 = vld [vmem:[%s3279 + $0x7b8] sm:$0xff]
      %v3528 = vld [vmem:[%s3279 + $0x7c0] sm:$0xff]
      %v3529 = vld [vmem:[%s3279 + $0x7c8] sm:$0xff]
      %v3530 = vld [vmem:[%s3279 + $0x7d0] sm:$0xff]
      %v3531 = vld [vmem:[%s3279 + $0x7d8] sm:$0xff]
      %v3532 = vld [vmem:[%s3279 + $0x7e0] sm:$0xff]
      %v3533 = vld [vmem:[%s3279 + $0x7e8] sm:$0xff]
      %v3534 = vld [vmem:[%s3279 + $0x7f0] sm:$0xff]
      %v3535 = vld [vmem:[%s3279 + $0x7f8] sm:$0xff]
      %vm3544 = vcmask 1045504
      %v3545 = vrot.slane %v3271, 2
      %v3546 = vrot.slane %v3275, 2
      %v3547 = vsel %vm3544, %v3545, %v3546
      %v3548 = vrot.slane %v3272, 2
      %v3549 = vrot.slane %v3276, 2
      %v3550 = vsel %vm3544, %v3548, %v3549
      %v3551 = vrot.slane %v3273, 2
      %v3552 = vrot.slane %v3277, 2
      %v3553 = vsel %vm3544, %v3551, %v3552
      %v3554 = vrot.slane %v3274, 2
      %v3555 = vrot.slane %v3278, 2
      %v3556 = vsel %vm3544, %v3554, %v3555
      %3561 = vmatprep.subr.mxu0 %v3281
      %3562 = vmatpush1.msra.mxu0 %v3280
      %3563 = vmatprep.subr.mxu0 %v3285
      %3564 = vmatpush1.msra.mxu0 %v3284
      %3565 = vmatprep.subr.mxu0 %v3289
      %3566 = vmatpush1.msra.mxu0 %v3288
      %3567 = vmatprep.subr.mxu0 %v3293
      %3568 = vmatpush1.msra.mxu0 %v3292
      %3569 = vmatprep.subr.mxu0 %v3297
      %3570 = vmatpush1.msra.mxu0 %v3296
      %3571 = vmatprep.subr.mxu0 %v3301
      %3572 = vmatpush1.msra.mxu0 %v3300
      %3573 = vmatprep.subr.mxu0 %v3305
      %3574 = vmatpush1.msra.mxu0 %v3304
      %3575 = vmatprep.subr.mxu0 %v3309
      %3576 = vmatpush1.msra.mxu0 %v3308
      %3577 = vmatprep.subr.mxu0 %v3313
      %3578 = vmatpush1.msra.mxu0 %v3312
      %3579 = vmatprep.subr.mxu0 %v3317
      %3580 = vmatpush1.msra.mxu0 %v3316
      %3581 = vmatprep.subr.mxu0 %v3321
      %3582 = vmatpush1.msra.mxu0 %v3320
      %3583 = vmatprep.subr.mxu0 %v3325
      %3584 = vmatpush1.msra.mxu0 %v3324
      %3585 = vmatprep.subr.mxu0 %v3329
      %3586 = vmatpush1.msra.mxu0 %v3328
      %3587 = vmatprep.subr.mxu0 %v3333
      %3588 = vmatpush1.msra.mxu0 %v3332
      %3589 = vmatprep.subr.mxu0 %v3337
      %3590 = vmatpush1.msra.mxu0 %v3336
      %3591 = vmatprep.subr.mxu0 %v3341
      %3592 = vmatpush1.msra.mxu0 %v3340
      %3593 = vmatprep.subr.mxu0 %v3345
      %3594 = vmatpush1.msra.mxu0 %v3344
      %3595 = vmatprep.subr.mxu0 %v3349
      %3596 = vmatpush1.msra.mxu0 %v3348
      %3597 = vmatprep.subr.mxu0 %v3353
      %3598 = vmatpush1.msra.mxu0 %v3352
      %3599 = vmatprep.subr.mxu0 %v3357
      %3600 = vmatpush1.msra.mxu0 %v3356
      %3601 = vmatprep.subr.mxu0 %v3361
      %3602 = vmatpush1.msra.mxu0 %v3360
      %3603 = vmatprep.subr.mxu0 %v3365
      %3604 = vmatpush1.msra.mxu0 %v3364
      %3605 = vmatprep.subr.mxu0 %v3369
      %3606 = vmatpush1.msra.mxu0 %v3368
      %3607 = vmatprep.subr.mxu0 %v3373
      %3608 = vmatpush1.msra.mxu0 %v3372
      %3609 = vmatprep.subr.mxu0 %v3377
      %3610 = vmatpush1.msra.mxu0 %v3376
      %3611 = vmatprep.subr.mxu0 %v3381
      %3612 = vmatpush1.msra.mxu0 %v3380
      %3613 = vmatprep.subr.mxu0 %v3385
      %3614 = vmatpush1.msra.mxu0 %v3384
      %3615 = vmatprep.subr.mxu0 %v3389
      %3616 = vmatpush1.msra.mxu0 %v3388
      %3617 = vmatprep.subr.mxu0 %v3393
      %3618 = vmatpush1.msra.mxu0 %v3392
      %3619 = vmatprep.subr.mxu0 %v3397
      %3620 = vmatpush1.msra.mxu0 %v3396
      %3621 = vmatprep.subr.mxu0 %v3401
      %3622 = vmatpush1.msra.mxu0 %v3400
      %3623 = vmatprep.subr.mxu0 %v3405
      %3624 = vmatpush1.msra.mxu0 %v3404
      %3625 = vmatprep.mubr.f32.mxu0 %v3550
      %3626 = vmatmul.mubr.f32.gmra.mrb[0].mxu0 %v3547
      %v3627 = vpop.f32.mrb[0].mxu0
      %v3628 = vadd.f32 0.0, %v3627
      %v3629 = vpop.f32.mrb[0].mxu0
      %v3630 = vadd.f32 0.0, %v3629
      %3631 = vdwg.mxu0
      %3632 = vmatprep.subr.mxu0 %v3409
      %3633 = vmatpush1.msra.mxu0 %v3408
      %3634 = vmatprep.subr.mxu0 %v3413
      %3635 = vmatpush1.msra.mxu0 %v3412
      %3636 = vmatprep.subr.mxu0 %v3417
      %3637 = vmatpush1.msra.mxu0 %v3416
      %3638 = vmatprep.subr.mxu0 %v3421
      %3639 = vmatpush1.msra.mxu0 %v3420
      %3640 = vmatprep.subr.mxu0 %v3425
      %3641 = vmatpush1.msra.mxu0 %v3424
      %3642 = vmatprep.subr.mxu0 %v3429
      %3643 = vmatpush1.msra.mxu0 %v3428
      %3644 = vmatprep.subr.mxu0 %v3433
      %3645 = vmatpush1.msra.mxu0 %v3432
      %3646 = vmatprep.subr.mxu0 %v3437
      %3647 = vmatpush1.msra.mxu0 %v3436
      %3648 = vmatprep.subr.mxu0 %v3441
      %3649 = vmatpush1.msra.mxu0 %v3440
      %3650 = vmatprep.subr.mxu0 %v3445
      %3651 = vmatpush1.msra.mxu0 %v3444
      %3652 = vmatprep.subr.mxu0 %v3449
      %3653 = vmatpush1.msra.mxu0 %v3448
      %3654 = vmatprep.subr.mxu0 %v3453
      %3655 = vmatpush1.msra.mxu0 %v3452
      %3656 = vmatprep.subr.mxu0 %v3457
      %3657 = vmatpush1.msra.mxu0 %v3456
      %3658 = vmatprep.subr.mxu0 %v3461
      %3659 = vmatpush1.msra.mxu0 %v3460
      %3660 = vmatprep.subr.mxu0 %v3465
      %3661 = vmatpush1.msra.mxu0 %v3464
      %3662 = vmatprep.subr.mxu0 %v3469
      %3663 = vmatpush1.msra.mxu0 %v3468
      %3664 = vmatprep.subr.mxu0 %v3473
      %3665 = vmatpush1.msra.mxu0 %v3472
      %3666 = vmatprep.subr.mxu0 %v3477
      %3667 = vmatpush1.msra.mxu0 %v3476
      %3668 = vmatprep.subr.mxu0 %v3481
      %3669 = vmatpush1.msra.mxu0 %v3480
      %3670 = vmatprep.subr.mxu0 %v3485
      %3671 = vmatpush1.msra.mxu0 %v3484
      %3672 = vmatprep.subr.mxu0 %v3489
      %3673 = vmatpush1.msra.mxu0 %v3488
      %3674 = vmatprep.subr.mxu0 %v3493
      %3675 = vmatpush1.msra.mxu0 %v3492
      %3676 = vmatprep.subr.mxu0 %v3497
      %3677 = vmatpush1.msra.mxu0 %v3496
      %3678 = vmatprep.subr.mxu0 %v3501
      %3679 = vmatpush1.msra.mxu0 %v3500
      %3680 = vmatprep.subr.mxu0 %v3505
      %3681 = vmatpush1.msra.mxu0 %v3504
      %3682 = vmatprep.subr.mxu0 %v3509
      %3683 = vmatpush1.msra.mxu0 %v3508
      %3684 = vmatprep.subr.mxu0 %v3513
      %3685 = vmatpush1.msra.mxu0 %v3512
      %3686 = vmatprep.subr.mxu0 %v3517
      %3687 = vmatpush1.msra.mxu0 %v3516
      %3688 = vmatprep.subr.mxu0 %v3521
      %3689 = vmatpush1.msra.mxu0 %v3520
      %3690 = vmatprep.subr.mxu0 %v3525
      %3691 = vmatpush1.msra.mxu0 %v3524
      %3692 = vmatprep.subr.mxu0 %v3529
      %3693 = vmatpush1.msra.mxu0 %v3528
      %3694 = vmatprep.subr.mxu0 %v3533
      %3695 = vmatpush1.msra.mxu0 %v3532
      %3696 = vmatprep.mubr.f32.mxu0 %v3556
      %3697 = vmatmul.mubr.f32.gmra.mrb[0].mxu0 %v3553
      %v3698 = vpop.f32.mrb[0].mxu0
      %v3699 = vadd.f32 %v3628, %v3698
      %v3700 = vpop.f32.mrb[0].mxu0
      %v3701 = vadd.f32 %v3630, %v3700
      %3702 = vdwg.mxu0
      %3703 = vmatprep.subr.mxu0 %v3283
      %3704 = vmatpush1.msra.mxu0 %v3282
      %3705 = vmatprep.subr.mxu0 %v3287
      %3706 = vmatpush1.msra.mxu0 %v3286
      %3707 = vmatprep.subr.mxu0 %v3291
      %3708 = vmatpush1.msra.mxu0 %v3290
      %3709 = vmatprep.subr.mxu0 %v3295
      %3710 = vmatpush1.msra.mxu0 %v3294
      %3711 = vmatprep.subr.mxu0 %v3299
      %3712 = vmatpush1.msra.mxu0 %v3298
      %3713 = vmatprep.subr.mxu0 %v3303
      %3714 = vmatpush1.msra.mxu0 %v3302
      %3715 = vmatprep.subr.mxu0 %v3307
      %3716 = vmatpush1.msra.mxu0 %v3306
      %3717 = vmatprep.subr.mxu0 %v3311
      %3718 = vmatpush1.msra.mxu0 %v3310
      %3719 = vmatprep.subr.mxu0 %v3315
      %3720 = vmatpush1.msra.mxu0 %v3314
      %3721 = vmatprep.subr.mxu0 %v3319
      %3722 = vmatpush1.msra.mxu0 %v3318
      %3723 = vmatprep.subr.mxu0 %v3323
      %3724 = vmatpush1.msra.mxu0 %v3322
      %3725 = vmatprep.subr.mxu0 %v3327
      %3726 = vmatpush1.msra.mxu0 %v3326
      %3727 = vmatprep.subr.mxu0 %v3331
      %3728 = vmatpush1.msra.mxu0 %v3330
      %3729 = vmatprep.subr.mxu0 %v3335
      %3730 = vmatpush1.msra.mxu0 %v3334
      %3731 = vmatprep.subr.mxu0 %v3339
      %3732 = vmatpush1.msra.mxu0 %v3338
      %3733 = vmatprep.subr.mxu0 %v3343
      %3734 = vmatpush1.msra.mxu0 %v3342
      %3735 = vmatprep.subr.mxu0 %v3347
      %3736 = vmatpush1.msra.mxu0 %v3346
      %3737 = vmatprep.subr.mxu0 %v3351
      %3738 = vmatpush1.msra.mxu0 %v3350
      %3739 = vmatprep.subr.mxu0 %v3355
      %3740 = vmatpush1.msra.mxu0 %v3354
      %3741 = vmatprep.subr.mxu0 %v3359
      %3742 = vmatpush1.msra.mxu0 %v3358
      %3743 = vmatprep.subr.mxu0 %v3363
      %3744 = vmatpush1.msra.mxu0 %v3362
      %3745 = vmatprep.subr.mxu0 %v3367
      %3746 = vmatpush1.msra.mxu0 %v3366
      %3747 = vmatprep.subr.mxu0 %v3371
      %3748 = vmatpush1.msra.mxu0 %v3370
      %3749 = vmatprep.subr.mxu0 %v3375
      %3750 = vmatpush1.msra.mxu0 %v3374
      %3751 = vmatprep.subr.mxu0 %v3379
      %3752 = vmatpush1.msra.mxu0 %v3378
      %3753 = vmatprep.subr.mxu0 %v3383
      %3754 = vmatpush1.msra.mxu0 %v3382
      %3755 = vmatprep.subr.mxu0 %v3387
      %3756 = vmatpush1.msra.mxu0 %v3386
      %3757 = vmatprep.subr.mxu0 %v3391
      %3758 = vmatpush1.msra.mxu0 %v3390
      %3759 = vmatprep.subr.mxu0 %v3395
      %3760 = vmatpush1.msra.mxu0 %v3394
      %3761 = vmatprep.subr.mxu0 %v3399
      %3762 = vmatpush1.msra.mxu0 %v3398
      %3763 = vmatprep.subr.mxu0 %v3403
      %3764 = vmatpush1.msra.mxu0 %v3402
      %3765 = vmatprep.subr.mxu0 %v3407
      %3766 = vmatpush1.msra.mxu0 %v3406
      %3767 = vmatprep.mubr.f32.mxu0 %v3550
      %3768 = vmatmul.mubr.f32.gmra.mrb[0].mxu0 %v3547
      %v3769 = vpop.f32.mrb[0].mxu0
      %v3770 = vadd.f32 0.0, %v3769
      %v3771 = vpop.f32.mrb[0].mxu0
      %v3772 = vadd.f32 0.0, %v3771
      %3773 = vdwg.mxu0
      %3774 = vmatprep.subr.mxu0 %v3411
      %3775 = vmatpush1.msra.mxu0 %v3410
      %3776 = vmatprep.subr.mxu0 %v3415
      %3777 = vmatpush1.msra.mxu0 %v3414
      %3778 = vmatprep.subr.mxu0 %v3419
      %3779 = vmatpush1.msra.mxu0 %v3418
      %3780 = vmatprep.subr.mxu0 %v3423
      %3781 = vmatpush1.msra.mxu0 %v3422
      %3782 = vmatprep.subr.mxu0 %v3427
      %3783 = vmatpush1.msra.mxu0 %v3426
      %3784 = vmatprep.subr.mxu0 %v3431
      %3785 = vmatpush1.msra.mxu0 %v3430
      %3786 = vmatprep.subr.mxu0 %v3435
      %3787 = vmatpush1.msra.mxu0 %v3434
      %3788 = vmatprep.subr.mxu0 %v3439
      %3789 = vmatpush1.msra.mxu0 %v3438
      %3790 = vmatprep.subr.mxu0 %v3443
      %3791 = vmatpush1.msra.mxu0 %v3442
      %3792 = vmatprep.subr.mxu0 %v3447
      %3793 = vmatpush1.msra.mxu0 %v3446
      %3794 = vmatprep.subr.mxu0 %v3451
      %3795 = vmatpush1.msra.mxu0 %v3450
      %3796 = vmatprep.subr.mxu0 %v3455
      %3797 = vmatpush1.msra.mxu0 %v3454
      %3798 = vmatprep.subr.mxu0 %v3459
      %3799 = vmatpush1.msra.mxu0 %v3458
      %3800 = vmatprep.subr.mxu0 %v3463
      %3801 = vmatpush1.msra.mxu0 %v3462
      %3802 = vmatprep.subr.mxu0 %v3467
      %3803 = vmatpush1.msra.mxu0 %v3466
      %3804 = vmatprep.subr.mxu0 %v3471
      %3805 = vmatpush1.msra.mxu0 %v3470
      %3806 = vmatprep.subr.mxu0 %v3475
      %3807 = vmatpush1.msra.mxu0 %v3474
      %3808 = vmatprep.subr.mxu0 %v3479
      %3809 = vmatpush1.msra.mxu0 %v3478
      %3810 = vmatprep.subr.mxu0 %v3483
      %3811 = vmatpush1.msra.mxu0 %v3482
      %3812 = vmatprep.subr.mxu0 %v3487
      %3813 = vmatpush1.msra.mxu0 %v3486
      %3814 = vmatprep.subr.mxu0 %v3491
      %3815 = vmatpush1.msra.mxu0 %v3490
      %3816 = vmatprep.subr.mxu0 %v3495
      %3817 = vmatpush1.msra.mxu0 %v3494
      %3818 = vmatprep.subr.mxu0 %v3499
      %3819 = vmatpush1.msra.mxu0 %v3498
      %3820 = vmatprep.subr.mxu0 %v3503
      %3821 = vmatpush1.msra.mxu0 %v3502
      %3822 = vmatprep.subr.mxu0 %v3507
      %3823 = vmatpush1.msra.mxu0 %v3506
      %3824 = vmatprep.subr.mxu0 %v3511
      %3825 = vmatpush1.msra.mxu0 %v3510
      %3826 = vmatprep.subr.mxu0 %v3515
      %3827 = vmatpush1.msra.mxu0 %v3514
      %3828 = vmatprep.subr.mxu0 %v3519
      %3829 = vmatpush1.msra.mxu0 %v3518
      %3830 = vmatprep.subr.mxu0 %v3523
      %3831 = vmatpush1.msra.mxu0 %v3522
      %3832 = vmatprep.subr.mxu0 %v3527
      %3833 = vmatpush1.msra.mxu0 %v3526
      %3834 = vmatprep.subr.mxu0 %v3531
      %3835 = vmatpush1.msra.mxu0 %v3530
      %3836 = vmatprep.subr.mxu0 %v3535
      %3837 = vmatpush1.msra.mxu0 %v3534
      %3838 = vmatprep.mubr.f32.mxu0 %v3556
      %3839 = vmatmul.mubr.f32.gmra.mrb[0].mxu0 %v3553
      %v3840 = vpop.f32.mrb[0].mxu0
      %v3841 = vadd.f32 %v3770, %v3840
      %v3842 = vpop.f32.mrb[0].mxu0
      %v3843 = vadd.f32 %v3772, %v3842
      %3844 = vdwg.mxu0
      %3845 = vmatprep.subr.mxu0 %v3016
      %3846 = vmatpush1.msra.mxu0 %v3015
      %3847 = vmatprep.subr.mxu0 %v3020
      %3848 = vmatpush1.msra.mxu0 %v3019
      %3849 = vmatprep.subr.mxu0 %v3024
      %3850 = vmatpush1.msra.mxu0 %v3023
      %3851 = vmatprep.subr.mxu0 %v3028
      %3852 = vmatpush1.msra.mxu0 %v3027
      %3853 = vmatprep.subr.mxu0 %v3032
      %3854 = vmatpush1.msra.mxu0 %v3031
      %3855 = vmatprep.subr.mxu0 %v3036
      %3856 = vmatpush1.msra.mxu0 %v3035
      %3857 = vmatprep.subr.mxu0 %v3040
      %3858 = vmatpush1.msra.mxu0 %v3039
      %3859 = vmatprep.subr.mxu0 %v3044
      %3860 = vmatpush1.msra.mxu0 %v3043
      %3861 = vmatprep.subr.mxu0 %v3048
      %3862 = vmatpush1.msra.mxu0 %v3047
      %3863 = vmatprep.subr.mxu0 %v3052
      %3864 = vmatpush1.msra.mxu0 %v3051
      %3865 = vmatprep.subr.mxu0 %v3056
      %3866 = vmatpush1.msra.mxu0 %v3055
      %3867 = vmatprep.subr.mxu0 %v3060
      %3868 = vmatpush1.msra.mxu0 %v3059
      %3869 = vmatprep.subr.mxu0 %v3064
      %3870 = vmatpush1.msra.mxu0 %v3063
      %3871 = vmatprep.subr.mxu0 %v3068
      %3872 = vmatpush1.msra.mxu0 %v3067
      %3873 = vmatprep.subr.mxu0 %v3072
      %3874 = vmatpush1.msra.mxu0 %v3071
      %3875 = vmatprep.subr.mxu0 %v3076
      %3876 = vmatpush1.msra.mxu0 %v3075
      %3877 = vmatprep.subr.mxu0 %v3080
      %3878 = vmatpush1.msra.mxu0 %v3079
      %3879 = vmatprep.subr.mxu0 %v3084
      %3880 = vmatpush1.msra.mxu0 %v3083
      %3881 = vmatprep.subr.mxu0 %v3088
      %3882 = vmatpush1.msra.mxu0 %v3087
      %3883 = vmatprep.subr.mxu0 %v3092
      %3884 = vmatpush1.msra.mxu0 %v3091
      %3885 = vmatprep.subr.mxu0 %v3096
      %3886 = vmatpush1.msra.mxu0 %v3095
      %3887 = vmatprep.subr.mxu0 %v3100
      %3888 = vmatpush1.msra.mxu0 %v3099
      %3889 = vmatprep.subr.mxu0 %v3104
      %3890 = vmatpush1.msra.mxu0 %v3103
      %3891 = vmatprep.subr.mxu0 %v3108
      %3892 = vmatpush1.msra.mxu0 %v3107
      %3893 = vmatprep.subr.mxu0 %v3112
      %3894 = vmatpush1.msra.mxu0 %v3111
      %3895 = vmatprep.subr.mxu0 %v3116
      %3896 = vmatpush1.msra.mxu0 %v3115
      %3897 = vmatprep.subr.mxu0 %v3120
      %3898 = vmatpush1.msra.mxu0 %v3119
      %3899 = vmatprep.subr.mxu0 %v3124
      %3900 = vmatpush1.msra.mxu0 %v3123
      %3901 = vmatprep.subr.mxu0 %v3128
      %3902 = vmatpush1.msra.mxu0 %v3127
      %3903 = vmatprep.subr.mxu0 %v3132
      %3904 = vmatpush1.msra.mxu0 %v3131
      %3905 = vmatprep.subr.mxu0 %v3136
      %3906 = vmatpush1.msra.mxu0 %v3135
      %3907 = vmatprep.subr.mxu0 %v3140
      %3908 = vmatpush1.msra.mxu0 %v3139
      %3909 = vmatprep.mubr.f32.mxu0 %v2338
      %3910 = vmatmul.mubr.f32.gmra.mrb[0].mxu0 %v2337
      %v3911 = vpop.f32.mrb[0].mxu0
      %v3912 = vadd.f32 %v3699, %v3911
      %v3913 = vpop.f32.mrb[0].mxu0
      %v3914 = vadd.f32 %v3701, %v3913
      %3915 = vdwg.mxu0
      %3916 = vmatprep.subr.mxu0 %v3144
      %3917 = vmatpush1.msra.mxu0 %v3143
      %3918 = vmatprep.subr.mxu0 %v3148
      %3919 = vmatpush1.msra.mxu0 %v3147
      %3920 = vmatprep.subr.mxu0 %v3152
      %3921 = vmatpush1.msra.mxu0 %v3151
      %3922 = vmatprep.subr.mxu0 %v3156
      %3923 = vmatpush1.msra.mxu0 %v3155
      %3924 = vmatprep.subr.mxu0 %v3160
      %3925 = vmatpush1.msra.mxu0 %v3159
      %3926 = vmatprep.subr.mxu0 %v3164
      %3927 = vmatpush1.msra.mxu0 %v3163
      %3928 = vmatprep.subr.mxu0 %v3168
      %3929 = vmatpush1.msra.mxu0 %v3167
      %3930 = vmatprep.subr.mxu0 %v3172
      %3931 = vmatpush1.msra.mxu0 %v3171
      %3932 = vmatprep.subr.mxu0 %v3176
      %3933 = vmatpush1.msra.mxu0 %v3175
      %3934 = vmatprep.subr.mxu0 %v3180
      %3935 = vmatpush1.msra.mxu0 %v3179
      %3936 = vmatprep.subr.mxu0 %v3184
      %3937 = vmatpush1.msra.mxu0 %v3183
      %3938 = vmatprep.subr.mxu0 %v3188
      %3939 = vmatpush1.msra.mxu0 %v3187
      %3940 = vmatprep.subr.mxu0 %v3192
      %3941 = vmatpush1.msra.mxu0 %v3191
      %3942 = vmatprep.subr.mxu0 %v3196
      %3943 = vmatpush1.msra.mxu0 %v3195
      %3944 = vmatprep.subr.mxu0 %v3200
      %3945 = vmatpush1.msra.mxu0 %v3199
      %3946 = vmatprep.subr.mxu0 %v3204
      %3947 = vmatpush1.msra.mxu0 %v3203
      %3948 = vmatprep.subr.mxu0 %v3208
      %3949 = vmatpush1.msra.mxu0 %v3207
      %3950 = vmatprep.subr.mxu0 %v3212
      %3951 = vmatpush1.msra.mxu0 %v3211
      %3952 = vmatprep.subr.mxu0 %v3216
      %3953 = vmatpush1.msra.mxu0 %v3215
      %3954 = vmatprep.subr.mxu0 %v3220
      %3955 = vmatpush1.msra.mxu0 %v3219
      %3956 = vmatprep.subr.mxu0 %v3224
      %3957 = vmatpush1.msra.mxu0 %v3223
      %3958 = vmatprep.subr.mxu0 %v3228
      %3959 = vmatpush1.msra.mxu0 %v3227
      %3960 = vmatprep.subr.mxu0 %v3232
      %3961 = vmatpush1.msra.mxu0 %v3231
      %3962 = vmatprep.subr.mxu0 %v3236
      %3963 = vmatpush1.msra.mxu0 %v3235
      %3964 = vmatprep.subr.mxu0 %v3240
      %3965 = vmatpush1.msra.mxu0 %v3239
      %3966 = vmatprep.subr.mxu0 %v3244
      %3967 = vmatpush1.msra.mxu0 %v3243
      %3968 = vmatprep.subr.mxu0 %v3248
      %3969 = vmatpush1.msra.mxu0 %v3247
      %3970 = vmatprep.subr.mxu0 %v3252
      %3971 = vmatpush1.msra.mxu0 %v3251
      %3972 = vmatprep.subr.mxu0 %v3256
      %3973 = vmatpush1.msra.mxu0 %v3255
      %3974 = vmatprep.subr.mxu0 %v3260
      %3975 = vmatpush1.msra.mxu0 %v3259
      %3976 = vmatprep.subr.mxu0 %v3264
      %3977 = vmatpush1.msra.mxu0 %v3263
      %3978 = vmatprep.subr.mxu0 %v3268
      %3979 = vmatpush1.msra.mxu0 %v3267
      %3980 = vmatprep.mubr.f32.mxu0 %v2340
      %3981 = vmatmul.mubr.f32.gmra.mrb[0].mxu0 %v2339
      %v3982 = vpop.f32.mrb[0].mxu0
      %v3983 = vadd.f32 %v3912, %v3982
      %v3984 = vpop.f32.mrb[0].mxu0
      %v3985 = vadd.f32 %v3914, %v3984
      %3986 = vdwg.mxu0
      %3987 = vmatprep.subr.mxu0 %v3018
      %3988 = vmatpush1.msra.mxu0 %v3017
      %3989 = vmatprep.subr.mxu0 %v3022
      %3990 = vmatpush1.msra.mxu0 %v3021
      %3991 = vmatprep.subr.mxu0 %v3026
      %3992 = vmatpush1.msra.mxu0 %v3025
      %3993 = vmatprep.subr.mxu0 %v3030
      %3994 = vmatpush1.msra.mxu0 %v3029
      %3995 = vmatprep.subr.mxu0 %v3034
      %3996 = vmatpush1.msra.mxu0 %v3033
      %3997 = vmatprep.subr.mxu0 %v3038
      %3998 = vmatpush1.msra.mxu0 %v3037
      %3999 = vmatprep.subr.mxu0 %v3042
      %4000 = vmatpush1.msra.mxu0 %v3041
      %4001 = vmatprep.subr.mxu0 %v3046
      %4002 = vmatpush1.msra.mxu0 %v3045
      %4003 = vmatprep.subr.mxu0 %v3050
      %4004 = vmatpush1.msra.mxu0 %v3049
      %4005 = vmatprep.subr.mxu0 %v3054
      %4006 = vmatpush1.msra.mxu0 %v3053
      %4007 = vmatprep.subr.mxu0 %v3058
      %4008 = vmatpush1.msra.mxu0 %v3057
      %4009 = vmatprep.subr.mxu0 %v3062
      %4010 = vmatpush1.msra.mxu0 %v3061
      %4011 = vmatprep.subr.mxu0 %v3066
      %4012 = vmatpush1.msra.mxu0 %v3065
      %4013 = vmatprep.subr.mxu0 %v3070
      %4014 = vmatpush1.msra.mxu0 %v3069
      %4015 = vmatprep.subr.mxu0 %v3074
      %4016 = vmatpush1.msra.mxu0 %v3073
      %4017 = vmatprep.subr.mxu0 %v3078
      %4018 = vmatpush1.msra.mxu0 %v3077
      %4019 = vmatprep.subr.mxu0 %v3082
      %4020 = vmatpush1.msra.mxu0 %v3081
      %4021 = vmatprep.subr.mxu0 %v3086
      %4022 = vmatpush1.msra.mxu0 %v3085
      %4023 = vmatprep.subr.mxu0 %v3090
      %4024 = vmatpush1.msra.mxu0 %v3089
      %4025 = vmatprep.subr.mxu0 %v3094
      %4026 = vmatpush1.msra.mxu0 %v3093
      %4027 = vmatprep.subr.mxu0 %v3098
      %4028 = vmatpush1.msra.mxu0 %v3097
      %4029 = vmatprep.subr.mxu0 %v3102
      %4030 = vmatpush1.msra.mxu0 %v3101
      %4031 = vmatprep.subr.mxu0 %v3106
      %4032 = vmatpush1.msra.mxu0 %v3105
      %4033 = vmatprep.subr.mxu0 %v3110
      %4034 = vmatpush1.msra.mxu0 %v3109
      %4035 = vmatprep.subr.mxu0 %v3114
      %4036 = vmatpush1.msra.mxu0 %v3113
      %4037 = vmatprep.subr.mxu0 %v3118
      %4038 = vmatpush1.msra.mxu0 %v3117
      %4039 = vmatprep.subr.mxu0 %v3122
      %4040 = vmatpush1.msra.mxu0 %v3121
      %4041 = vmatprep.subr.mxu0 %v3126
      %4042 = vmatpush1.msra.mxu0 %v3125
      %4043 = vmatprep.subr.mxu0 %v3130
      %4044 = vmatpush1.msra.mxu0 %v3129
      %4045 = vmatprep.subr.mxu0 %v3134
      %4046 = vmatpush1.msra.mxu0 %v3133
      %4047 = vmatprep.subr.mxu0 %v3138
      %4048 = vmatpush1.msra.mxu0 %v3137
      %4049 = vmatprep.subr.mxu0 %v3142
      %4050 = vmatpush1.msra.mxu0 %v3141
      %4051 = vmatprep.mubr.f32.mxu0 %v2338
      %4052 = vmatmul.mubr.f32.gmra.mrb[0].mxu0 %v2337
      %v4053 = vpop.f32.mrb[0].mxu0
      %v4054 = vadd.f32 %v3841, %v4053
      %v4055 = vpop.f32.mrb[0].mxu0
      %v4056 = vadd.f32 %v3843, %v4055
      %4057 = vdwg.mxu0
      %4058 = vmatprep.subr.mxu0 %v3146
      %4059 = vmatpush1.msra.mxu0 %v3145
      %4060 = vmatprep.subr.mxu0 %v3150
      %4061 = vmatpush1.msra.mxu0 %v3149
      %4062 = vmatprep.subr.mxu0 %v3154
      %4063 = vmatpush1.msra.mxu0 %v3153
      %4064 = vmatprep.subr.mxu0 %v3158
      %4065 = vmatpush1.msra.mxu0 %v3157
      %4066 = vmatprep.subr.mxu0 %v3162
      %4067 = vmatpush1.msra.mxu0 %v3161
      %4068 = vmatprep.subr.mxu0 %v3166
      %4069 = vmatpush1.msra.mxu0 %v3165
      %4070 = vmatprep.subr.mxu0 %v3170
      %4071 = vmatpush1.msra.mxu0 %v3169
      %4072 = vmatprep.subr.mxu0 %v3174
      %4073 = vmatpush1.msra.mxu0 %v3173
      %4074 = vmatprep.subr.mxu0 %v3178
      %4075 = vmatpush1.msra.mxu0 %v3177
      %4076 = vmatprep.subr.mxu0 %v3182
      %4077 = vmatpush1.msra.mxu0 %v3181
      %4078 = vmatprep.subr.mxu0 %v3186
      %4079 = vmatpush1.msra.mxu0 %v3185
      %4080 = vmatprep.subr.mxu0 %v3190
      %4081 = vmatpush1.msra.mxu0 %v3189
      %4082 = vmatprep.subr.mxu0 %v3194
      %4083 = vmatpush1.msra.mxu0 %v3193
      %4084 = vmatprep.subr.mxu0 %v3198
      %4085 = vmatpush1.msra.mxu0 %v3197
      %4086 = vmatprep.subr.mxu0 %v3202
      %4087 = vmatpush1.msra.mxu0 %v3201
      %4088 = vmatprep.subr.mxu0 %v3206
      %4089 = vmatpush1.msra.mxu0 %v3205
      %4090 = vmatprep.subr.mxu0 %v3210
      %4091 = vmatpush1.msra.mxu0 %v3209
      %4092 = vmatprep.subr.mxu0 %v3214
      %4093 = vmatpush1.msra.mxu0 %v3213
      %4094 = vmatprep.subr.mxu0 %v3218
      %4095 = vmatpush1.msra.mxu0 %v3217
      %4096 = vmatprep.subr.mxu0 %v3222
      %4097 = vmatpush1.msra.mxu0 %v3221
      %4098 = vmatprep.subr.mxu0 %v3226
      %4099 = vmatpush1.msra.mxu0 %v3225
      %4100 = vmatprep.subr.mxu0 %v3230
      %4101 = vmatpush1.msra.mxu0 %v3229
      %4102 = vmatprep.subr.mxu0 %v3234
      %4103 = vmatpush1.msra.mxu0 %v3233
      %4104 = vmatprep.subr.mxu0 %v3238
      %4105 = vmatpush1.msra.mxu0 %v3237
      %4106 = vmatprep.subr.mxu0 %v3242
      %4107 = vmatpush1.msra.mxu0 %v3241
      %4108 = vmatprep.subr.mxu0 %v3246
      %4109 = vmatpush1.msra.mxu0 %v3245
      %4110 = vmatprep.subr.mxu0 %v3250
      %4111 = vmatpush1.msra.mxu0 %v3249
      %4112 = vmatprep.subr.mxu0 %v3254
      %4113 = vmatpush1.msra.mxu0 %v3253
      %4114 = vmatprep.subr.mxu0 %v3258
      %4115 = vmatpush1.msra.mxu0 %v3257
      %4116 = vmatprep.subr.mxu0 %v3262
      %4117 = vmatpush1.msra.mxu0 %v3261
      %4118 = vmatprep.subr.mxu0 %v3266
      %4119 = vmatpush1.msra.mxu0 %v3265
      %4120 = vmatprep.subr.mxu0 %v3270
      %4121 = vmatpush1.msra.mxu0 %v3269
      %4122 = vmatprep.mubr.f32.mxu0 %v2340
      %4123 = vmatmul.mubr.f32.gmra.mrb[0].mxu0 %v2339
      %v4124 = vpop.f32.mrb[0].mxu0
      %v4125 = vadd.f32 %v4054, %v4124
      %v4126 = vpop.f32.mrb[0].mxu0
      %v4127 = vadd.f32 %v4056, %v4126
      %4128 = vdwg.mxu0
      %v4129 = vadd.f32 %v3983, %v2918
      %v4130 = vadd.f32 %v3985, %v2922
      %v4131 = vadd.f32 %v4125, %v2926
      %v4132 = vadd.f32 %v4127, %v2930
      %v4133 = vmax.f32 %v4129, 0.0
      %v4134 = vmax.f32 %v4130, 0.0
      %v4135 = vmax.f32 %v4131, 0.0
      %v4136 = vmax.f32 %v4132, 0.0
      %v4141 = vcombine.low %v4133, %v4134
      %v4142 = vcombine.high %v4133, %v4134
      %v4143 = vcombine.low %v4135, %v4136
      %v4144 = vcombine.high %v4135, %v4136
      %v4146 = vunpack.c.l.s4 1966171168
      %v4147 = vunpack.c.0.s8 %v4146
      %v4148 = vlaneseq
      %v4149 = vshrl.u32 %v4148, 7
      %v4150 = vsub.s32 %v4147, %v4149
      %v4151 = vrot.slane %v4141, %v4150
      %v4153 = vunpack.c.l.s4 1966171168
      %v4154 = vunpack.c.0.s8 %v4153
      %v4155 = vlaneseq
      %v4156 = vshrl.u32 %v4155, 7
      %v4157 = vsub.s32 %v4154, %v4156
      %v4158 = vrot.slane %v4142, %v4157
      %v4160 = vunpack.c.l.s4 1966171168
      %v4161 = vunpack.c.0.s8 %v4160
      %v4162 = vlaneseq
      %v4163 = vshrl.u32 %v4162, 7
      %v4164 = vsub.s32 %v4161, %v4163
      %v4165 = vrot.slane %v4143, %v4164
      %v4167 = vunpack.c.l.s4 1966171168
      %v4168 = vunpack.c.0.s8 %v4167
      %v4169 = vlaneseq
      %v4170 = vshrl.u32 %v4169, 7
      %v4171 = vsub.s32 %v4168, %v4170
      %v4172 = vrot.slane %v4144, %v4171
      %v4173 = vcombine.low %v4151, %v4165
      %v4174 = vcombine.high %v4151, %v4165
      %v4175 = vcombine.low %v4158, %v4172
      %v4176 = vcombine.high %v4158, %v4172
      %v4178 = vunpack.c.l.s4 1966171168
      %v4179 = vunpack.c.0.s8 %v4178
      %v4180 = vlaneseq
      %v4181 = vshrl.u32 %v4180, 7
      %v4182 = vsub.s32 %v4179, %v4181
      %v4183 = vrot.slane %v4173, %v4182
      %v4185 = vunpack.c.l.s4 1966171168
      %v4186 = vunpack.c.0.s8 %v4185
      %v4187 = vlaneseq
      %v4188 = vshrl.u32 %v4187, 7
      %v4189 = vsub.s32 %v4186, %v4188
      %v4190 = vrot.slane %v4175, %v4189
      %v4192 = vunpack.c.l.s4 1966171168
      %v4193 = vunpack.c.0.s8 %v4192
      %v4194 = vlaneseq
      %v4195 = vshrl.u32 %v4194, 7
      %v4196 = vsub.s32 %v4193, %v4195
      %v4197 = vrot.slane %v4174, %v4196
      %v4199 = vunpack.c.l.s4 1966171168
      %v4200 = vunpack.c.0.s8 %v4199
      %v4201 = vlaneseq
      %v4202 = vshrl.u32 %v4201, 7
      %v4203 = vsub.s32 %v4200, %v4202
      %v4204 = vrot.slane %v4176, %v4203
      %v4205 = vcombine.high %v4183, %v4183
      %v4206 = vcombine.high %v4190, %v4190
      %v4207 = vcombine.high %v4197, %v4197
      %v4208 = vlaneseq
      %v4209 = vshrl.u32 %v4208, 7
      %v4210 = vsub.s32 0, %v4209
      %v4211 = vrot.slane %v2989, %v4210
      %v4212 = vlaneseq
      %v4213 = vshrl.u32 %v4212, 7
      %v4214 = vsub.s32 1, %v4213
      %v4215 = vrot.slane %v2989, %v4214
      %v4216 = vlaneseq
      %v4217 = vshrl.u32 %v4216, 7
      %v4218 = vsub.s32 2, %v4217
      %v4219 = vrot.slane %v2989, %v4218
      %v4220 = vlaneseq
      %v4221 = vshrl.u32 %v4220, 7
      %v4222 = vsub.s32 3, %v4221
      %v4223 = vrot.slane %v2989, %v4222
      %v4224 = vlaneseq
      %v4225 = vshrl.u32 %v4224, 7
      %v4226 = vsub.s32 0, %v4225
      %v4227 = vrot.slane %v3003, %v4226
      %v4228 = vlaneseq
      %v4229 = vshrl.u32 %v4228, 7
      %v4230 = vsub.s32 1, %v4229
      %v4231 = vrot.slane %v3003, %v4230
      %v4232 = vlaneseq
      %v4233 = vshrl.u32 %v4232, 7
      %v4234 = vsub.s32 2, %v4233
      %v4235 = vrot.slane %v3003, %v4234
      %v4236 = vlaneseq
      %v4237 = vshrl.u32 %v4236, 7
      %v4238 = vsub.s32 3, %v4237
      %v4239 = vrot.slane %v3003, %v4238
      %v4240 = vlaneseq
      %v4241 = vshrl.u32 %v4240, 7
      %v4242 = vsub.s32 0, %v4241
      %v4243 = vrot.slane %v3011, %v4242
      %v4244 = vlaneseq
      %v4245 = vshrl.u32 %v4244, 7
      %v4246 = vsub.s32 1, %v4245
      %v4247 = vrot.slane %v3011, %v4246
      %v4248 = vlaneseq
      %v4249 = vshrl.u32 %v4248, 7
      %v4250 = vsub.s32 2, %v4249
      %v4251 = vrot.slane %v3011, %v4250
      %v4252 = vlaneseq
      %v4253 = vshrl.u32 %v4252, 7
      %v4254 = vsub.s32 3, %v4253
      %v4255 = vrot.slane %v3011, %v4254
      %v4256 = vlaneseq
      %v4257 = vshrl.u32 %v4256, 7
      %v4258 = vsub.s32 0, %v4257
      %v4259 = vrot.slane %v3013, %v4258
      %v4260 = vlaneseq
      %v4261 = vshrl.u32 %v4260, 7
      %v4262 = vsub.s32 1, %v4261
      %v4263 = vrot.slane %v3013, %v4262
      %v4264 = vlaneseq
      %v4265 = vshrl.u32 %v4264, 7
      %v4266 = vsub.s32 2, %v4265
      %v4267 = vrot.slane %v3013, %v4266
      %v4268 = vlaneseq
      %v4269 = vshrl.u32 %v4268, 7
      %v4270 = vsub.s32 3, %v4269
      %v4271 = vrot.slane %v3013, %v4270
      %v4272 = vlaneseq
      %v4273 = vshrl.u32 %v4272, 7
      %v4274 = vsub.s32 0, %v4273
      %v4275 = vrot.slane %v2996, %v4274
      %v4276 = vlaneseq
      %v4277 = vshrl.u32 %v4276, 7
      %v4278 = vsub.s32 1, %v4277
      %v4279 = vrot.slane %v2996, %v4278
      %v4280 = vlaneseq
      %v4281 = vshrl.u32 %v4280, 7
      %v4282 = vsub.s32 2, %v4281
      %v4283 = vrot.slane %v2996, %v4282
      %v4284 = vlaneseq
      %v4285 = vshrl.u32 %v4284, 7
      %v4286 = vsub.s32 3, %v4285
      %v4287 = vrot.slane %v2996, %v4286
      %v4288 = vlaneseq
      %v4289 = vshrl.u32 %v4288, 7
      %v4290 = vsub.s32 0, %v4289
      %v4291 = vrot.slane %v3010, %v4290
      %v4292 = vlaneseq
      %v4293 = vshrl.u32 %v4292, 7
      %v4294 = vsub.s32 1, %v4293
      %v4295 = vrot.slane %v3010, %v4294
      %v4296 = vlaneseq
      %v4297 = vshrl.u32 %v4296, 7
      %v4298 = vsub.s32 2, %v4297
      %v4299 = vrot.slane %v3010, %v4298
      %v4300 = vlaneseq
      %v4301 = vshrl.u32 %v4300, 7
      %v4302 = vsub.s32 3, %v4301
      %v4303 = vrot.slane %v3010, %v4302
      %v4304 = vlaneseq
      %v4305 = vshrl.u32 %v4304, 7
      %v4306 = vsub.s32 0, %v4305
      %v4307 = vrot.slane %v3012, %v4306
      %v4308 = vlaneseq
      %v4309 = vshrl.u32 %v4308, 7
      %v4310 = vsub.s32 1, %v4309
      %v4311 = vrot.slane %v3012, %v4310
      %v4312 = vlaneseq
      %v4313 = vshrl.u32 %v4312, 7
      %v4314 = vsub.s32 2, %v4313
      %v4315 = vrot.slane %v3012, %v4314
      %v4316 = vlaneseq
      %v4317 = vshrl.u32 %v4316, 7
      %v4318 = vsub.s32 3, %v4317
      %v4319 = vrot.slane %v3012, %v4318
      %v4348 = vlaneseq
      %v4349 = vshrl.u32 %v4348, 7
      %v4350 = vsub.s32 0, %v4349
      %v4351 = vrot.slane %v4183, %v4350
      %v4352 = vlaneseq
      %v4353 = vshrl.u32 %v4352, 7
      %v4354 = vsub.s32 1, %v4353
      %v4355 = vrot.slane %v4183, %v4354
      %v4356 = vlaneseq
      %v4357 = vshrl.u32 %v4356, 7
      %v4358 = vsub.s32 2, %v4357
      %v4359 = vrot.slane %v4183, %v4358
      %v4360 = vlaneseq
      %v4361 = vshrl.u32 %v4360, 7
      %v4362 = vsub.s32 3, %v4361
      %v4363 = vrot.slane %v4183, %v4362
      %v4364 = vlaneseq
      %v4365 = vshrl.u32 %v4364, 7
      %v4366 = vsub.s32 0, %v4365
      %v4367 = vrot.slane %v4197, %v4366
      %v4368 = vlaneseq
      %v4369 = vshrl.u32 %v4368, 7
      %v4370 = vsub.s32 1, %v4369
      %v4371 = vrot.slane %v4197, %v4370
      %v4372 = vlaneseq
      %v4373 = vshrl.u32 %v4372, 7
      %v4374 = vsub.s32 2, %v4373
      %v4375 = vrot.slane %v4197, %v4374
      %v4376 = vlaneseq
      %v4377 = vshrl.u32 %v4376, 7
      %v4378 = vsub.s32 3, %v4377
      %v4379 = vrot.slane %v4197, %v4378
      %v4380 = vlaneseq
      %v4381 = vshrl.u32 %v4380, 7
      %v4382 = vsub.s32 0, %v4381
      %v4383 = vrot.slane %v4205, %v4382
      %v4384 = vlaneseq
      %v4385 = vshrl.u32 %v4384, 7
      %v4386 = vsub.s32 1, %v4385
      %v4387 = vrot.slane %v4205, %v4386
      %v4388 = vlaneseq
      %v4389 = vshrl.u32 %v4388, 7
      %v4390 = vsub.s32 2, %v4389
      %v4391 = vrot.slane %v4205, %v4390
      %v4392 = vlaneseq
      %v4393 = vshrl.u32 %v4392, 7
      %v4394 = vsub.s32 3, %v4393
      %v4395 = vrot.slane %v4205, %v4394
      %v4396 = vlaneseq
      %v4397 = vshrl.u32 %v4396, 7
      %v4398 = vsub.s32 0, %v4397
      %v4399 = vrot.slane %v4207, %v4398
      %v4400 = vlaneseq
      %v4401 = vshrl.u32 %v4400, 7
      %v4402 = vsub.s32 1, %v4401
      %v4403 = vrot.slane %v4207, %v4402
      %v4404 = vlaneseq
      %v4405 = vshrl.u32 %v4404, 7
      %v4406 = vsub.s32 2, %v4405
      %v4407 = vrot.slane %v4207, %v4406
      %v4408 = vlaneseq
      %v4409 = vshrl.u32 %v4408, 7
      %v4410 = vsub.s32 3, %v4409
      %v4411 = vrot.slane %v4207, %v4410
      %v4412 = vlaneseq
      %v4413 = vshrl.u32 %v4412, 7
      %v4414 = vsub.s32 0, %v4413
      %v4415 = vrot.slane %v4190, %v4414
      %v4416 = vlaneseq
      %v4417 = vshrl.u32 %v4416, 7
      %v4418 = vsub.s32 1, %v4417
      %v4419 = vrot.slane %v4190, %v4418
      %v4420 = vlaneseq
      %v4421 = vshrl.u32 %v4420, 7
      %v4422 = vsub.s32 2, %v4421
      %v4423 = vrot.slane %v4190, %v4422
      %v4424 = vlaneseq
      %v4425 = vshrl.u32 %v4424, 7
      %v4426 = vsub.s32 3, %v4425
      %v4427 = vrot.slane %v4190, %v4426
      %v4428 = vlaneseq
      %v4429 = vshrl.u32 %v4428, 7
      %v4430 = vsub.s32 0, %v4429
      %v4431 = vrot.slane %v4204, %v4430
      %v4432 = vlaneseq
      %v4433 = vshrl.u32 %v4432, 7
      %v4434 = vsub.s32 1, %v4433
      %v4435 = vrot.slane %v4204, %v4434
      %v4436 = vlaneseq
      %v4437 = vshrl.u32 %v4436, 7
      %v4438 = vsub.s32 2, %v4437
      %v4439 = vrot.slane %v4204, %v4438
      %v4440 = vlaneseq
      %v4441 = vshrl.u32 %v4440, 7
      %v4442 = vsub.s32 3, %v4441
      %v4443 = vrot.slane %v4204, %v4442
      %v4444 = vlaneseq
      %v4445 = vshrl.u32 %v4444, 7
      %v4446 = vsub.s32 0, %v4445
      %v4447 = vrot.slane %v4206, %v4446
      %v4448 = vlaneseq
      %v4449 = vshrl.u32 %v4448, 7
      %v4450 = vsub.s32 1, %v4449
      %v4451 = vrot.slane %v4206, %v4450
      %v4452 = vlaneseq
      %v4453 = vshrl.u32 %v4452, 7
      %v4454 = vsub.s32 2, %v4453
      %v4455 = vrot.slane %v4206, %v4454
      %v4456 = vlaneseq
      %v4457 = vshrl.u32 %v4456, 7
      %v4458 = vsub.s32 3, %v4457
      %v4459 = vrot.slane %v4206, %v4458
      %vm4488 = vcmask 1040384
      %v4489 = vsel %vm4488, %v4211, %v4351
      %v4490 = vsel %vm4488, %v4215, %v4355
      %v4491 = vsel %vm4488, %v4219, %v4359
      %v4492 = vsel %vm4488, %v4223, %v4363
      %v4493 = vsel %vm4488, %v4227, %v4367
      %v4494 = vsel %vm4488, %v4231, %v4371
      %v4495 = vsel %vm4488, %v4235, %v4375
      %v4496 = vsel %vm4488, %v4239, %v4379
      %v4497 = vsel %vm4488, %v4243, %v4383
      %v4498 = vsel %vm4488, %v4247, %v4387
      %v4499 = vsel %vm4488, %v4251, %v4391
      %v4500 = vsel %vm4488, %v4255, %v4395
      %v4501 = vsel %vm4488, %v4259, %v4399
      %v4502 = vsel %vm4488, %v4263, %v4403
      %v4503 = vsel %vm4488, %v4267, %v4407
      %v4504 = vsel %vm4488, %v4271, %v4411
      %v4505 = vsel %vm4488, %v4275, %v4415
      %v4506 = vsel %vm4488, %v4279, %v4419
      %v4507 = vsel %vm4488, %v4283, %v4423
      %v4508 = vsel %vm4488, %v4287, %v4427
      %v4509 = vsel %vm4488, %v4291, %v4431
      %v4510 = vsel %vm4488, %v4295, %v4435
      %v4511 = vsel %vm4488, %v4299, %v4439
      %v4512 = vsel %vm4488, %v4303, %v4443
      %v4513 = vsel %vm4488, %v4307, %v4447
      %v4514 = vsel %vm4488, %v4311, %v4451
      %v4515 = vsel %vm4488, %v4315, %v4455
      %v4516 = vsel %vm4488, %v4319, %v4459
      %v4545 = vcombine.low %v4489, %v4490
      %v4546 = vcombine.low %v4491, %v4492
      %v4548 = vunpack.c.l.s4 1983009808
      %v4549 = vunpack.c.0.s8 %v4548
      %v4550 = vlaneseq
      %v4551 = vshrl.u32 %v4550, 7
      %v4552 = vsub.s32 %v4549, %v4551
      %v4553 = vrot.slane %v4545, %v4552
      %v4555 = vunpack.c.l.s4 1983009808
      %v4556 = vunpack.c.0.s8 %v4555
      %v4557 = vlaneseq
      %v4558 = vshrl.u32 %v4557, 7
      %v4559 = vsub.s32 %v4556, %v4558
      %v4560 = vrot.slane %v4546, %v4559
      %v4561 = vcombine.low %v4553, %v4560
      %v4562 = vcombine.low %v4493, %v4494
      %v4563 = vcombine.low %v4495, %v4496
      %v4565 = vunpack.c.l.s4 1983009808
      %v4566 = vunpack.c.0.s8 %v4565
      %v4567 = vlaneseq
      %v4568 = vshrl.u32 %v4567, 7
      %v4569 = vsub.s32 %v4566, %v4568
      %v4570 = vrot.slane %v4562, %v4569
      %v4572 = vunpack.c.l.s4 1983009808
      %v4573 = vunpack.c.0.s8 %v4572
      %v4574 = vlaneseq
      %v4575 = vshrl.u32 %v4574, 7
      %v4576 = vsub.s32 %v4573, %v4575
      %v4577 = vrot.slane %v4563, %v4576
      %v4578 = vcombine.low %v4570, %v4577
      %v4579 = vcombine.low %v4497, %v4498
      %v4580 = vcombine.low %v4499, %v4500
      %v4582 = vunpack.c.l.s4 1983009808
      %v4583 = vunpack.c.0.s8 %v4582
      %v4584 = vlaneseq
      %v4585 = vshrl.u32 %v4584, 7
      %v4586 = vsub.s32 %v4583, %v4585
      %v4587 = vrot.slane %v4579, %v4586
      %v4589 = vunpack.c.l.s4 1983009808
      %v4590 = vunpack.c.0.s8 %v4589
      %v4591 = vlaneseq
      %v4592 = vshrl.u32 %v4591, 7
      %v4593 = vsub.s32 %v4590, %v4592
      %v4594 = vrot.slane %v4580, %v4593
      %v4595 = vcombine.low %v4587, %v4594
      %v4596 = vcombine.low %v4501, %v4502
      %v4597 = vcombine.low %v4503, %v4504
      %v4599 = vunpack.c.l.s4 1983009808
      %v4600 = vunpack.c.0.s8 %v4599
      %v4601 = vlaneseq
      %v4602 = vshrl.u32 %v4601, 7
      %v4603 = vsub.s32 %v4600, %v4602
      %v4604 = vrot.slane %v4596, %v4603
      %v4606 = vunpack.c.l.s4 1983009808
      %v4607 = vunpack.c.0.s8 %v4606
      %v4608 = vlaneseq
      %v4609 = vshrl.u32 %v4608, 7
      %v4610 = vsub.s32 %v4607, %v4609
      %v4611 = vrot.slane %v4597, %v4610
      %v4612 = vcombine.low %v4604, %v4611
      %v4613 = vcombine.low %v4505, %v4506
      %v4614 = vcombine.low %v4507, %v4508
      %v4616 = vunpack.c.l.s4 1983009808
      %v4617 = vunpack.c.0.s8 %v4616
      %v4618 = vlaneseq
      %v4619 = vshrl.u32 %v4618, 7
      %v4620 = vsub.s32 %v4617, %v4619
      %v4621 = vrot.slane %v4613, %v4620
      %v4623 = vunpack.c.l.s4 1983009808
      %v4624 = vunpack.c.0.s8 %v4623
      %v4625 = vlaneseq
      %v4626 = vshrl.u32 %v4625, 7
      %v4627 = vsub.s32 %v4624, %v4626
      %v4628 = vrot.slane %v4614, %v4627
      %v4629 = vcombine.low %v4621, %v4628
      %v4630 = vcombine.low %v4509, %v4510
      %v4631 = vcombine.low %v4511, %v4512
      %v4633 = vunpack.c.l.s4 1983009808
      %v4634 = vunpack.c.0.s8 %v4633
      %v4635 = vlaneseq
      %v4636 = vshrl.u32 %v4635, 7
      %v4637 = vsub.s32 %v4634, %v4636
      %v4638 = vrot.slane %v4630, %v4637
      %v4640 = vunpack.c.l.s4 1983009808
      %v4641 = vunpack.c.0.s8 %v4640
      %v4642 = vlaneseq
      %v4643 = vshrl.u32 %v4642, 7
      %v4644 = vsub.s32 %v4641, %v4643
      %v4645 = vrot.slane %v4631, %v4644
      %v4646 = vcombine.low %v4638, %v4645
      %v4647 = vcombine.low %v4513, %v4514
      %v4648 = vcombine.low %v4515, %v4516
      %v4650 = vunpack.c.l.s4 1983009808
      %v4651 = vunpack.c.0.s8 %v4650
      %v4652 = vlaneseq
      %v4653 = vshrl.u32 %v4652, 7
      %v4654 = vsub.s32 %v4651, %v4653
      %v4655 = vrot.slane %v4647, %v4654
      %v4657 = vunpack.c.l.s4 1983009808
      %v4658 = vunpack.c.0.s8 %v4657
      %v4659 = vlaneseq
      %v4660 = vshrl.u32 %v4659, 7
      %v4661 = vsub.s32 %v4658, %v4660
      %v4662 = vrot.slane %v4648, %v4661
      %v4663 = vcombine.low %v4655, %v4662
      %4664 = vst [vmem:[#allocation3] sm:$0xff] 0.0
      %4665 = vst [vmem:[#allocation3 + $0x8] sm:$0xff] 0.0
      %4666 = vst [vmem:[#allocation3 + $0x10] sm:$0xff] 0.0
      %vm4667 = vcmask 785408
      %4668 = vst.msk [vmem:[#allocation3 + $0x18] sm:$0xff] %vm4667, 0.0
      %4669 = vst [vmem:[#allocation3 + $0x20] sm:$0xff] 0.0
      %4670 = vst [vmem:[#allocation3 + $0x28] sm:$0xff] 0.0
      %4671 = vst [vmem:[#allocation3 + $0x30] sm:$0xff] 0.0
      %4672 = vst.msk [vmem:[#allocation3 + $0x38] sm:$0xff] %vm4667, 0.0
      %v4673 = vcombine.low %v4561, %v4578
      %v4674 = vcombine.high %v4561, %v4578
      %v4675 = vcombine.low %v4595, %v4612
      %v4676 = vcombine.high %v4595, %v4612
      %v4678 = vunpack.c.l.s4 1983009808
      %v4679 = vunpack.c.0.s8 %v4678
      %v4680 = vlaneseq
      %v4681 = vshrl.u32 %v4680, 7
      %v4682 = vsub.s32 %v4679, %v4681
      %v4683 = vrot.slane %v4673, %v4682
      %v4685 = vunpack.c.l.s4 1983009808
      %v4686 = vunpack.c.0.s8 %v4685
      %v4687 = vlaneseq
      %v4688 = vshrl.u32 %v4687, 7
      %v4689 = vsub.s32 %v4686, %v4688
      %v4690 = vrot.slane %v4674, %v4689
      %v4692 = vunpack.c.l.s4 1983009808
      %v4693 = vunpack.c.0.s8 %v4692
      %v4694 = vlaneseq
      %v4695 = vshrl.u32 %v4694, 7
      %v4696 = vsub.s32 %v4693, %v4695
      %v4697 = vrot.slane %v4675, %v4696
      %v4699 = vunpack.c.l.s4 1983009808
      %v4700 = vunpack.c.0.s8 %v4699
      %v4701 = vlaneseq
      %v4702 = vshrl.u32 %v4701, 7
      %v4703 = vsub.s32 %v4700, %v4702
      %v4704 = vrot.slane %v4676, %v4703
      %v4705 = vcombine.low %v4683, %v4697
      %v4706 = vcombine.high %v4683, %v4697
      %v4707 = vcombine.low %v4690, %v4704
      %v4708 = vcombine.high %v4690, %v4704
      %v4709 = vcombine.low %v4629, %v4646
      %v4710 = vcombine.high %v4629, %v4646
      %v4711 = vcombine.high %v4663, %v4663
      %v4713 = vunpack.c.l.s4 1983009808
      %v4714 = vunpack.c.0.s8 %v4713
      %v4715 = vlaneseq
      %v4716 = vshrl.u32 %v4715, 7
      %v4717 = vsub.s32 %v4714, %v4716
      %v4718 = vrot.slane %v4709, %v4717
      %v4720 = vunpack.c.l.s4 1983009808
      %v4721 = vunpack.c.0.s8 %v4720
      %v4722 = vlaneseq
      %v4723 = vshrl.u32 %v4722, 7
      %v4724 = vsub.s32 %v4721, %v4723
      %v4725 = vrot.slane %v4710, %v4724
      %v4727 = vunpack.c.l.s4 1983009808
      %v4728 = vunpack.c.0.s8 %v4727
      %v4729 = vlaneseq
      %v4730 = vshrl.u32 %v4729, 7
      %v4731 = vsub.s32 %v4728, %v4730
      %v4732 = vrot.slane %v4663, %v4731
      %v4734 = vunpack.c.l.s4 1983009808
      %v4735 = vunpack.c.0.s8 %v4734
      %v4736 = vlaneseq
      %v4737 = vshrl.u32 %v4736, 7
      %v4738 = vsub.s32 %v4735, %v4737
      %v4739 = vrot.slane %v4711, %v4738
      %v4740 = vcombine.low %v4718, %v4732
      %v4741 = vcombine.high %v4718, %v4732
      %v4742 = vcombine.low %v4725, %v4739
      %v4743 = vcombine.high %v4725, %v4739
      %v4744 = vrot.slane %v4705, 7
      %v4745 = vrot.slane %v4706, 7
      %v4746 = vrot.slane %v4707, 7
      %v4747 = vrot.slane %v4708, 7
      %v4748 = vrot.slane %v4740, 7
      %v4749 = vsel %vm4488, %v4744, %v4748
      %v4750 = vrot.slane %v4741, 7
      %v4751 = vsel %vm4488, %v4745, %v4750
      %v4752 = vrot.slane %v4742, 7
      %v4753 = vsel %vm4488, %v4746, %v4752
      %v4754 = vrot.slane %v4743, 7
      %v4755 = vsel %vm4488, %v4747, %v4754
      %4764 = vst [vmem:[#allocation3] sm:$0xfe] %v4744
      %4765 = vst [vmem:[#allocation3 + $0x8] sm:$0xfe] %v4745
      %4766 = vst [vmem:[#allocation3 + $0x10] sm:$0xfe] %v4746
      %vm4767 = vcmask 523265
      %4768 = vst.msk [vmem:[#allocation3 + $0x18] sm:$0xfe] %vm4767, %v4747
      %4769 = vst [vmem:[#allocation3 + $0x20] sm:$0x7f] %v4749
      %4770 = vst [vmem:[#allocation3 + $0x28] sm:$0x7f] %v4751
      %4771 = vst [vmem:[#allocation3 + $0x30] sm:$0x7f] %v4753
      %vm4772 = vcmask 522240
      %4773 = vst.msk [vmem:[#allocation3 + $0x38] sm:$0x7f] %vm4772, %v4755
      %v4774 = vld [vmem:[#allocation3] sm:$0xff]
      %v4775 = vld [vmem:[#allocation3 + $0x8] sm:$0xff]
      %v4776 = vld [vmem:[#allocation3 + $0x10] sm:$0xff]
      %v4777 = vld [vmem:[#allocation3 + $0x18] sm:$0xff]
      %v4778 = vld [vmem:[#allocation3 + $0x20] sm:$0x3f]
      %v4779 = vld [vmem:[#allocation3 + $0x28] sm:$0x3f]
      %v4780 = vld [vmem:[#allocation3 + $0x30] sm:$0x3f]
      %v4781 = vld [vmem:[#allocation3 + $0x38] sm:$0x3f]
      %v4782 = vld [vmem:[%s5] sm:$0xff]
      %v4783 = vld [vmem:[%s5 + $0x8] sm:$0xff]
      %v4784 = vld [vmem:[%s5 + $0x10] sm:$0xff]
      %v4785 = vld [vmem:[%s5 + $0x18] sm:$0xff]
      %v4786 = vld [vmem:[%s5 + $0x20] sm:$0xff]
      %v4787 = vld [vmem:[%s5 + $0x28] sm:$0xff]
      %v4788 = vld [vmem:[%s5 + $0x30] sm:$0xff]
      %v4789 = vld [vmem:[%s5 + $0x38] sm:$0xff]
      %v4790 = vld [vmem:[%s5 + $0x40] sm:$0xff]
      %v4791 = vld [vmem:[%s5 + $0x48] sm:$0xff]
      %v4792 = vld [vmem:[%s5 + $0x50] sm:$0xff]
      %v4793 = vld [vmem:[%s5 + $0x58] sm:$0xff]
      %v4794 = vld [vmem:[%s5 + $0x60] sm:$0xff]
      %v4795 = vld [vmem:[%s5 + $0x68] sm:$0xff]
      %v4796 = vld [vmem:[%s5 + $0x70] sm:$0xff]
      %v4797 = vld [vmem:[%s5 + $0x78] sm:$0xff]
      %v4798 = vld [vmem:[%s5 + $0x80] sm:$0xff]
      %v4799 = vld [vmem:[%s5 + $0x88] sm:$0xff]
      %v4800 = vld [vmem:[%s5 + $0x90] sm:$0xff]
      %v4801 = vld [vmem:[%s5 + $0x98] sm:$0xff]
      %v4802 = vld [vmem:[%s5 + $0xa0] sm:$0xff]
      %v4803 = vld [vmem:[%s5 + $0xa8] sm:$0xff]
      %v4804 = vld [vmem:[%s5 + $0xb0] sm:$0xff]
      %v4805 = vld [vmem:[%s5 + $0xb8] sm:$0xff]
      %v4806 = vld [vmem:[%s5 + $0xc0] sm:$0xff]
      %v4807 = vld [vmem:[%s5 + $0xc8] sm:$0xff]
      %v4808 = vld [vmem:[%s5 + $0xd0] sm:$0xff]
      %v4809 = vld [vmem:[%s5 + $0xd8] sm:$0xff]
      %v4810 = vld [vmem:[%s5 + $0xe0] sm:$0xff]
      %v4811 = vld [vmem:[%s5 + $0xe8] sm:$0xff]
      %v4812 = vld [vmem:[%s5 + $0xf0] sm:$0xff]
      %v4813 = vld [vmem:[%s5 + $0xf8] sm:$0xff]
      %v4814 = vld [vmem:[%s5 + $0x100] sm:$0xff]
      %v4815 = vld [vmem:[%s5 + $0x108] sm:$0xff]
      %v4816 = vld [vmem:[%s5 + $0x110] sm:$0xff]
      %v4817 = vld [vmem:[%s5 + $0x118] sm:$0xff]
      %v4818 = vld [vmem:[%s5 + $0x120] sm:$0xff]
      %v4819 = vld [vmem:[%s5 + $0x128] sm:$0xff]
      %v4820 = vld [vmem:[%s5 + $0x130] sm:$0xff]
      %v4821 = vld [vmem:[%s5 + $0x138] sm:$0xff]
      %v4822 = vld [vmem:[%s5 + $0x140] sm:$0xff]
      %v4823 = vld [vmem:[%s5 + $0x148] sm:$0xff]
      %v4824 = vld [vmem:[%s5 + $0x150] sm:$0xff]
      %v4825 = vld [vmem:[%s5 + $0x158] sm:$0xff]
      %v4826 = vld [vmem:[%s5 + $0x160] sm:$0xff]
      %v4827 = vld [vmem:[%s5 + $0x168] sm:$0xff]
      %v4828 = vld [vmem:[%s5 + $0x170] sm:$0xff]
      %v4829 = vld [vmem:[%s5 + $0x178] sm:$0xff]
      %v4830 = vld [vmem:[%s5 + $0x180] sm:$0xff]
      %v4831 = vld [vmem:[%s5 + $0x188] sm:$0xff]
      %v4832 = vld [vmem:[%s5 + $0x190] sm:$0xff]
      %v4833 = vld [vmem:[%s5 + $0x198] sm:$0xff]
      %v4834 = vld [vmem:[%s5 + $0x1a0] sm:$0xff]
      %v4835 = vld [vmem:[%s5 + $0x1a8] sm:$0xff]
      %v4836 = vld [vmem:[%s5 + $0x1b0] sm:$0xff]
      %v4837 = vld [vmem:[%s5 + $0x1b8] sm:$0xff]
      %v4838 = vld [vmem:[%s5 + $0x1c0] sm:$0xff]
      %v4839 = vld [vmem:[%s5 + $0x1c8] sm:$0xff]
      %v4840 = vld [vmem:[%s5 + $0x1d0] sm:$0xff]
      %v4841 = vld [vmem:[%s5 + $0x1d8] sm:$0xff]
      %v4842 = vld [vmem:[%s5 + $0x1e0] sm:$0xff]
      %v4843 = vld [vmem:[%s5 + $0x1e8] sm:$0xff]
      %v4844 = vld [vmem:[%s5 + $0x1f0] sm:$0xff]
      %v4845 = vld [vmem:[%s5 + $0x1f8] sm:$0xff]
      %v4846 = vld [vmem:[%s5 + $0x200] sm:$0xff]
      %v4847 = vld [vmem:[%s5 + $0x208] sm:$0xff]
      %v4848 = vld [vmem:[%s5 + $0x210] sm:$0xff]
      %v4849 = vld [vmem:[%s5 + $0x218] sm:$0xff]
      %v4850 = vld [vmem:[%s5 + $0x220] sm:$0xff]
      %v4851 = vld [vmem:[%s5 + $0x228] sm:$0xff]
      %v4852 = vld [vmem:[%s5 + $0x230] sm:$0xff]
      %v4853 = vld [vmem:[%s5 + $0x238] sm:$0xff]
      %v4854 = vld [vmem:[%s5 + $0x240] sm:$0xff]
      %v4855 = vld [vmem:[%s5 + $0x248] sm:$0xff]
      %v4856 = vld [vmem:[%s5 + $0x250] sm:$0xff]
      %v4857 = vld [vmem:[%s5 + $0x258] sm:$0xff]
      %v4858 = vld [vmem:[%s5 + $0x260] sm:$0xff]
      %v4859 = vld [vmem:[%s5 + $0x268] sm:$0xff]
      %v4860 = vld [vmem:[%s5 + $0x270] sm:$0xff]
      %v4861 = vld [vmem:[%s5 + $0x278] sm:$0xff]
      %v4862 = vld [vmem:[%s5 + $0x280] sm:$0xff]
      %v4863 = vld [vmem:[%s5 + $0x288] sm:$0xff]
      %v4864 = vld [vmem:[%s5 + $0x290] sm:$0xff]
      %v4865 = vld [vmem:[%s5 + $0x298] sm:$0xff]
      %v4866 = vld [vmem:[%s5 + $0x2a0] sm:$0xff]
      %v4867 = vld [vmem:[%s5 + $0x2a8] sm:$0xff]
      %v4868 = vld [vmem:[%s5 + $0x2b0] sm:$0xff]
      %v4869 = vld [vmem:[%s5 + $0x2b8] sm:$0xff]
      %v4870 = vld [vmem:[%s5 + $0x2c0] sm:$0xff]
      %v4871 = vld [vmem:[%s5 + $0x2c8] sm:$0xff]
      %v4872 = vld [vmem:[%s5 + $0x2d0] sm:$0xff]
      %v4873 = vld [vmem:[%s5 + $0x2d8] sm:$0xff]
      %v4874 = vld [vmem:[%s5 + $0x2e0] sm:$0xff]
      %v4875 = vld [vmem:[%s5 + $0x2e8] sm:$0xff]
      %v4876 = vld [vmem:[%s5 + $0x2f0] sm:$0xff]
      %v4877 = vld [vmem:[%s5 + $0x2f8] sm:$0xff]
      %v4878 = vld [vmem:[%s5 + $0x300] sm:$0xff]
      %v4879 = vld [vmem:[%s5 + $0x308] sm:$0xff]
      %v4880 = vld [vmem:[%s5 + $0x310] sm:$0xff]
      %v4881 = vld [vmem:[%s5 + $0x318] sm:$0xff]
      %v4882 = vld [vmem:[%s5 + $0x320] sm:$0xff]
      %v4883 = vld [vmem:[%s5 + $0x328] sm:$0xff]
      %v4884 = vld [vmem:[%s5 + $0x330] sm:$0xff]
      %v4885 = vld [vmem:[%s5 + $0x338] sm:$0xff]
      %v4886 = vld [vmem:[%s5 + $0x340] sm:$0xff]
      %v4887 = vld [vmem:[%s5 + $0x348] sm:$0xff]
      %v4888 = vld [vmem:[%s5 + $0x350] sm:$0xff]
      %v4889 = vld [vmem:[%s5 + $0x358] sm:$0xff]
      %v4890 = vld [vmem:[%s5 + $0x360] sm:$0xff]
      %v4891 = vld [vmem:[%s5 + $0x368] sm:$0xff]
      %v4892 = vld [vmem:[%s5 + $0x370] sm:$0xff]
      %v4893 = vld [vmem:[%s5 + $0x378] sm:$0xff]
      %v4894 = vld [vmem:[%s5 + $0x380] sm:$0xff]
      %v4895 = vld [vmem:[%s5 + $0x388] sm:$0xff]
      %v4896 = vld [vmem:[%s5 + $0x390] sm:$0xff]
      %v4897 = vld [vmem:[%s5 + $0x398] sm:$0xff]
      %v4898 = vld [vmem:[%s5 + $0x3a0] sm:$0xff]
      %v4899 = vld [vmem:[%s5 + $0x3a8] sm:$0xff]
      %v4900 = vld [vmem:[%s5 + $0x3b0] sm:$0xff]
      %v4901 = vld [vmem:[%s5 + $0x3b8] sm:$0xff]
      %v4902 = vld [vmem:[%s5 + $0x3c0] sm:$0xff]
      %v4903 = vld [vmem:[%s5 + $0x3c8] sm:$0xff]
      %v4904 = vld [vmem:[%s5 + $0x3d0] sm:$0xff]
      %v4905 = vld [vmem:[%s5 + $0x3d8] sm:$0xff]
      %v4906 = vld [vmem:[%s5 + $0x3e0] sm:$0xff]
      %v4907 = vld [vmem:[%s5 + $0x3e8] sm:$0xff]
      %v4908 = vld [vmem:[%s5 + $0x3f0] sm:$0xff]
      %v4909 = vld [vmem:[%s5 + $0x3f8] sm:$0xff]
      %v4910 = vld [vmem:[%s5 + $0x400] sm:$0xff]
      %v4911 = vld [vmem:[%s5 + $0x408] sm:$0xff]
      %v4912 = vld [vmem:[%s5 + $0x410] sm:$0xff]
      %v4913 = vld [vmem:[%s5 + $0x418] sm:$0xff]
      %v4914 = vld [vmem:[%s5 + $0x420] sm:$0xff]
      %v4915 = vld [vmem:[%s5 + $0x428] sm:$0xff]
      %v4916 = vld [vmem:[%s5 + $0x430] sm:$0xff]
      %v4917 = vld [vmem:[%s5 + $0x438] sm:$0xff]
      %v4918 = vld [vmem:[%s5 + $0x440] sm:$0xff]
      %v4919 = vld [vmem:[%s5 + $0x448] sm:$0xff]
      %v4920 = vld [vmem:[%s5 + $0x450] sm:$0xff]
      %v4921 = vld [vmem:[%s5 + $0x458] sm:$0xff]
      %v4922 = vld [vmem:[%s5 + $0x460] sm:$0xff]
      %v4923 = vld [vmem:[%s5 + $0x468] sm:$0xff]
      %v4924 = vld [vmem:[%s5 + $0x470] sm:$0xff]
      %v4925 = vld [vmem:[%s5 + $0x478] sm:$0xff]
      %v4926 = vld [vmem:[%s5 + $0x480] sm:$0xff]
      %v4927 = vld [vmem:[%s5 + $0x488] sm:$0xff]
      %v4928 = vld [vmem:[%s5 + $0x490] sm:$0xff]
      %v4929 = vld [vmem:[%s5 + $0x498] sm:$0xff]
      %v4930 = vld [vmem:[%s5 + $0x4a0] sm:$0xff]
      %v4931 = vld [vmem:[%s5 + $0x4a8] sm:$0xff]
      %v4932 = vld [vmem:[%s5 + $0x4b0] sm:$0xff]
      %v4933 = vld [vmem:[%s5 + $0x4b8] sm:$0xff]
      %v4934 = vld [vmem:[%s5 + $0x4c0] sm:$0xff]
      %v4935 = vld [vmem:[%s5 + $0x4c8] sm:$0xff]
      %v4936 = vld [vmem:[%s5 + $0x4d0] sm:$0xff]
      %v4937 = vld [vmem:[%s5 + $0x4d8] sm:$0xff]
      %v4938 = vld [vmem:[%s5 + $0x4e0] sm:$0xff]
      %v4939 = vld [vmem:[%s5 + $0x4e8] sm:$0xff]
      %v4940 = vld [vmem:[%s5 + $0x4f0] sm:$0xff]
      %v4941 = vld [vmem:[%s5 + $0x4f8] sm:$0xff]
      %v4942 = vld [vmem:[%s5 + $0x500] sm:$0xff]
      %v4943 = vld [vmem:[%s5 + $0x508] sm:$0xff]
      %v4944 = vld [vmem:[%s5 + $0x510] sm:$0xff]
      %v4945 = vld [vmem:[%s5 + $0x518] sm:$0xff]
      %v4946 = vld [vmem:[%s5 + $0x520] sm:$0xff]
      %v4947 = vld [vmem:[%s5 + $0x528] sm:$0xff]
      %v4948 = vld [vmem:[%s5 + $0x530] sm:$0xff]
      %v4949 = vld [vmem:[%s5 + $0x538] sm:$0xff]
      %v4950 = vld [vmem:[%s5 + $0x540] sm:$0xff]
      %v4951 = vld [vmem:[%s5 + $0x548] sm:$0xff]
      %v4952 = vld [vmem:[%s5 + $0x550] sm:$0xff]
      %v4953 = vld [vmem:[%s5 + $0x558] sm:$0xff]
      %v4954 = vld [vmem:[%s5 + $0x560] sm:$0xff]
      %v4955 = vld [vmem:[%s5 + $0x568] sm:$0xff]
      %v4956 = vld [vmem:[%s5 + $0x570] sm:$0xff]
      %v4957 = vld [vmem:[%s5 + $0x578] sm:$0xff]
      %v4958 = vld [vmem:[%s5 + $0x580] sm:$0xff]
      %v4959 = vld [vmem:[%s5 + $0x588] sm:$0xff]
      %v4960 = vld [vmem:[%s5 + $0x590] sm:$0xff]
      %v4961 = vld [vmem:[%s5 + $0x598] sm:$0xff]
      %v4962 = vld [vmem:[%s5 + $0x5a0] sm:$0xff]
      %v4963 = vld [vmem:[%s5 + $0x5a8] sm:$0xff]
      %v4964 = vld [vmem:[%s5 + $0x5b0] sm:$0xff]
      %v4965 = vld [vmem:[%s5 + $0x5b8] sm:$0xff]
      %v4966 = vld [vmem:[%s5 + $0x5c0] sm:$0xff]
      %v4967 = vld [vmem:[%s5 + $0x5c8] sm:$0xff]
      %v4968 = vld [vmem:[%s5 + $0x5d0] sm:$0xff]
      %v4969 = vld [vmem:[%s5 + $0x5d8] sm:$0xff]
      %v4970 = vld [vmem:[%s5 + $0x5e0] sm:$0xff]
      %v4971 = vld [vmem:[%s5 + $0x5e8] sm:$0xff]
      %v4972 = vld [vmem:[%s5 + $0x5f0] sm:$0xff]
      %v4973 = vld [vmem:[%s5 + $0x5f8] sm:$0xff]
      %v4974 = vld [vmem:[%s5 + $0x600] sm:$0xff]
      %v4975 = vld [vmem:[%s5 + $0x608] sm:$0xff]
      %v4976 = vld [vmem:[%s5 + $0x610] sm:$0xff]
      %v4977 = vld [vmem:[%s5 + $0x618] sm:$0xff]
      %v4978 = vld [vmem:[%s5 + $0x620] sm:$0xff]
      %v4979 = vld [vmem:[%s5 + $0x628] sm:$0xff]
      %v4980 = vld [vmem:[%s5 + $0x630] sm:$0xff]
      %v4981 = vld [vmem:[%s5 + $0x638] sm:$0xff]
      %v4982 = vld [vmem:[%s5 + $0x640] sm:$0xff]
      %v4983 = vld [vmem:[%s5 + $0x648] sm:$0xff]
      %v4984 = vld [vmem:[%s5 + $0x650] sm:$0xff]
      %v4985 = vld [vmem:[%s5 + $0x658] sm:$0xff]
      %v4986 = vld [vmem:[%s5 + $0x660] sm:$0xff]
      %v4987 = vld [vmem:[%s5 + $0x668] sm:$0xff]
      %v4988 = vld [vmem:[%s5 + $0x670] sm:$0xff]
      %v4989 = vld [vmem:[%s5 + $0x678] sm:$0xff]
      %v4990 = vld [vmem:[%s5 + $0x680] sm:$0xff]
      %v4991 = vld [vmem:[%s5 + $0x688] sm:$0xff]
      %v4992 = vld [vmem:[%s5 + $0x690] sm:$0xff]
      %v4993 = vld [vmem:[%s5 + $0x698] sm:$0xff]
      %v4994 = vld [vmem:[%s5 + $0x6a0] sm:$0xff]
      %v4995 = vld [vmem:[%s5 + $0x6a8] sm:$0xff]
      %v4996 = vld [vmem:[%s5 + $0x6b0] sm:$0xff]
      %v4997 = vld [vmem:[%s5 + $0x6b8] sm:$0xff]
      %v4998 = vld [vmem:[%s5 + $0x6c0] sm:$0xff]
      %v4999 = vld [vmem:[%s5 + $0x6c8] sm:$0xff]
      %v5000 = vld [vmem:[%s5 + $0x6d0] sm:$0xff]
      %v5001 = vld [vmem:[%s5 + $0x6d8] sm:$0xff]
      %v5002 = vld [vmem:[%s5 + $0x6e0] sm:$0xff]
      %v5003 = vld [vmem:[%s5 + $0x6e8] sm:$0xff]
      %v5004 = vld [vmem:[%s5 + $0x6f0] sm:$0xff]
      %v5005 = vld [vmem:[%s5 + $0x6f8] sm:$0xff]
      %v5006 = vld [vmem:[%s5 + $0x700] sm:$0xff]
      %v5007 = vld [vmem:[%s5 + $0x708] sm:$0xff]
      %v5008 = vld [vmem:[%s5 + $0x710] sm:$0xff]
      %v5009 = vld [vmem:[%s5 + $0x718] sm:$0xff]
      %v5010 = vld [vmem:[%s5 + $0x720] sm:$0xff]
      %v5011 = vld [vmem:[%s5 + $0x728] sm:$0xff]
      %v5012 = vld [vmem:[%s5 + $0x730] sm:$0xff]
      %v5013 = vld [vmem:[%s5 + $0x738] sm:$0xff]
      %v5014 = vld [vmem:[%s5 + $0x740] sm:$0xff]
      %v5015 = vld [vmem:[%s5 + $0x748] sm:$0xff]
      %v5016 = vld [vmem:[%s5 + $0x750] sm:$0xff]
      %v5017 = vld [vmem:[%s5 + $0x758] sm:$0xff]
      %v5018 = vld [vmem:[%s5 + $0x760] sm:$0xff]
      %v5019 = vld [vmem:[%s5 + $0x768] sm:$0xff]
      %v5020 = vld [vmem:[%s5 + $0x770] sm:$0xff]
      %v5021 = vld [vmem:[%s5 + $0x778] sm:$0xff]
      %v5022 = vld [vmem:[#allocation3] sm:$0xfe]
      %v5023 = vld [vmem:[#allocation3 + $0x8] sm:$0xfe]
      %v5024 = vld [vmem:[#allocation3 + $0x10] sm:$0xfe]
      %v5025 = vld [vmem:[#allocation3 + $0x18] sm:$0xfe]
      %v5026 = vld [vmem:[#allocation3 + $0x20] sm:$0x7f]
      %v5027 = vld [vmem:[#allocation3 + $0x28] sm:$0x7f]
      %v5028 = vld [vmem:[#allocation3 + $0x30] sm:$0x7f]
      %v5029 = vld [vmem:[#allocation3 + $0x38] sm:$0x7f]
      %s5030 = scalar_lea.vmem %s5, 1920
      %v5031 = vld [vmem:[%s5030] sm:$0xff]
      %v5032 = vld [vmem:[%s5030 + $0x8] sm:$0xff]
      %v5033 = vld [vmem:[%s5030 + $0x10] sm:$0xff]
      %v5034 = vld [vmem:[%s5030 + $0x18] sm:$0xff]
      %v5035 = vld [vmem:[%s5030 + $0x20] sm:$0xff]
      %v5036 = vld [vmem:[%s5030 + $0x28] sm:$0xff]
      %v5037 = vld [vmem:[%s5030 + $0x30] sm:$0xff]
      %v5038 = vld [vmem:[%s5030 + $0x38] sm:$0xff]
      %v5039 = vld [vmem:[%s5030 + $0x40] sm:$0xff]
      %v5040 = vld [vmem:[%s5030 + $0x48] sm:$0xff]
      %v5041 = vld [vmem:[%s5030 + $0x50] sm:$0xff]
      %v5042 = vld [vmem:[%s5030 + $0x58] sm:$0xff]
      %v5043 = vld [vmem:[%s5030 + $0x60] sm:$0xff]
      %v5044 = vld [vmem:[%s5030 + $0x68] sm:$0xff]
      %v5045 = vld [vmem:[%s5030 + $0x70] sm:$0xff]
      %v5046 = vld [vmem:[%s5030 + $0x78] sm:$0xff]
      %v5047 = vld [vmem:[%s5030 + $0x80] sm:$0xff]
      %v5048 = vld [vmem:[%s5030 + $0x88] sm:$0xff]
      %v5049 = vld [vmem:[%s5030 + $0x90] sm:$0xff]
      %v5050 = vld [vmem:[%s5030 + $0x98] sm:$0xff]
      %v5051 = vld [vmem:[%s5030 + $0xa0] sm:$0xff]
      %v5052 = vld [vmem:[%s5030 + $0xa8] sm:$0xff]
      %v5053 = vld [vmem:[%s5030 + $0xb0] sm:$0xff]
      %v5054 = vld [vmem:[%s5030 + $0xb8] sm:$0xff]
      %v5055 = vld [vmem:[%s5030 + $0xc0] sm:$0xff]
      %v5056 = vld [vmem:[%s5030 + $0xc8] sm:$0xff]
      %v5057 = vld [vmem:[%s5030 + $0xd0] sm:$0xff]
      %v5058 = vld [vmem:[%s5030 + $0xd8] sm:$0xff]
      %v5059 = vld [vmem:[%s5030 + $0xe0] sm:$0xff]
      %v5060 = vld [vmem:[%s5030 + $0xe8] sm:$0xff]
      %v5061 = vld [vmem:[%s5030 + $0xf0] sm:$0xff]
      %v5062 = vld [vmem:[%s5030 + $0xf8] sm:$0xff]
      %v5063 = vld [vmem:[%s5030 + $0x100] sm:$0xff]
      %v5064 = vld [vmem:[%s5030 + $0x108] sm:$0xff]
      %v5065 = vld [vmem:[%s5030 + $0x110] sm:$0xff]
      %v5066 = vld [vmem:[%s5030 + $0x118] sm:$0xff]
      %v5067 = vld [vmem:[%s5030 + $0x120] sm:$0xff]
      %v5068 = vld [vmem:[%s5030 + $0x128] sm:$0xff]
      %v5069 = vld [vmem:[%s5030 + $0x130] sm:$0xff]
      %v5070 = vld [vmem:[%s5030 + $0x138] sm:$0xff]
      %v5071 = vld [vmem:[%s5030 + $0x140] sm:$0xff]
      %v5072 = vld [vmem:[%s5030 + $0x148] sm:$0xff]
      %v5073 = vld [vmem:[%s5030 + $0x150] sm:$0xff]
      %v5074 = vld [vmem:[%s5030 + $0x158] sm:$0xff]
      %v5075 = vld [vmem:[%s5030 + $0x160] sm:$0xff]
      %v5076 = vld [vmem:[%s5030 + $0x168] sm:$0xff]
      %v5077 = vld [vmem:[%s5030 + $0x170] sm:$0xff]
      %v5078 = vld [vmem:[%s5030 + $0x178] sm:$0xff]
      %v5079 = vld [vmem:[%s5030 + $0x180] sm:$0xff]
      %v5080 = vld [vmem:[%s5030 + $0x188] sm:$0xff]
      %v5081 = vld [vmem:[%s5030 + $0x190] sm:$0xff]
      %v5082 = vld [vmem:[%s5030 + $0x198] sm:$0xff]
      %v5083 = vld [vmem:[%s5030 + $0x1a0] sm:$0xff]
      %v5084 = vld [vmem:[%s5030 + $0x1a8] sm:$0xff]
      %v5085 = vld [vmem:[%s5030 + $0x1b0] sm:$0xff]
      %v5086 = vld [vmem:[%s5030 + $0x1b8] sm:$0xff]
      %v5087 = vld [vmem:[%s5030 + $0x1c0] sm:$0xff]
      %v5088 = vld [vmem:[%s5030 + $0x1c8] sm:$0xff]
      %v5089 = vld [vmem:[%s5030 + $0x1d0] sm:$0xff]
      %v5090 = vld [vmem:[%s5030 + $0x1d8] sm:$0xff]
      %v5091 = vld [vmem:[%s5030 + $0x1e0] sm:$0xff]
      %v5092 = vld [vmem:[%s5030 + $0x1e8] sm:$0xff]
      %v5093 = vld [vmem:[%s5030 + $0x1f0] sm:$0xff]
      %v5094 = vld [vmem:[%s5030 + $0x1f8] sm:$0xff]
      %v5095 = vld [vmem:[%s5030 + $0x200] sm:$0xff]
      %v5096 = vld [vmem:[%s5030 + $0x208] sm:$0xff]
      %v5097 = vld [vmem:[%s5030 + $0x210] sm:$0xff]
      %v5098 = vld [vmem:[%s5030 + $0x218] sm:$0xff]
      %v5099 = vld [vmem:[%s5030 + $0x220] sm:$0xff]
      %v5100 = vld [vmem:[%s5030 + $0x228] sm:$0xff]
      %v5101 = vld [vmem:[%s5030 + $0x230] sm:$0xff]
      %v5102 = vld [vmem:[%s5030 + $0x238] sm:$0xff]
      %v5103 = vld [vmem:[%s5030 + $0x240] sm:$0xff]
      %v5104 = vld [vmem:[%s5030 + $0x248] sm:$0xff]
      %v5105 = vld [vmem:[%s5030 + $0x250] sm:$0xff]
      %v5106 = vld [vmem:[%s5030 + $0x258] sm:$0xff]
      %v5107 = vld [vmem:[%s5030 + $0x260] sm:$0xff]
      %v5108 = vld [vmem:[%s5030 + $0x268] sm:$0xff]
      %v5109 = vld [vmem:[%s5030 + $0x270] sm:$0xff]
      %v5110 = vld [vmem:[%s5030 + $0x278] sm:$0xff]
      %v5111 = vld [vmem:[%s5030 + $0x280] sm:$0xff]
      %v5112 = vld [vmem:[%s5030 + $0x288] sm:$0xff]
      %v5113 = vld [vmem:[%s5030 + $0x290] sm:$0xff]
      %v5114 = vld [vmem:[%s5030 + $0x298] sm:$0xff]
      %v5115 = vld [vmem:[%s5030 + $0x2a0] sm:$0xff]
      %v5116 = vld [vmem:[%s5030 + $0x2a8] sm:$0xff]
      %v5117 = vld [vmem:[%s5030 + $0x2b0] sm:$0xff]
      %v5118 = vld [vmem:[%s5030 + $0x2b8] sm:$0xff]
      %v5119 = vld [vmem:[%s5030 + $0x2c0] sm:$0xff]
      %v5120 = vld [vmem:[%s5030 + $0x2c8] sm:$0xff]
      %v5121 = vld [vmem:[%s5030 + $0x2d0] sm:$0xff]
      %v5122 = vld [vmem:[%s5030 + $0x2d8] sm:$0xff]
      %v5123 = vld [vmem:[%s5030 + $0x2e0] sm:$0xff]
      %v5124 = vld [vmem:[%s5030 + $0x2e8] sm:$0xff]
      %v5125 = vld [vmem:[%s5030 + $0x2f0] sm:$0xff]
      %v5126 = vld [vmem:[%s5030 + $0x2f8] sm:$0xff]
      %v5127 = vld [vmem:[%s5030 + $0x300] sm:$0xff]
      %v5128 = vld [vmem:[%s5030 + $0x308] sm:$0xff]
      %v5129 = vld [vmem:[%s5030 + $0x310] sm:$0xff]
      %v5130 = vld [vmem:[%s5030 + $0x318] sm:$0xff]
      %v5131 = vld [vmem:[%s5030 + $0x320] sm:$0xff]
      %v5132 = vld [vmem:[%s5030 + $0x328] sm:$0xff]
      %v5133 = vld [vmem:[%s5030 + $0x330] sm:$0xff]
      %v5134 = vld [vmem:[%s5030 + $0x338] sm:$0xff]
      %v5135 = vld [vmem:[%s5030 + $0x340] sm:$0xff]
      %v5136 = vld [vmem:[%s5030 + $0x348] sm:$0xff]
      %v5137 = vld [vmem:[%s5030 + $0x350] sm:$0xff]
      %v5138 = vld [vmem:[%s5030 + $0x358] sm:$0xff]
      %v5139 = vld [vmem:[%s5030 + $0x360] sm:$0xff]
      %v5140 = vld [vmem:[%s5030 + $0x368] sm:$0xff]
      %v5141 = vld [vmem:[%s5030 + $0x370] sm:$0xff]
      %v5142 = vld [vmem:[%s5030 + $0x378] sm:$0xff]
      %v5143 = vld [vmem:[%s5030 + $0x380] sm:$0xff]
      %v5144 = vld [vmem:[%s5030 + $0x388] sm:$0xff]
      %v5145 = vld [vmem:[%s5030 + $0x390] sm:$0xff]
      %v5146 = vld [vmem:[%s5030 + $0x398] sm:$0xff]
      %v5147 = vld [vmem:[%s5030 + $0x3a0] sm:$0xff]
      %v5148 = vld [vmem:[%s5030 + $0x3a8] sm:$0xff]
      %v5149 = vld [vmem:[%s5030 + $0x3b0] sm:$0xff]
      %v5150 = vld [vmem:[%s5030 + $0x3b8] sm:$0xff]
      %v5151 = vld [vmem:[%s5030 + $0x3c0] sm:$0xff]
      %v5152 = vld [vmem:[%s5030 + $0x3c8] sm:$0xff]
      %v5153 = vld [vmem:[%s5030 + $0x3d0] sm:$0xff]
      %v5154 = vld [vmem:[%s5030 + $0x3d8] sm:$0xff]
      %v5155 = vld [vmem:[%s5030 + $0x3e0] sm:$0xff]
      %v5156 = vld [vmem:[%s5030 + $0x3e8] sm:$0xff]
      %v5157 = vld [vmem:[%s5030 + $0x3f0] sm:$0xff]
      %v5158 = vld [vmem:[%s5030 + $0x3f8] sm:$0xff]
      %v5159 = vld [vmem:[%s5030 + $0x400] sm:$0xff]
      %v5160 = vld [vmem:[%s5030 + $0x408] sm:$0xff]
      %v5161 = vld [vmem:[%s5030 + $0x410] sm:$0xff]
      %v5162 = vld [vmem:[%s5030 + $0x418] sm:$0xff]
      %v5163 = vld [vmem:[%s5030 + $0x420] sm:$0xff]
      %v5164 = vld [vmem:[%s5030 + $0x428] sm:$0xff]
      %v5165 = vld [vmem:[%s5030 + $0x430] sm:$0xff]
      %v5166 = vld [vmem:[%s5030 + $0x438] sm:$0xff]
      %v5167 = vld [vmem:[%s5030 + $0x440] sm:$0xff]
      %v5168 = vld [vmem:[%s5030 + $0x448] sm:$0xff]
      %v5169 = vld [vmem:[%s5030 + $0x450] sm:$0xff]
      %v5170 = vld [vmem:[%s5030 + $0x458] sm:$0xff]
      %v5171 = vld [vmem:[%s5030 + $0x460] sm:$0xff]
      %v5172 = vld [vmem:[%s5030 + $0x468] sm:$0xff]
      %v5173 = vld [vmem:[%s5030 + $0x470] sm:$0xff]
      %v5174 = vld [vmem:[%s5030 + $0x478] sm:$0xff]
      %v5175 = vld [vmem:[%s5030 + $0x480] sm:$0xff]
      %v5176 = vld [vmem:[%s5030 + $0x488] sm:$0xff]
      %v5177 = vld [vmem:[%s5030 + $0x490] sm:$0xff]
      %v5178 = vld [vmem:[%s5030 + $0x498] sm:$0xff]
      %v5179 = vld [vmem:[%s5030 + $0x4a0] sm:$0xff]
      %v5180 = vld [vmem:[%s5030 + $0x4a8] sm:$0xff]
      %v5181 = vld [vmem:[%s5030 + $0x4b0] sm:$0xff]
      %v5182 = vld [vmem:[%s5030 + $0x4b8] sm:$0xff]
      %v5183 = vld [vmem:[%s5030 + $0x4c0] sm:$0xff]
      %v5184 = vld [vmem:[%s5030 + $0x4c8] sm:$0xff]
      %v5185 = vld [vmem:[%s5030 + $0x4d0] sm:$0xff]
      %v5186 = vld [vmem:[%s5030 + $0x4d8] sm:$0xff]
      %v5187 = vld [vmem:[%s5030 + $0x4e0] sm:$0xff]
      %v5188 = vld [vmem:[%s5030 + $0x4e8] sm:$0xff]
      %v5189 = vld [vmem:[%s5030 + $0x4f0] sm:$0xff]
      %v5190 = vld [vmem:[%s5030 + $0x4f8] sm:$0xff]
      %v5191 = vld [vmem:[%s5030 + $0x500] sm:$0xff]
      %v5192 = vld [vmem:[%s5030 + $0x508] sm:$0xff]
      %v5193 = vld [vmem:[%s5030 + $0x510] sm:$0xff]
      %v5194 = vld [vmem:[%s5030 + $0x518] sm:$0xff]
      %v5195 = vld [vmem:[%s5030 + $0x520] sm:$0xff]
      %v5196 = vld [vmem:[%s5030 + $0x528] sm:$0xff]
      %v5197 = vld [vmem:[%s5030 + $0x530] sm:$0xff]
      %v5198 = vld [vmem:[%s5030 + $0x538] sm:$0xff]
      %v5199 = vld [vmem:[%s5030 + $0x540] sm:$0xff]
      %v5200 = vld [vmem:[%s5030 + $0x548] sm:$0xff]
      %v5201 = vld [vmem:[%s5030 + $0x550] sm:$0xff]
      %v5202 = vld [vmem:[%s5030 + $0x558] sm:$0xff]
      %v5203 = vld [vmem:[%s5030 + $0x560] sm:$0xff]
      %v5204 = vld [vmem:[%s5030 + $0x568] sm:$0xff]
      %v5205 = vld [vmem:[%s5030 + $0x570] sm:$0xff]
      %v5206 = vld [vmem:[%s5030 + $0x578] sm:$0xff]
      %v5207 = vld [vmem:[%s5030 + $0x580] sm:$0xff]
      %v5208 = vld [vmem:[%s5030 + $0x588] sm:$0xff]
      %v5209 = vld [vmem:[%s5030 + $0x590] sm:$0xff]
      %v5210 = vld [vmem:[%s5030 + $0x598] sm:$0xff]
      %v5211 = vld [vmem:[%s5030 + $0x5a0] sm:$0xff]
      %v5212 = vld [vmem:[%s5030 + $0x5a8] sm:$0xff]
      %v5213 = vld [vmem:[%s5030 + $0x5b0] sm:$0xff]
      %v5214 = vld [vmem:[%s5030 + $0x5b8] sm:$0xff]
      %v5215 = vld [vmem:[%s5030 + $0x5c0] sm:$0xff]
      %v5216 = vld [vmem:[%s5030 + $0x5c8] sm:$0xff]
      %v5217 = vld [vmem:[%s5030 + $0x5d0] sm:$0xff]
      %v5218 = vld [vmem:[%s5030 + $0x5d8] sm:$0xff]
      %v5219 = vld [vmem:[%s5030 + $0x5e0] sm:$0xff]
      %v5220 = vld [vmem:[%s5030 + $0x5e8] sm:$0xff]
      %v5221 = vld [vmem:[%s5030 + $0x5f0] sm:$0xff]
      %v5222 = vld [vmem:[%s5030 + $0x5f8] sm:$0xff]
      %v5223 = vld [vmem:[%s5030 + $0x600] sm:$0xff]
      %v5224 = vld [vmem:[%s5030 + $0x608] sm:$0xff]
      %v5225 = vld [vmem:[%s5030 + $0x610] sm:$0xff]
      %v5226 = vld [vmem:[%s5030 + $0x618] sm:$0xff]
      %v5227 = vld [vmem:[%s5030 + $0x620] sm:$0xff]
      %v5228 = vld [vmem:[%s5030 + $0x628] sm:$0xff]
      %v5229 = vld [vmem:[%s5030 + $0x630] sm:$0xff]
      %v5230 = vld [vmem:[%s5030 + $0x638] sm:$0xff]
      %v5231 = vld [vmem:[%s5030 + $0x640] sm:$0xff]
      %v5232 = vld [vmem:[%s5030 + $0x648] sm:$0xff]
      %v5233 = vld [vmem:[%s5030 + $0x650] sm:$0xff]
      %v5234 = vld [vmem:[%s5030 + $0x658] sm:$0xff]
      %v5235 = vld [vmem:[%s5030 + $0x660] sm:$0xff]
      %v5236 = vld [vmem:[%s5030 + $0x668] sm:$0xff]
      %v5237 = vld [vmem:[%s5030 + $0x670] sm:$0xff]
      %v5238 = vld [vmem:[%s5030 + $0x678] sm:$0xff]
      %v5239 = vld [vmem:[%s5030 + $0x680] sm:$0xff]
      %v5240 = vld [vmem:[%s5030 + $0x688] sm:$0xff]
      %v5241 = vld [vmem:[%s5030 + $0x690] sm:$0xff]
      %v5242 = vld [vmem:[%s5030 + $0x698] sm:$0xff]
      %v5243 = vld [vmem:[%s5030 + $0x6a0] sm:$0xff]
      %v5244 = vld [vmem:[%s5030 + $0x6a8] sm:$0xff]
      %v5245 = vld [vmem:[%s5030 + $0x6b0] sm:$0xff]
      %v5246 = vld [vmem:[%s5030 + $0x6b8] sm:$0xff]
      %v5247 = vld [vmem:[%s5030 + $0x6c0] sm:$0xff]
      %v5248 = vld [vmem:[%s5030 + $0x6c8] sm:$0xff]
      %v5249 = vld [vmem:[%s5030 + $0x6d0] sm:$0xff]
      %v5250 = vld [vmem:[%s5030 + $0x6d8] sm:$0xff]
      %v5251 = vld [vmem:[%s5030 + $0x6e0] sm:$0xff]
      %v5252 = vld [vmem:[%s5030 + $0x6e8] sm:$0xff]
      %v5253 = vld [vmem:[%s5030 + $0x6f0] sm:$0xff]
      %v5254 = vld [vmem:[%s5030 + $0x6f8] sm:$0xff]
      %v5255 = vld [vmem:[%s5030 + $0x700] sm:$0xff]
      %v5256 = vld [vmem:[%s5030 + $0x708] sm:$0xff]
      %v5257 = vld [vmem:[%s5030 + $0x710] sm:$0xff]
      %v5258 = vld [vmem:[%s5030 + $0x718] sm:$0xff]
      %v5259 = vld [vmem:[%s5030 + $0x720] sm:$0xff]
      %v5260 = vld [vmem:[%s5030 + $0x728] sm:$0xff]
      %v5261 = vld [vmem:[%s5030 + $0x730] sm:$0xff]
      %v5262 = vld [vmem:[%s5030 + $0x738] sm:$0xff]
      %v5263 = vld [vmem:[%s5030 + $0x740] sm:$0xff]
      %v5264 = vld [vmem:[%s5030 + $0x748] sm:$0xff]
      %v5265 = vld [vmem:[%s5030 + $0x750] sm:$0xff]
      %v5266 = vld [vmem:[%s5030 + $0x758] sm:$0xff]
      %v5267 = vld [vmem:[%s5030 + $0x760] sm:$0xff]
      %v5268 = vld [vmem:[%s5030 + $0x768] sm:$0xff]
      %v5269 = vld [vmem:[%s5030 + $0x770] sm:$0xff]
      %v5270 = vld [vmem:[%s5030 + $0x778] sm:$0xff]
      %vm5279 = vcmask 1046528
      %v5280 = vrot.slane %v5022, 1
      %v5281 = vrot.slane %v5026, 1
      %v5282 = vsel %vm5279, %v5280, %v5281
      %v5283 = vrot.slane %v5023, 1
      %v5284 = vrot.slane %v5027, 1
      %v5285 = vsel %vm5279, %v5283, %v5284
      %v5286 = vrot.slane %v5024, 1
      %v5287 = vrot.slane %v5028, 1
      %v5288 = vsel %vm5279, %v5286, %v5287
      %v5289 = vrot.slane %v5025, 1
      %v5290 = vrot.slane %v5029, 1
      %v5291 = vsel %vm5279, %v5289, %v5290
      %v5298 = vsel %vm4667, %v5291, 0
      %v5300 = vsel %vm4667, %v5290, 0
      %5302 = vmatprep.subr.mxu0 %v5032
      %5303 = vmatpush1.msra.mxu0 %v5031
      %5304 = vmatprep.subr.mxu0 %v5036
      %5305 = vmatpush1.msra.mxu0 %v5035
      %5306 = vmatprep.subr.mxu0 %v5040
      %5307 = vmatpush1.msra.mxu0 %v5039
      %5308 = vmatprep.subr.mxu0 %v5044
      %5309 = vmatpush1.msra.mxu0 %v5043
      %5310 = vmatprep.subr.mxu0 %v5048
      %5311 = vmatpush1.msra.mxu0 %v5047
      %5312 = vmatprep.subr.mxu0 %v5052
      %5313 = vmatpush1.msra.mxu0 %v5051
      %5314 = vmatprep.subr.mxu0 %v5056
      %5315 = vmatpush1.msra.mxu0 %v5055
      %5316 = vmatprep.subr.mxu0 %v5060
      %5317 = vmatpush1.msra.mxu0 %v5059
      %5318 = vmatprep.subr.mxu0 %v5064
      %5319 = vmatpush1.msra.mxu0 %v5063
      %5320 = vmatprep.subr.mxu0 %v5068
      %5321 = vmatpush1.msra.mxu0 %v5067
      %5322 = vmatprep.subr.mxu0 %v5072
      %5323 = vmatpush1.msra.mxu0 %v5071
      %5324 = vmatprep.subr.mxu0 %v5076
      %5325 = vmatpush1.msra.mxu0 %v5075
      %5326 = vmatprep.subr.mxu0 %v5080
      %5327 = vmatpush1.msra.mxu0 %v5079
      %5328 = vmatprep.subr.mxu0 %v5084
      %5329 = vmatpush1.msra.mxu0 %v5083
      %5330 = vmatprep.subr.mxu0 %v5088
      %5331 = vmatpush1.msra.mxu0 %v5087
      %5332 = vmatprep.subr.mxu0 %v5092
      %5333 = vmatpush1.msra.mxu0 %v5091
      %5334 = vmatprep.subr.mxu0 %v5096
      %5335 = vmatpush1.msra.mxu0 %v5095
      %5336 = vmatprep.subr.mxu0 %v5100
      %5337 = vmatpush1.msra.mxu0 %v5099
      %5338 = vmatprep.subr.mxu0 %v5104
      %5339 = vmatpush1.msra.mxu0 %v5103
      %5340 = vmatprep.subr.mxu0 %v5108
      %5341 = vmatpush1.msra.mxu0 %v5107
      %5342 = vmatprep.subr.mxu0 %v5112
      %5343 = vmatpush1.msra.mxu0 %v5111
      %5344 = vmatprep.subr.mxu0 %v5116
      %5345 = vmatpush1.msra.mxu0 %v5115
      %5346 = vmatprep.subr.mxu0 %v5120
      %5347 = vmatpush1.msra.mxu0 %v5119
      %5348 = vmatprep.subr.mxu0 %v5124
      %5349 = vmatpush1.msra.mxu0 %v5123
      %5350 = vmatprep.subr.mxu0 %v5128
      %5351 = vmatpush1.msra.mxu0 %v5127
      %5352 = vmatprep.subr.mxu0 %v5132
      %5353 = vmatpush1.msra.mxu0 %v5131
      %5354 = vmatprep.subr.mxu0 %v5136
      %5355 = vmatpush1.msra.mxu0 %v5135
      %5356 = vmatprep.subr.mxu0 %v5140
      %5357 = vmatpush1.msra.mxu0 %v5139
      %5358 = vmatprep.subr.mxu0 %v5144
      %5359 = vmatpush1.msra.mxu0 %v5143
      %5360 = vmatprep.subr.mxu0 %v5148
      %5361 = vmatpush1.msra.mxu0 %v5147
      %5362 = vmatprep.subr.mxu0 %v5152
      %5363 = vmatpush1.msra.mxu0 %v5151
      %5364 = vmatprep.subr.mxu0 %v5156
      %5365 = vmatpush1.msra.mxu0 %v5155
      %5366 = vmatprep.mubr.f32.mxu0 %v5285
      %5367 = vmatmul.mubr.f32.gmra.mrb[0].mxu0 %v5282
      %v5368 = vpop.f32.mrb[0].mxu0
      %v5369 = vadd.f32 0.0, %v5368
      %v5370 = vpop.f32.mrb[0].mxu0
      %v5371 = vadd.f32 0.0, %v5370
      %5372 = vmatprep.mubr.f32.mxu0 %v5284
      %5373 = vmatmul.mubr.f32.gmra.mrb[0].mxu0 %v5281
      %v5374 = vpop.f32.mrb[0].mxu0
      %v5375 = vadd.f32 0.0, %v5374
      %v5376 = vpop.f32.mrb[0].mxu0
      %v5377 = vadd.f32 0.0, %v5376
      %5378 = vdwg.mxu0
      %5379 = vmatprep.subr.mxu0 %v5160
      %5380 = vmatpush1.msra.mxu0 %v5159
      %5381 = vmatprep.subr.mxu0 %v5164
      %5382 = vmatpush1.msra.mxu0 %v5163
      %5383 = vmatprep.subr.mxu0 %v5168
      %5384 = vmatpush1.msra.mxu0 %v5167
      %5385 = vmatprep.subr.mxu0 %v5172
      %5386 = vmatpush1.msra.mxu0 %v5171
      %5387 = vmatprep.subr.mxu0 %v5176
      %5388 = vmatpush1.msra.mxu0 %v5175
      %5389 = vmatprep.subr.mxu0 %v5180
      %5390 = vmatpush1.msra.mxu0 %v5179
      %5391 = vmatprep.subr.mxu0 %v5184
      %5392 = vmatpush1.msra.mxu0 %v5183
      %5393 = vmatprep.subr.mxu0 %v5188
      %5394 = vmatpush1.msra.mxu0 %v5187
      %5395 = vmatprep.subr.mxu0 %v5192
      %5396 = vmatpush1.msra.mxu0 %v5191
      %5397 = vmatprep.subr.mxu0 %v5196
      %5398 = vmatpush1.msra.mxu0 %v5195
      %5399 = vmatprep.subr.mxu0 %v5200
      %5400 = vmatpush1.msra.mxu0 %v5199
      %5401 = vmatprep.subr.mxu0 %v5204
      %5402 = vmatpush1.msra.mxu0 %v5203
      %5403 = vmatprep.subr.mxu0 %v5208
      %5404 = vmatpush1.msra.mxu0 %v5207
      %5405 = vmatprep.subr.mxu0 %v5212
      %5406 = vmatpush1.msra.mxu0 %v5211
      %5407 = vmatprep.subr.mxu0 %v5216
      %5408 = vmatpush1.msra.mxu0 %v5215
      %5409 = vmatprep.subr.mxu0 %v5220
      %5410 = vmatpush1.msra.mxu0 %v5219
      %5411 = vmatprep.subr.mxu0 %v5224
      %5412 = vmatpush1.msra.mxu0 %v5223
      %5413 = vmatprep.subr.mxu0 %v5228
      %5414 = vmatpush1.msra.mxu0 %v5227
      %5415 = vmatprep.subr.mxu0 %v5232
      %5416 = vmatpush1.msra.mxu0 %v5231
      %5417 = vmatprep.subr.mxu0 %v5236
      %5418 = vmatpush1.msra.mxu0 %v5235
      %5419 = vmatprep.subr.mxu0 %v5240
      %5420 = vmatpush1.msra.mxu0 %v5239
      %5421 = vmatprep.subr.mxu0 %v5244
      %5422 = vmatpush1.msra.mxu0 %v5243
      %5423 = vmatprep.subr.mxu0 %v5248
      %5424 = vmatpush1.msra.mxu0 %v5247
      %5425 = vmatprep.subr.mxu0 %v5252
      %5426 = vmatpush1.msra.mxu0 %v5251
      %5427 = vmatprep.subr.mxu0 %v5256
      %5428 = vmatpush1.msra.mxu0 %v5255
      %5429 = vmatprep.subr.mxu0 %v5260
      %5430 = vmatpush1.msra.mxu0 %v5259
      %5431 = vmatprep.subr.mxu0 %v5264
      %5432 = vmatpush1.msra.mxu0 %v5263
      %5433 = vmatprep.subr.mxu0 %v5268
      %5434 = vmatpush1.msra.mxu0 %v5267
      %5435 = vmatprep.subr.mxu0 0.0
      %5436 = vmatpush1.msra.mxu0 0.0
      %5437 = vmatprep.subr.mxu0 0.0
      %5438 = vmatpush1.msra.mxu0 0.0
      %5439 = vmatprep.subr.mxu0 0.0
      %5440 = vmatpush1.msra.mxu0 0.0
      %5441 = vmatprep.subr.mxu0 0.0
      %5442 = vmatpush1.msra.mxu0 0.0
      %5443 = vmatprep.mubr.f32.mxu0 %v5298
      %5444 = vmatmul.mubr.f32.gmra.mrb[0].mxu0 %v5288
      %v5445 = vpop.f32.mrb[0].mxu0
      %v5446 = vadd.f32 %v5369, %v5445
      %v5447 = vpop.f32.mrb[0].mxu0
      %v5448 = vadd.f32 %v5371, %v5447
      %5449 = vmatprep.mubr.f32.mxu0 %v5300
      %5450 = vmatmul.mubr.f32.gmra.mrb[0].mxu0 %v5287
      %v5451 = vpop.f32.mrb[0].mxu0
      %v5452 = vadd.f32 %v5375, %v5451
      %v5453 = vpop.f32.mrb[0].mxu0
      %v5454 = vadd.f32 %v5377, %v5453
      %5455 = vdwg.mxu0
      %5456 = vmatprep.subr.mxu0 %v5034
      %5457 = vmatpush1.msra.mxu0 %v5033
      %5458 = vmatprep.subr.mxu0 %v5038
      %5459 = vmatpush1.msra.mxu0 %v5037
      %5460 = vmatprep.subr.mxu0 %v5042
      %5461 = vmatpush1.msra.mxu0 %v5041
      %5462 = vmatprep.subr.mxu0 %v5046
      %5463 = vmatpush1.msra.mxu0 %v5045
      %5464 = vmatprep.subr.mxu0 %v5050
      %5465 = vmatpush1.msra.mxu0 %v5049
      %5466 = vmatprep.subr.mxu0 %v5054
      %5467 = vmatpush1.msra.mxu0 %v5053
      %5468 = vmatprep.subr.mxu0 %v5058
      %5469 = vmatpush1.msra.mxu0 %v5057
      %5470 = vmatprep.subr.mxu0 %v5062
      %5471 = vmatpush1.msra.mxu0 %v5061
      %5472 = vmatprep.subr.mxu0 %v5066
      %5473 = vmatpush1.msra.mxu0 %v5065
      %5474 = vmatprep.subr.mxu0 %v5070
      %5475 = vmatpush1.msra.mxu0 %v5069
      %5476 = vmatprep.subr.mxu0 %v5074
      %5477 = vmatpush1.msra.mxu0 %v5073
      %5478 = vmatprep.subr.mxu0 %v5078
      %5479 = vmatpush1.msra.mxu0 %v5077
      %5480 = vmatprep.subr.mxu0 %v5082
      %5481 = vmatpush1.msra.mxu0 %v5081
      %5482 = vmatprep.subr.mxu0 %v5086
      %5483 = vmatpush1.msra.mxu0 %v5085
      %5484 = vmatprep.subr.mxu0 %v5090
      %5485 = vmatpush1.msra.mxu0 %v5089
      %5486 = vmatprep.subr.mxu0 %v5094
      %5487 = vmatpush1.msra.mxu0 %v5093
      %5488 = vmatprep.subr.mxu0 %v5098
      %5489 = vmatpush1.msra.mxu0 %v5097
      %5490 = vmatprep.subr.mxu0 %v5102
      %5491 = vmatpush1.msra.mxu0 %v5101
      %5492 = vmatprep.subr.mxu0 %v5106
      %5493 = vmatpush1.msra.mxu0 %v5105
      %5494 = vmatprep.subr.mxu0 %v5110
      %5495 = vmatpush1.msra.mxu0 %v5109
      %5496 = vmatprep.subr.mxu0 %v5114
      %5497 = vmatpush1.msra.mxu0 %v5113
      %5498 = vmatprep.subr.mxu0 %v5118
      %5499 = vmatpush1.msra.mxu0 %v5117
      %5500 = vmatprep.subr.mxu0 %v5122
      %5501 = vmatpush1.msra.mxu0 %v5121
      %5502 = vmatprep.subr.mxu0 %v5126
      %5503 = vmatpush1.msra.mxu0 %v5125
      %5504 = vmatprep.subr.mxu0 %v5130
      %5505 = vmatpush1.msra.mxu0 %v5129
      %5506 = vmatprep.subr.mxu0 %v5134
      %5507 = vmatpush1.msra.mxu0 %v5133
      %5508 = vmatprep.subr.mxu0 %v5138
      %5509 = vmatpush1.msra.mxu0 %v5137
      %5510 = vmatprep.subr.mxu0 %v5142
      %5511 = vmatpush1.msra.mxu0 %v5141
      %5512 = vmatprep.subr.mxu0 %v5146
      %5513 = vmatpush1.msra.mxu0 %v5145
      %5514 = vmatprep.subr.mxu0 %v5150
      %5515 = vmatpush1.msra.mxu0 %v5149
      %5516 = vmatprep.subr.mxu0 %v5154
      %5517 = vmatpush1.msra.mxu0 %v5153
      %5518 = vmatprep.subr.mxu0 %v5158
      %5519 = vmatpush1.msra.mxu0 %v5157
      %5520 = vmatprep.mubr.f32.mxu0 %v5285
      %5521 = vmatmul.mubr.f32.gmra.mrb[0].mxu0 %v5282
      %v5522 = vpop.f32.mrb[0].mxu0
      %v5523 = vadd.f32 0.0, %v5522
      %v5524 = vpop.f32.mrb[0].mxu0
      %v5525 = vadd.f32 0.0, %v5524
      %5526 = vmatprep.mubr.f32.mxu0 %v5284
      %5527 = vmatmul.mubr.f32.gmra.mrb[0].mxu0 %v5281
      %v5528 = vpop.f32.mrb[0].mxu0
      %v5529 = vadd.f32 0.0, %v5528
      %v5530 = vpop.f32.mrb[0].mxu0
      %v5531 = vadd.f32 0.0, %v5530
      %5532 = vdwg.mxu0
      %5533 = vmatprep.subr.mxu0 %v5162
      %5534 = vmatpush1.msra.mxu0 %v5161
      %5535 = vmatprep.subr.mxu0 %v5166
      %5536 = vmatpush1.msra.mxu0 %v5165
      %5537 = vmatprep.subr.mxu0 %v5170
      %5538 = vmatpush1.msra.mxu0 %v5169
      %5539 = vmatprep.subr.mxu0 %v5174
      %5540 = vmatpush1.msra.mxu0 %v5173
      %5541 = vmatprep.subr.mxu0 %v5178
      %5542 = vmatpush1.msra.mxu0 %v5177
      %5543 = vmatprep.subr.mxu0 %v5182
      %5544 = vmatpush1.msra.mxu0 %v5181
      %5545 = vmatprep.subr.mxu0 %v5186
      %5546 = vmatpush1.msra.mxu0 %v5185
      %5547 = vmatprep.subr.mxu0 %v5190
      %5548 = vmatpush1.msra.mxu0 %v5189
      %5549 = vmatprep.subr.mxu0 %v5194
      %5550 = vmatpush1.msra.mxu0 %v5193
      %5551 = vmatprep.subr.mxu0 %v5198
      %5552 = vmatpush1.msra.mxu0 %v5197
      %5553 = vmatprep.subr.mxu0 %v5202
      %5554 = vmatpush1.msra.mxu0 %v5201
      %5555 = vmatprep.subr.mxu0 %v5206
      %5556 = vmatpush1.msra.mxu0 %v5205
      %5557 = vmatprep.subr.mxu0 %v5210
      %5558 = vmatpush1.msra.mxu0 %v5209
      %5559 = vmatprep.subr.mxu0 %v5214
      %5560 = vmatpush1.msra.mxu0 %v5213
      %5561 = vmatprep.subr.mxu0 %v5218
      %5562 = vmatpush1.msra.mxu0 %v5217
      %5563 = vmatprep.subr.mxu0 %v5222
      %5564 = vmatpush1.msra.mxu0 %v5221
      %5565 = vmatprep.subr.mxu0 %v5226
      %5566 = vmatpush1.msra.mxu0 %v5225
      %5567 = vmatprep.subr.mxu0 %v5230
      %5568 = vmatpush1.msra.mxu0 %v5229
      %5569 = vmatprep.subr.mxu0 %v5234
      %5570 = vmatpush1.msra.mxu0 %v5233
      %5571 = vmatprep.subr.mxu0 %v5238
      %5572 = vmatpush1.msra.mxu0 %v5237
      %5573 = vmatprep.subr.mxu0 %v5242
      %5574 = vmatpush1.msra.mxu0 %v5241
      %5575 = vmatprep.subr.mxu0 %v5246
      %5576 = vmatpush1.msra.mxu0 %v5245
      %5577 = vmatprep.subr.mxu0 %v5250
      %5578 = vmatpush1.msra.mxu0 %v5249
      %5579 = vmatprep.subr.mxu0 %v5254
      %5580 = vmatpush1.msra.mxu0 %v5253
      %5581 = vmatprep.subr.mxu0 %v5258
      %5582 = vmatpush1.msra.mxu0 %v5257
      %5583 = vmatprep.subr.mxu0 %v5262
      %5584 = vmatpush1.msra.mxu0 %v5261
      %5585 = vmatprep.subr.mxu0 %v5266
      %5586 = vmatpush1.msra.mxu0 %v5265
      %5587 = vmatprep.subr.mxu0 %v5270
      %5588 = vmatpush1.msra.mxu0 %v5269
      %5589 = vmatprep.subr.mxu0 0.0
      %5590 = vmatpush1.msra.mxu0 0.0
      %5591 = vmatprep.subr.mxu0 0.0
      %5592 = vmatpush1.msra.mxu0 0.0
      %5593 = vmatprep.subr.mxu0 0.0
      %5594 = vmatpush1.msra.mxu0 0.0
      %5595 = vmatprep.subr.mxu0 0.0
      %5596 = vmatpush1.msra.mxu0 0.0
      %5597 = vmatprep.mubr.f32.mxu0 %v5298
      %5598 = vmatmul.mubr.f32.gmra.mrb[0].mxu0 %v5288
      %v5599 = vpop.f32.mrb[0].mxu0
      %v5600 = vadd.f32 %v5523, %v5599
      %v5601 = vpop.f32.mrb[0].mxu0
      %v5602 = vadd.f32 %v5525, %v5601
      %5603 = vmatprep.mubr.f32.mxu0 %v5300
      %5604 = vmatmul.mubr.f32.gmra.mrb[0].mxu0 %v5287
      %v5605 = vpop.f32.mrb[0].mxu0
      %v5606 = vadd.f32 %v5529, %v5605
      %v5607 = vpop.f32.mrb[0].mxu0
      %v5608 = vadd.f32 %v5531, %v5607
      %5609 = vdwg.mxu0
      %v5611 = vsel %vm4667, %v4777, 0
      %v5614 = vsel %vm4667, %v4781, 0
      %5616 = vmatprep.subr.mxu0 %v4783
      %5617 = vmatpush1.msra.mxu0 %v4782
      %5618 = vmatprep.subr.mxu0 %v4787
      %5619 = vmatpush1.msra.mxu0 %v4786
      %5620 = vmatprep.subr.mxu0 %v4791
      %5621 = vmatpush1.msra.mxu0 %v4790
      %5622 = vmatprep.subr.mxu0 %v4795
      %5623 = vmatpush1.msra.mxu0 %v4794
      %5624 = vmatprep.subr.mxu0 %v4799
      %5625 = vmatpush1.msra.mxu0 %v4798
      %5626 = vmatprep.subr.mxu0 %v4803
      %5627 = vmatpush1.msra.mxu0 %v4802
      %5628 = vmatprep.subr.mxu0 %v4807
      %5629 = vmatpush1.msra.mxu0 %v4806
      %5630 = vmatprep.subr.mxu0 %v4811
      %5631 = vmatpush1.msra.mxu0 %v4810
      %5632 = vmatprep.subr.mxu0 %v4815
      %5633 = vmatpush1.msra.mxu0 %v4814
      %5634 = vmatprep.subr.mxu0 %v4819
      %5635 = vmatpush1.msra.mxu0 %v4818
      %5636 = vmatprep.subr.mxu0 %v4823
      %5637 = vmatpush1.msra.mxu0 %v4822
      %5638 = vmatprep.subr.mxu0 %v4827
      %5639 = vmatpush1.msra.mxu0 %v4826
      %5640 = vmatprep.subr.mxu0 %v4831
      %5641 = vmatpush1.msra.mxu0 %v4830
      %5642 = vmatprep.subr.mxu0 %v4835
      %5643 = vmatpush1.msra.mxu0 %v4834
      %5644 = vmatprep.subr.mxu0 %v4839
      %5645 = vmatpush1.msra.mxu0 %v4838
      %5646 = vmatprep.subr.mxu0 %v4843
      %5647 = vmatpush1.msra.mxu0 %v4842
      %5648 = vmatprep.subr.mxu0 %v4847
      %5649 = vmatpush1.msra.mxu0 %v4846
      %5650 = vmatprep.subr.mxu0 %v4851
      %5651 = vmatpush1.msra.mxu0 %v4850
      %5652 = vmatprep.subr.mxu0 %v4855
      %5653 = vmatpush1.msra.mxu0 %v4854
      %5654 = vmatprep.subr.mxu0 %v4859
      %5655 = vmatpush1.msra.mxu0 %v4858
      %5656 = vmatprep.subr.mxu0 %v4863
      %5657 = vmatpush1.msra.mxu0 %v4862
      %5658 = vmatprep.subr.mxu0 %v4867
      %5659 = vmatpush1.msra.mxu0 %v4866
      %5660 = vmatprep.subr.mxu0 %v4871
      %5661 = vmatpush1.msra.mxu0 %v4870
      %5662 = vmatprep.subr.mxu0 %v4875
      %5663 = vmatpush1.msra.mxu0 %v4874
      %5664 = vmatprep.subr.mxu0 %v4879
      %5665 = vmatpush1.msra.mxu0 %v4878
      %5666 = vmatprep.subr.mxu0 %v4883
      %5667 = vmatpush1.msra.mxu0 %v4882
      %5668 = vmatprep.subr.mxu0 %v4887
      %5669 = vmatpush1.msra.mxu0 %v4886
      %5670 = vmatprep.subr.mxu0 %v4891
      %5671 = vmatpush1.msra.mxu0 %v4890
      %5672 = vmatprep.subr.mxu0 %v4895
      %5673 = vmatpush1.msra.mxu0 %v4894
      %5674 = vmatprep.subr.mxu0 %v4899
      %5675 = vmatpush1.msra.mxu0 %v4898
      %5676 = vmatprep.subr.mxu0 %v4903
      %5677 = vmatpush1.msra.mxu0 %v4902
      %5678 = vmatprep.subr.mxu0 %v4907
      %5679 = vmatpush1.msra.mxu0 %v4906
      %5680 = vmatprep.mubr.f32.mxu0 %v4775
      %5681 = vmatmul.mubr.f32.gmra.mrb[0].mxu0 %v4774
      %v5682 = vpop.f32.mrb[0].mxu0
      %v5683 = vadd.f32 %v5446, %v5682
      %v5684 = vpop.f32.mrb[0].mxu0
      %v5685 = vadd.f32 %v5448, %v5684
      %5686 = vmatprep.mubr.f32.mxu0 %v4779
      %5687 = vmatmul.mubr.f32.gmra.mrb[0].mxu0 %v4778
      %v5688 = vpop.f32.mrb[0].mxu0
      %v5689 = vadd.f32 %v5452, %v5688
      %v5690 = vpop.f32.mrb[0].mxu0
      %v5691 = vadd.f32 %v5454, %v5690
      %5692 = vdwg.mxu0
      %5693 = vmatprep.subr.mxu0 %v4911
      %5694 = vmatpush1.msra.mxu0 %v4910
      %5695 = vmatprep.subr.mxu0 %v4915
      %5696 = vmatpush1.msra.mxu0 %v4914
      %5697 = vmatprep.subr.mxu0 %v4919
      %5698 = vmatpush1.msra.mxu0 %v4918
      %5699 = vmatprep.subr.mxu0 %v4923
      %5700 = vmatpush1.msra.mxu0 %v4922
      %5701 = vmatprep.subr.mxu0 %v4927
      %5702 = vmatpush1.msra.mxu0 %v4926
      %5703 = vmatprep.subr.mxu0 %v4931
      %5704 = vmatpush1.msra.mxu0 %v4930
      %5705 = vmatprep.subr.mxu0 %v4935
      %5706 = vmatpush1.msra.mxu0 %v4934
      %5707 = vmatprep.subr.mxu0 %v4939
      %5708 = vmatpush1.msra.mxu0 %v4938
      %5709 = vmatprep.subr.mxu0 %v4943
      %5710 = vmatpush1.msra.mxu0 %v4942
      %5711 = vmatprep.subr.mxu0 %v4947
      %5712 = vmatpush1.msra.mxu0 %v4946
      %5713 = vmatprep.subr.mxu0 %v4951
      %5714 = vmatpush1.msra.mxu0 %v4950
      %5715 = vmatprep.subr.mxu0 %v4955
      %5716 = vmatpush1.msra.mxu0 %v4954
      %5717 = vmatprep.subr.mxu0 %v4959
      %5718 = vmatpush1.msra.mxu0 %v4958
      %5719 = vmatprep.subr.mxu0 %v4963
      %5720 = vmatpush1.msra.mxu0 %v4962
      %5721 = vmatprep.subr.mxu0 %v4967
      %5722 = vmatpush1.msra.mxu0 %v4966
      %5723 = vmatprep.subr.mxu0 %v4971
      %5724 = vmatpush1.msra.mxu0 %v4970
      %5725 = vmatprep.subr.mxu0 %v4975
      %5726 = vmatpush1.msra.mxu0 %v4974
      %5727 = vmatprep.subr.mxu0 %v4979
      %5728 = vmatpush1.msra.mxu0 %v4978
      %5729 = vmatprep.subr.mxu0 %v4983
      %5730 = vmatpush1.msra.mxu0 %v4982
      %5731 = vmatprep.subr.mxu0 %v4987
      %5732 = vmatpush1.msra.mxu0 %v4986
      %5733 = vmatprep.subr.mxu0 %v4991
      %5734 = vmatpush1.msra.mxu0 %v4990
      %5735 = vmatprep.subr.mxu0 %v4995
      %5736 = vmatpush1.msra.mxu0 %v4994
      %5737 = vmatprep.subr.mxu0 %v4999
      %5738 = vmatpush1.msra.mxu0 %v4998
      %5739 = vmatprep.subr.mxu0 %v5003
      %5740 = vmatpush1.msra.mxu0 %v5002
      %5741 = vmatprep.subr.mxu0 %v5007
      %5742 = vmatpush1.msra.mxu0 %v5006
      %5743 = vmatprep.subr.mxu0 %v5011
      %5744 = vmatpush1.msra.mxu0 %v5010
      %5745 = vmatprep.subr.mxu0 %v5015
      %5746 = vmatpush1.msra.mxu0 %v5014
      %5747 = vmatprep.subr.mxu0 %v5019
      %5748 = vmatpush1.msra.mxu0 %v5018
      %5749 = vmatprep.subr.mxu0 0.0
      %5750 = vmatpush1.msra.mxu0 0.0
      %5751 = vmatprep.subr.mxu0 0.0
      %5752 = vmatpush1.msra.mxu0 0.0
      %5753 = vmatprep.subr.mxu0 0.0
      %5754 = vmatpush1.msra.mxu0 0.0
      %5755 = vmatprep.subr.mxu0 0.0
      %5756 = vmatpush1.msra.mxu0 0.0
      %5757 = vmatprep.mubr.f32.mxu0 %v5611
      %5758 = vmatmul.mubr.f32.gmra.mrb[0].mxu0 %v4776
      %v5759 = vpop.f32.mrb[0].mxu0
      %v5760 = vadd.f32 %v5683, %v5759
      %v5761 = vpop.f32.mrb[0].mxu0
      %v5762 = vadd.f32 %v5685, %v5761
      %5763 = vmatprep.mubr.f32.mxu0 %v5614
      %5764 = vmatmul.mubr.f32.gmra.mrb[0].mxu0 %v4780
      %v5765 = vpop.f32.mrb[0].mxu0
      %v5766 = vadd.f32 %v5689, %v5765
      %v5767 = vpop.f32.mrb[0].mxu0
      %v5768 = vadd.f32 %v5691, %v5767
      %5769 = vdwg.mxu0
      %5770 = vmatprep.subr.mxu0 %v4785
      %5771 = vmatpush1.msra.mxu0 %v4784
      %5772 = vmatprep.subr.mxu0 %v4789
      %5773 = vmatpush1.msra.mxu0 %v4788
      %5774 = vmatprep.subr.mxu0 %v4793
      %5775 = vmatpush1.msra.mxu0 %v4792
      %5776 = vmatprep.subr.mxu0 %v4797
      %5777 = vmatpush1.msra.mxu0 %v4796
      %5778 = vmatprep.subr.mxu0 %v4801
      %5779 = vmatpush1.msra.mxu0 %v4800
      %5780 = vmatprep.subr.mxu0 %v4805
      %5781 = vmatpush1.msra.mxu0 %v4804
      %5782 = vmatprep.subr.mxu0 %v4809
      %5783 = vmatpush1.msra.mxu0 %v4808
      %5784 = vmatprep.subr.mxu0 %v4813
      %5785 = vmatpush1.msra.mxu0 %v4812
      %5786 = vmatprep.subr.mxu0 %v4817
      %5787 = vmatpush1.msra.mxu0 %v4816
      %5788 = vmatprep.subr.mxu0 %v4821
      %5789 = vmatpush1.msra.mxu0 %v4820
      %5790 = vmatprep.subr.mxu0 %v4825
      %5791 = vmatpush1.msra.mxu0 %v4824
      %5792 = vmatprep.subr.mxu0 %v4829
      %5793 = vmatpush1.msra.mxu0 %v4828
      %5794 = vmatprep.subr.mxu0 %v4833
      %5795 = vmatpush1.msra.mxu0 %v4832
      %5796 = vmatprep.subr.mxu0 %v4837
      %5797 = vmatpush1.msra.mxu0 %v4836
      %5798 = vmatprep.subr.mxu0 %v4841
      %5799 = vmatpush1.msra.mxu0 %v4840
      %5800 = vmatprep.subr.mxu0 %v4845
      %5801 = vmatpush1.msra.mxu0 %v4844
      %5802 = vmatprep.subr.mxu0 %v4849
      %5803 = vmatpush1.msra.mxu0 %v4848
      %5804 = vmatprep.subr.mxu0 %v4853
      %5805 = vmatpush1.msra.mxu0 %v4852
      %5806 = vmatprep.subr.mxu0 %v4857
      %5807 = vmatpush1.msra.mxu0 %v4856
      %5808 = vmatprep.subr.mxu0 %v4861
      %5809 = vmatpush1.msra.mxu0 %v4860
      %5810 = vmatprep.subr.mxu0 %v4865
      %5811 = vmatpush1.msra.mxu0 %v4864
      %5812 = vmatprep.subr.mxu0 %v4869
      %5813 = vmatpush1.msra.mxu0 %v4868
      %5814 = vmatprep.subr.mxu0 %v4873
      %5815 = vmatpush1.msra.mxu0 %v4872
      %5816 = vmatprep.subr.mxu0 %v4877
      %5817 = vmatpush1.msra.mxu0 %v4876
      %5818 = vmatprep.subr.mxu0 %v4881
      %5819 = vmatpush1.msra.mxu0 %v4880
      %5820 = vmatprep.subr.mxu0 %v4885
      %5821 = vmatpush1.msra.mxu0 %v4884
      %5822 = vmatprep.subr.mxu0 %v4889
      %5823 = vmatpush1.msra.mxu0 %v4888
      %5824 = vmatprep.subr.mxu0 %v4893
      %5825 = vmatpush1.msra.mxu0 %v4892
      %5826 = vmatprep.subr.mxu0 %v4897
      %5827 = vmatpush1.msra.mxu0 %v4896
      %5828 = vmatprep.subr.mxu0 %v4901
      %5829 = vmatpush1.msra.mxu0 %v4900
      %5830 = vmatprep.subr.mxu0 %v4905
      %5831 = vmatpush1.msra.mxu0 %v4904
      %5832 = vmatprep.subr.mxu0 %v4909
      %5833 = vmatpush1.msra.mxu0 %v4908
      %5834 = vmatprep.mubr.f32.mxu0 %v4775
      %5835 = vmatmul.mubr.f32.gmra.mrb[0].mxu0 %v4774
      %v5836 = vpop.f32.mrb[0].mxu0
      %v5837 = vadd.f32 %v5600, %v5836
      %v5838 = vpop.f32.mrb[0].mxu0
      %v5839 = vadd.f32 %v5602, %v5838
      %5840 = vmatprep.mubr.f32.mxu0 %v4779
      %5841 = vmatmul.mubr.f32.gmra.mrb[0].mxu0 %v4778
      %v5842 = vpop.f32.mrb[0].mxu0
      %v5843 = vadd.f32 %v5606, %v5842
      %v5844 = vpop.f32.mrb[0].mxu0
      %v5845 = vadd.f32 %v5608, %v5844
      %5846 = vdwg.mxu0
      %5847 = vmatprep.subr.mxu0 %v4913
      %5848 = vmatpush1.msra.mxu0 %v4912
      %5849 = vmatprep.subr.mxu0 %v4917
      %5850 = vmatpush1.msra.mxu0 %v4916
      %5851 = vmatprep.subr.mxu0 %v4921
      %5852 = vmatpush1.msra.mxu0 %v4920
      %5853 = vmatprep.subr.mxu0 %v4925
      %5854 = vmatpush1.msra.mxu0 %v4924
      %5855 = vmatprep.subr.mxu0 %v4929
      %5856 = vmatpush1.msra.mxu0 %v4928
      %5857 = vmatprep.subr.mxu0 %v4933
      %5858 = vmatpush1.msra.mxu0 %v4932
      %5859 = vmatprep.subr.mxu0 %v4937
      %5860 = vmatpush1.msra.mxu0 %v4936
      %5861 = vmatprep.subr.mxu0 %v4941
      %5862 = vmatpush1.msra.mxu0 %v4940
      %5863 = vmatprep.subr.mxu0 %v4945
      %5864 = vmatpush1.msra.mxu0 %v4944
      %5865 = vmatprep.subr.mxu0 %v4949
      %5866 = vmatpush1.msra.mxu0 %v4948
      %5867 = vmatprep.subr.mxu0 %v4953
      %5868 = vmatpush1.msra.mxu0 %v4952
      %5869 = vmatprep.subr.mxu0 %v4957
      %5870 = vmatpush1.msra.mxu0 %v4956
      %5871 = vmatprep.subr.mxu0 %v4961
      %5872 = vmatpush1.msra.mxu0 %v4960
      %5873 = vmatprep.subr.mxu0 %v4965
      %5874 = vmatpush1.msra.mxu0 %v4964
      %5875 = vmatprep.subr.mxu0 %v4969
      %5876 = vmatpush1.msra.mxu0 %v4968
      %5877 = vmatprep.subr.mxu0 %v4973
      %5878 = vmatpush1.msra.mxu0 %v4972
      %5879 = vmatprep.subr.mxu0 %v4977
      %5880 = vmatpush1.msra.mxu0 %v4976
      %5881 = vmatprep.subr.mxu0 %v4981
      %5882 = vmatpush1.msra.mxu0 %v4980
      %5883 = vmatprep.subr.mxu0 %v4985
      %5884 = vmatpush1.msra.mxu0 %v4984
      %5885 = vmatprep.subr.mxu0 %v4989
      %5886 = vmatpush1.msra.mxu0 %v4988
      %5887 = vmatprep.subr.mxu0 %v4993
      %5888 = vmatpush1.msra.mxu0 %v4992
      %5889 = vmatprep.subr.mxu0 %v4997
      %5890 = vmatpush1.msra.mxu0 %v4996
      %5891 = vmatprep.subr.mxu0 %v5001
      %5892 = vmatpush1.msra.mxu0 %v5000
      %5893 = vmatprep.subr.mxu0 %v5005
      %5894 = vmatpush1.msra.mxu0 %v5004
      %5895 = vmatprep.subr.mxu0 %v5009
      %5896 = vmatpush1.msra.mxu0 %v5008
      %5897 = vmatprep.subr.mxu0 %v5013
      %5898 = vmatpush1.msra.mxu0 %v5012
      %5899 = vmatprep.subr.mxu0 %v5017
      %5900 = vmatpush1.msra.mxu0 %v5016
      %5901 = vmatprep.subr.mxu0 %v5021
      %5902 = vmatpush1.msra.mxu0 %v5020
      %5903 = vmatprep.subr.mxu0 0.0
      %5904 = vmatpush1.msra.mxu0 0.0
      %5905 = vmatprep.subr.mxu0 0.0
      %5906 = vmatpush1.msra.mxu0 0.0
      %5907 = vmatprep.subr.mxu0 0.0
      %5908 = vmatpush1.msra.mxu0 0.0
      %5909 = vmatprep.subr.mxu0 0.0
      %5910 = vmatpush1.msra.mxu0 0.0
      %5911 = vmatprep.mubr.f32.mxu0 %v5611
      %5912 = vmatmul.mubr.f32.gmra.mrb[0].mxu0 %v4776
      %v5913 = vpop.f32.mrb[0].mxu0
      %v5914 = vadd.f32 %v5837, %v5913
      %v5915 = vpop.f32.mrb[0].mxu0
      %v5916 = vadd.f32 %v5839, %v5915
      %5917 = vmatprep.mubr.f32.mxu0 %v5614
      %5918 = vmatmul.mubr.f32.gmra.mrb[0].mxu0 %v4780
      %v5919 = vpop.f32.mrb[0].mxu0
      %v5920 = vadd.f32 %v5843, %v5919
      %v5921 = vpop.f32.mrb[0].mxu0
      %v5922 = vadd.f32 %v5845, %v5921
      %5923 = vdwg.mxu0
      %v5924 = vld [vmem:[%s6] sm:$0xf]
      %v5926 = vlaneseq
      %v5927 = vshrl.u32 %v5926, 7
      %v5928 = vsub.s32 0, %v5927
      %v5929 = vrot.slane %v5924, %v5928
      %v5930 = vlaneseq
      %v5931 = vshrl.u32 %v5930, 7
      %v5932 = vsub.s32 1, %v5931
      %v5933 = vrot.slane %v5924, %v5932
      %v5934 = vlaneseq
      %v5935 = vshrl.u32 %v5934, 7
      %v5936 = vsub.s32 2, %v5935
      %v5937 = vrot.slane %v5924, %v5936
      %v5938 = vlaneseq
      %v5939 = vshrl.u32 %v5938, 7
      %v5940 = vsub.s32 3, %v5939
      %v5941 = vrot.slane %v5924, %v5940
      %v5946 = vadd.f32 %v5760, %v5929
      %v5947 = vadd.f32 %v5762, %v5933
      %v5948 = vadd.f32 %v5914, %v5937
      %v5949 = vadd.f32 %v5916, %v5941
      %v5950 = vadd.f32 %v5766, %v5929
      %v5951 = vadd.f32 %v5768, %v5933
      %v5952 = vadd.f32 %v5920, %v5937
      %v5953 = vadd.f32 %v5922, %v5941
      %v5962 = vcombine.low %v5946, %v5947
      %v5963 = vcombine.high %v5946, %v5947
      %v5964 = vcombine.low %v5948, %v5949
      %v5965 = vcombine.high %v5948, %v5949
      %v5967 = vunpack.c.l.s4 1966171168
      %v5968 = vunpack.c.0.s8 %v5967
      %v5969 = vlaneseq
      %v5970 = vshrl.u32 %v5969, 7
      %v5971 = vsub.s32 %v5968, %v5970
      %v5972 = vrot.slane %v5962, %v5971
      %v5974 = vunpack.c.l.s4 1966171168
      %v5975 = vunpack.c.0.s8 %v5974
      %v5976 = vlaneseq
      %v5977 = vshrl.u32 %v5976, 7
      %v5978 = vsub.s32 %v5975, %v5977
      %v5979 = vrot.slane %v5963, %v5978
      %v5981 = vunpack.c.l.s4 1966171168
      %v5982 = vunpack.c.0.s8 %v5981
      %v5983 = vlaneseq
      %v5984 = vshrl.u32 %v5983, 7
      %v5985 = vsub.s32 %v5982, %v5984
      %v5986 = vrot.slane %v5964, %v5985
      %v5988 = vunpack.c.l.s4 1966171168
      %v5989 = vunpack.c.0.s8 %v5988
      %v5990 = vlaneseq
      %v5991 = vshrl.u32 %v5990, 7
      %v5992 = vsub.s32 %v5989, %v5991
      %v5993 = vrot.slane %v5965, %v5992
      %v5994 = vcombine.low %v5972, %v5986
      %v5995 = vcombine.high %v5972, %v5986
      %v5996 = vcombine.low %v5979, %v5993
      %v5997 = vcombine.high %v5979, %v5993
      %v5999 = vunpack.c.l.s4 1966171168
      %v6000 = vunpack.c.0.s8 %v5999
      %v6001 = vlaneseq
      %v6002 = vshrl.u32 %v6001, 7
      %v6003 = vsub.s32 %v6000, %v6002
      %v6004 = vrot.slane %v5994, %v6003
      %v6006 = vunpack.c.l.s4 1966171168
      %v6007 = vunpack.c.0.s8 %v6006
      %v6008 = vlaneseq
      %v6009 = vshrl.u32 %v6008, 7
      %v6010 = vsub.s32 %v6007, %v6009
      %v6011 = vrot.slane %v5996, %v6010
      %v6013 = vunpack.c.l.s4 1966171168
      %v6014 = vunpack.c.0.s8 %v6013
      %v6015 = vlaneseq
      %v6016 = vshrl.u32 %v6015, 7
      %v6017 = vsub.s32 %v6014, %v6016
      %v6018 = vrot.slane %v5995, %v6017
      %v6020 = vunpack.c.l.s4 1966171168
      %v6021 = vunpack.c.0.s8 %v6020
      %v6022 = vlaneseq
      %v6023 = vshrl.u32 %v6022, 7
      %v6024 = vsub.s32 %v6021, %v6023
      %v6025 = vrot.slane %v5997, %v6024
      %v6026 = vcombine.high %v6004, %v6004
      %v6027 = vcombine.high %v6011, %v6011
      %v6028 = vcombine.high %v6018, %v6018
      %v6029 = vcombine.high %v6025, %v6025
      %v6030 = vcombine.low %v5950, %v5951
      %v6031 = vcombine.high %v5950, %v5951
      %v6032 = vcombine.low %v5952, %v5953
      %v6033 = vcombine.high %v5952, %v5953
      %v6035 = vunpack.c.l.s4 1966171168
      %v6036 = vunpack.c.0.s8 %v6035
      %v6037 = vlaneseq
      %v6038 = vshrl.u32 %v6037, 7
      %v6039 = vsub.s32 %v6036, %v6038
      %v6040 = vrot.slane %v6030, %v6039
      %v6042 = vunpack.c.l.s4 1966171168
      %v6043 = vunpack.c.0.s8 %v6042
      %v6044 = vlaneseq
      %v6045 = vshrl.u32 %v6044, 7
      %v6046 = vsub.s32 %v6043, %v6045
      %v6047 = vrot.slane %v6031, %v6046
      %v6049 = vunpack.c.l.s4 1966171168
      %v6050 = vunpack.c.0.s8 %v6049
      %v6051 = vlaneseq
      %v6052 = vshrl.u32 %v6051, 7
      %v6053 = vsub.s32 %v6050, %v6052
      %v6054 = vrot.slane %v6032, %v6053
      %v6056 = vunpack.c.l.s4 1966171168
      %v6057 = vunpack.c.0.s8 %v6056
      %v6058 = vlaneseq
      %v6059 = vshrl.u32 %v6058, 7
      %v6060 = vsub.s32 %v6057, %v6059
      %v6061 = vrot.slane %v6033, %v6060
      %v6062 = vcombine.low %v6040, %v6054
      %v6063 = vcombine.high %v6040, %v6054
      %v6064 = vcombine.low %v6047, %v6061
      %v6065 = vcombine.high %v6047, %v6061
      %v6067 = vunpack.c.l.s4 1966171168
      %v6068 = vunpack.c.0.s8 %v6067
      %v6069 = vlaneseq
      %v6070 = vshrl.u32 %v6069, 7
      %v6071 = vsub.s32 %v6068, %v6070
      %v6072 = vrot.slane %v6062, %v6071
      %v6074 = vunpack.c.l.s4 1966171168
      %v6075 = vunpack.c.0.s8 %v6074
      %v6076 = vlaneseq
      %v6077 = vshrl.u32 %v6076, 7
      %v6078 = vsub.s32 %v6075, %v6077
      %v6079 = vrot.slane %v6064, %v6078
      %v6081 = vunpack.c.l.s4 1966171168
      %v6082 = vunpack.c.0.s8 %v6081
      %v6083 = vlaneseq
      %v6084 = vshrl.u32 %v6083, 7
      %v6085 = vsub.s32 %v6082, %v6084
      %v6086 = vrot.slane %v6063, %v6085
      %v6088 = vunpack.c.l.s4 1966171168
      %v6089 = vunpack.c.0.s8 %v6088
      %v6090 = vlaneseq
      %v6091 = vshrl.u32 %v6090, 7
      %v6092 = vsub.s32 %v6089, %v6091
      %v6093 = vrot.slane %v6065, %v6092
      %v6094 = vcombine.high %v6072, %v6072
      %v6095 = vcombine.high %v6086, %v6086
      %s6096 = scalar_lea.vmem %s5, 3840
      %v6097 = vld [vmem:[%s6096] sm:$0xff]
      %v6098 = vld [vmem:[%s6096 + $0x8] sm:$0xff]
      %v6099 = vld [vmem:[%s6096 + $0x10] sm:$0xff]
      %v6100 = vld [vmem:[%s6096 + $0x18] sm:$0xff]
      %v6101 = vld [vmem:[%s6096 + $0x20] sm:$0xff]
      %v6102 = vld [vmem:[%s6096 + $0x28] sm:$0xff]
      %v6103 = vld [vmem:[%s6096 + $0x30] sm:$0xff]
      %v6104 = vld [vmem:[%s6096 + $0x38] sm:$0xff]
      %v6105 = vld [vmem:[%s6096 + $0x40] sm:$0xff]
      %v6106 = vld [vmem:[%s6096 + $0x48] sm:$0xff]
      %v6107 = vld [vmem:[%s6096 + $0x50] sm:$0xff]
      %v6108 = vld [vmem:[%s6096 + $0x58] sm:$0xff]
      %v6109 = vld [vmem:[%s6096 + $0x60] sm:$0xff]
      %v6110 = vld [vmem:[%s6096 + $0x68] sm:$0xff]
      %v6111 = vld [vmem:[%s6096 + $0x70] sm:$0xff]
      %v6112 = vld [vmem:[%s6096 + $0x78] sm:$0xff]
      %v6113 = vld [vmem:[%s6096 + $0x80] sm:$0xff]
      %v6114 = vld [vmem:[%s6096 + $0x88] sm:$0xff]
      %v6115 = vld [vmem:[%s6096 + $0x90] sm:$0xff]
      %v6116 = vld [vmem:[%s6096 + $0x98] sm:$0xff]
      %v6117 = vld [vmem:[%s6096 + $0xa0] sm:$0xff]
      %v6118 = vld [vmem:[%s6096 + $0xa8] sm:$0xff]
      %v6119 = vld [vmem:[%s6096 + $0xb0] sm:$0xff]
      %v6120 = vld [vmem:[%s6096 + $0xb8] sm:$0xff]
      %v6121 = vld [vmem:[%s6096 + $0xc0] sm:$0xff]
      %v6122 = vld [vmem:[%s6096 + $0xc8] sm:$0xff]
      %v6123 = vld [vmem:[%s6096 + $0xd0] sm:$0xff]
      %v6124 = vld [vmem:[%s6096 + $0xd8] sm:$0xff]
      %v6125 = vld [vmem:[%s6096 + $0xe0] sm:$0xff]
      %v6126 = vld [vmem:[%s6096 + $0xe8] sm:$0xff]
      %v6127 = vld [vmem:[%s6096 + $0xf0] sm:$0xff]
      %v6128 = vld [vmem:[%s6096 + $0xf8] sm:$0xff]
      %v6129 = vld [vmem:[%s6096 + $0x100] sm:$0xff]
      %v6130 = vld [vmem:[%s6096 + $0x108] sm:$0xff]
      %v6131 = vld [vmem:[%s6096 + $0x110] sm:$0xff]
      %v6132 = vld [vmem:[%s6096 + $0x118] sm:$0xff]
      %v6133 = vld [vmem:[%s6096 + $0x120] sm:$0xff]
      %v6134 = vld [vmem:[%s6096 + $0x128] sm:$0xff]
      %v6135 = vld [vmem:[%s6096 + $0x130] sm:$0xff]
      %v6136 = vld [vmem:[%s6096 + $0x138] sm:$0xff]
      %v6137 = vld [vmem:[%s6096 + $0x140] sm:$0xff]
      %v6138 = vld [vmem:[%s6096 + $0x148] sm:$0xff]
      %v6139 = vld [vmem:[%s6096 + $0x150] sm:$0xff]
      %v6140 = vld [vmem:[%s6096 + $0x158] sm:$0xff]
      %v6141 = vld [vmem:[%s6096 + $0x160] sm:$0xff]
      %v6142 = vld [vmem:[%s6096 + $0x168] sm:$0xff]
      %v6143 = vld [vmem:[%s6096 + $0x170] sm:$0xff]
      %v6144 = vld [vmem:[%s6096 + $0x178] sm:$0xff]
      %v6145 = vld [vmem:[%s6096 + $0x180] sm:$0xff]
      %v6146 = vld [vmem:[%s6096 + $0x188] sm:$0xff]
      %v6147 = vld [vmem:[%s6096 + $0x190] sm:$0xff]
      %v6148 = vld [vmem:[%s6096 + $0x198] sm:$0xff]
      %v6149 = vld [vmem:[%s6096 + $0x1a0] sm:$0xff]
      %v6150 = vld [vmem:[%s6096 + $0x1a8] sm:$0xff]
      %v6151 = vld [vmem:[%s6096 + $0x1b0] sm:$0xff]
      %v6152 = vld [vmem:[%s6096 + $0x1b8] sm:$0xff]
      %v6153 = vld [vmem:[%s6096 + $0x1c0] sm:$0xff]
      %v6154 = vld [vmem:[%s6096 + $0x1c8] sm:$0xff]
      %v6155 = vld [vmem:[%s6096 + $0x1d0] sm:$0xff]
      %v6156 = vld [vmem:[%s6096 + $0x1d8] sm:$0xff]
      %v6157 = vld [vmem:[%s6096 + $0x1e0] sm:$0xff]
      %v6158 = vld [vmem:[%s6096 + $0x1e8] sm:$0xff]
      %v6159 = vld [vmem:[%s6096 + $0x1f0] sm:$0xff]
      %v6160 = vld [vmem:[%s6096 + $0x1f8] sm:$0xff]
      %v6161 = vld [vmem:[%s6096 + $0x200] sm:$0xff]
      %v6162 = vld [vmem:[%s6096 + $0x208] sm:$0xff]
      %v6163 = vld [vmem:[%s6096 + $0x210] sm:$0xff]
      %v6164 = vld [vmem:[%s6096 + $0x218] sm:$0xff]
      %v6165 = vld [vmem:[%s6096 + $0x220] sm:$0xff]
      %v6166 = vld [vmem:[%s6096 + $0x228] sm:$0xff]
      %v6167 = vld [vmem:[%s6096 + $0x230] sm:$0xff]
      %v6168 = vld [vmem:[%s6096 + $0x238] sm:$0xff]
      %v6169 = vld [vmem:[%s6096 + $0x240] sm:$0xff]
      %v6170 = vld [vmem:[%s6096 + $0x248] sm:$0xff]
      %v6171 = vld [vmem:[%s6096 + $0x250] sm:$0xff]
      %v6172 = vld [vmem:[%s6096 + $0x258] sm:$0xff]
      %v6173 = vld [vmem:[%s6096 + $0x260] sm:$0xff]
      %v6174 = vld [vmem:[%s6096 + $0x268] sm:$0xff]
      %v6175 = vld [vmem:[%s6096 + $0x270] sm:$0xff]
      %v6176 = vld [vmem:[%s6096 + $0x278] sm:$0xff]
      %v6177 = vld [vmem:[%s6096 + $0x280] sm:$0xff]
      %v6178 = vld [vmem:[%s6096 + $0x288] sm:$0xff]
      %v6179 = vld [vmem:[%s6096 + $0x290] sm:$0xff]
      %v6180 = vld [vmem:[%s6096 + $0x298] sm:$0xff]
      %v6181 = vld [vmem:[%s6096 + $0x2a0] sm:$0xff]
      %v6182 = vld [vmem:[%s6096 + $0x2a8] sm:$0xff]
      %v6183 = vld [vmem:[%s6096 + $0x2b0] sm:$0xff]
      %v6184 = vld [vmem:[%s6096 + $0x2b8] sm:$0xff]
      %v6185 = vld [vmem:[%s6096 + $0x2c0] sm:$0xff]
      %v6186 = vld [vmem:[%s6096 + $0x2c8] sm:$0xff]
      %v6187 = vld [vmem:[%s6096 + $0x2d0] sm:$0xff]
      %v6188 = vld [vmem:[%s6096 + $0x2d8] sm:$0xff]
      %v6189 = vld [vmem:[%s6096 + $0x2e0] sm:$0xff]
      %v6190 = vld [vmem:[%s6096 + $0x2e8] sm:$0xff]
      %v6191 = vld [vmem:[%s6096 + $0x2f0] sm:$0xff]
      %v6192 = vld [vmem:[%s6096 + $0x2f8] sm:$0xff]
      %v6193 = vld [vmem:[%s6096 + $0x300] sm:$0xff]
      %v6194 = vld [vmem:[%s6096 + $0x308] sm:$0xff]
      %v6195 = vld [vmem:[%s6096 + $0x310] sm:$0xff]
      %v6196 = vld [vmem:[%s6096 + $0x318] sm:$0xff]
      %v6197 = vld [vmem:[%s6096 + $0x320] sm:$0xff]
      %v6198 = vld [vmem:[%s6096 + $0x328] sm:$0xff]
      %v6199 = vld [vmem:[%s6096 + $0x330] sm:$0xff]
      %v6200 = vld [vmem:[%s6096 + $0x338] sm:$0xff]
      %v6201 = vld [vmem:[%s6096 + $0x340] sm:$0xff]
      %v6202 = vld [vmem:[%s6096 + $0x348] sm:$0xff]
      %v6203 = vld [vmem:[%s6096 + $0x350] sm:$0xff]
      %v6204 = vld [vmem:[%s6096 + $0x358] sm:$0xff]
      %v6205 = vld [vmem:[%s6096 + $0x360] sm:$0xff]
      %v6206 = vld [vmem:[%s6096 + $0x368] sm:$0xff]
      %v6207 = vld [vmem:[%s6096 + $0x370] sm:$0xff]
      %v6208 = vld [vmem:[%s6096 + $0x378] sm:$0xff]
      %v6209 = vld [vmem:[%s6096 + $0x380] sm:$0xff]
      %v6210 = vld [vmem:[%s6096 + $0x388] sm:$0xff]
      %v6211 = vld [vmem:[%s6096 + $0x390] sm:$0xff]
      %v6212 = vld [vmem:[%s6096 + $0x398] sm:$0xff]
      %v6213 = vld [vmem:[%s6096 + $0x3a0] sm:$0xff]
      %v6214 = vld [vmem:[%s6096 + $0x3a8] sm:$0xff]
      %v6215 = vld [vmem:[%s6096 + $0x3b0] sm:$0xff]
      %v6216 = vld [vmem:[%s6096 + $0x3b8] sm:$0xff]
      %v6217 = vld [vmem:[%s6096 + $0x3c0] sm:$0xff]
      %v6218 = vld [vmem:[%s6096 + $0x3c8] sm:$0xff]
      %v6219 = vld [vmem:[%s6096 + $0x3d0] sm:$0xff]
      %v6220 = vld [vmem:[%s6096 + $0x3d8] sm:$0xff]
      %v6221 = vld [vmem:[%s6096 + $0x3e0] sm:$0xff]
      %v6222 = vld [vmem:[%s6096 + $0x3e8] sm:$0xff]
      %v6223 = vld [vmem:[%s6096 + $0x3f0] sm:$0xff]
      %v6224 = vld [vmem:[%s6096 + $0x3f8] sm:$0xff]
      %v6225 = vld [vmem:[%s6096 + $0x400] sm:$0xff]
      %v6226 = vld [vmem:[%s6096 + $0x408] sm:$0xff]
      %v6227 = vld [vmem:[%s6096 + $0x410] sm:$0xff]
      %v6228 = vld [vmem:[%s6096 + $0x418] sm:$0xff]
      %v6229 = vld [vmem:[%s6096 + $0x420] sm:$0xff]
      %v6230 = vld [vmem:[%s6096 + $0x428] sm:$0xff]
      %v6231 = vld [vmem:[%s6096 + $0x430] sm:$0xff]
      %v6232 = vld [vmem:[%s6096 + $0x438] sm:$0xff]
      %v6233 = vld [vmem:[%s6096 + $0x440] sm:$0xff]
      %v6234 = vld [vmem:[%s6096 + $0x448] sm:$0xff]
      %v6235 = vld [vmem:[%s6096 + $0x450] sm:$0xff]
      %v6236 = vld [vmem:[%s6096 + $0x458] sm:$0xff]
      %v6237 = vld [vmem:[%s6096 + $0x460] sm:$0xff]
      %v6238 = vld [vmem:[%s6096 + $0x468] sm:$0xff]
      %v6239 = vld [vmem:[%s6096 + $0x470] sm:$0xff]
      %v6240 = vld [vmem:[%s6096 + $0x478] sm:$0xff]
      %v6241 = vld [vmem:[%s6096 + $0x480] sm:$0xff]
      %v6242 = vld [vmem:[%s6096 + $0x488] sm:$0xff]
      %v6243 = vld [vmem:[%s6096 + $0x490] sm:$0xff]
      %v6244 = vld [vmem:[%s6096 + $0x498] sm:$0xff]
      %v6245 = vld [vmem:[%s6096 + $0x4a0] sm:$0xff]
      %v6246 = vld [vmem:[%s6096 + $0x4a8] sm:$0xff]
      %v6247 = vld [vmem:[%s6096 + $0x4b0] sm:$0xff]
      %v6248 = vld [vmem:[%s6096 + $0x4b8] sm:$0xff]
      %v6249 = vld [vmem:[%s6096 + $0x4c0] sm:$0xff]
      %v6250 = vld [vmem:[%s6096 + $0x4c8] sm:$0xff]
      %v6251 = vld [vmem:[%s6096 + $0x4d0] sm:$0xff]
      %v6252 = vld [vmem:[%s6096 + $0x4d8] sm:$0xff]
      %v6253 = vld [vmem:[%s6096 + $0x4e0] sm:$0xff]
      %v6254 = vld [vmem:[%s6096 + $0x4e8] sm:$0xff]
      %v6255 = vld [vmem:[%s6096 + $0x4f0] sm:$0xff]
      %v6256 = vld [vmem:[%s6096 + $0x4f8] sm:$0xff]
      %v6257 = vld [vmem:[%s6096 + $0x500] sm:$0xff]
      %v6258 = vld [vmem:[%s6096 + $0x508] sm:$0xff]
      %v6259 = vld [vmem:[%s6096 + $0x510] sm:$0xff]
      %v6260 = vld [vmem:[%s6096 + $0x518] sm:$0xff]
      %v6261 = vld [vmem:[%s6096 + $0x520] sm:$0xff]
      %v6262 = vld [vmem:[%s6096 + $0x528] sm:$0xff]
      %v6263 = vld [vmem:[%s6096 + $0x530] sm:$0xff]
      %v6264 = vld [vmem:[%s6096 + $0x538] sm:$0xff]
      %v6265 = vld [vmem:[%s6096 + $0x540] sm:$0xff]
      %v6266 = vld [vmem:[%s6096 + $0x548] sm:$0xff]
      %v6267 = vld [vmem:[%s6096 + $0x550] sm:$0xff]
      %v6268 = vld [vmem:[%s6096 + $0x558] sm:$0xff]
      %v6269 = vld [vmem:[%s6096 + $0x560] sm:$0xff]
      %v6270 = vld [vmem:[%s6096 + $0x568] sm:$0xff]
      %v6271 = vld [vmem:[%s6096 + $0x570] sm:$0xff]
      %v6272 = vld [vmem:[%s6096 + $0x578] sm:$0xff]
      %v6273 = vld [vmem:[%s6096 + $0x580] sm:$0xff]
      %v6274 = vld [vmem:[%s6096 + $0x588] sm:$0xff]
      %v6275 = vld [vmem:[%s6096 + $0x590] sm:$0xff]
      %v6276 = vld [vmem:[%s6096 + $0x598] sm:$0xff]
      %v6277 = vld [vmem:[%s6096 + $0x5a0] sm:$0xff]
      %v6278 = vld [vmem:[%s6096 + $0x5a8] sm:$0xff]
      %v6279 = vld [vmem:[%s6096 + $0x5b0] sm:$0xff]
      %v6280 = vld [vmem:[%s6096 + $0x5b8] sm:$0xff]
      %v6281 = vld [vmem:[%s6096 + $0x5c0] sm:$0xff]
      %v6282 = vld [vmem:[%s6096 + $0x5c8] sm:$0xff]
      %v6283 = vld [vmem:[%s6096 + $0x5d0] sm:$0xff]
      %v6284 = vld [vmem:[%s6096 + $0x5d8] sm:$0xff]
      %v6285 = vld [vmem:[%s6096 + $0x5e0] sm:$0xff]
      %v6286 = vld [vmem:[%s6096 + $0x5e8] sm:$0xff]
      %v6287 = vld [vmem:[%s6096 + $0x5f0] sm:$0xff]
      %v6288 = vld [vmem:[%s6096 + $0x5f8] sm:$0xff]
      %v6289 = vld [vmem:[%s6096 + $0x600] sm:$0xff]
      %v6290 = vld [vmem:[%s6096 + $0x608] sm:$0xff]
      %v6291 = vld [vmem:[%s6096 + $0x610] sm:$0xff]
      %v6292 = vld [vmem:[%s6096 + $0x618] sm:$0xff]
      %v6293 = vld [vmem:[%s6096 + $0x620] sm:$0xff]
      %v6294 = vld [vmem:[%s6096 + $0x628] sm:$0xff]
      %v6295 = vld [vmem:[%s6096 + $0x630] sm:$0xff]
      %v6296 = vld [vmem:[%s6096 + $0x638] sm:$0xff]
      %v6297 = vld [vmem:[%s6096 + $0x640] sm:$0xff]
      %v6298 = vld [vmem:[%s6096 + $0x648] sm:$0xff]
      %v6299 = vld [vmem:[%s6096 + $0x650] sm:$0xff]
      %v6300 = vld [vmem:[%s6096 + $0x658] sm:$0xff]
      %v6301 = vld [vmem:[%s6096 + $0x660] sm:$0xff]
      %v6302 = vld [vmem:[%s6096 + $0x668] sm:$0xff]
      %v6303 = vld [vmem:[%s6096 + $0x670] sm:$0xff]
      %v6304 = vld [vmem:[%s6096 + $0x678] sm:$0xff]
      %v6305 = vld [vmem:[%s6096 + $0x680] sm:$0xff]
      %v6306 = vld [vmem:[%s6096 + $0x688] sm:$0xff]
      %v6307 = vld [vmem:[%s6096 + $0x690] sm:$0xff]
      %v6308 = vld [vmem:[%s6096 + $0x698] sm:$0xff]
      %v6309 = vld [vmem:[%s6096 + $0x6a0] sm:$0xff]
      %v6310 = vld [vmem:[%s6096 + $0x6a8] sm:$0xff]
      %v6311 = vld [vmem:[%s6096 + $0x6b0] sm:$0xff]
      %v6312 = vld [vmem:[%s6096 + $0x6b8] sm:$0xff]
      %v6313 = vld [vmem:[%s6096 + $0x6c0] sm:$0xff]
      %v6314 = vld [vmem:[%s6096 + $0x6c8] sm:$0xff]
      %v6315 = vld [vmem:[%s6096 + $0x6d0] sm:$0xff]
      %v6316 = vld [vmem:[%s6096 + $0x6d8] sm:$0xff]
      %v6317 = vld [vmem:[%s6096 + $0x6e0] sm:$0xff]
      %v6318 = vld [vmem:[%s6096 + $0x6e8] sm:$0xff]
      %v6319 = vld [vmem:[%s6096 + $0x6f0] sm:$0xff]
      %v6320 = vld [vmem:[%s6096 + $0x6f8] sm:$0xff]
      %v6321 = vld [vmem:[%s6096 + $0x700] sm:$0xff]
      %v6322 = vld [vmem:[%s6096 + $0x708] sm:$0xff]
      %v6323 = vld [vmem:[%s6096 + $0x710] sm:$0xff]
      %v6324 = vld [vmem:[%s6096 + $0x718] sm:$0xff]
      %v6325 = vld [vmem:[%s6096 + $0x720] sm:$0xff]
      %v6326 = vld [vmem:[%s6096 + $0x728] sm:$0xff]
      %v6327 = vld [vmem:[%s6096 + $0x730] sm:$0xff]
      %v6328 = vld [vmem:[%s6096 + $0x738] sm:$0xff]
      %v6329 = vld [vmem:[%s6096 + $0x740] sm:$0xff]
      %v6330 = vld [vmem:[%s6096 + $0x748] sm:$0xff]
      %v6331 = vld [vmem:[%s6096 + $0x750] sm:$0xff]
      %v6332 = vld [vmem:[%s6096 + $0x758] sm:$0xff]
      %v6333 = vld [vmem:[%s6096 + $0x760] sm:$0xff]
      %v6334 = vld [vmem:[%s6096 + $0x768] sm:$0xff]
      %v6335 = vld [vmem:[%s6096 + $0x770] sm:$0xff]
      %v6336 = vld [vmem:[%s6096 + $0x778] sm:$0xff]
      %v6337 = vld [vmem:[#allocation3] sm:$0xfc]
      %v6338 = vld [vmem:[#allocation3 + $0x8] sm:$0xfc]
      %v6339 = vld [vmem:[#allocation3 + $0x10] sm:$0xfc]
      %v6340 = vld [vmem:[#allocation3 + $0x18] sm:$0xfc]
      %v6341 = vld [vmem:[#allocation3 + $0x20] sm:$0xff]
      %v6342 = vld [vmem:[#allocation3 + $0x28] sm:$0xff]
      %v6343 = vld [vmem:[#allocation3 + $0x30] sm:$0xff]
      %v6344 = vld [vmem:[#allocation3 + $0x38] sm:$0xff]
      %s6345 = scalar_lea.vmem %s5, 5760
      %v6346 = vld [vmem:[%s6345] sm:$0xff]
      %v6347 = vld [vmem:[%s6345 + $0x8] sm:$0xff]
      %v6348 = vld [vmem:[%s6345 + $0x10] sm:$0xff]
      %v6349 = vld [vmem:[%s6345 + $0x18] sm:$0xff]
      %v6350 = vld [vmem:[%s6345 + $0x20] sm:$0xff]
      %v6351 = vld [vmem:[%s6345 + $0x28] sm:$0xff]
      %v6352 = vld [vmem:[%s6345 + $0x30] sm:$0xff]
      %v6353 = vld [vmem:[%s6345 + $0x38] sm:$0xff]
      %v6354 = vld [vmem:[%s6345 + $0x40] sm:$0xff]
      %v6355 = vld [vmem:[%s6345 + $0x48] sm:$0xff]
      %v6356 = vld [vmem:[%s6345 + $0x50] sm:$0xff]
      %v6357 = vld [vmem:[%s6345 + $0x58] sm:$0xff]
      %v6358 = vld [vmem:[%s6345 + $0x60] sm:$0xff]
      %v6359 = vld [vmem:[%s6345 + $0x68] sm:$0xff]
      %v6360 = vld [vmem:[%s6345 + $0x70] sm:$0xff]
      %v6361 = vld [vmem:[%s6345 + $0x78] sm:$0xff]
      %v6362 = vld [vmem:[%s6345 + $0x80] sm:$0xff]
      %v6363 = vld [vmem:[%s6345 + $0x88] sm:$0xff]
      %v6364 = vld [vmem:[%s6345 + $0x90] sm:$0xff]
      %v6365 = vld [vmem:[%s6345 + $0x98] sm:$0xff]
      %v6366 = vld [vmem:[%s6345 + $0xa0] sm:$0xff]
      %v6367 = vld [vmem:[%s6345 + $0xa8] sm:$0xff]
      %v6368 = vld [vmem:[%s6345 + $0xb0] sm:$0xff]
      %v6369 = vld [vmem:[%s6345 + $0xb8] sm:$0xff]
      %v6370 = vld [vmem:[%s6345 + $0xc0] sm:$0xff]
      %v6371 = vld [vmem:[%s6345 + $0xc8] sm:$0xff]
      %v6372 = vld [vmem:[%s6345 + $0xd0] sm:$0xff]
      %v6373 = vld [vmem:[%s6345 + $0xd8] sm:$0xff]
      %v6374 = vld [vmem:[%s6345 + $0xe0] sm:$0xff]
      %v6375 = vld [vmem:[%s6345 + $0xe8] sm:$0xff]
      %v6376 = vld [vmem:[%s6345 + $0xf0] sm:$0xff]
      %v6377 = vld [vmem:[%s6345 + $0xf8] sm:$0xff]
      %v6378 = vld [vmem:[%s6345 + $0x100] sm:$0xff]
      %v6379 = vld [vmem:[%s6345 + $0x108] sm:$0xff]
      %v6380 = vld [vmem:[%s6345 + $0x110] sm:$0xff]
      %v6381 = vld [vmem:[%s6345 + $0x118] sm:$0xff]
      %v6382 = vld [vmem:[%s6345 + $0x120] sm:$0xff]
      %v6383 = vld [vmem:[%s6345 + $0x128] sm:$0xff]
      %v6384 = vld [vmem:[%s6345 + $0x130] sm:$0xff]
      %v6385 = vld [vmem:[%s6345 + $0x138] sm:$0xff]
      %v6386 = vld [vmem:[%s6345 + $0x140] sm:$0xff]
      %v6387 = vld [vmem:[%s6345 + $0x148] sm:$0xff]
      %v6388 = vld [vmem:[%s6345 + $0x150] sm:$0xff]
      %v6389 = vld [vmem:[%s6345 + $0x158] sm:$0xff]
      %v6390 = vld [vmem:[%s6345 + $0x160] sm:$0xff]
      %v6391 = vld [vmem:[%s6345 + $0x168] sm:$0xff]
      %v6392 = vld [vmem:[%s6345 + $0x170] sm:$0xff]
      %v6393 = vld [vmem:[%s6345 + $0x178] sm:$0xff]
      %v6394 = vld [vmem:[%s6345 + $0x180] sm:$0xff]
      %v6395 = vld [vmem:[%s6345 + $0x188] sm:$0xff]
      %v6396 = vld [vmem:[%s6345 + $0x190] sm:$0xff]
      %v6397 = vld [vmem:[%s6345 + $0x198] sm:$0xff]
      %v6398 = vld [vmem:[%s6345 + $0x1a0] sm:$0xff]
      %v6399 = vld [vmem:[%s6345 + $0x1a8] sm:$0xff]
      %v6400 = vld [vmem:[%s6345 + $0x1b0] sm:$0xff]
      %v6401 = vld [vmem:[%s6345 + $0x1b8] sm:$0xff]
      %v6402 = vld [vmem:[%s6345 + $0x1c0] sm:$0xff]
      %v6403 = vld [vmem:[%s6345 + $0x1c8] sm:$0xff]
      %v6404 = vld [vmem:[%s6345 + $0x1d0] sm:$0xff]
      %v6405 = vld [vmem:[%s6345 + $0x1d8] sm:$0xff]
      %v6406 = vld [vmem:[%s6345 + $0x1e0] sm:$0xff]
      %v6407 = vld [vmem:[%s6345 + $0x1e8] sm:$0xff]
      %v6408 = vld [vmem:[%s6345 + $0x1f0] sm:$0xff]
      %v6409 = vld [vmem:[%s6345 + $0x1f8] sm:$0xff]
      %v6410 = vld [vmem:[%s6345 + $0x200] sm:$0xff]
      %v6411 = vld [vmem:[%s6345 + $0x208] sm:$0xff]
      %v6412 = vld [vmem:[%s6345 + $0x210] sm:$0xff]
      %v6413 = vld [vmem:[%s6345 + $0x218] sm:$0xff]
      %v6414 = vld [vmem:[%s6345 + $0x220] sm:$0xff]
      %v6415 = vld [vmem:[%s6345 + $0x228] sm:$0xff]
      %v6416 = vld [vmem:[%s6345 + $0x230] sm:$0xff]
      %v6417 = vld [vmem:[%s6345 + $0x238] sm:$0xff]
      %v6418 = vld [vmem:[%s6345 + $0x240] sm:$0xff]
      %v6419 = vld [vmem:[%s6345 + $0x248] sm:$0xff]
      %v6420 = vld [vmem:[%s6345 + $0x250] sm:$0xff]
      %v6421 = vld [vmem:[%s6345 + $0x258] sm:$0xff]
      %v6422 = vld [vmem:[%s6345 + $0x260] sm:$0xff]
      %v6423 = vld [vmem:[%s6345 + $0x268] sm:$0xff]
      %v6424 = vld [vmem:[%s6345 + $0x270] sm:$0xff]
      %v6425 = vld [vmem:[%s6345 + $0x278] sm:$0xff]
      %v6426 = vld [vmem:[%s6345 + $0x280] sm:$0xff]
      %v6427 = vld [vmem:[%s6345 + $0x288] sm:$0xff]
      %v6428 = vld [vmem:[%s6345 + $0x290] sm:$0xff]
      %v6429 = vld [vmem:[%s6345 + $0x298] sm:$0xff]
      %v6430 = vld [vmem:[%s6345 + $0x2a0] sm:$0xff]
      %v6431 = vld [vmem:[%s6345 + $0x2a8] sm:$0xff]
      %v6432 = vld [vmem:[%s6345 + $0x2b0] sm:$0xff]
      %v6433 = vld [vmem:[%s6345 + $0x2b8] sm:$0xff]
      %v6434 = vld [vmem:[%s6345 + $0x2c0] sm:$0xff]
      %v6435 = vld [vmem:[%s6345 + $0x2c8] sm:$0xff]
      %v6436 = vld [vmem:[%s6345 + $0x2d0] sm:$0xff]
      %v6437 = vld [vmem:[%s6345 + $0x2d8] sm:$0xff]
      %v6438 = vld [vmem:[%s6345 + $0x2e0] sm:$0xff]
      %v6439 = vld [vmem:[%s6345 + $0x2e8] sm:$0xff]
      %v6440 = vld [vmem:[%s6345 + $0x2f0] sm:$0xff]
      %v6441 = vld [vmem:[%s6345 + $0x2f8] sm:$0xff]
      %v6442 = vld [vmem:[%s6345 + $0x300] sm:$0xff]
      %v6443 = vld [vmem:[%s6345 + $0x308] sm:$0xff]
      %v6444 = vld [vmem:[%s6345 + $0x310] sm:$0xff]
      %v6445 = vld [vmem:[%s6345 + $0x318] sm:$0xff]
      %v6446 = vld [vmem:[%s6345 + $0x320] sm:$0xff]
      %v6447 = vld [vmem:[%s6345 + $0x328] sm:$0xff]
      %v6448 = vld [vmem:[%s6345 + $0x330] sm:$0xff]
      %v6449 = vld [vmem:[%s6345 + $0x338] sm:$0xff]
      %v6450 = vld [vmem:[%s6345 + $0x340] sm:$0xff]
      %v6451 = vld [vmem:[%s6345 + $0x348] sm:$0xff]
      %v6452 = vld [vmem:[%s6345 + $0x350] sm:$0xff]
      %v6453 = vld [vmem:[%s6345 + $0x358] sm:$0xff]
      %v6454 = vld [vmem:[%s6345 + $0x360] sm:$0xff]
      %v6455 = vld [vmem:[%s6345 + $0x368] sm:$0xff]
      %v6456 = vld [vmem:[%s6345 + $0x370] sm:$0xff]
      %v6457 = vld [vmem:[%s6345 + $0x378] sm:$0xff]
      %v6458 = vld [vmem:[%s6345 + $0x380] sm:$0xff]
      %v6459 = vld [vmem:[%s6345 + $0x388] sm:$0xff]
      %v6460 = vld [vmem:[%s6345 + $0x390] sm:$0xff]
      %v6461 = vld [vmem:[%s6345 + $0x398] sm:$0xff]
      %v6462 = vld [vmem:[%s6345 + $0x3a0] sm:$0xff]
      %v6463 = vld [vmem:[%s6345 + $0x3a8] sm:$0xff]
      %v6464 = vld [vmem:[%s6345 + $0x3b0] sm:$0xff]
      %v6465 = vld [vmem:[%s6345 + $0x3b8] sm:$0xff]
      %v6466 = vld [vmem:[%s6345 + $0x3c0] sm:$0xff]
      %v6467 = vld [vmem:[%s6345 + $0x3c8] sm:$0xff]
      %v6468 = vld [vmem:[%s6345 + $0x3d0] sm:$0xff]
      %v6469 = vld [vmem:[%s6345 + $0x3d8] sm:$0xff]
      %v6470 = vld [vmem:[%s6345 + $0x3e0] sm:$0xff]
      %v6471 = vld [vmem:[%s6345 + $0x3e8] sm:$0xff]
      %v6472 = vld [vmem:[%s6345 + $0x3f0] sm:$0xff]
      %v6473 = vld [vmem:[%s6345 + $0x3f8] sm:$0xff]
      %v6474 = vld [vmem:[%s6345 + $0x400] sm:$0xff]
      %v6475 = vld [vmem:[%s6345 + $0x408] sm:$0xff]
      %v6476 = vld [vmem:[%s6345 + $0x410] sm:$0xff]
      %v6477 = vld [vmem:[%s6345 + $0x418] sm:$0xff]
      %v6478 = vld [vmem:[%s6345 + $0x420] sm:$0xff]
      %v6479 = vld [vmem:[%s6345 + $0x428] sm:$0xff]
      %v6480 = vld [vmem:[%s6345 + $0x430] sm:$0xff]
      %v6481 = vld [vmem:[%s6345 + $0x438] sm:$0xff]
      %v6482 = vld [vmem:[%s6345 + $0x440] sm:$0xff]
      %v6483 = vld [vmem:[%s6345 + $0x448] sm:$0xff]
      %v6484 = vld [vmem:[%s6345 + $0x450] sm:$0xff]
      %v6485 = vld [vmem:[%s6345 + $0x458] sm:$0xff]
      %v6486 = vld [vmem:[%s6345 + $0x460] sm:$0xff]
      %v6487 = vld [vmem:[%s6345 + $0x468] sm:$0xff]
      %v6488 = vld [vmem:[%s6345 + $0x470] sm:$0xff]
      %v6489 = vld [vmem:[%s6345 + $0x478] sm:$0xff]
      %v6490 = vld [vmem:[%s6345 + $0x480] sm:$0xff]
      %v6491 = vld [vmem:[%s6345 + $0x488] sm:$0xff]
      %v6492 = vld [vmem:[%s6345 + $0x490] sm:$0xff]
      %v6493 = vld [vmem:[%s6345 + $0x498] sm:$0xff]
      %v6494 = vld [vmem:[%s6345 + $0x4a0] sm:$0xff]
      %v6495 = vld [vmem:[%s6345 + $0x4a8] sm:$0xff]
      %v6496 = vld [vmem:[%s6345 + $0x4b0] sm:$0xff]
      %v6497 = vld [vmem:[%s6345 + $0x4b8] sm:$0xff]
      %v6498 = vld [vmem:[%s6345 + $0x4c0] sm:$0xff]
      %v6499 = vld [vmem:[%s6345 + $0x4c8] sm:$0xff]
      %v6500 = vld [vmem:[%s6345 + $0x4d0] sm:$0xff]
      %v6501 = vld [vmem:[%s6345 + $0x4d8] sm:$0xff]
      %v6502 = vld [vmem:[%s6345 + $0x4e0] sm:$0xff]
      %v6503 = vld [vmem:[%s6345 + $0x4e8] sm:$0xff]
      %v6504 = vld [vmem:[%s6345 + $0x4f0] sm:$0xff]
      %v6505 = vld [vmem:[%s6345 + $0x4f8] sm:$0xff]
      %v6506 = vld [vmem:[%s6345 + $0x500] sm:$0xff]
      %v6507 = vld [vmem:[%s6345 + $0x508] sm:$0xff]
      %v6508 = vld [vmem:[%s6345 + $0x510] sm:$0xff]
      %v6509 = vld [vmem:[%s6345 + $0x518] sm:$0xff]
      %v6510 = vld [vmem:[%s6345 + $0x520] sm:$0xff]
      %v6511 = vld [vmem:[%s6345 + $0x528] sm:$0xff]
      %v6512 = vld [vmem:[%s6345 + $0x530] sm:$0xff]
      %v6513 = vld [vmem:[%s6345 + $0x538] sm:$0xff]
      %v6514 = vld [vmem:[%s6345 + $0x540] sm:$0xff]
      %v6515 = vld [vmem:[%s6345 + $0x548] sm:$0xff]
      %v6516 = vld [vmem:[%s6345 + $0x550] sm:$0xff]
      %v6517 = vld [vmem:[%s6345 + $0x558] sm:$0xff]
      %v6518 = vld [vmem:[%s6345 + $0x560] sm:$0xff]
      %v6519 = vld [vmem:[%s6345 + $0x568] sm:$0xff]
      %v6520 = vld [vmem:[%s6345 + $0x570] sm:$0xff]
      %v6521 = vld [vmem:[%s6345 + $0x578] sm:$0xff]
      %v6522 = vld [vmem:[%s6345 + $0x580] sm:$0xff]
      %v6523 = vld [vmem:[%s6345 + $0x588] sm:$0xff]
      %v6524 = vld [vmem:[%s6345 + $0x590] sm:$0xff]
      %v6525 = vld [vmem:[%s6345 + $0x598] sm:$0xff]
      %v6526 = vld [vmem:[%s6345 + $0x5a0] sm:$0xff]
      %v6527 = vld [vmem:[%s6345 + $0x5a8] sm:$0xff]
      %v6528 = vld [vmem:[%s6345 + $0x5b0] sm:$0xff]
      %v6529 = vld [vmem:[%s6345 + $0x5b8] sm:$0xff]
      %v6530 = vld [vmem:[%s6345 + $0x5c0] sm:$0xff]
      %v6531 = vld [vmem:[%s6345 + $0x5c8] sm:$0xff]
      %v6532 = vld [vmem:[%s6345 + $0x5d0] sm:$0xff]
      %v6533 = vld [vmem:[%s6345 + $0x5d8] sm:$0xff]
      %v6534 = vld [vmem:[%s6345 + $0x5e0] sm:$0xff]
      %v6535 = vld [vmem:[%s6345 + $0x5e8] sm:$0xff]
      %v6536 = vld [vmem:[%s6345 + $0x5f0] sm:$0xff]
      %v6537 = vld [vmem:[%s6345 + $0x5f8] sm:$0xff]
      %v6538 = vld [vmem:[%s6345 + $0x600] sm:$0xff]
      %v6539 = vld [vmem:[%s6345 + $0x608] sm:$0xff]
      %v6540 = vld [vmem:[%s6345 + $0x610] sm:$0xff]
      %v6541 = vld [vmem:[%s6345 + $0x618] sm:$0xff]
      %v6542 = vld [vmem:[%s6345 + $0x620] sm:$0xff]
      %v6543 = vld [vmem:[%s6345 + $0x628] sm:$0xff]
      %v6544 = vld [vmem:[%s6345 + $0x630] sm:$0xff]
      %v6545 = vld [vmem:[%s6345 + $0x638] sm:$0xff]
      %v6546 = vld [vmem:[%s6345 + $0x640] sm:$0xff]
      %v6547 = vld [vmem:[%s6345 + $0x648] sm:$0xff]
      %v6548 = vld [vmem:[%s6345 + $0x650] sm:$0xff]
      %v6549 = vld [vmem:[%s6345 + $0x658] sm:$0xff]
      %v6550 = vld [vmem:[%s6345 + $0x660] sm:$0xff]
      %v6551 = vld [vmem:[%s6345 + $0x668] sm:$0xff]
      %v6552 = vld [vmem:[%s6345 + $0x670] sm:$0xff]
      %v6553 = vld [vmem:[%s6345 + $0x678] sm:$0xff]
      %v6554 = vld [vmem:[%s6345 + $0x680] sm:$0xff]
      %v6555 = vld [vmem:[%s6345 + $0x688] sm:$0xff]
      %v6556 = vld [vmem:[%s6345 + $0x690] sm:$0xff]
      %v6557 = vld [vmem:[%s6345 + $0x698] sm:$0xff]
      %v6558 = vld [vmem:[%s6345 + $0x6a0] sm:$0xff]
      %v6559 = vld [vmem:[%s6345 + $0x6a8] sm:$0xff]
      %v6560 = vld [vmem:[%s6345 + $0x6b0] sm:$0xff]
      %v6561 = vld [vmem:[%s6345 + $0x6b8] sm:$0xff]
      %v6562 = vld [vmem:[%s6345 + $0x6c0] sm:$0xff]
      %v6563 = vld [vmem:[%s6345 + $0x6c8] sm:$0xff]
      %v6564 = vld [vmem:[%s6345 + $0x6d0] sm:$0xff]
      %v6565 = vld [vmem:[%s6345 + $0x6d8] sm:$0xff]
      %v6566 = vld [vmem:[%s6345 + $0x6e0] sm:$0xff]
      %v6567 = vld [vmem:[%s6345 + $0x6e8] sm:$0xff]
      %v6568 = vld [vmem:[%s6345 + $0x6f0] sm:$0xff]
      %v6569 = vld [vmem:[%s6345 + $0x6f8] sm:$0xff]
      %v6570 = vld [vmem:[%s6345 + $0x700] sm:$0xff]
      %v6571 = vld [vmem:[%s6345 + $0x708] sm:$0xff]
      %v6572 = vld [vmem:[%s6345 + $0x710] sm:$0xff]
      %v6573 = vld [vmem:[%s6345 + $0x718] sm:$0xff]
      %v6574 = vld [vmem:[%s6345 + $0x720] sm:$0xff]
      %v6575 = vld [vmem:[%s6345 + $0x728] sm:$0xff]
      %v6576 = vld [vmem:[%s6345 + $0x730] sm:$0xff]
      %v6577 = vld [vmem:[%s6345 + $0x738] sm:$0xff]
      %v6578 = vld [vmem:[%s6345 + $0x740] sm:$0xff]
      %v6579 = vld [vmem:[%s6345 + $0x748] sm:$0xff]
      %v6580 = vld [vmem:[%s6345 + $0x750] sm:$0xff]
      %v6581 = vld [vmem:[%s6345 + $0x758] sm:$0xff]
      %v6582 = vld [vmem:[%s6345 + $0x760] sm:$0xff]
      %v6583 = vld [vmem:[%s6345 + $0x768] sm:$0xff]
      %v6584 = vld [vmem:[%s6345 + $0x770] sm:$0xff]
      %v6585 = vld [vmem:[%s6345 + $0x778] sm:$0xff]
      %v6594 = vrot.slane %v6337, 2
      %v6595 = vrot.slane %v6341, 2
      %v6596 = vsel %vm3544, %v6594, %v6595
      %v6597 = vrot.slane %v6338, 2
      %v6598 = vrot.slane %v6342, 2
      %v6599 = vsel %vm3544, %v6597, %v6598
      %v6600 = vrot.slane %v6339, 2
      %v6601 = vrot.slane %v6343, 2
      %v6602 = vsel %vm3544, %v6600, %v6601
      %v6603 = vrot.slane %v6340, 2
      %v6604 = vrot.slane %v6344, 2
      %v6605 = vsel %vm3544, %v6603, %v6604
      %v6612 = vsel %vm4667, %v6605, 0
      %v6614 = vsel %vm4667, %v6604, 0
      %6616 = vmatprep.subr.mxu0 %v6347
      %6617 = vmatpush1.msra.mxu0 %v6346
      %6618 = vmatprep.subr.mxu0 %v6351
      %6619 = vmatpush1.msra.mxu0 %v6350
      %6620 = vmatprep.subr.mxu0 %v6355
      %6621 = vmatpush1.msra.mxu0 %v6354
      %6622 = vmatprep.subr.mxu0 %v6359
      %6623 = vmatpush1.msra.mxu0 %v6358
      %6624 = vmatprep.subr.mxu0 %v6363
      %6625 = vmatpush1.msra.mxu0 %v6362
      %6626 = vmatprep.subr.mxu0 %v6367
      %6627 = vmatpush1.msra.mxu0 %v6366
      %6628 = vmatprep.subr.mxu0 %v6371
      %6629 = vmatpush1.msra.mxu0 %v6370
      %6630 = vmatprep.subr.mxu0 %v6375
      %6631 = vmatpush1.msra.mxu0 %v6374
      %6632 = vmatprep.subr.mxu0 %v6379
      %6633 = vmatpush1.msra.mxu0 %v6378
      %6634 = vmatprep.subr.mxu0 %v6383
      %6635 = vmatpush1.msra.mxu0 %v6382
      %6636 = vmatprep.subr.mxu0 %v6387
      %6637 = vmatpush1.msra.mxu0 %v6386
      %6638 = vmatprep.subr.mxu0 %v6391
      %6639 = vmatpush1.msra.mxu0 %v6390
      %6640 = vmatprep.subr.mxu0 %v6395
      %6641 = vmatpush1.msra.mxu0 %v6394
      %6642 = vmatprep.subr.mxu0 %v6399
      %6643 = vmatpush1.msra.mxu0 %v6398
      %6644 = vmatprep.subr.mxu0 %v6403
      %6645 = vmatpush1.msra.mxu0 %v6402
      %6646 = vmatprep.subr.mxu0 %v6407
      %6647 = vmatpush1.msra.mxu0 %v6406
      %6648 = vmatprep.subr.mxu0 %v6411
      %6649 = vmatpush1.msra.mxu0 %v6410
      %6650 = vmatprep.subr.mxu0 %v6415
      %6651 = vmatpush1.msra.mxu0 %v6414
      %6652 = vmatprep.subr.mxu0 %v6419
      %6653 = vmatpush1.msra.mxu0 %v6418
      %6654 = vmatprep.subr.mxu0 %v6423
      %6655 = vmatpush1.msra.mxu0 %v6422
      %6656 = vmatprep.subr.mxu0 %v6427
      %6657 = vmatpush1.msra.mxu0 %v6426
      %6658 = vmatprep.subr.mxu0 %v6431
      %6659 = vmatpush1.msra.mxu0 %v6430
      %6660 = vmatprep.subr.mxu0 %v6435
      %6661 = vmatpush1.msra.mxu0 %v6434
      %6662 = vmatprep.subr.mxu0 %v6439
      %6663 = vmatpush1.msra.mxu0 %v6438
      %6664 = vmatprep.subr.mxu0 %v6443
      %6665 = vmatpush1.msra.mxu0 %v6442
      %6666 = vmatprep.subr.mxu0 %v6447
      %6667 = vmatpush1.msra.mxu0 %v6446
      %6668 = vmatprep.subr.mxu0 %v6451
      %6669 = vmatpush1.msra.mxu0 %v6450
      %6670 = vmatprep.subr.mxu0 %v6455
      %6671 = vmatpush1.msra.mxu0 %v6454
      %6672 = vmatprep.subr.mxu0 %v6459
      %6673 = vmatpush1.msra.mxu0 %v6458
      %6674 = vmatprep.subr.mxu0 %v6463
      %6675 = vmatpush1.msra.mxu0 %v6462
      %6676 = vmatprep.subr.mxu0 %v6467
      %6677 = vmatpush1.msra.mxu0 %v6466
      %6678 = vmatprep.subr.mxu0 %v6471
      %6679 = vmatpush1.msra.mxu0 %v6470
      %6680 = vmatprep.mubr.f32.mxu0 %v6599
      %6681 = vmatmul.mubr.f32.gmra.mrb[0].mxu0 %v6596
      %v6682 = vpop.f32.mrb[0].mxu0
      %v6683 = vadd.f32 0.0, %v6682
      %v6684 = vpop.f32.mrb[0].mxu0
      %v6685 = vadd.f32 0.0, %v6684
      %6686 = vmatprep.mubr.f32.mxu0 %v6598
      %6687 = vmatmul.mubr.f32.gmra.mrb[0].mxu0 %v6595
      %v6688 = vpop.f32.mrb[0].mxu0
      %v6689 = vadd.f32 0.0, %v6688
      %v6690 = vpop.f32.mrb[0].mxu0
      %v6691 = vadd.f32 0.0, %v6690
      %6692 = vdwg.mxu0
      %6693 = vmatprep.subr.mxu0 %v6475
      %6694 = vmatpush1.msra.mxu0 %v6474
      %6695 = vmatprep.subr.mxu0 %v6479
      %6696 = vmatpush1.msra.mxu0 %v6478
      %6697 = vmatprep.subr.mxu0 %v6483
      %6698 = vmatpush1.msra.mxu0 %v6482
      %6699 = vmatprep.subr.mxu0 %v6487
      %6700 = vmatpush1.msra.mxu0 %v6486
      %6701 = vmatprep.subr.mxu0 %v6491
      %6702 = vmatpush1.msra.mxu0 %v6490
      %6703 = vmatprep.subr.mxu0 %v6495
      %6704 = vmatpush1.msra.mxu0 %v6494
      %6705 = vmatprep.subr.mxu0 %v6499
      %6706 = vmatpush1.msra.mxu0 %v6498
      %6707 = vmatprep.subr.mxu0 %v6503
      %6708 = vmatpush1.msra.mxu0 %v6502
      %6709 = vmatprep.subr.mxu0 %v6507
      %6710 = vmatpush1.msra.mxu0 %v6506
      %6711 = vmatprep.subr.mxu0 %v6511
      %6712 = vmatpush1.msra.mxu0 %v6510
      %6713 = vmatprep.subr.mxu0 %v6515
      %6714 = vmatpush1.msra.mxu0 %v6514
      %6715 = vmatprep.subr.mxu0 %v6519
      %6716 = vmatpush1.msra.mxu0 %v6518
      %6717 = vmatprep.subr.mxu0 %v6523
      %6718 = vmatpush1.msra.mxu0 %v6522
      %6719 = vmatprep.subr.mxu0 %v6527
      %6720 = vmatpush1.msra.mxu0 %v6526
      %6721 = vmatprep.subr.mxu0 %v6531
      %6722 = vmatpush1.msra.mxu0 %v6530
      %6723 = vmatprep.subr.mxu0 %v6535
      %6724 = vmatpush1.msra.mxu0 %v6534
      %6725 = vmatprep.subr.mxu0 %v6539
      %6726 = vmatpush1.msra.mxu0 %v6538
      %6727 = vmatprep.subr.mxu0 %v6543
      %6728 = vmatpush1.msra.mxu0 %v6542
      %6729 = vmatprep.subr.mxu0 %v6547
      %6730 = vmatpush1.msra.mxu0 %v6546
      %6731 = vmatprep.subr.mxu0 %v6551
      %6732 = vmatpush1.msra.mxu0 %v6550
      %6733 = vmatprep.subr.mxu0 %v6555
      %6734 = vmatpush1.msra.mxu0 %v6554
      %6735 = vmatprep.subr.mxu0 %v6559
      %6736 = vmatpush1.msra.mxu0 %v6558
      %6737 = vmatprep.subr.mxu0 %v6563
      %6738 = vmatpush1.msra.mxu0 %v6562
      %6739 = vmatprep.subr.mxu0 %v6567
      %6740 = vmatpush1.msra.mxu0 %v6566
      %6741 = vmatprep.subr.mxu0 %v6571
      %6742 = vmatpush1.msra.mxu0 %v6570
      %6743 = vmatprep.subr.mxu0 %v6575
      %6744 = vmatpush1.msra.mxu0 %v6574
      %6745 = vmatprep.subr.mxu0 %v6579
      %6746 = vmatpush1.msra.mxu0 %v6578
      %6747 = vmatprep.subr.mxu0 %v6583
      %6748 = vmatpush1.msra.mxu0 %v6582
      %6749 = vmatprep.subr.mxu0 0.0
      %6750 = vmatpush1.msra.mxu0 0.0
      %6751 = vmatprep.subr.mxu0 0.0
      %6752 = vmatpush1.msra.mxu0 0.0
      %6753 = vmatprep.subr.mxu0 0.0
      %6754 = vmatpush1.msra.mxu0 0.0
      %6755 = vmatprep.subr.mxu0 0.0
      %6756 = vmatpush1.msra.mxu0 0.0
      %6757 = vmatprep.mubr.f32.mxu0 %v6612
      %6758 = vmatmul.mubr.f32.gmra.mrb[0].mxu0 %v6602
      %v6759 = vpop.f32.mrb[0].mxu0
      %v6760 = vadd.f32 %v6683, %v6759
      %v6761 = vpop.f32.mrb[0].mxu0
      %v6762 = vadd.f32 %v6685, %v6761
      %6763 = vmatprep.mubr.f32.mxu0 %v6614
      %6764 = vmatmul.mubr.f32.gmra.mrb[0].mxu0 %v6601
      %v6765 = vpop.f32.mrb[0].mxu0
      %v6766 = vadd.f32 %v6689, %v6765
      %v6767 = vpop.f32.mrb[0].mxu0
      %v6768 = vadd.f32 %v6691, %v6767
      %6769 = vdwg.mxu0
      %6770 = vmatprep.subr.mxu0 %v6349
      %6771 = vmatpush1.msra.mxu0 %v6348
      %6772 = vmatprep.subr.mxu0 %v6353
      %6773 = vmatpush1.msra.mxu0 %v6352
      %6774 = vmatprep.subr.mxu0 %v6357
      %6775 = vmatpush1.msra.mxu0 %v6356
      %6776 = vmatprep.subr.mxu0 %v6361
      %6777 = vmatpush1.msra.mxu0 %v6360
      %6778 = vmatprep.subr.mxu0 %v6365
      %6779 = vmatpush1.msra.mxu0 %v6364
      %6780 = vmatprep.subr.mxu0 %v6369
      %6781 = vmatpush1.msra.mxu0 %v6368
      %6782 = vmatprep.subr.mxu0 %v6373
      %6783 = vmatpush1.msra.mxu0 %v6372
      %6784 = vmatprep.subr.mxu0 %v6377
      %6785 = vmatpush1.msra.mxu0 %v6376
      %6786 = vmatprep.subr.mxu0 %v6381
      %6787 = vmatpush1.msra.mxu0 %v6380
      %6788 = vmatprep.subr.mxu0 %v6385
      %6789 = vmatpush1.msra.mxu0 %v6384
      %6790 = vmatprep.subr.mxu0 %v6389
      %6791 = vmatpush1.msra.mxu0 %v6388
      %6792 = vmatprep.subr.mxu0 %v6393
      %6793 = vmatpush1.msra.mxu0 %v6392
      %6794 = vmatprep.subr.mxu0 %v6397
      %6795 = vmatpush1.msra.mxu0 %v6396
      %6796 = vmatprep.subr.mxu0 %v6401
      %6797 = vmatpush1.msra.mxu0 %v6400
      %6798 = vmatprep.subr.mxu0 %v6405
      %6799 = vmatpush1.msra.mxu0 %v6404
      %6800 = vmatprep.subr.mxu0 %v6409
      %6801 = vmatpush1.msra.mxu0 %v6408
      %6802 = vmatprep.subr.mxu0 %v6413
      %6803 = vmatpush1.msra.mxu0 %v6412
      %6804 = vmatprep.subr.mxu0 %v6417
      %6805 = vmatpush1.msra.mxu0 %v6416
      %6806 = vmatprep.subr.mxu0 %v6421
      %6807 = vmatpush1.msra.mxu0 %v6420
      %6808 = vmatprep.subr.mxu0 %v6425
      %6809 = vmatpush1.msra.mxu0 %v6424
      %6810 = vmatprep.subr.mxu0 %v6429
      %6811 = vmatpush1.msra.mxu0 %v6428
      %6812 = vmatprep.subr.mxu0 %v6433
      %6813 = vmatpush1.msra.mxu0 %v6432
      %6814 = vmatprep.subr.mxu0 %v6437
      %6815 = vmatpush1.msra.mxu0 %v6436
      %6816 = vmatprep.subr.mxu0 %v6441
      %6817 = vmatpush1.msra.mxu0 %v6440
      %6818 = vmatprep.subr.mxu0 %v6445
      %6819 = vmatpush1.msra.mxu0 %v6444
      %6820 = vmatprep.subr.mxu0 %v6449
      %6821 = vmatpush1.msra.mxu0 %v6448
      %6822 = vmatprep.subr.mxu0 %v6453
      %6823 = vmatpush1.msra.mxu0 %v6452
      %6824 = vmatprep.subr.mxu0 %v6457
      %6825 = vmatpush1.msra.mxu0 %v6456
      %6826 = vmatprep.subr.mxu0 %v6461
      %6827 = vmatpush1.msra.mxu0 %v6460
      %6828 = vmatprep.subr.mxu0 %v6465
      %6829 = vmatpush1.msra.mxu0 %v6464
      %6830 = vmatprep.subr.mxu0 %v6469
      %6831 = vmatpush1.msra.mxu0 %v6468
      %6832 = vmatprep.subr.mxu0 %v6473
      %6833 = vmatpush1.msra.mxu0 %v6472
      %6834 = vmatprep.mubr.f32.mxu0 %v6599
      %6835 = vmatmul.mubr.f32.gmra.mrb[0].mxu0 %v6596
      %v6836 = vpop.f32.mrb[0].mxu0
      %v6837 = vadd.f32 0.0, %v6836
      %v6838 = vpop.f32.mrb[0].mxu0
      %v6839 = vadd.f32 0.0, %v6838
      %6840 = vmatprep.mubr.f32.mxu0 %v6598
      %6841 = vmatmul.mubr.f32.gmra.mrb[0].mxu0 %v6595
      %v6842 = vpop.f32.mrb[0].mxu0
      %v6843 = vadd.f32 0.0, %v6842
      %v6844 = vpop.f32.mrb[0].mxu0
      %v6845 = vadd.f32 0.0, %v6844
      %6846 = vdwg.mxu0
      %6847 = vmatprep.subr.mxu0 %v6477
      %6848 = vmatpush1.msra.mxu0 %v6476
      %6849 = vmatprep.subr.mxu0 %v6481
      %6850 = vmatpush1.msra.mxu0 %v6480
      %6851 = vmatprep.subr.mxu0 %v6485
      %6852 = vmatpush1.msra.mxu0 %v6484
      %6853 = vmatprep.subr.mxu0 %v6489
      %6854 = vmatpush1.msra.mxu0 %v6488
      %6855 = vmatprep.subr.mxu0 %v6493
      %6856 = vmatpush1.msra.mxu0 %v6492
      %6857 = vmatprep.subr.mxu0 %v6497
      %6858 = vmatpush1.msra.mxu0 %v6496
      %6859 = vmatprep.subr.mxu0 %v6501
      %6860 = vmatpush1.msra.mxu0 %v6500
      %6861 = vmatprep.subr.mxu0 %v6505
      %6862 = vmatpush1.msra.mxu0 %v6504
      %6863 = vmatprep.subr.mxu0 %v6509
      %6864 = vmatpush1.msra.mxu0 %v6508
      %6865 = vmatprep.subr.mxu0 %v6513
      %6866 = vmatpush1.msra.mxu0 %v6512
      %6867 = vmatprep.subr.mxu0 %v6517
      %6868 = vmatpush1.msra.mxu0 %v6516
      %6869 = vmatprep.subr.mxu0 %v6521
      %6870 = vmatpush1.msra.mxu0 %v6520
      %6871 = vmatprep.subr.mxu0 %v6525
      %6872 = vmatpush1.msra.mxu0 %v6524
      %6873 = vmatprep.subr.mxu0 %v6529
      %6874 = vmatpush1.msra.mxu0 %v6528
      %6875 = vmatprep.subr.mxu0 %v6533
      %6876 = vmatpush1.msra.mxu0 %v6532
      %6877 = vmatprep.subr.mxu0 %v6537
      %6878 = vmatpush1.msra.mxu0 %v6536
      %6879 = vmatprep.subr.mxu0 %v6541
      %6880 = vmatpush1.msra.mxu0 %v6540
      %6881 = vmatprep.subr.mxu0 %v6545
      %6882 = vmatpush1.msra.mxu0 %v6544
      %6883 = vmatprep.subr.mxu0 %v6549
      %6884 = vmatpush1.msra.mxu0 %v6548
      %6885 = vmatprep.subr.mxu0 %v6553
      %6886 = vmatpush1.msra.mxu0 %v6552
      %6887 = vmatprep.subr.mxu0 %v6557
      %6888 = vmatpush1.msra.mxu0 %v6556
      %6889 = vmatprep.subr.mxu0 %v6561
      %6890 = vmatpush1.msra.mxu0 %v6560
      %6891 = vmatprep.subr.mxu0 %v6565
      %6892 = vmatpush1.msra.mxu0 %v6564
      %6893 = vmatprep.subr.mxu0 %v6569
      %6894 = vmatpush1.msra.mxu0 %v6568
      %6895 = vmatprep.subr.mxu0 %v6573
      %6896 = vmatpush1.msra.mxu0 %v6572
      %6897 = vmatprep.subr.mxu0 %v6577
      %6898 = vmatpush1.msra.mxu0 %v6576
      %6899 = vmatprep.subr.mxu0 %v6581
      %6900 = vmatpush1.msra.mxu0 %v6580
      %6901 = vmatprep.subr.mxu0 %v6585
      %6902 = vmatpush1.msra.mxu0 %v6584
      %6903 = vmatprep.subr.mxu0 0.0
      %6904 = vmatpush1.msra.mxu0 0.0
      %6905 = vmatprep.subr.mxu0 0.0
      %6906 = vmatpush1.msra.mxu0 0.0
      %6907 = vmatprep.subr.mxu0 0.0
      %6908 = vmatpush1.msra.mxu0 0.0
      %6909 = vmatprep.subr.mxu0 0.0
      %6910 = vmatpush1.msra.mxu0 0.0
      %6911 = vmatprep.mubr.f32.mxu0 %v6612
      %6912 = vmatmul.mubr.f32.gmra.mrb[0].mxu0 %v6602
      %v6913 = vpop.f32.mrb[0].mxu0
      %v6914 = vadd.f32 %v6837, %v6913
      %v6915 = vpop.f32.mrb[0].mxu0
      %v6916 = vadd.f32 %v6839, %v6915
      %6917 = vmatprep.mubr.f32.mxu0 %v6614
      %6918 = vmatmul.mubr.f32.gmra.mrb[0].mxu0 %v6601
      %v6919 = vpop.f32.mrb[0].mxu0
      %v6920 = vadd.f32 %v6843, %v6919
      %v6921 = vpop.f32.mrb[0].mxu0
      %v6922 = vadd.f32 %v6845, %v6921
      %6923 = vdwg.mxu0
      %6924 = vmatprep.subr.mxu0 %v6098
      %6925 = vmatpush1.msra.mxu0 %v6097
      %6926 = vmatprep.subr.mxu0 %v6102
      %6927 = vmatpush1.msra.mxu0 %v6101
      %6928 = vmatprep.subr.mxu0 %v6106
      %6929 = vmatpush1.msra.mxu0 %v6105
      %6930 = vmatprep.subr.mxu0 %v6110
      %6931 = vmatpush1.msra.mxu0 %v6109
      %6932 = vmatprep.subr.mxu0 %v6114
      %6933 = vmatpush1.msra.mxu0 %v6113
      %6934 = vmatprep.subr.mxu0 %v6118
      %6935 = vmatpush1.msra.mxu0 %v6117
      %6936 = vmatprep.subr.mxu0 %v6122
      %6937 = vmatpush1.msra.mxu0 %v6121
      %6938 = vmatprep.subr.mxu0 %v6126
      %6939 = vmatpush1.msra.mxu0 %v6125
      %6940 = vmatprep.subr.mxu0 %v6130
      %6941 = vmatpush1.msra.mxu0 %v6129
      %6942 = vmatprep.subr.mxu0 %v6134
      %6943 = vmatpush1.msra.mxu0 %v6133
      %6944 = vmatprep.subr.mxu0 %v6138
      %6945 = vmatpush1.msra.mxu0 %v6137
      %6946 = vmatprep.subr.mxu0 %v6142
      %6947 = vmatpush1.msra.mxu0 %v6141
      %6948 = vmatprep.subr.mxu0 %v6146
      %6949 = vmatpush1.msra.mxu0 %v6145
      %6950 = vmatprep.subr.mxu0 %v6150
      %6951 = vmatpush1.msra.mxu0 %v6149
      %6952 = vmatprep.subr.mxu0 %v6154
      %6953 = vmatpush1.msra.mxu0 %v6153
      %6954 = vmatprep.subr.mxu0 %v6158
      %6955 = vmatpush1.msra.mxu0 %v6157
      %6956 = vmatprep.subr.mxu0 %v6162
      %6957 = vmatpush1.msra.mxu0 %v6161
      %6958 = vmatprep.subr.mxu0 %v6166
      %6959 = vmatpush1.msra.mxu0 %v6165
      %6960 = vmatprep.subr.mxu0 %v6170
      %6961 = vmatpush1.msra.mxu0 %v6169
      %6962 = vmatprep.subr.mxu0 %v6174
      %6963 = vmatpush1.msra.mxu0 %v6173
      %6964 = vmatprep.subr.mxu0 %v6178
      %6965 = vmatpush1.msra.mxu0 %v6177
      %6966 = vmatprep.subr.mxu0 %v6182
      %6967 = vmatpush1.msra.mxu0 %v6181
      %6968 = vmatprep.subr.mxu0 %v6186
      %6969 = vmatpush1.msra.mxu0 %v6185
      %6970 = vmatprep.subr.mxu0 %v6190
      %6971 = vmatpush1.msra.mxu0 %v6189
      %6972 = vmatprep.subr.mxu0 %v6194
      %6973 = vmatpush1.msra.mxu0 %v6193
      %6974 = vmatprep.subr.mxu0 %v6198
      %6975 = vmatpush1.msra.mxu0 %v6197
      %6976 = vmatprep.subr.mxu0 %v6202
      %6977 = vmatpush1.msra.mxu0 %v6201
      %6978 = vmatprep.subr.mxu0 %v6206
      %6979 = vmatpush1.msra.mxu0 %v6205
      %6980 = vmatprep.subr.mxu0 %v6210
      %6981 = vmatpush1.msra.mxu0 %v6209
      %6982 = vmatprep.subr.mxu0 %v6214
      %6983 = vmatpush1.msra.mxu0 %v6213
      %6984 = vmatprep.subr.mxu0 %v6218
      %6985 = vmatpush1.msra.mxu0 %v6217
      %6986 = vmatprep.subr.mxu0 %v6222
      %6987 = vmatpush1.msra.mxu0 %v6221
      %6988 = vmatprep.mubr.f32.mxu0 %v5285
      %6989 = vmatmul.mubr.f32.gmra.mrb[0].mxu0 %v5282
      %v6990 = vpop.f32.mrb[0].mxu0
      %v6991 = vadd.f32 %v6760, %v6990
      %v6992 = vpop.f32.mrb[0].mxu0
      %v6993 = vadd.f32 %v6762, %v6992
      %6994 = vmatprep.mubr.f32.mxu0 %v5284
      %6995 = vmatmul.mubr.f32.gmra.mrb[0].mxu0 %v5281
      %v6996 = vpop.f32.mrb[0].mxu0
      %v6997 = vadd.f32 %v6766, %v6996
      %v6998 = vpop.f32.mrb[0].mxu0
      %v6999 = vadd.f32 %v6768, %v6998
      %7000 = vdwg.mxu0
      %7001 = vmatprep.subr.mxu0 %v6226
      %7002 = vmatpush1.msra.mxu0 %v6225
      %7003 = vmatprep.subr.mxu0 %v6230
      %7004 = vmatpush1.msra.mxu0 %v6229
      %7005 = vmatprep.subr.mxu0 %v6234
      %7006 = vmatpush1.msra.mxu0 %v6233
      %7007 = vmatprep.subr.mxu0 %v6238
      %7008 = vmatpush1.msra.mxu0 %v6237
      %7009 = vmatprep.subr.mxu0 %v6242
      %7010 = vmatpush1.msra.mxu0 %v6241
      %7011 = vmatprep.subr.mxu0 %v6246
      %7012 = vmatpush1.msra.mxu0 %v6245
      %7013 = vmatprep.subr.mxu0 %v6250
      %7014 = vmatpush1.msra.mxu0 %v6249
      %7015 = vmatprep.subr.mxu0 %v6254
      %7016 = vmatpush1.msra.mxu0 %v6253
      %7017 = vmatprep.subr.mxu0 %v6258
      %7018 = vmatpush1.msra.mxu0 %v6257
      %7019 = vmatprep.subr.mxu0 %v6262
      %7020 = vmatpush1.msra.mxu0 %v6261
      %7021 = vmatprep.subr.mxu0 %v6266
      %7022 = vmatpush1.msra.mxu0 %v6265
      %7023 = vmatprep.subr.mxu0 %v6270
      %7024 = vmatpush1.msra.mxu0 %v6269
      %7025 = vmatprep.subr.mxu0 %v6274
      %7026 = vmatpush1.msra.mxu0 %v6273
      %7027 = vmatprep.subr.mxu0 %v6278
      %7028 = vmatpush1.msra.mxu0 %v6277
      %7029 = vmatprep.subr.mxu0 %v6282
      %7030 = vmatpush1.msra.mxu0 %v6281
      %7031 = vmatprep.subr.mxu0 %v6286
      %7032 = vmatpush1.msra.mxu0 %v6285
      %7033 = vmatprep.subr.mxu0 %v6290
      %7034 = vmatpush1.msra.mxu0 %v6289
      %7035 = vmatprep.subr.mxu0 %v6294
      %7036 = vmatpush1.msra.mxu0 %v6293
      %7037 = vmatprep.subr.mxu0 %v6298
      %7038 = vmatpush1.msra.mxu0 %v6297
      %7039 = vmatprep.subr.mxu0 %v6302
      %7040 = vmatpush1.msra.mxu0 %v6301
      %7041 = vmatprep.subr.mxu0 %v6306
      %7042 = vmatpush1.msra.mxu0 %v6305
      %7043 = vmatprep.subr.mxu0 %v6310
      %7044 = vmatpush1.msra.mxu0 %v6309
      %7045 = vmatprep.subr.mxu0 %v6314
      %7046 = vmatpush1.msra.mxu0 %v6313
      %7047 = vmatprep.subr.mxu0 %v6318
      %7048 = vmatpush1.msra.mxu0 %v6317
      %7049 = vmatprep.subr.mxu0 %v6322
      %7050 = vmatpush1.msra.mxu0 %v6321
      %7051 = vmatprep.subr.mxu0 %v6326
      %7052 = vmatpush1.msra.mxu0 %v6325
      %7053 = vmatprep.subr.mxu0 %v6330
      %7054 = vmatpush1.msra.mxu0 %v6329
      %7055 = vmatprep.subr.mxu0 %v6334
      %7056 = vmatpush1.msra.mxu0 %v6333
      %7057 = vmatprep.subr.mxu0 0.0
      %7058 = vmatpush1.msra.mxu0 0.0
      %7059 = vmatprep.subr.mxu0 0.0
      %7060 = vmatpush1.msra.mxu0 0.0
      %7061 = vmatprep.subr.mxu0 0.0
      %7062 = vmatpush1.msra.mxu0 0.0
      %7063 = vmatprep.subr.mxu0 0.0
      %7064 = vmatpush1.msra.mxu0 0.0
      %7065 = vmatprep.mubr.f32.mxu0 %v5298
      %7066 = vmatmul.mubr.f32.gmra.mrb[0].mxu0 %v5288
      %v7067 = vpop.f32.mrb[0].mxu0
      %v7068 = vadd.f32 %v6991, %v7067
      %v7069 = vpop.f32.mrb[0].mxu0
      %v7070 = vadd.f32 %v6993, %v7069
      %7071 = vmatprep.mubr.f32.mxu0 %v5300
      %7072 = vmatmul.mubr.f32.gmra.mrb[0].mxu0 %v5287
      %v7073 = vpop.f32.mrb[0].mxu0
      %v7074 = vadd.f32 %v6997, %v7073
      %v7075 = vpop.f32.mrb[0].mxu0
      %v7076 = vadd.f32 %v6999, %v7075
      %7077 = vdwg.mxu0
      %7078 = vmatprep.subr.mxu0 %v6100
      %7079 = vmatpush1.msra.mxu0 %v6099
      %7080 = vmatprep.subr.mxu0 %v6104
      %7081 = vmatpush1.msra.mxu0 %v6103
      %7082 = vmatprep.subr.mxu0 %v6108
      %7083 = vmatpush1.msra.mxu0 %v6107
      %7084 = vmatprep.subr.mxu0 %v6112
      %7085 = vmatpush1.msra.mxu0 %v6111
      %7086 = vmatprep.subr.mxu0 %v6116
      %7087 = vmatpush1.msra.mxu0 %v6115
      %7088 = vmatprep.subr.mxu0 %v6120
      %7089 = vmatpush1.msra.mxu0 %v6119
      %7090 = vmatprep.subr.mxu0 %v6124
      %7091 = vmatpush1.msra.mxu0 %v6123
      %7092 = vmatprep.subr.mxu0 %v6128
      %7093 = vmatpush1.msra.mxu0 %v6127
      %7094 = vmatprep.subr.mxu0 %v6132
      %7095 = vmatpush1.msra.mxu0 %v6131
      %7096 = vmatprep.subr.mxu0 %v6136
      %7097 = vmatpush1.msra.mxu0 %v6135
      %7098 = vmatprep.subr.mxu0 %v6140
      %7099 = vmatpush1.msra.mxu0 %v6139
      %7100 = vmatprep.subr.mxu0 %v6144
      %7101 = vmatpush1.msra.mxu0 %v6143
      %7102 = vmatprep.subr.mxu0 %v6148
      %7103 = vmatpush1.msra.mxu0 %v6147
      %7104 = vmatprep.subr.mxu0 %v6152
      %7105 = vmatpush1.msra.mxu0 %v6151
      %7106 = vmatprep.subr.mxu0 %v6156
      %7107 = vmatpush1.msra.mxu0 %v6155
      %7108 = vmatprep.subr.mxu0 %v6160
      %7109 = vmatpush1.msra.mxu0 %v6159
      %7110 = vmatprep.subr.mxu0 %v6164
      %7111 = vmatpush1.msra.mxu0 %v6163
      %7112 = vmatprep.subr.mxu0 %v6168
      %7113 = vmatpush1.msra.mxu0 %v6167
      %7114 = vmatprep.subr.mxu0 %v6172
      %7115 = vmatpush1.msra.mxu0 %v6171
      %7116 = vmatprep.subr.mxu0 %v6176
      %7117 = vmatpush1.msra.mxu0 %v6175
      %7118 = vmatprep.subr.mxu0 %v6180
      %7119 = vmatpush1.msra.mxu0 %v6179
      %7120 = vmatprep.subr.mxu0 %v6184
      %7121 = vmatpush1.msra.mxu0 %v6183
      %7122 = vmatprep.subr.mxu0 %v6188
      %7123 = vmatpush1.msra.mxu0 %v6187
      %7124 = vmatprep.subr.mxu0 %v6192
      %7125 = vmatpush1.msra.mxu0 %v6191
      %7126 = vmatprep.subr.mxu0 %v6196
      %7127 = vmatpush1.msra.mxu0 %v6195
      %7128 = vmatprep.subr.mxu0 %v6200
      %7129 = vmatpush1.msra.mxu0 %v6199
      %7130 = vmatprep.subr.mxu0 %v6204
      %7131 = vmatpush1.msra.mxu0 %v6203
      %7132 = vmatprep.subr.mxu0 %v6208
      %7133 = vmatpush1.msra.mxu0 %v6207
      %7134 = vmatprep.subr.mxu0 %v6212
      %7135 = vmatpush1.msra.mxu0 %v6211
      %7136 = vmatprep.subr.mxu0 %v6216
      %7137 = vmatpush1.msra.mxu0 %v6215
      %7138 = vmatprep.subr.mxu0 %v6220
      %7139 = vmatpush1.msra.mxu0 %v6219
      %7140 = vmatprep.subr.mxu0 %v6224
      %7141 = vmatpush1.msra.mxu0 %v6223
      %7142 = vmatprep.mubr.f32.mxu0 %v5285
      %7143 = vmatmul.mubr.f32.gmra.mrb[0].mxu0 %v5282
      %v7144 = vpop.f32.mrb[0].mxu0
      %v7145 = vadd.f32 %v6914, %v7144
      %v7146 = vpop.f32.mrb[0].mxu0
      %v7147 = vadd.f32 %v6916, %v7146
      %7148 = vmatprep.mubr.f32.mxu0 %v5284
      %7149 = vmatmul.mubr.f32.gmra.mrb[0].mxu0 %v5281
      %v7150 = vpop.f32.mrb[0].mxu0
      %v7151 = vadd.f32 %v6920, %v7150
      %v7152 = vpop.f32.mrb[0].mxu0
      %v7153 = vadd.f32 %v6922, %v7152
      %7154 = vdwg.mxu0
      %7155 = vmatprep.subr.mxu0 %v6228
      %7156 = vmatpush1.msra.mxu0 %v6227
      %7157 = vmatprep.subr.mxu0 %v6232
      %7158 = vmatpush1.msra.mxu0 %v6231
      %7159 = vmatprep.subr.mxu0 %v6236
      %7160 = vmatpush1.msra.mxu0 %v6235
      %7161 = vmatprep.subr.mxu0 %v6240
      %7162 = vmatpush1.msra.mxu0 %v6239
      %7163 = vmatprep.subr.mxu0 %v6244
      %7164 = vmatpush1.msra.mxu0 %v6243
      %7165 = vmatprep.subr.mxu0 %v6248
      %7166 = vmatpush1.msra.mxu0 %v6247
      %7167 = vmatprep.subr.mxu0 %v6252
      %7168 = vmatpush1.msra.mxu0 %v6251
      %7169 = vmatprep.subr.mxu0 %v6256
      %7170 = vmatpush1.msra.mxu0 %v6255
      %7171 = vmatprep.subr.mxu0 %v6260
      %7172 = vmatpush1.msra.mxu0 %v6259
      %7173 = vmatprep.subr.mxu0 %v6264
      %7174 = vmatpush1.msra.mxu0 %v6263
      %7175 = vmatprep.subr.mxu0 %v6268
      %7176 = vmatpush1.msra.mxu0 %v6267
      %7177 = vmatprep.subr.mxu0 %v6272
      %7178 = vmatpush1.msra.mxu0 %v6271
      %7179 = vmatprep.subr.mxu0 %v6276
      %7180 = vmatpush1.msra.mxu0 %v6275
      %7181 = vmatprep.subr.mxu0 %v6280
      %7182 = vmatpush1.msra.mxu0 %v6279
      %7183 = vmatprep.subr.mxu0 %v6284
      %7184 = vmatpush1.msra.mxu0 %v6283
      %7185 = vmatprep.subr.mxu0 %v6288
      %7186 = vmatpush1.msra.mxu0 %v6287
      %7187 = vmatprep.subr.mxu0 %v6292
      %7188 = vmatpush1.msra.mxu0 %v6291
      %7189 = vmatprep.subr.mxu0 %v6296
      %7190 = vmatpush1.msra.mxu0 %v6295
      %7191 = vmatprep.subr.mxu0 %v6300
      %7192 = vmatpush1.msra.mxu0 %v6299
      %7193 = vmatprep.subr.mxu0 %v6304
      %7194 = vmatpush1.msra.mxu0 %v6303
      %7195 = vmatprep.subr.mxu0 %v6308
      %7196 = vmatpush1.msra.mxu0 %v6307
      %7197 = vmatprep.subr.mxu0 %v6312
      %7198 = vmatpush1.msra.mxu0 %v6311
      %7199 = vmatprep.subr.mxu0 %v6316
      %7200 = vmatpush1.msra.mxu0 %v6315
      %7201 = vmatprep.subr.mxu0 %v6320
      %7202 = vmatpush1.msra.mxu0 %v6319
      %7203 = vmatprep.subr.mxu0 %v6324
      %7204 = vmatpush1.msra.mxu0 %v6323
      %7205 = vmatprep.subr.mxu0 %v6328
      %7206 = vmatpush1.msra.mxu0 %v6327
      %7207 = vmatprep.subr.mxu0 %v6332
      %7208 = vmatpush1.msra.mxu0 %v6331
      %7209 = vmatprep.subr.mxu0 %v6336
      %7210 = vmatpush1.msra.mxu0 %v6335
      %7211 = vmatprep.subr.mxu0 0.0
      %7212 = vmatpush1.msra.mxu0 0.0
      %7213 = vmatprep.subr.mxu0 0.0
      %7214 = vmatpush1.msra.mxu0 0.0
      %7215 = vmatprep.subr.mxu0 0.0
      %7216 = vmatpush1.msra.mxu0 0.0
      %7217 = vmatprep.subr.mxu0 0.0
      %7218 = vmatpush1.msra.mxu0 0.0
      %7219 = vmatprep.mubr.f32.mxu0 %v5298
      %7220 = vmatmul.mubr.f32.gmra.mrb[0].mxu0 %v5288
      %v7221 = vpop.f32.mrb[0].mxu0
      %v7222 = vadd.f32 %v7145, %v7221
      %v7223 = vpop.f32.mrb[0].mxu0
      %v7224 = vadd.f32 %v7147, %v7223
      %7225 = vmatprep.mubr.f32.mxu0 %v5300
      %7226 = vmatmul.mubr.f32.gmra.mrb[0].mxu0 %v5287
      %v7227 = vpop.f32.mrb[0].mxu0
      %v7228 = vadd.f32 %v7151, %v7227
      %v7229 = vpop.f32.mrb[0].mxu0
      %v7230 = vadd.f32 %v7153, %v7229
      %7231 = vdwg.mxu0
      %v7232 = vadd.f32 %v7068, %v5929
      %v7233 = vadd.f32 %v7070, %v5933
      %v7234 = vadd.f32 %v7222, %v5937
      %v7235 = vadd.f32 %v7224, %v5941
      %v7236 = vadd.f32 %v7074, %v5929
      %v7237 = vadd.f32 %v7076, %v5933
      %v7238 = vadd.f32 %v7228, %v5937
      %v7239 = vadd.f32 %v7230, %v5941
      %v7248 = vcombine.low %v7232, %v7233
      %v7249 = vcombine.high %v7232, %v7233
      %v7250 = vcombine.low %v7234, %v7235
      %v7251 = vcombine.high %v7234, %v7235
      %v7253 = vunpack.c.l.s4 1966171168
      %v7254 = vunpack.c.0.s8 %v7253
      %v7255 = vlaneseq
      %v7256 = vshrl.u32 %v7255, 7
      %v7257 = vsub.s32 %v7254, %v7256
      %v7258 = vrot.slane %v7248, %v7257
      %v7260 = vunpack.c.l.s4 1966171168
      %v7261 = vunpack.c.0.s8 %v7260
      %v7262 = vlaneseq
      %v7263 = vshrl.u32 %v7262, 7
      %v7264 = vsub.s32 %v7261, %v7263
      %v7265 = vrot.slane %v7249, %v7264
      %v7267 = vunpack.c.l.s4 1966171168
      %v7268 = vunpack.c.0.s8 %v7267
      %v7269 = vlaneseq
      %v7270 = vshrl.u32 %v7269, 7
      %v7271 = vsub.s32 %v7268, %v7270
      %v7272 = vrot.slane %v7250, %v7271
      %v7274 = vunpack.c.l.s4 1966171168
      %v7275 = vunpack.c.0.s8 %v7274
      %v7276 = vlaneseq
      %v7277 = vshrl.u32 %v7276, 7
      %v7278 = vsub.s32 %v7275, %v7277
      %v7279 = vrot.slane %v7251, %v7278
      %v7280 = vcombine.low %v7258, %v7272
      %v7281 = vcombine.high %v7258, %v7272
      %v7282 = vcombine.low %v7265, %v7279
      %v7283 = vcombine.high %v7265, %v7279
      %v7285 = vunpack.c.l.s4 1966171168
      %v7286 = vunpack.c.0.s8 %v7285
      %v7287 = vlaneseq
      %v7288 = vshrl.u32 %v7287, 7
      %v7289 = vsub.s32 %v7286, %v7288
      %v7290 = vrot.slane %v7280, %v7289
      %v7292 = vunpack.c.l.s4 1966171168
      %v7293 = vunpack.c.0.s8 %v7292
      %v7294 = vlaneseq
      %v7295 = vshrl.u32 %v7294, 7
      %v7296 = vsub.s32 %v7293, %v7295
      %v7297 = vrot.slane %v7282, %v7296
      %v7299 = vunpack.c.l.s4 1966171168
      %v7300 = vunpack.c.0.s8 %v7299
      %v7301 = vlaneseq
      %v7302 = vshrl.u32 %v7301, 7
      %v7303 = vsub.s32 %v7300, %v7302
      %v7304 = vrot.slane %v7281, %v7303
      %v7306 = vunpack.c.l.s4 1966171168
      %v7307 = vunpack.c.0.s8 %v7306
      %v7308 = vlaneseq
      %v7309 = vshrl.u32 %v7308, 7
      %v7310 = vsub.s32 %v7307, %v7309
      %v7311 = vrot.slane %v7283, %v7310
      %v7312 = vcombine.high %v7290, %v7290
      %v7313 = vcombine.high %v7297, %v7297
      %v7314 = vcombine.high %v7304, %v7304
      %v7315 = vcombine.high %v7311, %v7311
      %v7316 = vcombine.low %v7236, %v7237
      %v7317 = vcombine.high %v7236, %v7237
      %v7318 = vcombine.low %v7238, %v7239
      %v7319 = vcombine.high %v7238, %v7239
      %v7321 = vunpack.c.l.s4 1966171168
      %v7322 = vunpack.c.0.s8 %v7321
      %v7323 = vlaneseq
      %v7324 = vshrl.u32 %v7323, 7
      %v7325 = vsub.s32 %v7322, %v7324
      %v7326 = vrot.slane %v7316, %v7325
      %v7328 = vunpack.c.l.s4 1966171168
      %v7329 = vunpack.c.0.s8 %v7328
      %v7330 = vlaneseq
      %v7331 = vshrl.u32 %v7330, 7
      %v7332 = vsub.s32 %v7329, %v7331
      %v7333 = vrot.slane %v7317, %v7332
      %v7335 = vunpack.c.l.s4 1966171168
      %v7336 = vunpack.c.0.s8 %v7335
      %v7337 = vlaneseq
      %v7338 = vshrl.u32 %v7337, 7
      %v7339 = vsub.s32 %v7336, %v7338
      %v7340 = vrot.slane %v7318, %v7339
      %v7342 = vunpack.c.l.s4 1966171168
      %v7343 = vunpack.c.0.s8 %v7342
      %v7344 = vlaneseq
      %v7345 = vshrl.u32 %v7344, 7
      %v7346 = vsub.s32 %v7343, %v7345
      %v7347 = vrot.slane %v7319, %v7346
      %v7348 = vcombine.low %v7326, %v7340
      %v7349 = vcombine.high %v7326, %v7340
      %v7350 = vcombine.low %v7333, %v7347
      %v7351 = vcombine.high %v7333, %v7347
      %v7353 = vunpack.c.l.s4 1966171168
      %v7354 = vunpack.c.0.s8 %v7353
      %v7355 = vlaneseq
      %v7356 = vshrl.u32 %v7355, 7
      %v7357 = vsub.s32 %v7354, %v7356
      %v7358 = vrot.slane %v7348, %v7357
      %v7360 = vunpack.c.l.s4 1966171168
      %v7361 = vunpack.c.0.s8 %v7360
      %v7362 = vlaneseq
      %v7363 = vshrl.u32 %v7362, 7
      %v7364 = vsub.s32 %v7361, %v7363
      %v7365 = vrot.slane %v7350, %v7364
      %v7367 = vunpack.c.l.s4 1966171168
      %v7368 = vunpack.c.0.s8 %v7367
      %v7369 = vlaneseq
      %v7370 = vshrl.u32 %v7369, 7
      %v7371 = vsub.s32 %v7368, %v7370
      %v7372 = vrot.slane %v7349, %v7371
      %v7374 = vunpack.c.l.s4 1966171168
      %v7375 = vunpack.c.0.s8 %v7374
      %v7376 = vlaneseq
      %v7377 = vshrl.u32 %v7376, 7
      %v7378 = vsub.s32 %v7375, %v7377
      %v7379 = vrot.slane %v7351, %v7378
      %v7380 = vcombine.high %v7358, %v7358
      %v7381 = vcombine.high %v7372, %v7372
      %v7382 = vlaneseq
      %v7383 = vshrl.u32 %v7382, 7
      %v7384 = vsub.s32 0, %v7383
      %v7385 = vrot.slane %v6004, %v7384
      %v7386 = vlaneseq
      %v7387 = vshrl.u32 %v7386, 7
      %v7388 = vsub.s32 1, %v7387
      %v7389 = vrot.slane %v6004, %v7388
      %v7390 = vlaneseq
      %v7391 = vshrl.u32 %v7390, 7
      %v7392 = vsub.s32 2, %v7391
      %v7393 = vrot.slane %v6004, %v7392
      %v7394 = vlaneseq
      %v7395 = vshrl.u32 %v7394, 7
      %v7396 = vsub.s32 3, %v7395
      %v7397 = vrot.slane %v6004, %v7396
      %v7398 = vlaneseq
      %v7399 = vshrl.u32 %v7398, 7
      %v7400 = vsub.s32 0, %v7399
      %v7401 = vrot.slane %v6018, %v7400
      %v7402 = vlaneseq
      %v7403 = vshrl.u32 %v7402, 7
      %v7404 = vsub.s32 1, %v7403
      %v7405 = vrot.slane %v6018, %v7404
      %v7406 = vlaneseq
      %v7407 = vshrl.u32 %v7406, 7
      %v7408 = vsub.s32 2, %v7407
      %v7409 = vrot.slane %v6018, %v7408
      %v7410 = vlaneseq
      %v7411 = vshrl.u32 %v7410, 7
      %v7412 = vsub.s32 3, %v7411
      %v7413 = vrot.slane %v6018, %v7412
      %v7414 = vlaneseq
      %v7415 = vshrl.u32 %v7414, 7
      %v7416 = vsub.s32 0, %v7415
      %v7417 = vrot.slane %v6026, %v7416
      %v7418 = vlaneseq
      %v7419 = vshrl.u32 %v7418, 7
      %v7420 = vsub.s32 1, %v7419
      %v7421 = vrot.slane %v6026, %v7420
      %v7422 = vlaneseq
      %v7423 = vshrl.u32 %v7422, 7
      %v7424 = vsub.s32 2, %v7423
      %v7425 = vrot.slane %v6026, %v7424
      %v7426 = vlaneseq
      %v7427 = vshrl.u32 %v7426, 7
      %v7428 = vsub.s32 3, %v7427
      %v7429 = vrot.slane %v6026, %v7428
      %v7430 = vlaneseq
      %v7431 = vshrl.u32 %v7430, 7
      %v7432 = vsub.s32 0, %v7431
      %v7433 = vrot.slane %v6028, %v7432
      %v7434 = vlaneseq
      %v7435 = vshrl.u32 %v7434, 7
      %v7436 = vsub.s32 1, %v7435
      %v7437 = vrot.slane %v6028, %v7436
      %v7438 = vlaneseq
      %v7439 = vshrl.u32 %v7438, 7
      %v7440 = vsub.s32 2, %v7439
      %v7441 = vrot.slane %v6028, %v7440
      %v7442 = vlaneseq
      %v7443 = vshrl.u32 %v7442, 7
      %v7444 = vsub.s32 3, %v7443
      %v7445 = vrot.slane %v6028, %v7444
      %v7446 = vlaneseq
      %v7447 = vshrl.u32 %v7446, 7
      %v7448 = vsub.s32 0, %v7447
      %v7449 = vrot.slane %v6011, %v7448
      %v7450 = vlaneseq
      %v7451 = vshrl.u32 %v7450, 7
      %v7452 = vsub.s32 1, %v7451
      %v7453 = vrot.slane %v6011, %v7452
      %v7454 = vlaneseq
      %v7455 = vshrl.u32 %v7454, 7
      %v7456 = vsub.s32 2, %v7455
      %v7457 = vrot.slane %v6011, %v7456
      %v7458 = vlaneseq
      %v7459 = vshrl.u32 %v7458, 7
      %v7460 = vsub.s32 3, %v7459
      %v7461 = vrot.slane %v6011, %v7460
      %v7462 = vlaneseq
      %v7463 = vshrl.u32 %v7462, 7
      %v7464 = vsub.s32 0, %v7463
      %v7465 = vrot.slane %v6025, %v7464
      %v7466 = vlaneseq
      %v7467 = vshrl.u32 %v7466, 7
      %v7468 = vsub.s32 1, %v7467
      %v7469 = vrot.slane %v6025, %v7468
      %v7470 = vlaneseq
      %v7471 = vshrl.u32 %v7470, 7
      %v7472 = vsub.s32 2, %v7471
      %v7473 = vrot.slane %v6025, %v7472
      %v7474 = vlaneseq
      %v7475 = vshrl.u32 %v7474, 7
      %v7476 = vsub.s32 3, %v7475
      %v7477 = vrot.slane %v6025, %v7476
      %v7478 = vlaneseq
      %v7479 = vshrl.u32 %v7478, 7
      %v7480 = vsub.s32 0, %v7479
      %v7481 = vrot.slane %v6027, %v7480
      %v7482 = vlaneseq
      %v7483 = vshrl.u32 %v7482, 7
      %v7484 = vsub.s32 1, %v7483
      %v7485 = vrot.slane %v6027, %v7484
      %v7486 = vlaneseq
      %v7487 = vshrl.u32 %v7486, 7
      %v7488 = vsub.s32 2, %v7487
      %v7489 = vrot.slane %v6027, %v7488
      %v7490 = vlaneseq
      %v7491 = vshrl.u32 %v7490, 7
      %v7492 = vsub.s32 3, %v7491
      %v7493 = vrot.slane %v6027, %v7492
      %v7494 = vlaneseq
      %v7495 = vshrl.u32 %v7494, 7
      %v7496 = vsub.s32 0, %v7495
      %v7497 = vrot.slane %v6029, %v7496
      %v7498 = vlaneseq
      %v7499 = vshrl.u32 %v7498, 7
      %v7500 = vsub.s32 1, %v7499
      %v7501 = vrot.slane %v6029, %v7500
      %v7502 = vlaneseq
      %v7503 = vshrl.u32 %v7502, 7
      %v7504 = vsub.s32 2, %v7503
      %v7505 = vrot.slane %v6029, %v7504
      %v7506 = vlaneseq
      %v7507 = vshrl.u32 %v7506, 7
      %v7508 = vsub.s32 3, %v7507
      %v7509 = vrot.slane %v6029, %v7508
      %v7510 = vlaneseq
      %v7511 = vshrl.u32 %v7510, 7
      %v7512 = vsub.s32 0, %v7511
      %v7513 = vrot.slane %v6072, %v7512
      %v7514 = vlaneseq
      %v7515 = vshrl.u32 %v7514, 7
      %v7516 = vsub.s32 1, %v7515
      %v7517 = vrot.slane %v6072, %v7516
      %v7518 = vlaneseq
      %v7519 = vshrl.u32 %v7518, 7
      %v7520 = vsub.s32 2, %v7519
      %v7521 = vrot.slane %v6072, %v7520
      %v7522 = vlaneseq
      %v7523 = vshrl.u32 %v7522, 7
      %v7524 = vsub.s32 3, %v7523
      %v7525 = vrot.slane %v6072, %v7524
      %v7526 = vlaneseq
      %v7527 = vshrl.u32 %v7526, 7
      %v7528 = vsub.s32 0, %v7527
      %v7529 = vrot.slane %v6086, %v7528
      %v7530 = vlaneseq
      %v7531 = vshrl.u32 %v7530, 7
      %v7532 = vsub.s32 1, %v7531
      %v7533 = vrot.slane %v6086, %v7532
      %v7534 = vlaneseq
      %v7535 = vshrl.u32 %v7534, 7
      %v7536 = vsub.s32 2, %v7535
      %v7537 = vrot.slane %v6086, %v7536
      %v7538 = vlaneseq
      %v7539 = vshrl.u32 %v7538, 7
      %v7540 = vsub.s32 3, %v7539
      %v7541 = vrot.slane %v6086, %v7540
      %v7542 = vlaneseq
      %v7543 = vshrl.u32 %v7542, 7
      %v7544 = vsub.s32 0, %v7543
      %v7545 = vrot.slane %v6094, %v7544
      %v7546 = vlaneseq
      %v7547 = vshrl.u32 %v7546, 7
      %v7548 = vsub.s32 1, %v7547
      %v7549 = vrot.slane %v6094, %v7548
      %v7550 = vlaneseq
      %v7551 = vshrl.u32 %v7550, 7
      %v7552 = vsub.s32 2, %v7551
      %v7553 = vrot.slane %v6094, %v7552
      %v7554 = vlaneseq
      %v7555 = vshrl.u32 %v7554, 7
      %v7556 = vsub.s32 3, %v7555
      %v7557 = vrot.slane %v6094, %v7556
      %v7558 = vlaneseq
      %v7559 = vshrl.u32 %v7558, 7
      %v7560 = vsub.s32 0, %v7559
      %v7561 = vrot.slane %v6095, %v7560
      %v7562 = vlaneseq
      %v7563 = vshrl.u32 %v7562, 7
      %v7564 = vsub.s32 1, %v7563
      %v7565 = vrot.slane %v6095, %v7564
      %v7566 = vlaneseq
      %v7567 = vshrl.u32 %v7566, 7
      %v7568 = vsub.s32 2, %v7567
      %v7569 = vrot.slane %v6095, %v7568
      %v7570 = vlaneseq
      %v7571 = vshrl.u32 %v7570, 7
      %v7572 = vsub.s32 3, %v7571
      %v7573 = vrot.slane %v6095, %v7572
      %v7574 = vlaneseq
      %v7575 = vshrl.u32 %v7574, 7
      %v7576 = vsub.s32 0, %v7575
      %v7577 = vrot.slane %v6079, %v7576
      %v7578 = vlaneseq
      %v7579 = vshrl.u32 %v7578, 7
      %v7580 = vsub.s32 1, %v7579
      %v7581 = vrot.slane %v6079, %v7580
      %v7582 = vlaneseq
      %v7583 = vshrl.u32 %v7582, 7
      %v7584 = vsub.s32 2, %v7583
      %v7585 = vrot.slane %v6079, %v7584
      %v7586 = vlaneseq
      %v7587 = vshrl.u32 %v7586, 7
      %v7588 = vsub.s32 3, %v7587
      %v7589 = vrot.slane %v6079, %v7588
      %v7590 = vlaneseq
      %v7591 = vshrl.u32 %v7590, 7
      %v7592 = vsub.s32 0, %v7591
      %v7593 = vrot.slane %v6093, %v7592
      %v7594 = vlaneseq
      %v7595 = vshrl.u32 %v7594, 7
      %v7596 = vsub.s32 1, %v7595
      %v7597 = vrot.slane %v6093, %v7596
      %v7598 = vlaneseq
      %v7599 = vshrl.u32 %v7598, 7
      %v7600 = vsub.s32 2, %v7599
      %v7601 = vrot.slane %v6093, %v7600
      %v7602 = vlaneseq
      %v7603 = vshrl.u32 %v7602, 7
      %v7604 = vsub.s32 3, %v7603
      %v7605 = vrot.slane %v6093, %v7604
      %v7662 = vlaneseq
      %v7663 = vshrl.u32 %v7662, 7
      %v7664 = vsub.s32 0, %v7663
      %v7665 = vrot.slane %v7290, %v7664
      %v7666 = vlaneseq
      %v7667 = vshrl.u32 %v7666, 7
      %v7668 = vsub.s32 1, %v7667
      %v7669 = vrot.slane %v7290, %v7668
      %v7670 = vlaneseq
      %v7671 = vshrl.u32 %v7670, 7
      %v7672 = vsub.s32 2, %v7671
      %v7673 = vrot.slane %v7290, %v7672
      %v7674 = vlaneseq
      %v7675 = vshrl.u32 %v7674, 7
      %v7676 = vsub.s32 3, %v7675
      %v7677 = vrot.slane %v7290, %v7676
      %v7678 = vlaneseq
      %v7679 = vshrl.u32 %v7678, 7
      %v7680 = vsub.s32 0, %v7679
      %v7681 = vrot.slane %v7304, %v7680
      %v7682 = vlaneseq
      %v7683 = vshrl.u32 %v7682, 7
      %v7684 = vsub.s32 1, %v7683
      %v7685 = vrot.slane %v7304, %v7684
      %v7686 = vlaneseq
      %v7687 = vshrl.u32 %v7686, 7
      %v7688 = vsub.s32 2, %v7687
      %v7689 = vrot.slane %v7304, %v7688
      %v7690 = vlaneseq
      %v7691 = vshrl.u32 %v7690, 7
      %v7692 = vsub.s32 3, %v7691
      %v7693 = vrot.slane %v7304, %v7692
      %v7694 = vlaneseq
      %v7695 = vshrl.u32 %v7694, 7
      %v7696 = vsub.s32 0, %v7695
      %v7697 = vrot.slane %v7312, %v7696
      %v7698 = vlaneseq
      %v7699 = vshrl.u32 %v7698, 7
      %v7700 = vsub.s32 1, %v7699
      %v7701 = vrot.slane %v7312, %v7700
      %v7702 = vlaneseq
      %v7703 = vshrl.u32 %v7702, 7
      %v7704 = vsub.s32 2, %v7703
      %v7705 = vrot.slane %v7312, %v7704
      %v7706 = vlaneseq
      %v7707 = vshrl.u32 %v7706, 7
      %v7708 = vsub.s32 3, %v7707
      %v7709 = vrot.slane %v7312, %v7708
      %v7710 = vlaneseq
      %v7711 = vshrl.u32 %v7710, 7
      %v7712 = vsub.s32 0, %v7711
      %v7713 = vrot.slane %v7314, %v7712
      %v7714 = vlaneseq
      %v7715 = vshrl.u32 %v7714, 7
      %v7716 = vsub.s32 1, %v7715
      %v7717 = vrot.slane %v7314, %v7716
      %v7718 = vlaneseq
      %v7719 = vshrl.u32 %v7718, 7
      %v7720 = vsub.s32 2, %v7719
      %v7721 = vrot.slane %v7314, %v7720
      %v7722 = vlaneseq
      %v7723 = vshrl.u32 %v7722, 7
      %v7724 = vsub.s32 3, %v7723
      %v7725 = vrot.slane %v7314, %v7724
      %v7726 = vlaneseq
      %v7727 = vshrl.u32 %v7726, 7
      %v7728 = vsub.s32 0, %v7727
      %v7729 = vrot.slane %v7297, %v7728
      %v7730 = vlaneseq
      %v7731 = vshrl.u32 %v7730, 7
      %v7732 = vsub.s32 1, %v7731
      %v7733 = vrot.slane %v7297, %v7732
      %v7734 = vlaneseq
      %v7735 = vshrl.u32 %v7734, 7
      %v7736 = vsub.s32 2, %v7735
      %v7737 = vrot.slane %v7297, %v7736
      %v7738 = vlaneseq
      %v7739 = vshrl.u32 %v7738, 7
      %v7740 = vsub.s32 3, %v7739
      %v7741 = vrot.slane %v7297, %v7740
      %v7742 = vlaneseq
      %v7743 = vshrl.u32 %v7742, 7
      %v7744 = vsub.s32 0, %v7743
      %v7745 = vrot.slane %v7311, %v7744
      %v7746 = vlaneseq
      %v7747 = vshrl.u32 %v7746, 7
      %v7748 = vsub.s32 1, %v7747
      %v7749 = vrot.slane %v7311, %v7748
      %v7750 = vlaneseq
      %v7751 = vshrl.u32 %v7750, 7
      %v7752 = vsub.s32 2, %v7751
      %v7753 = vrot.slane %v7311, %v7752
      %v7754 = vlaneseq
      %v7755 = vshrl.u32 %v7754, 7
      %v7756 = vsub.s32 3, %v7755
      %v7757 = vrot.slane %v7311, %v7756
      %v7758 = vlaneseq
      %v7759 = vshrl.u32 %v7758, 7
      %v7760 = vsub.s32 0, %v7759
      %v7761 = vrot.slane %v7313, %v7760
      %v7762 = vlaneseq
      %v7763 = vshrl.u32 %v7762, 7
      %v7764 = vsub.s32 1, %v7763
      %v7765 = vrot.slane %v7313, %v7764
      %v7766 = vlaneseq
      %v7767 = vshrl.u32 %v7766, 7
      %v7768 = vsub.s32 2, %v7767
      %v7769 = vrot.slane %v7313, %v7768
      %v7770 = vlaneseq
      %v7771 = vshrl.u32 %v7770, 7
      %v7772 = vsub.s32 3, %v7771
      %v7773 = vrot.slane %v7313, %v7772
      %v7774 = vlaneseq
      %v7775 = vshrl.u32 %v7774, 7
      %v7776 = vsub.s32 0, %v7775
      %v7777 = vrot.slane %v7315, %v7776
      %v7778 = vlaneseq
      %v7779 = vshrl.u32 %v7778, 7
      %v7780 = vsub.s32 1, %v7779
      %v7781 = vrot.slane %v7315, %v7780
      %v7782 = vlaneseq
      %v7783 = vshrl.u32 %v7782, 7
      %v7784 = vsub.s32 2, %v7783
      %v7785 = vrot.slane %v7315, %v7784
      %v7786 = vlaneseq
      %v7787 = vshrl.u32 %v7786, 7
      %v7788 = vsub.s32 3, %v7787
      %v7789 = vrot.slane %v7315, %v7788
      %v7790 = vlaneseq
      %v7791 = vshrl.u32 %v7790, 7
      %v7792 = vsub.s32 0, %v7791
      %v7793 = vrot.slane %v7358, %v7792
      %v7794 = vlaneseq
      %v7795 = vshrl.u32 %v7794, 7
      %v7796 = vsub.s32 1, %v7795
      %v7797 = vrot.slane %v7358, %v7796
      %v7798 = vlaneseq
      %v7799 = vshrl.u32 %v7798, 7
      %v7800 = vsub.s32 2, %v7799
      %v7801 = vrot.slane %v7358, %v7800
      %v7802 = vlaneseq
      %v7803 = vshrl.u32 %v7802, 7
      %v7804 = vsub.s32 3, %v7803
      %v7805 = vrot.slane %v7358, %v7804
      %v7806 = vlaneseq
      %v7807 = vshrl.u32 %v7806, 7
      %v7808 = vsub.s32 0, %v7807
      %v7809 = vrot.slane %v7372, %v7808
      %v7810 = vlaneseq
      %v7811 = vshrl.u32 %v7810, 7
      %v7812 = vsub.s32 1, %v7811
      %v7813 = vrot.slane %v7372, %v7812
      %v7814 = vlaneseq
      %v7815 = vshrl.u32 %v7814, 7
      %v7816 = vsub.s32 2, %v7815
      %v7817 = vrot.slane %v7372, %v7816
      %v7818 = vlaneseq
      %v7819 = vshrl.u32 %v7818, 7
      %v7820 = vsub.s32 3, %v7819
      %v7821 = vrot.slane %v7372, %v7820
      %v7822 = vlaneseq
      %v7823 = vshrl.u32 %v7822, 7
      %v7824 = vsub.s32 0, %v7823
      %v7825 = vrot.slane %v7380, %v7824
      %v7826 = vlaneseq
      %v7827 = vshrl.u32 %v7826, 7
      %v7828 = vsub.s32 1, %v7827
      %v7829 = vrot.slane %v7380, %v7828
      %v7830 = vlaneseq
      %v7831 = vshrl.u32 %v7830, 7
      %v7832 = vsub.s32 2, %v7831
      %v7833 = vrot.slane %v7380, %v7832
      %v7834 = vlaneseq
      %v7835 = vshrl.u32 %v7834, 7
      %v7836 = vsub.s32 3, %v7835
      %v7837 = vrot.slane %v7380, %v7836
      %v7838 = vlaneseq
      %v7839 = vshrl.u32 %v7838, 7
      %v7840 = vsub.s32 0, %v7839
      %v7841 = vrot.slane %v7381, %v7840
      %v7842 = vlaneseq
      %v7843 = vshrl.u32 %v7842, 7
      %v7844 = vsub.s32 1, %v7843
      %v7845 = vrot.slane %v7381, %v7844
      %v7846 = vlaneseq
      %v7847 = vshrl.u32 %v7846, 7
      %v7848 = vsub.s32 2, %v7847
      %v7849 = vrot.slane %v7381, %v7848
      %v7850 = vlaneseq
      %v7851 = vshrl.u32 %v7850, 7
      %v7852 = vsub.s32 3, %v7851
      %v7853 = vrot.slane %v7381, %v7852
      %v7854 = vlaneseq
      %v7855 = vshrl.u32 %v7854, 7
      %v7856 = vsub.s32 0, %v7855
      %v7857 = vrot.slane %v7365, %v7856
      %v7858 = vlaneseq
      %v7859 = vshrl.u32 %v7858, 7
      %v7860 = vsub.s32 1, %v7859
      %v7861 = vrot.slane %v7365, %v7860
      %v7862 = vlaneseq
      %v7863 = vshrl.u32 %v7862, 7
      %v7864 = vsub.s32 2, %v7863
      %v7865 = vrot.slane %v7365, %v7864
      %v7866 = vlaneseq
      %v7867 = vshrl.u32 %v7866, 7
      %v7868 = vsub.s32 3, %v7867
      %v7869 = vrot.slane %v7365, %v7868
      %v7870 = vlaneseq
      %v7871 = vshrl.u32 %v7870, 7
      %v7872 = vsub.s32 0, %v7871
      %v7873 = vrot.slane %v7379, %v7872
      %v7874 = vlaneseq
      %v7875 = vshrl.u32 %v7874, 7
      %v7876 = vsub.s32 1, %v7875
      %v7877 = vrot.slane %v7379, %v7876
      %v7878 = vlaneseq
      %v7879 = vshrl.u32 %v7878, 7
      %v7880 = vsub.s32 2, %v7879
      %v7881 = vrot.slane %v7379, %v7880
      %v7882 = vlaneseq
      %v7883 = vshrl.u32 %v7882, 7
      %v7884 = vsub.s32 3, %v7883
      %v7885 = vrot.slane %v7379, %v7884
      %v7942 = vsel %vm4488, %v7385, %v7665
      %v7943 = vsel %vm4488, %v7389, %v7669
      %v7944 = vsel %vm4488, %v7393, %v7673
      %v7945 = vsel %vm4488, %v7397, %v7677
      %v7946 = vsel %vm4488, %v7401, %v7681
      %v7947 = vsel %vm4488, %v7405, %v7685
      %v7948 = vsel %vm4488, %v7409, %v7689
      %v7949 = vsel %vm4488, %v7413, %v7693
      %v7950 = vsel %vm4488, %v7417, %v7697
      %v7951 = vsel %vm4488, %v7421, %v7701
      %v7952 = vsel %vm4488, %v7425, %v7705
      %v7953 = vsel %vm4488, %v7429, %v7709
      %v7954 = vsel %vm4488, %v7433, %v7713
      %v7955 = vsel %vm4488, %v7437, %v7717
      %v7956 = vsel %vm4488, %v7441, %v7721
      %v7957 = vsel %vm4488, %v7445, %v7725
      %v7958 = vsel %vm4488, %v7449, %v7729
      %v7959 = vsel %vm4488, %v7453, %v7733
      %v7960 = vsel %vm4488, %v7457, %v7737
      %v7961 = vsel %vm4488, %v7461, %v7741
      %v7962 = vsel %vm4488, %v7465, %v7745
      %v7963 = vsel %vm4488, %v7469, %v7749
      %v7964 = vsel %vm4488, %v7473, %v7753
      %v7965 = vsel %vm4488, %v7477, %v7757
      %v7966 = vsel %vm4488, %v7481, %v7761
      %v7967 = vsel %vm4488, %v7485, %v7765
      %v7968 = vsel %vm4488, %v7489, %v7769
      %v7969 = vsel %vm4488, %v7493, %v7773
      %v7970 = vsel %vm4488, %v7497, %v7777
      %v7971 = vsel %vm4488, %v7501, %v7781
      %v7972 = vsel %vm4488, %v7505, %v7785
      %v7973 = vsel %vm4488, %v7509, %v7789
      %v7974 = vsel %vm4488, %v7513, %v7793
      %v7975 = vsel %vm4488, %v7517, %v7797
      %v7976 = vsel %vm4488, %v7521, %v7801
      %v7977 = vsel %vm4488, %v7525, %v7805
      %v7978 = vsel %vm4488, %v7529, %v7809
      %v7979 = vsel %vm4488, %v7533, %v7813
      %v7980 = vsel %vm4488, %v7537, %v7817
      %v7981 = vsel %vm4488, %v7541, %v7821
      %v7982 = vsel %vm4488, %v7545, %v7825
      %v7983 = vsel %vm4488, %v7549, %v7829
      %v7984 = vsel %vm4488, %v7553, %v7833
      %v7985 = vsel %vm4488, %v7557, %v7837
      %v7986 = vsel %vm4488, %v7561, %v7841
      %v7987 = vsel %vm4488, %v7565, %v7845
      %v7988 = vsel %vm4488, %v7569, %v7849
      %v7989 = vsel %vm4488, %v7573, %v7853
      %v7990 = vsel %vm4488, %v7577, %v7857
      %v7991 = vsel %vm4488, %v7581, %v7861
      %v7992 = vsel %vm4488, %v7585, %v7865
      %v7993 = vsel %vm4488, %v7589, %v7869
      %v7994 = vsel %vm4488, %v7593, %v7873
      %v7995 = vsel %vm4488, %v7597, %v7877
      %v7996 = vsel %vm4488, %v7601, %v7881
      %v7997 = vsel %vm4488, %v7605, %v7885
      %v8054 = vcombine.low %v7942, %v7943
      %v8055 = vcombine.low %v7944, %v7945
      %v8057 = vunpack.c.l.s4 1983009808
      %v8058 = vunpack.c.0.s8 %v8057
      %v8059 = vlaneseq
      %v8060 = vshrl.u32 %v8059, 7
      %v8061 = vsub.s32 %v8058, %v8060
      %v8062 = vrot.slane %v8054, %v8061
      %v8064 = vunpack.c.l.s4 1983009808
      %v8065 = vunpack.c.0.s8 %v8064
      %v8066 = vlaneseq
      %v8067 = vshrl.u32 %v8066, 7
      %v8068 = vsub.s32 %v8065, %v8067
      %v8069 = vrot.slane %v8055, %v8068
      %v8070 = vcombine.low %v8062, %v8069
      %v8071 = vcombine.low %v7946, %v7947
      %v8072 = vcombine.low %v7948, %v7949
      %v8074 = vunpack.c.l.s4 1983009808
      %v8075 = vunpack.c.0.s8 %v8074
      %v8076 = vlaneseq
      %v8077 = vshrl.u32 %v8076, 7
      %v8078 = vsub.s32 %v8075, %v8077
      %v8079 = vrot.slane %v8071, %v8078
      %v8081 = vunpack.c.l.s4 1983009808
      %v8082 = vunpack.c.0.s8 %v8081
      %v8083 = vlaneseq
      %v8084 = vshrl.u32 %v8083, 7
      %v8085 = vsub.s32 %v8082, %v8084
      %v8086 = vrot.slane %v8072, %v8085
      %v8087 = vcombine.low %v8079, %v8086
      %v8088 = vcombine.low %v7950, %v7951
      %v8089 = vcombine.low %v7952, %v7953
      %v8091 = vunpack.c.l.s4 1983009808
      %v8092 = vunpack.c.0.s8 %v8091
      %v8093 = vlaneseq
      %v8094 = vshrl.u32 %v8093, 7
      %v8095 = vsub.s32 %v8092, %v8094
      %v8096 = vrot.slane %v8088, %v8095
      %v8098 = vunpack.c.l.s4 1983009808
      %v8099 = vunpack.c.0.s8 %v8098
      %v8100 = vlaneseq
      %v8101 = vshrl.u32 %v8100, 7
      %v8102 = vsub.s32 %v8099, %v8101
      %v8103 = vrot.slane %v8089, %v8102
      %v8104 = vcombine.low %v8096, %v8103
      %v8105 = vcombine.low %v7954, %v7955
      %v8106 = vcombine.low %v7956, %v7957
      %v8108 = vunpack.c.l.s4 1983009808
      %v8109 = vunpack.c.0.s8 %v8108
      %v8110 = vlaneseq
      %v8111 = vshrl.u32 %v8110, 7
      %v8112 = vsub.s32 %v8109, %v8111
      %v8113 = vrot.slane %v8105, %v8112
      %v8115 = vunpack.c.l.s4 1983009808
      %v8116 = vunpack.c.0.s8 %v8115
      %v8117 = vlaneseq
      %v8118 = vshrl.u32 %v8117, 7
      %v8119 = vsub.s32 %v8116, %v8118
      %v8120 = vrot.slane %v8106, %v8119
      %v8121 = vcombine.low %v8113, %v8120
      %v8122 = vcombine.low %v7958, %v7959
      %v8123 = vcombine.low %v7960, %v7961
      %v8125 = vunpack.c.l.s4 1983009808
      %v8126 = vunpack.c.0.s8 %v8125
      %v8127 = vlaneseq
      %v8128 = vshrl.u32 %v8127, 7
      %v8129 = vsub.s32 %v8126, %v8128
      %v8130 = vrot.slane %v8122, %v8129
      %v8132 = vunpack.c.l.s4 1983009808
      %v8133 = vunpack.c.0.s8 %v8132
      %v8134 = vlaneseq
      %v8135 = vshrl.u32 %v8134, 7
      %v8136 = vsub.s32 %v8133, %v8135
      %v8137 = vrot.slane %v8123, %v8136
      %v8138 = vcombine.low %v8130, %v8137
      %v8139 = vcombine.low %v7962, %v7963
      %v8140 = vcombine.low %v7964, %v7965
      %v8142 = vunpack.c.l.s4 1983009808
      %v8143 = vunpack.c.0.s8 %v8142
      %v8144 = vlaneseq
      %v8145 = vshrl.u32 %v8144, 7
      %v8146 = vsub.s32 %v8143, %v8145
      %v8147 = vrot.slane %v8139, %v8146
      %v8149 = vunpack.c.l.s4 1983009808
      %v8150 = vunpack.c.0.s8 %v8149
      %v8151 = vlaneseq
      %v8152 = vshrl.u32 %v8151, 7
      %v8153 = vsub.s32 %v8150, %v8152
      %v8154 = vrot.slane %v8140, %v8153
      %v8155 = vcombine.low %v8147, %v8154
      %v8156 = vcombine.low %v7966, %v7967
      %v8157 = vcombine.low %v7968, %v7969
      %v8159 = vunpack.c.l.s4 1983009808
      %v8160 = vunpack.c.0.s8 %v8159
      %v8161 = vlaneseq
      %v8162 = vshrl.u32 %v8161, 7
      %v8163 = vsub.s32 %v8160, %v8162
      %v8164 = vrot.slane %v8156, %v8163
      %v8166 = vunpack.c.l.s4 1983009808
      %v8167 = vunpack.c.0.s8 %v8166
      %v8168 = vlaneseq
      %v8169 = vshrl.u32 %v8168, 7
      %v8170 = vsub.s32 %v8167, %v8169
      %v8171 = vrot.slane %v8157, %v8170
      %v8172 = vcombine.low %v8164, %v8171
      %v8173 = vcombine.low %v7970, %v7971
      %v8174 = vcombine.low %v7972, %v7973
      %v8176 = vunpack.c.l.s4 1983009808
      %v8177 = vunpack.c.0.s8 %v8176
      %v8178 = vlaneseq
      %v8179 = vshrl.u32 %v8178, 7
      %v8180 = vsub.s32 %v8177, %v8179
      %v8181 = vrot.slane %v8173, %v8180
      %v8183 = vunpack.c.l.s4 1983009808
      %v8184 = vunpack.c.0.s8 %v8183
      %v8185 = vlaneseq
      %v8186 = vshrl.u32 %v8185, 7
      %v8187 = vsub.s32 %v8184, %v8186
      %v8188 = vrot.slane %v8174, %v8187
      %v8189 = vcombine.low %v8181, %v8188
      %v8190 = vcombine.low %v7974, %v7975
      %v8191 = vcombine.low %v7976, %v7977
      %v8193 = vunpack.c.l.s4 1983009808
      %v8194 = vunpack.c.0.s8 %v8193
      %v8195 = vlaneseq
      %v8196 = vshrl.u32 %v8195, 7
      %v8197 = vsub.s32 %v8194, %v8196
      %v8198 = vrot.slane %v8190, %v8197
      %v8200 = vunpack.c.l.s4 1983009808
      %v8201 = vunpack.c.0.s8 %v8200
      %v8202 = vlaneseq
      %v8203 = vshrl.u32 %v8202, 7
      %v8204 = vsub.s32 %v8201, %v8203
      %v8205 = vrot.slane %v8191, %v8204
      %v8206 = vcombine.low %v8198, %v8205
      %v8207 = vcombine.low %v7978, %v7979
      %v8208 = vcombine.low %v7980, %v7981
      %v8210 = vunpack.c.l.s4 1983009808
      %v8211 = vunpack.c.0.s8 %v8210
      %v8212 = vlaneseq
      %v8213 = vshrl.u32 %v8212, 7
      %v8214 = vsub.s32 %v8211, %v8213
      %v8215 = vrot.slane %v8207, %v8214
      %v8217 = vunpack.c.l.s4 1983009808
      %v8218 = vunpack.c.0.s8 %v8217
      %v8219 = vlaneseq
      %v8220 = vshrl.u32 %v8219, 7
      %v8221 = vsub.s32 %v8218, %v8220
      %v8222 = vrot.slane %v8208, %v8221
      %v8223 = vcombine.low %v8215, %v8222
      %v8224 = vcombine.low %v7982, %v7983
      %v8225 = vcombine.low %v7984, %v7985
      %v8227 = vunpack.c.l.s4 1983009808
      %v8228 = vunpack.c.0.s8 %v8227
      %v8229 = vlaneseq
      %v8230 = vshrl.u32 %v8229, 7
      %v8231 = vsub.s32 %v8228, %v8230
      %v8232 = vrot.slane %v8224, %v8231
      %v8234 = vunpack.c.l.s4 1983009808
      %v8235 = vunpack.c.0.s8 %v8234
      %v8236 = vlaneseq
      %v8237 = vshrl.u32 %v8236, 7
      %v8238 = vsub.s32 %v8235, %v8237
      %v8239 = vrot.slane %v8225, %v8238
      %v8240 = vcombine.low %v8232, %v8239
      %v8241 = vcombine.low %v7986, %v7987
      %v8242 = vcombine.low %v7988, %v7989
      %v8244 = vunpack.c.l.s4 1983009808
      %v8245 = vunpack.c.0.s8 %v8244
      %v8246 = vlaneseq
      %v8247 = vshrl.u32 %v8246, 7
      %v8248 = vsub.s32 %v8245, %v8247
      %v8249 = vrot.slane %v8241, %v8248
      %v8251 = vunpack.c.l.s4 1983009808
      %v8252 = vunpack.c.0.s8 %v8251
      %v8253 = vlaneseq
      %v8254 = vshrl.u32 %v8253, 7
      %v8255 = vsub.s32 %v8252, %v8254
      %v8256 = vrot.slane %v8242, %v8255
      %v8257 = vcombine.low %v8249, %v8256
      %v8258 = vcombine.low %v7990, %v7991
      %v8259 = vcombine.low %v7992, %v7993
      %v8261 = vunpack.c.l.s4 1983009808
      %v8262 = vunpack.c.0.s8 %v8261
      %v8263 = vlaneseq
      %v8264 = vshrl.u32 %v8263, 7
      %v8265 = vsub.s32 %v8262, %v8264
      %v8266 = vrot.slane %v8258, %v8265
      %v8268 = vunpack.c.l.s4 1983009808
      %v8269 = vunpack.c.0.s8 %v8268
      %v8270 = vlaneseq
      %v8271 = vshrl.u32 %v8270, 7
      %v8272 = vsub.s32 %v8269, %v8271
      %v8273 = vrot.slane %v8259, %v8272
      %v8274 = vcombine.low %v8266, %v8273
      %v8275 = vcombine.low %v7994, %v7995
      %v8276 = vcombine.low %v7996, %v7997
      %v8278 = vunpack.c.l.s4 1983009808
      %v8279 = vunpack.c.0.s8 %v8278
      %v8280 = vlaneseq
      %v8281 = vshrl.u32 %v8280, 7
      %v8282 = vsub.s32 %v8279, %v8281
      %v8283 = vrot.slane %v8275, %v8282
      %v8285 = vunpack.c.l.s4 1983009808
      %v8286 = vunpack.c.0.s8 %v8285
      %v8287 = vlaneseq
      %v8288 = vshrl.u32 %v8287, 7
      %v8289 = vsub.s32 %v8286, %v8288
      %v8290 = vrot.slane %v8276, %v8289
      %v8291 = vcombine.low %v8283, %v8290
      %v8292 = vcombine.low %v8070, %v8087
      %v8293 = vcombine.high %v8070, %v8087
      %v8294 = vcombine.low %v8104, %v8121
      %v8295 = vcombine.high %v8104, %v8121
      %v8297 = vunpack.c.l.s4 1983009808
      %v8298 = vunpack.c.0.s8 %v8297
      %v8299 = vlaneseq
      %v8300 = vshrl.u32 %v8299, 7
      %v8301 = vsub.s32 %v8298, %v8300
      %v8302 = vrot.slane %v8292, %v8301
      %v8304 = vunpack.c.l.s4 1983009808
      %v8305 = vunpack.c.0.s8 %v8304
      %v8306 = vlaneseq
      %v8307 = vshrl.u32 %v8306, 7
      %v8308 = vsub.s32 %v8305, %v8307
      %v8309 = vrot.slane %v8293, %v8308
      %v8311 = vunpack.c.l.s4 1983009808
      %v8312 = vunpack.c.0.s8 %v8311
      %v8313 = vlaneseq
      %v8314 = vshrl.u32 %v8313, 7
      %v8315 = vsub.s32 %v8312, %v8314
      %v8316 = vrot.slane %v8294, %v8315
      %v8318 = vunpack.c.l.s4 1983009808
      %v8319 = vunpack.c.0.s8 %v8318
      %v8320 = vlaneseq
      %v8321 = vshrl.u32 %v8320, 7
      %v8322 = vsub.s32 %v8319, %v8321
      %v8323 = vrot.slane %v8295, %v8322
      %v8324 = vcombine.low %v8302, %v8316
      %v8325 = vcombine.high %v8302, %v8316
      %v8326 = vcombine.low %v8309, %v8323
      %v8327 = vcombine.high %v8309, %v8323
      %v8328 = vcombine.low %v8138, %v8155
      %v8329 = vcombine.high %v8138, %v8155
      %v8330 = vcombine.low %v8172, %v8189
      %v8331 = vcombine.high %v8172, %v8189
      %v8333 = vunpack.c.l.s4 1983009808
      %v8334 = vunpack.c.0.s8 %v8333
      %v8335 = vlaneseq
      %v8336 = vshrl.u32 %v8335, 7
      %v8337 = vsub.s32 %v8334, %v8336
      %v8338 = vrot.slane %v8328, %v8337
      %v8340 = vunpack.c.l.s4 1983009808
      %v8341 = vunpack.c.0.s8 %v8340
      %v8342 = vlaneseq
      %v8343 = vshrl.u32 %v8342, 7
      %v8344 = vsub.s32 %v8341, %v8343
      %v8345 = vrot.slane %v8329, %v8344
      %v8347 = vunpack.c.l.s4 1983009808
      %v8348 = vunpack.c.0.s8 %v8347
      %v8349 = vlaneseq
      %v8350 = vshrl.u32 %v8349, 7
      %v8351 = vsub.s32 %v8348, %v8350
      %v8352 = vrot.slane %v8330, %v8351
      %v8354 = vunpack.c.l.s4 1983009808
      %v8355 = vunpack.c.0.s8 %v8354
      %v8356 = vlaneseq
      %v8357 = vshrl.u32 %v8356, 7
      %v8358 = vsub.s32 %v8355, %v8357
      %v8359 = vrot.slane %v8331, %v8358
      %v8360 = vcombine.low %v8338, %v8352
      %v8361 = vcombine.high %v8338, %v8352
      %v8362 = vcombine.low %v8345, %v8359
      %v8363 = vcombine.high %v8345, %v8359
      %v8364 = vcombine.low %v8206, %v8223
      %v8365 = vcombine.high %v8206, %v8223
      %v8366 = vcombine.low %v8240, %v8257
      %v8367 = vcombine.high %v8240, %v8257
      %v8369 = vunpack.c.l.s4 1983009808
      %v8370 = vunpack.c.0.s8 %v8369
      %v8371 = vlaneseq
      %v8372 = vshrl.u32 %v8371, 7
      %v8373 = vsub.s32 %v8370, %v8372
      %v8374 = vrot.slane %v8364, %v8373
      %v8376 = vunpack.c.l.s4 1983009808
      %v8377 = vunpack.c.0.s8 %v8376
      %v8378 = vlaneseq
      %v8379 = vshrl.u32 %v8378, 7
      %v8380 = vsub.s32 %v8377, %v8379
      %v8381 = vrot.slane %v8365, %v8380
      %v8383 = vunpack.c.l.s4 1983009808
      %v8384 = vunpack.c.0.s8 %v8383
      %v8385 = vlaneseq
      %v8386 = vshrl.u32 %v8385, 7
      %v8387 = vsub.s32 %v8384, %v8386
      %v8388 = vrot.slane %v8366, %v8387
      %v8390 = vunpack.c.l.s4 1983009808
      %v8391 = vunpack.c.0.s8 %v8390
      %v8392 = vlaneseq
      %v8393 = vshrl.u32 %v8392, 7
      %v8394 = vsub.s32 %v8391, %v8393
      %v8395 = vrot.slane %v8367, %v8394
      %v8396 = vcombine.low %v8374, %v8388
      %v8397 = vcombine.high %v8374, %v8388
      %v8398 = vcombine.low %v8381, %v8395
      %v8399 = vcombine.high %v8381, %v8395
      %v8400 = vcombine.low %v8274, %v8291
      %v8401 = vcombine.high %v8274, %v8291
      %v8403 = vunpack.c.l.s4 1983009808
      %v8404 = vunpack.c.0.s8 %v8403
      %v8405 = vlaneseq
      %v8406 = vshrl.u32 %v8405, 7
      %v8407 = vsub.s32 %v8404, %v8406
      %v8408 = vrot.slane %v8400, %v8407
      %v8410 = vunpack.c.l.s4 1983009808
      %v8411 = vunpack.c.0.s8 %v8410
      %v8412 = vlaneseq
      %v8413 = vshrl.u32 %v8412, 7
      %v8414 = vsub.s32 %v8411, %v8413
      %v8415 = vrot.slane %v8401, %v8414
      %v8416 = vcombine.high %v8408, %v8408
      %v8417 = vcombine.high %v8415, %v8415
      %8434 = vst [vmem:[%s258] sm:$0xff] %v8324
      %8435 = vst [vmem:[%s258 + $0x8] sm:$0xff] %v8325
      %8436 = vst [vmem:[%s258 + $0x10] sm:$0xff] %v8326
      %vm8437 = vcmask 523264
      %8438 = vst.msk [vmem:[%s258 + $0x18] sm:$0xff] %vm8437, %v8327
      %8439 = vst [vmem:[%s258 + $0x20] sm:$0xff] %v8360
      %8440 = vst [vmem:[%s258 + $0x28] sm:$0xff] %v8361
      %8441 = vst [vmem:[%s258 + $0x30] sm:$0xff] %v8362
      %8442 = vst.msk [vmem:[%s258 + $0x38] sm:$0xff] %vm8437, %v8363
      %8443 = vst [vmem:[%s258 + $0x40] sm:$0xff] %v8396
      %8444 = vst [vmem:[%s258 + $0x48] sm:$0xff] %v8397
      %8445 = vst [vmem:[%s258 + $0x50] sm:$0xff] %v8398
      %8446 = vst.msk [vmem:[%s258 + $0x58] sm:$0xff] %vm8437, %v8399
      %8447 = vst [vmem:[%s258 + $0x60] sm:$0xf] %v8408
      %8448 = vst [vmem:[%s258 + $0x68] sm:$0xf] %v8416
      %8449 = vst [vmem:[%s258 + $0x70] sm:$0xf] %v8415
      %vm8450 = vcmask 519168
      %8451 = vst.msk [vmem:[%s258 + $0x78] sm:$0xf] %vm8450, %v8417
      %p8452 = scmp.lt.s32.totalorder %s18, 1
      %s8453 = scalar_select %p8452, %s18, 1
      %s8454 = smul.addr %s8453, 16
      %s8455 = smul.addr %s8454, 8
      %s8456 = scalar_lea.vmem %s7, %s8455
      // Predicated region
      $region49: #{decoder_apply.1} parent=47 // pred_check
        %p8457 = pneg %p183
      $region50: #{decoder_apply.1} parent=47 // pred_check_branch
        %8459 = sbr.rel (%p8457) target = $region52
      $region51: #{decoder_apply.1} parent=47 // pred_region
        _
      $region52: #{decoder_apply.1} parent=47 // pred_fallthru
        _
    $region48: #{decoder_apply.1} parent=5 // pred_fallthru
      _
    %p8460 = scmp.le.s32.totalorder 2, %s13
    // Predicated region
    $region53: #{decoder_apply.1} parent=5 // pred_check
      %p8461 = pneg %p8460
    $region54: #{decoder_apply.1} parent=5 // pred_check_branch
      %8463 = sbr.rel (%p8461) target = $region56
    $region55: #{decoder_apply.1} parent=5 // pred_region
      %s8464 = ssub.s32 %s13, 2
      // Predicated region
      $region57: #{decoder_apply.1} parent=55 // pred_check
        %p8465 = pneg %p189
      $region58: #{decoder_apply.1} parent=55 // pred_check_branch
        %8467 = sbr.rel (%p8465) target = $region60
      $region59: #{decoder_apply.1} parent=55 // pred_region
        %p8468 = scmp.lt.s32.totalorder %s19, 1
        %s8469 = scalar_select %p8468, %s19, 1
        %s8470 = smul.addr %s8469, 16
        %s8471 = smul.addr %s8470, 8
        %s8472 = scalar_lea.vmem %s7, %s8471
      $region60: #{decoder_apply.1} parent=55 // pred_fallthru
        _
    $region56: #{decoder_apply.1} parent=5 // pred_fallthru
      _
  $region6: #{decoder_apply.1} parent=0 // loop_footer
    %s17 = sadd.s32 1, %s13
  $region7: #{decoder_apply.1} parent=0 // loop_footer_branch
    %12 = sbr.rel target = $region3
  $region8: #{decoder_apply.1} parent=0 // loop_exit
    _

</llo_original>
